<compile_context>
chip_gen: v7x
topology: tpu7x:2x2x1
jax: 0.10.0
libtpu: 0.0.40
codegen_flags: <defaults>
</compile_context>

<pallas_src>
import functools
import numpy as np

import jax
import jax.numpy as jnp
from jax.experimental import pallas as pl
from jax.experimental.pallas import tpu as pltpu


# ----------------------------------------------------------------------------
# Pallas kernel: out[Cp, Mt] = relu?( W[Cp, Kp] @ P[Kp, Mt] + bias (+ residual) )
# W already carries the folded BatchNorm scale; bias is the folded BN shift.
# ----------------------------------------------------------------------------
def _gemm_bias_kernel(w_ref, p_ref, b_ref, o_ref, *, relu):
    acc = jnp.dot(w_ref[...], p_ref[...], preferred_element_type=jnp.float32)
    y = acc + b_ref[...]
    if relu:
        y = jnp.maximum(y, 0.0)
    o_ref[...] = y.astype(o_ref.dtype)


def _gemm_bias_res_kernel(w_ref, p_ref, b_ref, r_ref, o_ref, *, relu):
    acc = jnp.dot(w_ref[...], p_ref[...], preferred_element_type=jnp.float32)
    y = acc + b_ref[...] + r_ref[...].astype(jnp.float32)
    if relu:
        y = jnp.maximum(y, 0.0)
    o_ref[...] = y.astype(o_ref.dtype)


def _round_up(x, m):
    return (x + m - 1) // m * m


def _gemm(wq, bq, patches, *, relu, residual=None, out_dtype=jnp.bfloat16):
    """wq: [Cp, Kp] bf16 (pre-packed, BN scale folded); bq: [Cp, 1] f32;
    patches: [K, M] bf16 with K <= Kp; residual: [Cr, M] (Cr <= Cp) or None.
    Returns [Cp, Mp] out_dtype; the caller slices the logical [Cout, M] part."""
    cp, kp = wq.shape
    k, m = patches.shape

    # Single grid step for small problems; tile M (512-wide, "parallel") only when
    # there is enough work to shard across v7x's two TensorCores.
    mp = _round_up(m, 128)
    if mp >= 1024:
        mp = _round_up(m, 512)
        tm = 512
    else:
        tm = mp
    grid = (mp // tm,)

    if kp > k or mp > m:
        patches = jnp.pad(patches, ((0, kp - k), (0, mp - m)))

    w_spec = pl.BlockSpec((cp, kp), lambda i: (0, 0))
    p_spec = pl.BlockSpec((kp, tm), lambda i: (0, i))
    b_spec = pl.BlockSpec((cp, 1), lambda i: (0, 0))
    o_spec = pl.BlockSpec((cp, tm), lambda i: (0, i))
    out_shape = jax.ShapeDtypeStruct((cp, mp), out_dtype)
    cparams = pltpu.CompilerParams(dimension_semantics=("parallel",))
    # TODO(synk): if real Hiera-L widths (K up to ~10K) are restored, add a K grid
    #             axis with a VMEM f32 accumulator so the resident weight block stays
    #             inside v7x's 64 MiB VMEM.

    if residual is None:
        return pl.pallas_call(
            functools.partial(_gemm_bias_kernel, relu=relu),
            out_shape=out_shape,
            grid=grid,
            in_specs=[w_spec, p_spec, b_spec],
            out_specs=o_spec,
            compiler_params=cparams,
        )(wq, patches, bq)

    cr, mr = residual.shape
    r = jnp.pad(residual.astype(jnp.bfloat16), ((0, cp - cr), (0, mp - mr)))
    r_spec = pl.BlockSpec((cp, tm), lambda i: (0, i))
    return pl.pallas_call(
        functools.partial(_gemm_bias_res_kernel, relu=relu),
        out_shape=out_shape,
        grid=grid,
        in_specs=[w_spec, p_spec, b_spec, r_spec],
        out_specs=o_spec,
        compiler_params=cparams,
    )(wq, patches, bq, r)


# ----------------------------------------------------------------------------
# Static conv geometry (Python ints only — never traced by jit) + im2col glue
# ----------------------------------------------------------------------------
def _pair(v):
    return (v, v) if isinstance(v, int) else tuple(v)


def conv_spec(cin, cout, k, stride=1, padding=0, dilation=1):
    return dict(cin=cin, cout=cout, k=_pair(k), stride=_pair(stride),
                padding=_pair(padding), dilation=_pair(dilation))


def _out_hw(spec, h, w):
    kh, kw = spec['k']
    sh, sw = spec['stride']
    ph, pw = spec['padding']
    dh, dw = spec['dilation']
    ho = (h + 2 * ph - dh * (kh - 1) - 1) // sh + 1
    wo = (w + 2 * pw - dw * (kw - 1) - 1) // sw + 1
    return ho, wo


def _im2col(x, spec):
    """x: [Cin, N, H, W] channel-major bf16 -> (patches [K, N*Ho*Wo], ho, wo)."""
    cin, n, h, w = x.shape
    kh, kw = spec['k']
    sh, sw = spec['stride']
    ph, pw = spec['padding']
    dh, dw = spec['dilation']
    ho, wo = _out_hw(spec, h, w)
    m = n * ho * wo
    xp = jnp.pad(x, ((0, 0), (0, 0), (ph, ph), (pw, pw))) if (ph or pw) else x
    if kh == 1 and kw == 1 and sh == 1 and sw == 1:
        # 1x1 stride-1 conv: patches are just a reshape in the channel-major layout.
        return xp.reshape(cin, m), ho, wo
    # TODO(synk): bf16 tap materialization (no transpose); in-kernel tap accumulation
    #             over a halo'd VMEM block is left for a future revision.
    taps = [xp[:, :, i * dh: i * dh + (ho - 1) * sh + 1: sh,
               j * dw: j * dw + (wo - 1) * sw + 1: sw]
            for i in range(kh) for j in range(kw)]
    return jnp.concatenate(taps, axis=0).reshape(kh * kw * cin, m), ho, wo


def conv_cm(x, spec, p, *, relu, residual=None, out_dtype=jnp.bfloat16):
    """BasicConv2d (Conv2d bias-free + folded eval-mode BN) [+residual] [+ReLU] in the
    channel-major layout.  x: [Cin, N, H, W] -> [Cout, N, Ho, Wo]."""
    n = x.shape[1]
    patches, ho, wo = _im2col(x, spec)
    m = n * ho * wo
    y = _gemm(p['wq'], p['bq'], patches, relu=relu, residual=residual,
              out_dtype=out_dtype)
    return y[:spec['cout'], :m].reshape(spec['cout'], n, ho, wo)


# ----------------------------------------------------------------------------
# PyTorch-exact bilinear resize via separable interpolation matrices (JAX glue)
# ----------------------------------------------------------------------------
def _bilinear_matrix(in_size, out_size, align_corners):
    mat = np.zeros((out_size, in_size), np.float32)
    if align_corners:
        if out_size > 1:
            src = np.arange(out_size, dtype=np.float64) * (in_size - 1) / (out_size - 1)
        else:
            src = np.zeros((out_size,), np.float64)
    else:
        src = (np.arange(out_size, dtype=np.float64) + 0.5) * in_size / out_size - 0.5
        src = np.clip(src, 0.0, in_size - 1)
    lo = np.clip(np.floor(src).astype(np.int64), 0, in_size - 1)
    hi = np.minimum(lo + 1, in_size - 1)
    w_hi = (src - lo).astype(np.float32)
    w_lo = 1.0 - w_hi
    for o in range(out_size):
        mat[o, lo[o]] += w_lo[o]
        mat[o, hi[o]] += w_hi[o]
    return jnp.asarray(mat)


def bilinear_resize_cm(x, out_h, out_w, *, align_corners):
    """Bilinear interpolation on channel-major [C, N, H, W]; returns f32."""
    _, _, h, w = x.shape
    mh = _bilinear_matrix(h, out_h, align_corners)
    mw = _bilinear_matrix(w, out_w, align_corners)
    y = jnp.einsum('oh,cnhw->cnow', mh, x.astype(jnp.float32))
    return jnp.einsum('pw,cnow->cnop', mw, y)


# ----------------------------------------------------------------------------
# Deterministic parameter init + one-time weight packing
# ----------------------------------------------------------------------------
class KeyGen:
    def __init__(self, key):
        self.key = key

    def __call__(self):
        self.key, k = jax.random.split(self.key)
        return k


def _fold_bn(kg, c):
    gamma = 1.0 + 0.1 * jax.random.normal(kg(), (c,), jnp.float32)
    beta = 0.1 * jax.random.normal(kg(), (c,), jnp.float32)
    mean = 0.1 * jax.random.normal(kg(), (c,), jnp.float32)
    var = 1.0 + 0.1 * jnp.abs(jax.random.normal(kg(), (c,), jnp.float32))
    scale = gamma / jnp.sqrt(var + 1e-5)
    bias = beta - mean * scale
    return scale, bias


def _init_conv_raw(kg, spec):
    kh, kw = spec['k']
    cin, cout = spec['cin'], spec['cout']
    fan = cin * kh * kw
    w = jax.random.normal(kg(), (cout, cin, kh, kw), jnp.float32) / np.sqrt(fan)
    scale, bias = _fold_bn(kg, cout)
    return w, scale, bias


def _wmat(w, scale):
    # [Cout, Cin, KH, KW] * BN scale -> [Cout, KH*KW*Cin] matching the tap-major /
    # channel-minor row order produced by _im2col.
    cout = w.shape[0]
    return (w * scale[:, None, None, None]).transpose(0, 2, 3, 1).reshape(cout, -1)


def _pack_gemm(wmat, bias):
    # Pack once at init: pad to bf16-sublane-friendly multiples of 16, cast to bf16.
    cout, k = wmat.shape
    cp = _round_up(cout, 16)
    kp = _round_up(k, 16)
    wq = jnp.pad(wmat, ((0, cp - cout), (0, kp - k))).astype(jnp.bfloat16)
    bq = jnp.pad(bias.astype(jnp.float32).reshape(cout, 1), ((0, cp - cout), (0, 0)))
    return dict(wq=wq, bq=bq)


def _init_basic(kg, spec):
    w, s, b = _init_conv_raw(kg, spec)
    return _pack_gemm(_wmat(w, s), b)


def _block_diag(mats):
    rows = sum(m.shape[0] for m in mats)
    cols = sum(m.shape[1] for m in mats)
    out = jnp.zeros((rows, cols), jnp.float32)
    r = c = 0
    for m in mats:
        out = out.at[r:r + m.shape[0], c:c + m.shape[1]].set(m)
        r += m.shape[0]
        c += m.shape[1]
    return out


# ----------------------------------------------------------------------------
# Architecture (static Python structure, closed over by the jitted forward)
# ----------------------------------------------------------------------------
ENC_CH = (8, 16, 24, 32)   # stand-in widths for Hiera-L's (144, 288, 576, 1152)
TRANS = 16                 # stand-in for 64


def rfb_arch(cin, cout):
    return dict(
        cin=cin, cout=cout,
        tails=[
            [conv_spec(cout, cout, (1, 3), padding=(0, 1)),
             conv_spec(cout, cout, (3, 1), padding=(1, 0)),
             conv_spec(cout, cout, 3, padding=3, dilation=3)],
            [conv_spec(cout, cout, (1, 5), padding=(0, 2)),
             conv_spec(cout, cout, (5, 1), padding=(2, 0)),
             conv_spec(cout, cout, 3, padding=5, dilation=5)],
            [conv_spec(cout, cout, (1, 7), padding=(0, 3)),
             conv_spec(cout, cout, (7, 1), padding=(3, 0)),
             conv_spec(cout, cout, 3, padding=7, dilation=7)],
        ],
        cat=conv_spec(4 * cout, cout, 3, padding=1),
    )


def build_arch():
    c1, c2, c3, c4 = ENC_CH
    t = TRANS
    dc = lambda: [conv_spec(2 * t, t, 3, padding=1), conv_spec(t, t, 3, padding=1)]
    return dict(
        enc=dict(s1a=conv_spec(3, c1, 3, stride=2, padding=1),
                 s1b=conv_spec(c1, c1, 3, stride=2, padding=1),
                 s2=conv_spec(c1, c2, 3, stride=2, padding=1),
                 s3=conv_spec(c2, c3, 3, stride=2, padding=1),
                 s4=conv_spec(c3, c4, 3, stride=2, padding=1)),
        rfb1=rfb_arch(c1, t), rfb2=rfb_arch(c2, t),
        rfb3=rfb_arch(c3, t), rfb4=rfb_arch(c4, t),
        up1=dc(), up2=dc(), up3=dc(),
    )


def _init_rfb(kg, a):
    cin, cout = a['cin'], a['cout']
    # Five parallel 1x1 entry convs (b0, b1[0], b2[0], b3[0], conv_res) -> one GEMM.
    ws, bs = [], []
    for _ in range(5):
        w, s, b = _init_conv_raw(kg, conv_spec(cin, cout, 1))
        ws.append(_wmat(w, s))
        bs.append(b)
    entry = _pack_gemm(jnp.concatenate(ws, axis=0), jnp.concatenate(bs))
    # Each tail stage fused across the b1/b2/b3 branches with a block-diagonal weight.
    tails = []
    for s_idx in range(3):
        wms, bis = [], []
        for b_idx in range(3):
            w, s, b = _init_conv_raw(kg, a['tails'][b_idx][s_idx])
            wms.append(_wmat(w, s))
            bis.append(b)
        tails.append(_pack_gemm(_block_diag(wms), jnp.concatenate(bis)))
    return dict(entry=entry, tails=tails, cat=_init_basic(kg, a['cat']))


def _init_head(kg, cin):
    # nn.Conv2d(C, 1, kernel_size=1) with bias, no BN, no ReLU.
    w = jax.random.normal(kg(), (1, cin, 1, 1), jnp.float32) / np.sqrt(cin)
    b = 0.01 * jax.random.normal(kg(), (1,), jnp.float32)
    return _pack_gemm(_wmat(w, jnp.ones((1,), jnp.float32)), b)


def init_sam2unet(key, arch):
    kg = KeyGen(key)
    return dict(
        enc={name: _init_basic(kg, s) for name, s in arch['enc'].items()},
        rfb1=_init_rfb(kg, arch['rfb1']), rfb2=_init_rfb(kg, arch['rfb2']),
        rfb3=_init_rfb(kg, arch['rfb3']), rfb4=_init_rfb(kg, arch['rfb4']),
        up1=[_init_basic(kg, s) for s in arch['up1']],
        up2=[_init_basic(kg, s) for s in arch['up2']],
        up3=[_init_basic(kg, s) for s in arch['up3']],
        side1=_init_head(kg, TRANS), side2=_init_head(kg, TRANS),
        head=_init_head(kg, TRANS),
    )


# ----------------------------------------------------------------------------
# Forward pass (channel-major bf16 activations end-to-end)
# ----------------------------------------------------------------------------
def encoder_forward(arch, p, x):
    # TODO(synk): stand-in for the SAM2 Hiera-L trunk (+ Adapters, pretrained ckpt);
    #             produces the same /4,/8,/16,/32 feature pyramid.
    x = conv_cm(x, arch['s1a'], p['s1a'], relu=True)     # /2
    x1 = conv_cm(x, arch['s1b'], p['s1b'], relu=True)    # /4
    x2 = conv_cm(x1, arch['s2'], p['s2'], relu=True)     # /8
    x3 = conv_cm(x2, arch['s3'], p['s3'], relu=True)     # /16
    x4 = conv_cm(x3, arch['s4'], p['s4'], relu=True)     # /32
    return x1, x2, x3, x4


def rfb_forward(arch, p, x):
    cin, n, h, w = x.shape
    cout = arch['cout']
    m = n * h * w
    # Fused entry GEMM: b0 / b1 / b2 / b3 entry 1x1 convs + the residual 1x1 conv.
    y = _gemm(p['entry']['wq'], p['entry']['bq'], x.reshape(cin, m), relu=False)
    y = y[:5 * cout, :m]
    x0 = y[:cout].reshape(cout, n, h, w)
    zs = [y[(b + 1) * cout:(b + 2) * cout].reshape(cout, n, h, w) for b in range(3)]
    xres = y[4 * cout:5 * cout]                          # [cout, M] bf16 residual
    # Three fused tail stages (block-diagonal weight across the b1/b2/b3 branches).
    for s_idx in range(3):
        pats = [_im2col(zs[b], arch['tails'][b][s_idx])[0] for b in range(3)]
        yt = _gemm(p['tails'][s_idx]['wq'], p['tails'][s_idx]['bq'],
                   jnp.concatenate(pats, axis=0), relu=False)[:3 * cout, :m]
        zs = [yt[b * cout:(b + 1) * cout].reshape(cout, n, h, w) for b in range(3)]
    xcat = jnp.concatenate([x0] + zs, axis=0)
    # relu(conv_cat(xcat) + conv_res(x)) — residual add + ReLU fused in-kernel.
    return conv_cm(xcat, arch['cat'], p['cat'], relu=True, residual=xres)


def up_forward(arch_dc, p, x_low, x_skip):
    # nn.Upsample(x2, bilinear, align_corners=True) + pad + cat([skip, up]) + DoubleConv.
    _, _, h, w = x_low.shape
    xu = bilinear_resize_cm(x_low, 2 * h, 2 * w, align_corners=True).astype(jnp.bfloat16)
    dy = x_skip.shape[2] - xu.shape[2]
    dx = x_skip.shape[3] - xu.shape[3]
    if dy or dx:
        xu = jnp.pad(xu, ((0, 0), (0, 0), (dy // 2, dy - dy // 2),
                          (dx // 2, dx - dx // 2)))
    x = jnp.concatenate([x_skip, xu], axis=0)
    x = conv_cm(x, arch_dc[0], p[0], relu=True)
    return conv_cm(x, arch_dc[1], p[1], relu=True)


def head_forward(p, x):
    c, n, h, w = x.shape
    m = n * h * w
    y = _gemm(p['wq'], p['bq'], x.reshape(c, m), relu=False, out_dtype=jnp.float32)
    return y[:1, :m].reshape(1, n, h, w)


def sam2unet_forward(arch, params, x):
    """x: [N, 3, H, W] NCHW f32.  Returns [out, out1, out2], each [N, 1, H, W] f32."""
    _, _, h, w = x.shape
    xc = jnp.transpose(x, (1, 0, 2, 3)).astype(jnp.bfloat16)   # -> channel-major bf16

    e1, e2, e3, e4 = encoder_forward(arch['enc'], params['enc'], xc)
    r1 = rfb_forward(arch['rfb1'], params['rfb1'], e1)
    r2 = rfb_forward(arch['rfb2'], params['rfb2'], e2)
    r3 = rfb_forward(arch['rfb3'], params['rfb3'], e3)
    r4 = rfb_forward(arch['rfb4'], params['rfb4'], e4)

    d = up_forward(arch['up1'], params['up1'], r4, r3)
    out1 = bilinear_resize_cm(head_forward(params['side1'], d), h, w,
                              align_corners=False)
    d = up_forward(arch['up2'], params['up2'], d, r2)
    out2 = bilinear_resize_cm(head_forward(params['side2'], d), h, w,
                              align_corners=False)
    d = up_forward(arch['up3'], params['up3'], d, r1)
    out = bilinear_resize_cm(head_forward(params['head'], d), h, w,
                             align_corners=False)

    to_nchw = lambda t: jnp.transpose(t, (1, 0, 2, 3))
    return [to_nchw(out), to_nchw(out1), to_nchw(out2)]


if __name__ == "__main__":
    key = jax.random.PRNGKey(0)
    pkey, xkey = jax.random.split(key)
    arch = build_arch()
    params = init_sam2unet(pkey, arch)
    x = jax.random.normal(xkey, (2, 3, 64, 64), jnp.float32)   # NCHW, like PyTorch

    fwd = jax.jit(functools.partial(sam2unet_forward, arch))
    outs = jax.block_until_ready(fwd(params, x))

    assert len(outs) == 3
    for o in outs:
        assert o.shape == (2, 1, 64, 64), o.shape
        assert o.dtype == jnp.float32, o.dtype
        assert bool(jnp.all(jnp.isfinite(o)))
    print("KERNEL_OK")
</pallas_src>

<mosaic_0001>
module attributes {stable_mosaic.version = 11 : i64} {
  func.func @_gemm_bias_kernel(%arg0: i32, %arg1: memref<16x32xbf16, #tpu.memory_space<vmem>>, %arg2: memref<32x512xbf16, #tpu.memory_space<vmem>>, %arg3: memref<16x1xf32, #tpu.memory_space<vmem>>, %arg4: memref<16x512xbf16, #tpu.memory_space<vmem>>) attributes {dimension_semantics = [#tpu.dimension_semantics<parallel>], iteration_bounds = array<i64: 4>, scalar_prefetch = 0 : i64, scratch_operands = 0 : i64, tpu.core_type = #tpu.core_type<tc>, window_params = [{pipeline_mode = #tpu.pipeline_mode<synchronous>, transform_indices = @transform_0, window_bounds = array<i64: 16, 32>}, {transform_indices = @transform_1, window_bounds = array<i64: 32, 512>}, {pipeline_mode = #tpu.pipeline_mode<synchronous>, transform_indices = @transform_2, window_bounds = array<i64: 16, 1>}, {transform_indices = @transform_3, window_bounds = array<i64: 16, 512>}]} {
    %c0 = arith.constant 0 : index
    %c0_0 = arith.constant 0 : index
    %0 = vector.load %arg1[%c0, %c0_0] : memref<16x32xbf16, #tpu.memory_space<vmem>>, vector<16x32xbf16>
    %c0_1 = arith.constant 0 : index
    %c0_2 = arith.constant 0 : index
    %1 = vector.load %arg2[%c0_1, %c0_2] : memref<32x512xbf16, #tpu.memory_space<vmem>>, vector<32x512xbf16>
    %cst = arith.constant dense<0.000000e+00> : vector<16x512xf32>
    %2 = tpu.matmul %0, %1, %cst {dimension_numbers = #tpu.dot_dimension_numbers<[1], [0], [0], [1], [0, 0, 1, 1], [], []>} : vector<16x32xbf16>, vector<32x512xbf16>, vector<16x512xf32> -> vector<16x512xf32>
    %c0_3 = arith.constant 0 : index
    %c0_4 = arith.constant 0 : index
    %3 = vector.load %arg3[%c0_3, %c0_4] : memref<16x1xf32, #tpu.memory_space<vmem>>, vector<16x1xf32>
    %4 = vector.broadcast %3 : vector<16x1xf32> to vector<16x512xf32>
    %5 = arith.addf %2, %4 : vector<16x512xf32>
    %cst_5 = arith.constant 0.000000e+00 : f32
    %6 = vector.broadcast %cst_5 : f32 to vector<16x512xf32>
    %7 = arith.maximumf %5, %6 : vector<16x512xf32>
    %8 = arith.truncf %7 : vector<16x512xf32> to vector<16x512xbf16>
    %c0_6 = arith.constant 0 : index
    %c0_7 = arith.constant 0 : index
    %9 = vector.load %arg4[%c0_6, %c0_7] : memref<16x512xbf16, #tpu.memory_space<vmem>>, vector<16x512xbf16>
    tpu.vector_store %arg4[%c0_6, %c0_7], %8 {strides = array<i32>} : memref<16x512xbf16, #tpu.memory_space<vmem>>, vector<16x512xbf16>,
    return
  }
  func.func @transform_0(%arg0: i32) -> (i32, i32) {
    %c0_i32 = arith.constant 0 : i32
    %c0_i32_0 = arith.constant 0 : i32
    %c0_i32_1 = arith.constant 0 : i32
    return %c0_i32, %c0_i32_0 : i32, i32
  }
  func.func @transform_1(%arg0: i32) -> (i32, i32) {
    %c0_i32 = arith.constant 0 : i32
    %c0_i32_0 = arith.constant 0 : i32
    return %c0_i32, %arg0 : i32, i32
  }
  func.func @transform_2(%arg0: i32) -> (i32, i32) {
    %c0_i32 = arith.constant 0 : i32
    %c0_i32_0 = arith.constant 0 : i32
    %c0_i32_1 = arith.constant 0 : i32
    return %c0_i32, %c0_i32_0 : i32, i32
  }
  func.func @transform_3(%arg0: i32) -> (i32, i32) {
    %c0_i32 = arith.constant 0 : i32
    %c0_i32_0 = arith.constant 0 : i32
    return %c0_i32, %arg0 : i32, i32
  }
}

module attributes {stable_mosaic.version = 11 : i64} {
  func.func @_gemm_bias_kernel(%arg0: i32, %arg1: memref<16x80xbf16, #tpu.memory_space<vmem>>, %arg2: memref<80x512xbf16, #tpu.memory_space<vmem>>, %arg3: memref<16x1xf32, #tpu.memory_space<vmem>>, %arg4: memref<16x512xbf16, #tpu.memory_space<vmem>>) attributes {dimension_semantics = [#tpu.dimension_semantics<parallel>], iteration_bounds = array<i64: 1>, scalar_prefetch = 0 : i64, scratch_operands = 0 : i64, tpu.core_type = #tpu.core_type<tc>, window_params = [{pipeline_mode = #tpu.pipeline_mode<synchronous>, transform_indices = @transform_0, window_bounds = array<i64: 16, 80>}, {transform_indices = @transform_1, window_bounds = array<i64: 80, 512>}, {pipeline_mode = #tpu.pipeline_mode<synchronous>, transform_indices = @transform_2, window_bounds = array<i64: 16, 1>}, {transform_indices = @transform_3, window_bounds = array<i64: 16, 512>}]} {
    %c0 = arith.constant 0 : index
    %c0_0 = arith.constant 0 : index
    %0 = vector.load %arg1[%c0, %c0_0] : memref<16x80xbf16, #tpu.memory_space<vmem>>, vector<16x80xbf16>
    %c0_1 = arith.constant 0 : index
    %c0_2 = arith.constant 0 : index
    %1 = vector.load %arg2[%c0_1, %c0_2] : memref<80x512xbf16, #tpu.memory_space<vmem>>, vector<80x512xbf16>
    %cst = arith.constant dense<0.000000e+00> : vector<16x512xf32>
    %2 = tpu.matmul %0, %1, %cst {dimension_numbers = #tpu.dot_dimension_numbers<[1], [0], [0], [1], [0, 0, 1, 1], [], []>} : vector<16x80xbf16>, vector<80x512xbf16>, vector<16x512xf32> -> vector<16x512xf32>
    %c0_3 = arith.constant 0 : index
    %c0_4 = arith.constant 0 : index
    %3 = vector.load %arg3[%c0_3, %c0_4] : memref<16x1xf32, #tpu.memory_space<vmem>>, vector<16x1xf32>
    %4 = vector.broadcast %3 : vector<16x1xf32> to vector<16x512xf32>
    %5 = arith.addf %2, %4 : vector<16x512xf32>
    %cst_5 = arith.constant 0.000000e+00 : f32
    %6 = vector.broadcast %cst_5 : f32 to vector<16x512xf32>
    %7 = arith.maximumf %5, %6 : vector<16x512xf32>
    %8 = arith.truncf %7 : vector<16x512xf32> to vector<16x512xbf16>
    %c0_6 = arith.constant 0 : index
    %c0_7 = arith.constant 0 : index
    %9 = vector.load %arg4[%c0_6, %c0_7] : memref<16x512xbf16, #tpu.memory_space<vmem>>, vector<16x512xbf16>
    tpu.vector_store %arg4[%c0_6, %c0_7], %8 {strides = array<i32>} : memref<16x512xbf16, #tpu.memory_space<vmem>>, vector<16x512xbf16>,
    return
  }
  func.func @transform_0(%arg0: i32) -> (i32, i32) {
    %c0_i32 = arith.constant 0 : i32
    %c0_i32_0 = arith.constant 0 : i32
    %c0_i32_1 = arith.constant 0 : i32
    return %c0_i32, %c0_i32_0 : i32, i32
  }
  func.func @transform_1(%arg0: i32) -> (i32, i32) {
    %c0_i32 = arith.constant 0 : i32
    %c0_i32_0 = arith.constant 0 : i32
    return %c0_i32, %arg0 : i32, i32
  }
  func.func @transform_2(%arg0: i32) -> (i32, i32) {
    %c0_i32 = arith.constant 0 : i32
    %c0_i32_0 = arith.constant 0 : i32
    %c0_i32_1 = arith.constant 0 : i32
    return %c0_i32, %c0_i32_0 : i32, i32
  }
  func.func @transform_3(%arg0: i32) -> (i32, i32) {
    %c0_i32 = arith.constant 0 : i32
    %c0_i32_0 = arith.constant 0 : i32
    return %c0_i32, %arg0 : i32, i32
  }
}

module attributes {stable_mosaic.version = 11 : i64} {
  func.func @_gemm_bias_kernel(%arg0: i32, %arg1: memref<80x16xbf16, #tpu.memory_space<vmem>>, %arg2: memref<16x512xbf16, #tpu.memory_space<vmem>>, %arg3: memref<80x1xf32, #tpu.memory_space<vmem>>, %arg4: memref<80x512xbf16, #tpu.memory_space<vmem>>) attributes {dimension_semantics = [#tpu.dimension_semantics<parallel>], iteration_bounds = array<i64: 1>, scalar_prefetch = 0 : i64, scratch_operands = 0 : i64, tpu.core_type = #tpu.core_type<tc>, window_params = [{pipeline_mode = #tpu.pipeline_mode<synchronous>, transform_indices = @transform_0, window_bounds = array<i64: 80, 16>}, {transform_indices = @transform_1, window_bounds = array<i64: 16, 512>}, {pipeline_mode = #tpu.pipeline_mode<synchronous>, transform_indices = @transform_2, window_bounds = array<i64: 80, 1>}, {transform_indices = @transform_3, window_bounds = array<i64: 80, 512>}]} {
    %c0 = arith.constant 0 : index
    %c0_0 = arith.constant 0 : index
    %0 = vector.load %arg1[%c0, %c0_0] : memref<80x16xbf16, #tpu.memory_space<vmem>>, vector<80x16xbf16>
    %c0_1 = arith.constant 0 : index
    %c0_2 = arith.constant 0 : index
    %1 = vector.load %arg2[%c0_1, %c0_2] : memref<16x512xbf16, #tpu.memory_space<vmem>>, vector<16x512xbf16>
    %cst = arith.constant dense<0.000000e+00> : vector<80x512xf32>
    %2 = tpu.matmul %0, %1, %cst {dimension_numbers = #tpu.dot_dimension_numbers<[1], [0], [0], [1], [0, 0, 1, 1], [], []>} : vector<80x16xbf16>, vector<16x512xbf16>, vector<80x512xf32> -> vector<80x512xf32>
    %c0_3 = arith.constant 0 : index
    %c0_4 = arith.constant 0 : index
    %3 = vector.load %arg3[%c0_3, %c0_4] : memref<80x1xf32, #tpu.memory_space<vmem>>, vector<80x1xf32>
    %4 = vector.broadcast %3 : vector<80x1xf32> to vector<80x512xf32>
    %5 = arith.addf %2, %4 : vector<80x512xf32>
    %6 = arith.truncf %5 : vector<80x512xf32> to vector<80x512xbf16>
    %c0_5 = arith.constant 0 : index
    %c0_6 = arith.constant 0 : index
    %7 = vector.load %arg4[%c0_5, %c0_6] : memref<80x512xbf16, #tpu.memory_space<vmem>>, vector<80x512xbf16>
    tpu.vector_store %arg4[%c0_5, %c0_6], %6 {strides = array<i32>} : memref<80x512xbf16, #tpu.memory_space<vmem>>, vector<80x512xbf16>,
    return
  }
  func.func @transform_0(%arg0: i32) -> (i32, i32) {
    %c0_i32 = arith.constant 0 : i32
    %c0_i32_0 = arith.constant 0 : i32
    %c0_i32_1 = arith.constant 0 : i32
    return %c0_i32, %c0_i32_0 : i32, i32
  }
  func.func @transform_1(%arg0: i32) -> (i32, i32) {
    %c0_i32 = arith.constant 0 : i32
    %c0_i32_0 = arith.constant 0 : i32
    return %c0_i32, %arg0 : i32, i32
  }
  func.func @transform_2(%arg0: i32) -> (i32, i32) {
    %c0_i32 = arith.constant 0 : i32
    %c0_i32_0 = arith.constant 0 : i32
    %c0_i32_1 = arith.constant 0 : i32
    return %c0_i32, %c0_i32_0 : i32, i32
  }
  func.func @transform_3(%arg0: i32) -> (i32, i32) {
    %c0_i32 = arith.constant 0 : i32
    %c0_i32_0 = arith.constant 0 : i32
    return %c0_i32, %arg0 : i32, i32
  }
}

module attributes {stable_mosaic.version = 11 : i64} {
  func.func @_gemm_bias_kernel(%arg0: i32, %arg1: memref<48x240xbf16, #tpu.memory_space<vmem>>, %arg2: memref<240x512xbf16, #tpu.memory_space<vmem>>, %arg3: memref<48x1xf32, #tpu.memory_space<vmem>>, %arg4: memref<48x512xbf16, #tpu.memory_space<vmem>>) attributes {dimension_semantics = [#tpu.dimension_semantics<parallel>], iteration_bounds = array<i64: 1>, scalar_prefetch = 0 : i64, scratch_operands = 0 : i64, tpu.core_type = #tpu.core_type<tc>, window_params = [{pipeline_mode = #tpu.pipeline_mode<synchronous>, transform_indices = @transform_0, window_bounds = array<i64: 48, 240>}, {transform_indices = @transform_1, window_bounds = array<i64: 240, 512>}, {pipeline_mode = #tpu.pipeline_mode<synchronous>, transform_indices = @transform_2, window_bounds = array<i64: 48, 1>}, {transform_indices = @transform_3, window_bounds = array<i64: 48, 512>}]} {
    %c0 = arith.constant 0 : index
    %c0_0 = arith.constant 0 : index
    %0 = vector.load %arg1[%c0, %c0_0] : memref<48x240xbf16, #tpu.memory_space<vmem>>, vector<48x240xbf16>
    %c0_1 = arith.constant 0 : index
    %c0_2 = arith.constant 0 : index
    %1 = vector.load %arg2[%c0_1, %c0_2] : memref<240x512xbf16, #tpu.memory_space<vmem>>, vector<240x512xbf16>
    %cst = arith.constant dense<0.000000e+00> : vector<48x512xf32>
    %2 = tpu.matmul %0, %1, %cst {dimension_numbers = #tpu.dot_dimension_numbers<[1], [0], [0], [1], [0, 0, 1, 1], [], []>} : vector<48x240xbf16>, vector<240x512xbf16>, vector<48x512xf32> -> vector<48x512xf32>
    %c0_3 = arith.constant 0 : index
    %c0_4 = arith.constant 0 : index
    %3 = vector.load %arg3[%c0_3, %c0_4] : memref<48x1xf32, #tpu.memory_space<vmem>>, vector<48x1xf32>
    %4 = vector.broadcast %3 : vector<48x1xf32> to vector<48x512xf32>
    %5 = arith.addf %2, %4 : vector<48x512xf32>
    %6 = arith.truncf %5 : vector<48x512xf32> to vector<48x512xbf16>
    %c0_5 = arith.constant 0 : index
    %c0_6 = arith.constant 0 : index
    %7 = vector.load %arg4[%c0_5, %c0_6] : memref<48x512xbf16, #tpu.memory_space<vmem>>, vector<48x512xbf16>
    tpu.vector_store %arg4[%c0_5, %c0_6], %6 {strides = array<i32>} : memref<48x512xbf16, #tpu.memory_space<vmem>>, vector<48x512xbf16>,
    return
  }
  func.func @transform_0(%arg0: i32) -> (i32, i32) {
    %c0_i32 = arith.constant 0 : i32
    %c0_i32_0 = arith.constant 0 : i32
    %c0_i32_1 = arith.constant 0 : i32
    return %c0_i32, %c0_i32_0 : i32, i32
  }
  func.func @transform_1(%arg0: i32) -> (i32, i32) {
    %c0_i32 = arith.constant 0 : i32
    %c0_i32_0 = arith.constant 0 : i32
    return %c0_i32, %arg0 : i32, i32
  }
  func.func @transform_2(%arg0: i32) -> (i32, i32) {
    %c0_i32 = arith.constant 0 : i32
    %c0_i32_0 = arith.constant 0 : i32
    %c0_i32_1 = arith.constant 0 : i32
    return %c0_i32, %c0_i32_0 : i32, i32
  }
  func.func @transform_3(%arg0: i32) -> (i32, i32) {
    %c0_i32 = arith.constant 0 : i32
    %c0_i32_0 = arith.constant 0 : i32
    return %c0_i32, %arg0 : i32, i32
  }
}

module attributes {stable_mosaic.version = 11 : i64} {
  func.func @_gemm_bias_kernel(%arg0: i32, %arg1: memref<48x432xbf16, #tpu.memory_space<vmem>>, %arg2: memref<432x512xbf16, #tpu.memory_space<vmem>>, %arg3: memref<48x1xf32, #tpu.memory_space<vmem>>, %arg4: memref<48x512xbf16, #tpu.memory_space<vmem>>) attributes {dimension_semantics = [#tpu.dimension_semantics<parallel>], iteration_bounds = array<i64: 1>, scalar_prefetch = 0 : i64, scratch_operands = 0 : i64, tpu.core_type = #tpu.core_type<tc>, window_params = [{pipeline_mode = #tpu.pipeline_mode<synchronous>, transform_indices = @transform_0, window_bounds = array<i64: 48, 432>}, {transform_indices = @transform_1, window_bounds = array<i64: 432, 512>}, {pipeline_mode = #tpu.pipeline_mode<synchronous>, transform_indices = @transform_2, window_bounds = array<i64: 48, 1>}, {transform_indices = @transform_3, window_bounds = array<i64: 48, 512>}]} {
    %c0 = arith.constant 0 : index
    %c0_0 = arith.constant 0 : index
    %0 = vector.load %arg1[%c0, %c0_0] : memref<48x432xbf16, #tpu.memory_space<vmem>>, vector<48x432xbf16>
    %c0_1 = arith.constant 0 : index
    %c0_2 = arith.constant 0 : index
    %1 = vector.load %arg2[%c0_1, %c0_2] : memref<432x512xbf16, #tpu.memory_space<vmem>>, vector<432x512xbf16>
    %cst = arith.constant dense<0.000000e+00> : vector<48x512xf32>
    %2 = tpu.matmul %0, %1, %cst {dimension_numbers = #tpu.dot_dimension_numbers<[1], [0], [0], [1], [0, 0, 1, 1], [], []>} : vector<48x432xbf16>, vector<432x512xbf16>, vector<48x512xf32> -> vector<48x512xf32>
    %c0_3 = arith.constant 0 : index
    %c0_4 = arith.constant 0 : index
    %3 = vector.load %arg3[%c0_3, %c0_4] : memref<48x1xf32, #tpu.memory_space<vmem>>, vector<48x1xf32>
    %4 = vector.broadcast %3 : vector<48x1xf32> to vector<48x512xf32>
    %5 = arith.addf %2, %4 : vector<48x512xf32>
    %6 = arith.truncf %5 : vector<48x512xf32> to vector<48x512xbf16>
    %c0_5 = arith.constant 0 : index
    %c0_6 = arith.constant 0 : index
    %7 = vector.load %arg4[%c0_5, %c0_6] : memref<48x512xbf16, #tpu.memory_space<vmem>>, vector<48x512xbf16>
    tpu.vector_store %arg4[%c0_5, %c0_6], %6 {strides = array<i32>} : memref<48x512xbf16, #tpu.memory_space<vmem>>, vector<48x512xbf16>,
    return
  }
  func.func @transform_0(%arg0: i32) -> (i32, i32) {
    %c0_i32 = arith.constant 0 : i32
    %c0_i32_0 = arith.constant 0 : i32
    %c0_i32_1 = arith.constant 0 : i32
    return %c0_i32, %c0_i32_0 : i32, i32
  }
  func.func @transform_1(%arg0: i32) -> (i32, i32) {
    %c0_i32 = arith.constant 0 : i32
    %c0_i32_0 = arith.constant 0 : i32
    return %c0_i32, %arg0 : i32, i32
  }
  func.func @transform_2(%arg0: i32) -> (i32, i32) {
    %c0_i32 = arith.constant 0 : i32
    %c0_i32_0 = arith.constant 0 : i32
    %c0_i32_1 = arith.constant 0 : i32
    return %c0_i32, %c0_i32_0 : i32, i32
  }
  func.func @transform_3(%arg0: i32) -> (i32, i32) {
    %c0_i32 = arith.constant 0 : i32
    %c0_i32_0 = arith.constant 0 : i32
    return %c0_i32, %arg0 : i32, i32
  }
}

module attributes {stable_mosaic.version = 11 : i64} {
  func.func @_gemm_bias_res_kernel(%arg0: i32, %arg1: memref<16x576xbf16, #tpu.memory_space<vmem>>, %arg2: memref<576x512xbf16, #tpu.memory_space<vmem>>, %arg3: memref<16x1xf32, #tpu.memory_space<vmem>>, %arg4: memref<16x512xbf16, #tpu.memory_space<vmem>>, %arg5: memref<16x512xbf16, #tpu.memory_space<vmem>>) attributes {dimension_semantics = [#tpu.dimension_semantics<parallel>], iteration_bounds = array<i64: 1>, scalar_prefetch = 0 : i64, scratch_operands = 0 : i64, tpu.core_type = #tpu.core_type<tc>, window_params = [{pipeline_mode = #tpu.pipeline_mode<synchronous>, transform_indices = @transform_0, window_bounds = array<i64: 16, 576>}, {transform_indices = @transform_1, window_bounds = array<i64: 576, 512>}, {pipeline_mode = #tpu.pipeline_mode<synchronous>, transform_indices = @transform_2, window_bounds = array<i64: 16, 1>}, {transform_indices = @transform_3, window_bounds = array<i64: 16, 512>}, {transform_indices = @transform_4, window_bounds = array<i64: 16, 512>}]} {
    %c0 = arith.constant 0 : index
    %c0_0 = arith.constant 0 : index
    %0 = vector.load %arg1[%c0, %c0_0] : memref<16x576xbf16, #tpu.memory_space<vmem>>, vector<16x576xbf16>
    %c0_1 = arith.constant 0 : index
    %c0_2 = arith.constant 0 : index
    %1 = vector.load %arg2[%c0_1, %c0_2] : memref<576x512xbf16, #tpu.memory_space<vmem>>, vector<576x512xbf16>
    %cst = arith.constant dense<0.000000e+00> : vector<16x512xf32>
    %2 = tpu.matmul %0, %1, %cst {dimension_numbers = #tpu.dot_dimension_numbers<[1], [0], [0], [1], [0, 0, 1, 1], [], []>} : vector<16x576xbf16>, vector<576x512xbf16>, vector<16x512xf32> -> vector<16x512xf32>
    %c0_3 = arith.constant 0 : index
    %c0_4 = arith.constant 0 : index
    %3 = vector.load %arg3[%c0_3, %c0_4] : memref<16x1xf32, #tpu.memory_space<vmem>>, vector<16x1xf32>
    %4 = vector.broadcast %3 : vector<16x1xf32> to vector<16x512xf32>
    %5 = arith.addf %2, %4 : vector<16x512xf32>
    %c0_5 = arith.constant 0 : index
    %c0_6 = arith.constant 0 : index
    %6 = vector.load %arg4[%c0_5, %c0_6] : memref<16x512xbf16, #tpu.memory_space<vmem>>, vector<16x512xbf16>
    %7 = arith.extf %6 : vector<16x512xbf16> to vector<16x512xf32>
    %8 = arith.addf %5, %7 : vector<16x512xf32>
    %cst_7 = arith.constant 0.000000e+00 : f32
    %9 = vector.broadcast %cst_7 : f32 to vector<16x512xf32>
    %10 = arith.maximumf %8, %9 : vector<16x512xf32>
    %11 = arith.truncf %10 : vector<16x512xf32> to vector<16x512xbf16>
    %c0_8 = arith.constant 0 : index
    %c0_9 = arith.constant 0 : index
    %12 = vector.load %arg5[%c0_8, %c0_9] : memref<16x512xbf16, #tpu.memory_space<vmem>>, vector<16x512xbf16>
    tpu.vector_store %arg5[%c0_8, %c0_9], %11 {strides = array<i32>} : memref<16x512xbf16, #tpu.memory_space<vmem>>, vector<16x512xbf16>,
    return
  }
  func.func @transform_0(%arg0: i32) -> (i32, i32) {
    %c0_i32 = arith.constant 0 : i32
    %c0_i32_0 = arith.constant 0 : i32
    %c0_i32_1 = arith.constant 0 : i32
    return %c0_i32, %c0_i32_0 : i32, i32
  }
  func.func @transform_1(%arg0: i32) -> (i32, i32) {
    %c0_i32 = arith.constant 0 : i32
    %c0_i32_0 = arith.constant 0 : i32
    return %c0_i32, %arg0 : i32, i32
  }
  func.func @transform_2(%arg0: i32) -> (i32, i32) {
    %c0_i32 = arith.constant 0 : i32
    %c0_i32_0 = arith.constant 0 : i32
    %c0_i32_1 = arith.constant 0 : i32
    return %c0_i32, %c0_i32_0 : i32, i32
  }
  func.func @transform_3(%arg0: i32) -> (i32, i32) {
    %c0_i32 = arith.constant 0 : i32
    %c0_i32_0 = arith.constant 0 : i32
    return %c0_i32, %arg0 : i32, i32
  }
  func.func @transform_4(%arg0: i32) -> (i32, i32) {
    %c0_i32 = arith.constant 0 : i32
    %c0_i32_0 = arith.constant 0 : i32
    return %c0_i32, %arg0 : i32, i32
  }
}

module attributes {stable_mosaic.version = 11 : i64} {
  func.func @_gemm_bias_kernel(%arg0: i32, %arg1: memref<16x80xbf16, #tpu.memory_space<vmem>>, %arg2: memref<80x128xbf16, #tpu.memory_space<vmem>>, %arg3: memref<16x1xf32, #tpu.memory_space<vmem>>, %arg4: memref<16x128xbf16, #tpu.memory_space<vmem>>) attributes {dimension_semantics = [#tpu.dimension_semantics<parallel>], iteration_bounds = array<i64: 1>, scalar_prefetch = 0 : i64, scratch_operands = 0 : i64, tpu.core_type = #tpu.core_type<tc>, window_params = [{pipeline_mode = #tpu.pipeline_mode<synchronous>, transform_indices = @transform_0, window_bounds = array<i64: 16, 80>}, {transform_indices = @transform_1, window_bounds = array<i64: 80, 128>}, {pipeline_mode = #tpu.pipeline_mode<synchronous>, transform_indices = @transform_2, window_bounds = array<i64: 16, 1>}, {transform_indices = @transform_3, window_bounds = array<i64: 16, 128>}]} {
    %c0 = arith.constant 0 : index
    %c0_0 = arith.constant 0 : index
    %0 = vector.load %arg1[%c0, %c0_0] : memref<16x80xbf16, #tpu.memory_space<vmem>>, vector<16x80xbf16>
    %c0_1 = arith.constant 0 : index
    %c0_2 = arith.constant 0 : index
    %1 = vector.load %arg2[%c0_1, %c0_2] : memref<80x128xbf16, #tpu.memory_space<vmem>>, vector<80x128xbf16>
    %cst = arith.constant dense<0.000000e+00> : vector<16x128xf32>
    %2 = tpu.matmul %0, %1, %cst {dimension_numbers = #tpu.dot_dimension_numbers<[1], [0], [0], [1], [0, 0, 1, 1], [], []>} : vector<16x80xbf16>, vector<80x128xbf16>, vector<16x128xf32> -> vector<16x128xf32>
    %c0_3 = arith.constant 0 : index
    %c0_4 = arith.constant 0 : index
    %3 = vector.load %arg3[%c0_3, %c0_4] : memref<16x1xf32, #tpu.memory_space<vmem>>, vector<16x1xf32>
    %4 = vector.broadcast %3 : vector<16x1xf32> to vector<16x128xf32>
    %5 = arith.addf %2, %4 : vector<16x128xf32>
    %cst_5 = arith.constant 0.000000e+00 : f32
    %6 = vector.broadcast %cst_5 : f32 to vector<16x128xf32>
    %7 = arith.maximumf %5, %6 : vector<16x128xf32>
    %8 = arith.truncf %7 : vector<16x128xf32> to vector<16x128xbf16>
    %c0_6 = arith.constant 0 : index
    %c0_7 = arith.constant 0 : index
    %9 = vector.load %arg4[%c0_6, %c0_7] : memref<16x128xbf16, #tpu.memory_space<vmem>>, vector<16x128xbf16>
    tpu.vector_store %arg4[%c0_6, %c0_7], %8 {strides = array<i32>} : memref<16x128xbf16, #tpu.memory_space<vmem>>, vector<16x128xbf16>,
    return
  }
  func.func @transform_0(%arg0: i32) -> (i32, i32) {
    %c0_i32 = arith.constant 0 : i32
    %c0_i32_0 = arith.constant 0 : i32
    %c0_i32_1 = arith.constant 0 : i32
    return %c0_i32, %c0_i32_0 : i32, i32
  }
  func.func @transform_1(%arg0: i32) -> (i32, i32) {
    %c0_i32 = arith.constant 0 : i32
    %c0_i32_0 = arith.constant 0 : i32
    return %c0_i32, %arg0 : i32, i32
  }
  func.func @transform_2(%arg0: i32) -> (i32, i32) {
    %c0_i32 = arith.constant 0 : i32
    %c0_i32_0 = arith.constant 0 : i32
    %c0_i32_1 = arith.constant 0 : i32
    return %c0_i32, %c0_i32_0 : i32, i32
  }
  func.func @transform_3(%arg0: i32) -> (i32, i32) {
    %c0_i32 = arith.constant 0 : i32
    %c0_i32_0 = arith.constant 0 : i32
    return %c0_i32, %arg0 : i32, i32
  }
}

module attributes {stable_mosaic.version = 11 : i64} {
  func.func @_gemm_bias_kernel(%arg0: i32, %arg1: memref<80x16xbf16, #tpu.memory_space<vmem>>, %arg2: memref<16x128xbf16, #tpu.memory_space<vmem>>, %arg3: memref<80x1xf32, #tpu.memory_space<vmem>>, %arg4: memref<80x128xbf16, #tpu.memory_space<vmem>>) attributes {dimension_semantics = [#tpu.dimension_semantics<parallel>], iteration_bounds = array<i64: 1>, scalar_prefetch = 0 : i64, scratch_operands = 0 : i64, tpu.core_type = #tpu.core_type<tc>, window_params = [{pipeline_mode = #tpu.pipeline_mode<synchronous>, transform_indices = @transform_0, window_bounds = array<i64: 80, 16>}, {transform_indices = @transform_1, window_bounds = array<i64: 16, 128>}, {pipeline_mode = #tpu.pipeline_mode<synchronous>, transform_indices = @transform_2, window_bounds = array<i64: 80, 1>}, {transform_indices = @transform_3, window_bounds = array<i64: 80, 128>}]} {
    %c0 = arith.constant 0 : index
    %c0_0 = arith.constant 0 : index
    %0 = vector.load %arg1[%c0, %c0_0] : memref<80x16xbf16, #tpu.memory_space<vmem>>, vector<80x16xbf16>
    %c0_1 = arith.constant 0 : index
    %c0_2 = arith.constant 0 : index
    %1 = vector.load %arg2[%c0_1, %c0_2] : memref<16x128xbf16, #tpu.memory_space<vmem>>, vector<16x128xbf16>
    %cst = arith.constant dense<0.000000e+00> : vector<80x128xf32>
    %2 = tpu.matmul %0, %1, %cst {dimension_numbers = #tpu.dot_dimension_numbers<[1], [0], [0], [1], [0, 0, 1, 1], [], []>} : vector<80x16xbf16>, vector<16x128xbf16>, vector<80x128xf32> -> vector<80x128xf32>
    %c0_3 = arith.constant 0 : index
    %c0_4 = arith.constant 0 : index
    %3 = vector.load %arg3[%c0_3, %c0_4] : memref<80x1xf32, #tpu.memory_space<vmem>>, vector<80x1xf32>
    %4 = vector.broadcast %3 : vector<80x1xf32> to vector<80x128xf32>
    %5 = arith.addf %2, %4 : vector<80x128xf32>
    %6 = arith.truncf %5 : vector<80x128xf32> to vector<80x128xbf16>
    %c0_5 = arith.constant 0 : index
    %c0_6 = arith.constant 0 : index
    %7 = vector.load %arg4[%c0_5, %c0_6] : memref<80x128xbf16, #tpu.memory_space<vmem>>, vector<80x128xbf16>
    tpu.vector_store %arg4[%c0_5, %c0_6], %6 {strides = array<i32>} : memref<80x128xbf16, #tpu.memory_space<vmem>>, vector<80x128xbf16>,
    return
  }
  func.func @transform_0(%arg0: i32) -> (i32, i32) {
    %c0_i32 = arith.constant 0 : i32
    %c0_i32_0 = arith.constant 0 : i32
    %c0_i32_1 = arith.constant 0 : i32
    return %c0_i32, %c0_i32_0 : i32, i32
  }
  func.func @transform_1(%arg0: i32) -> (i32, i32) {
    %c0_i32 = arith.constant 0 : i32
    %c0_i32_0 = arith.constant 0 : i32
    return %c0_i32, %arg0 : i32, i32
  }
  func.func @transform_2(%arg0: i32) -> (i32, i32) {
    %c0_i32 = arith.constant 0 : i32
    %c0_i32_0 = arith.constant 0 : i32
    %c0_i32_1 = arith.constant 0 : i32
    return %c0_i32, %c0_i32_0 : i32, i32
  }
  func.func @transform_3(%arg0: i32) -> (i32, i32) {
    %c0_i32 = arith.constant 0 : i32
    %c0_i32_0 = arith.constant 0 : i32
    return %c0_i32, %arg0 : i32, i32
  }
}

module attributes {stable_mosaic.version = 11 : i64} {
  func.func @_gemm_bias_kernel(%arg0: i32, %arg1: memref<48x240xbf16, #tpu.memory_space<vmem>>, %arg2: memref<240x128xbf16, #tpu.memory_space<vmem>>, %arg3: memref<48x1xf32, #tpu.memory_space<vmem>>, %arg4: memref<48x128xbf16, #tpu.memory_space<vmem>>) attributes {dimension_semantics = [#tpu.dimension_semantics<parallel>], iteration_bounds = array<i64: 1>, scalar_prefetch = 0 : i64, scratch_operands = 0 : i64, tpu.core_type = #tpu.core_type<tc>, window_params = [{pipeline_mode = #tpu.pipeline_mode<synchronous>, transform_indices = @transform_0, window_bounds = array<i64: 48, 240>}, {transform_indices = @transform_1, window_bounds = array<i64: 240, 128>}, {pipeline_mode = #tpu.pipeline_mode<synchronous>, transform_indices = @transform_2, window_bounds = array<i64: 48, 1>}, {transform_indices = @transform_3, window_bounds = array<i64: 48, 128>}]} {
    %c0 = arith.constant 0 : index
    %c0_0 = arith.constant 0 : index
    %0 = vector.load %arg1[%c0, %c0_0] : memref<48x240xbf16, #tpu.memory_space<vmem>>, vector<48x240xbf16>
    %c0_1 = arith.constant 0 : index
    %c0_2 = arith.constant 0 : index
    %1 = vector.load %arg2[%c0_1, %c0_2] : memref<240x128xbf16, #tpu.memory_space<vmem>>, vector<240x128xbf16>
    %cst = arith.constant dense<0.000000e+00> : vector<48x128xf32>
    %2 = tpu.matmul %0, %1, %cst {dimension_numbers = #tpu.dot_dimension_numbers<[1], [0], [0], [1], [0, 0, 1, 1], [], []>} : vector<48x240xbf16>, vector<240x128xbf16>, vector<48x128xf32> -> vector<48x128xf32>
    %c0_3 = arith.constant 0 : index
    %c0_4 = arith.constant 0 : index
    %3 = vector.load %arg3[%c0_3, %c0_4] : memref<48x1xf32, #tpu.memory_space<vmem>>, vector<48x1xf32>
    %4 = vector.broadcast %3 : vector<48x1xf32> to vector<48x128xf32>
    %5 = arith.addf %2, %4 : vector<48x128xf32>
    %6 = arith.truncf %5 : vector<48x128xf32> to vector<48x128xbf16>
    %c0_5 = arith.constant 0 : index
    %c0_6 = arith.constant 0 : index
    %7 = vector.load %arg4[%c0_5, %c0_6] : memref<48x128xbf16, #tpu.memory_space<vmem>>, vector<48x128xbf16>
    tpu.vector_store %arg4[%c0_5, %c0_6], %6 {strides = array<i32>} : memref<48x128xbf16, #tpu.memory_space<vmem>>, vector<48x128xbf16>,
    return
  }
  func.func @transform_0(%arg0: i32) -> (i32, i32) {
    %c0_i32 = arith.constant 0 : i32
    %c0_i32_0 = arith.constant 0 : i32
    %c0_i32_1 = arith.constant 0 : i32
    return %c0_i32, %c0_i32_0 : i32, i32
  }
  func.func @transform_1(%arg0: i32) -> (i32, i32) {
    %c0_i32 = arith.constant 0 : i32
    %c0_i32_0 = arith.constant 0 : i32
    return %c0_i32, %arg0 : i32, i32
  }
  func.func @transform_2(%arg0: i32) -> (i32, i32) {
    %c0_i32 = arith.constant 0 : i32
    %c0_i32_0 = arith.constant 0 : i32
    %c0_i32_1 = arith.constant 0 : i32
    return %c0_i32, %c0_i32_0 : i32, i32
  }
  func.func @transform_3(%arg0: i32) -> (i32, i32) {
    %c0_i32 = arith.constant 0 : i32
    %c0_i32_0 = arith.constant 0 : i32
    return %c0_i32, %arg0 : i32, i32
  }
}

module attributes {stable_mosaic.version = 11 : i64} {
  func.func @_gemm_bias_kernel(%arg0: i32, %arg1: memref<48x432xbf16, #tpu.memory_space<vmem>>, %arg2: memref<432x128xbf16, #tpu.memory_space<vmem>>, %arg3: memref<48x1xf32, #tpu.memory_space<vmem>>, %arg4: memref<48x128xbf16, #tpu.memory_space<vmem>>) attributes {dimension_semantics = [#tpu.dimension_semantics<parallel>], iteration_bounds = array<i64: 1>, scalar_prefetch = 0 : i64, scratch_operands = 0 : i64, tpu.core_type = #tpu.core_type<tc>, window_params = [{pipeline_mode = #tpu.pipeline_mode<synchronous>, transform_indices = @transform_0, window_bounds = array<i64: 48, 432>}, {transform_indices = @transform_1, window_bounds = array<i64: 432, 128>}, {pipeline_mode = #tpu.pipeline_mode<synchronous>, transform_indices = @transform_2, window_bounds = array<i64: 48, 1>}, {transform_indices = @transform_3, window_bounds = array<i64: 48, 128>}]} {
    %c0 = arith.constant 0 : index
    %c0_0 = arith.constant 0 : index
    %0 = vector.load %arg1[%c0, %c0_0] : memref<48x432xbf16, #tpu.memory_space<vmem>>, vector<48x432xbf16>
    %c0_1 = arith.constant 0 : index
    %c0_2 = arith.constant 0 : index
    %1 = vector.load %arg2[%c0_1, %c0_2] : memref<432x128xbf16, #tpu.memory_space<vmem>>, vector<432x128xbf16>
    %cst = arith.constant dense<0.000000e+00> : vector<48x128xf32>
    %2 = tpu.matmul %0, %1, %cst {dimension_numbers = #tpu.dot_dimension_numbers<[1], [0], [0], [1], [0, 0, 1, 1], [], []>} : vector<48x432xbf16>, vector<432x128xbf16>, vector<48x128xf32> -> vector<48x128xf32>
    %c0_3 = arith.constant 0 : index
    %c0_4 = arith.constant 0 : index
    %3 = vector.load %arg3[%c0_3, %c0_4] : memref<48x1xf32, #tpu.memory_space<vmem>>, vector<48x1xf32>
    %4 = vector.broadcast %3 : vector<48x1xf32> to vector<48x128xf32>
    %5 = arith.addf %2, %4 : vector<48x128xf32>
    %6 = arith.truncf %5 : vector<48x128xf32> to vector<48x128xbf16>
    %c0_5 = arith.constant 0 : index
    %c0_6 = arith.constant 0 : index
    %7 = vector.load %arg4[%c0_5, %c0_6] : memref<48x128xbf16, #tpu.memory_space<vmem>>, vector<48x128xbf16>
    tpu.vector_store %arg4[%c0_5, %c0_6], %6 {strides = array<i32>} : memref<48x128xbf16, #tpu.memory_space<vmem>>, vector<48x128xbf16>,
    return
  }
  func.func @transform_0(%arg0: i32) -> (i32, i32) {
    %c0_i32 = arith.constant 0 : i32
    %c0_i32_0 = arith.constant 0 : i32
    %c0_i32_1 = arith.constant 0 : i32
    return %c0_i32, %c0_i32_0 : i32, i32
  }
  func.func @transform_1(%arg0: i32) -> (i32, i32) {
    %c0_i32 = arith.constant 0 : i32
    %c0_i32_0 = arith.constant 0 : i32
    return %c0_i32, %arg0 : i32, i32
  }
  func.func @transform_2(%arg0: i32) -> (i32, i32) {
    %c0_i32 = arith.constant 0 : i32
    %c0_i32_0 = arith.constant 0 : i32
    %c0_i32_1 = arith.constant 0 : i32
    return %c0_i32, %c0_i32_0 : i32, i32
  }
  func.func @transform_3(%arg0: i32) -> (i32, i32) {
    %c0_i32 = arith.constant 0 : i32
    %c0_i32_0 = arith.constant 0 : i32
    return %c0_i32, %arg0 : i32, i32
  }
}

module attributes {stable_mosaic.version = 11 : i64} {
  func.func @_gemm_bias_res_kernel(%arg0: i32, %arg1: memref<16x576xbf16, #tpu.memory_space<vmem>>, %arg2: memref<576x128xbf16, #tpu.memory_space<vmem>>, %arg3: memref<16x1xf32, #tpu.memory_space<vmem>>, %arg4: memref<16x128xbf16, #tpu.memory_space<vmem>>, %arg5: memref<16x128xbf16, #tpu.memory_space<vmem>>) attributes {dimension_semantics = [#tpu.dimension_semantics<parallel>], iteration_bounds = array<i64: 1>, scalar_prefetch = 0 : i64, scratch_operands = 0 : i64, tpu.core_type = #tpu.core_type<tc>, window_params = [{pipeline_mode = #tpu.pipeline_mode<synchronous>, transform_indices = @transform_0, window_bounds = array<i64: 16, 576>}, {transform_indices = @transform_1, window_bounds = array<i64: 576, 128>}, {pipeline_mode = #tpu.pipeline_mode<synchronous>, transform_indices = @transform_2, window_bounds = array<i64: 16, 1>}, {transform_indices = @transform_3, window_bounds = array<i64: 16, 128>}, {transform_indices = @transform_4, window_bounds = array<i64: 16, 128>}]} {
    %c0 = arith.constant 0 : index
    %c0_0 = arith.constant 0 : index
    %0 = vector.load %arg1[%c0, %c0_0] : memref<16x576xbf16, #tpu.memory_space<vmem>>, vector<16x576xbf16>
    %c0_1 = arith.constant 0 : index
    %c0_2 = arith.constant 0 : index
    %1 = vector.load %arg2[%c0_1, %c0_2] : memref<576x128xbf16, #tpu.memory_space<vmem>>, vector<576x128xbf16>
    %cst = arith.constant dense<0.000000e+00> : vector<16x128xf32>
    %2 = tpu.matmul %0, %1, %cst {dimension_numbers = #tpu.dot_dimension_numbers<[1], [0], [0], [1], [0, 0, 1, 1], [], []>} : vector<16x576xbf16>, vector<576x128xbf16>, vector<16x128xf32> -> vector<16x128xf32>
    %c0_3 = arith.constant 0 : index
    %c0_4 = arith.constant 0 : index
    %3 = vector.load %arg3[%c0_3, %c0_4] : memref<16x1xf32, #tpu.memory_space<vmem>>, vector<16x1xf32>
    %4 = vector.broadcast %3 : vector<16x1xf32> to vector<16x128xf32>
    %5 = arith.addf %2, %4 : vector<16x128xf32>
    %c0_5 = arith.constant 0 : index
    %c0_6 = arith.constant 0 : index
    %6 = vector.load %arg4[%c0_5, %c0_6] : memref<16x128xbf16, #tpu.memory_space<vmem>>, vector<16x128xbf16>
    %7 = arith.extf %6 : vector<16x128xbf16> to vector<16x128xf32>
    %8 = arith.addf %5, %7 : vector<16x128xf32>
    %cst_7 = arith.constant 0.000000e+00 : f32
    %9 = vector.broadcast %cst_7 : f32 to vector<16x128xf32>
    %10 = arith.maximumf %8, %9 : vector<16x128xf32>
    %11 = arith.truncf %10 : vector<16x128xf32> to vector<16x128xbf16>
    %c0_8 = arith.constant 0 : index
    %c0_9 = arith.constant 0 : index
    %12 = vector.load %arg5[%c0_8, %c0_9] : memref<16x128xbf16, #tpu.memory_space<vmem>>, vector<16x128xbf16>
    tpu.vector_store %arg5[%c0_8, %c0_9], %11 {strides = array<i32>} : memref<16x128xbf16, #tpu.memory_space<vmem>>, vector<16x128xbf16>,
    return
  }
  func.func @transform_0(%arg0: i32) -> (i32, i32) {
    %c0_i32 = arith.constant 0 : i32
    %c0_i32_0 = arith.constant 0 : i32
    %c0_i32_1 = arith.constant 0 : i32
    return %c0_i32, %c0_i32_0 : i32, i32
  }
  func.func @transform_1(%arg0: i32) -> (i32, i32) {
    %c0_i32 = arith.constant 0 : i32
    %c0_i32_0 = arith.constant 0 : i32
    return %c0_i32, %arg0 : i32, i32
  }
  func.func @transform_2(%arg0: i32) -> (i32, i32) {
    %c0_i32 = arith.constant 0 : i32
    %c0_i32_0 = arith.constant 0 : i32
    %c0_i32_1 = arith.constant 0 : i32
    return %c0_i32, %c0_i32_0 : i32, i32
  }
  func.func @transform_3(%arg0: i32) -> (i32, i32) {
    %c0_i32 = arith.constant 0 : i32
    %c0_i32_0 = arith.constant 0 : i32
    return %c0_i32, %arg0 : i32, i32
  }
  func.func @transform_4(%arg0: i32) -> (i32, i32) {
    %c0_i32 = arith.constant 0 : i32
    %c0_i32_0 = arith.constant 0 : i32
    return %c0_i32, %arg0 : i32, i32
  }
}

module attributes {stable_mosaic.version = 11 : i64} {
  func.func @_gemm_bias_kernel(%arg0: i32, %arg1: memref<32x144xbf16, #tpu.memory_space<vmem>>, %arg2: memref<144x128xbf16, #tpu.memory_space<vmem>>, %arg3: memref<32x1xf32, #tpu.memory_space<vmem>>, %arg4: memref<32x128xbf16, #tpu.memory_space<vmem>>) attributes {dimension_semantics = [#tpu.dimension_semantics<parallel>], iteration_bounds = array<i64: 1>, scalar_prefetch = 0 : i64, scratch_operands = 0 : i64, tpu.core_type = #tpu.core_type<tc>, window_params = [{pipeline_mode = #tpu.pipeline_mode<synchronous>, transform_indices = @transform_0, window_bounds = array<i64: 32, 144>}, {transform_indices = @transform_1, window_bounds = array<i64: 144, 128>}, {pipeline_mode = #tpu.pipeline_mode<synchronous>, transform_indices = @transform_2, window_bounds = array<i64: 32, 1>}, {transform_indices = @transform_3, window_bounds = array<i64: 32, 128>}]} {
    %c0 = arith.constant 0 : index
    %c0_0 = arith.constant 0 : index
    %0 = vector.load %arg1[%c0, %c0_0] : memref<32x144xbf16, #tpu.memory_space<vmem>>, vector<32x144xbf16>
    %c0_1 = arith.constant 0 : index
    %c0_2 = arith.constant 0 : index
    %1 = vector.load %arg2[%c0_1, %c0_2] : memref<144x128xbf16, #tpu.memory_space<vmem>>, vector<144x128xbf16>
    %cst = arith.constant dense<0.000000e+00> : vector<32x128xf32>
    %2 = tpu.matmul %0, %1, %cst {dimension_numbers = #tpu.dot_dimension_numbers<[1], [0], [0], [1], [0, 0, 1, 1], [], []>} : vector<32x144xbf16>, vector<144x128xbf16>, vector<32x128xf32> -> vector<32x128xf32>
    %c0_3 = arith.constant 0 : index
    %c0_4 = arith.constant 0 : index
    %3 = vector.load %arg3[%c0_3, %c0_4] : memref<32x1xf32, #tpu.memory_space<vmem>>, vector<32x1xf32>
    %4 = vector.broadcast %3 : vector<32x1xf32> to vector<32x128xf32>
    %5 = arith.addf %2, %4 : vector<32x128xf32>
    %cst_5 = arith.constant 0.000000e+00 : f32
    %6 = vector.broadcast %cst_5 : f32 to vector<32x128xf32>
    %7 = arith.maximumf %5, %6 : vector<32x128xf32>
    %8 = arith.truncf %7 : vector<32x128xf32> to vector<32x128xbf16>
    %c0_6 = arith.constant 0 : index
    %c0_7 = arith.constant 0 : index
    %9 = vector.load %arg4[%c0_6, %c0_7] : memref<32x128xbf16, #tpu.memory_space<vmem>>, vector<32x128xbf16>
    tpu.vector_store %arg4[%c0_6, %c0_7], %8 {strides = array<i32>} : memref<32x128xbf16, #tpu.memory_space<vmem>>, vector<32x128xbf16>,
    return
  }
  func.func @transform_0(%arg0: i32) -> (i32, i32) {
    %c0_i32 = arith.constant 0 : i32
    %c0_i32_0 = arith.constant 0 : i32
    %c0_i32_1 = arith.constant 0 : i32
    return %c0_i32, %c0_i32_0 : i32, i32
  }
  func.func @transform_1(%arg0: i32) -> (i32, i32) {
    %c0_i32 = arith.constant 0 : i32
    %c0_i32_0 = arith.constant 0 : i32
    return %c0_i32, %arg0 : i32, i32
  }
  func.func @transform_2(%arg0: i32) -> (i32, i32) {
    %c0_i32 = arith.constant 0 : i32
    %c0_i32_0 = arith.constant 0 : i32
    %c0_i32_1 = arith.constant 0 : i32
    return %c0_i32, %c0_i32_0 : i32, i32
  }
  func.func @transform_3(%arg0: i32) -> (i32, i32) {
    %c0_i32 = arith.constant 0 : i32
    %c0_i32_0 = arith.constant 0 : i32
    return %c0_i32, %arg0 : i32, i32
  }
}

module attributes {stable_mosaic.version = 11 : i64} {
  func.func @_gemm_bias_kernel(%arg0: i32, %arg1: memref<80x32xbf16, #tpu.memory_space<vmem>>, %arg2: memref<32x128xbf16, #tpu.memory_space<vmem>>, %arg3: memref<80x1xf32, #tpu.memory_space<vmem>>, %arg4: memref<80x128xbf16, #tpu.memory_space<vmem>>) attributes {dimension_semantics = [#tpu.dimension_semantics<parallel>], iteration_bounds = array<i64: 1>, scalar_prefetch = 0 : i64, scratch_operands = 0 : i64, tpu.core_type = #tpu.core_type<tc>, window_params = [{pipeline_mode = #tpu.pipeline_mode<synchronous>, transform_indices = @transform_0, window_bounds = array<i64: 80, 32>}, {transform_indices = @transform_1, window_bounds = array<i64: 32, 128>}, {pipeline_mode = #tpu.pipeline_mode<synchronous>, transform_indices = @transform_2, window_bounds = array<i64: 80, 1>}, {transform_indices = @transform_3, window_bounds = array<i64: 80, 128>}]} {
    %c0 = arith.constant 0 : index
    %c0_0 = arith.constant 0 : index
    %0 = vector.load %arg1[%c0, %c0_0] : memref<80x32xbf16, #tpu.memory_space<vmem>>, vector<80x32xbf16>
    %c0_1 = arith.constant 0 : index
    %c0_2 = arith.constant 0 : index
    %1 = vector.load %arg2[%c0_1, %c0_2] : memref<32x128xbf16, #tpu.memory_space<vmem>>, vector<32x128xbf16>
    %cst = arith.constant dense<0.000000e+00> : vector<80x128xf32>
    %2 = tpu.matmul %0, %1, %cst {dimension_numbers = #tpu.dot_dimension_numbers<[1], [0], [0], [1], [0, 0, 1, 1], [], []>} : vector<80x32xbf16>, vector<32x128xbf16>, vector<80x128xf32> -> vector<80x128xf32>
    %c0_3 = arith.constant 0 : index
    %c0_4 = arith.constant 0 : index
    %3 = vector.load %arg3[%c0_3, %c0_4] : memref<80x1xf32, #tpu.memory_space<vmem>>, vector<80x1xf32>
    %4 = vector.broadcast %3 : vector<80x1xf32> to vector<80x128xf32>
    %5 = arith.addf %2, %4 : vector<80x128xf32>
    %6 = arith.truncf %5 : vector<80x128xf32> to vector<80x128xbf16>
    %c0_5 = arith.constant 0 : index
    %c0_6 = arith.constant 0 : index
    %7 = vector.load %arg4[%c0_5, %c0_6] : memref<80x128xbf16, #tpu.memory_space<vmem>>, vector<80x128xbf16>
    tpu.vector_store %arg4[%c0_5, %c0_6], %6 {strides = array<i32>} : memref<80x128xbf16, #tpu.memory_space<vmem>>, vector<80x128xbf16>,
    return
  }
  func.func @transform_0(%arg0: i32) -> (i32, i32) {
    %c0_i32 = arith.constant 0 : i32
    %c0_i32_0 = arith.constant 0 : i32
    %c0_i32_1 = arith.constant 0 : i32
    return %c0_i32, %c0_i32_0 : i32, i32
  }
  func.func @transform_1(%arg0: i32) -> (i32, i32) {
    %c0_i32 = arith.constant 0 : i32
    %c0_i32_0 = arith.constant 0 : i32
    return %c0_i32, %arg0 : i32, i32
  }
  func.func @transform_2(%arg0: i32) -> (i32, i32) {
    %c0_i32 = arith.constant 0 : i32
    %c0_i32_0 = arith.constant 0 : i32
    %c0_i32_1 = arith.constant 0 : i32
    return %c0_i32, %c0_i32_0 : i32, i32
  }
  func.func @transform_3(%arg0: i32) -> (i32, i32) {
    %c0_i32 = arith.constant 0 : i32
    %c0_i32_0 = arith.constant 0 : i32
    return %c0_i32, %arg0 : i32, i32
  }
}

module attributes {stable_mosaic.version = 11 : i64} {
  func.func @_gemm_bias_kernel(%arg0: i32, %arg1: memref<32x224xbf16, #tpu.memory_space<vmem>>, %arg2: memref<224x128xbf16, #tpu.memory_space<vmem>>, %arg3: memref<32x1xf32, #tpu.memory_space<vmem>>, %arg4: memref<32x128xbf16, #tpu.memory_space<vmem>>) attributes {dimension_semantics = [#tpu.dimension_semantics<parallel>], iteration_bounds = array<i64: 1>, scalar_prefetch = 0 : i64, scratch_operands = 0 : i64, tpu.core_type = #tpu.core_type<tc>, window_params = [{pipeline_mode = #tpu.pipeline_mode<synchronous>, transform_indices = @transform_0, window_bounds = array<i64: 32, 224>}, {transform_indices = @transform_1, window_bounds = array<i64: 224, 128>}, {pipeline_mode = #tpu.pipeline_mode<synchronous>, transform_indices = @transform_2, window_bounds = array<i64: 32, 1>}, {transform_indices = @transform_3, window_bounds = array<i64: 32, 128>}]} {
    %c0 = arith.constant 0 : index
    %c0_0 = arith.constant 0 : index
    %0 = vector.load %arg1[%c0, %c0_0] : memref<32x224xbf16, #tpu.memory_space<vmem>>, vector<32x224xbf16>
    %c0_1 = arith.constant 0 : index
    %c0_2 = arith.constant 0 : index
    %1 = vector.load %arg2[%c0_1, %c0_2] : memref<224x128xbf16, #tpu.memory_space<vmem>>, vector<224x128xbf16>
    %cst = arith.constant dense<0.000000e+00> : vector<32x128xf32>
    %2 = tpu.matmul %0, %1, %cst {dimension_numbers = #tpu.dot_dimension_numbers<[1], [0], [0], [1], [0, 0, 1, 1], [], []>} : vector<32x224xbf16>, vector<224x128xbf16>, vector<32x128xf32> -> vector<32x128xf32>
    %c0_3 = arith.constant 0 : index
    %c0_4 = arith.constant 0 : index
    %3 = vector.load %arg3[%c0_3, %c0_4] : memref<32x1xf32, #tpu.memory_space<vmem>>, vector<32x1xf32>
    %4 = vector.broadcast %3 : vector<32x1xf32> to vector<32x128xf32>
    %5 = arith.addf %2, %4 : vector<32x128xf32>
    %cst_5 = arith.constant 0.000000e+00 : f32
    %6 = vector.broadcast %cst_5 : f32 to vector<32x128xf32>
    %7 = arith.maximumf %5, %6 : vector<32x128xf32>
    %8 = arith.truncf %7 : vector<32x128xf32> to vector<32x128xbf16>
    %c0_6 = arith.constant 0 : index
    %c0_7 = arith.constant 0 : index
    %9 = vector.load %arg4[%c0_6, %c0_7] : memref<32x128xbf16, #tpu.memory_space<vmem>>, vector<32x128xbf16>
    tpu.vector_store %arg4[%c0_6, %c0_7], %8 {strides = array<i32>} : memref<32x128xbf16, #tpu.memory_space<vmem>>, vector<32x128xbf16>,
    return
  }
  func.func @transform_0(%arg0: i32) -> (i32, i32) {
    %c0_i32 = arith.constant 0 : i32
    %c0_i32_0 = arith.constant 0 : i32
    %c0_i32_1 = arith.constant 0 : i32
    return %c0_i32, %c0_i32_0 : i32, i32
  }
  func.func @transform_1(%arg0: i32) -> (i32, i32) {
    %c0_i32 = arith.constant 0 : i32
    %c0_i32_0 = arith.constant 0 : i32
    return %c0_i32, %arg0 : i32, i32
  }
  func.func @transform_2(%arg0: i32) -> (i32, i32) {
    %c0_i32 = arith.constant 0 : i32
    %c0_i32_0 = arith.constant 0 : i32
    %c0_i32_1 = arith.constant 0 : i32
    return %c0_i32, %c0_i32_0 : i32, i32
  }
  func.func @transform_3(%arg0: i32) -> (i32, i32) {
    %c0_i32 = arith.constant 0 : i32
    %c0_i32_0 = arith.constant 0 : i32
    return %c0_i32, %arg0 : i32, i32
  }
}

module attributes {stable_mosaic.version = 11 : i64} {
  func.func @_gemm_bias_kernel(%arg0: i32, %arg1: memref<16x288xbf16, #tpu.memory_space<vmem>>, %arg2: memref<288x128xbf16, #tpu.memory_space<vmem>>, %arg3: memref<16x1xf32, #tpu.memory_space<vmem>>, %arg4: memref<16x128xbf16, #tpu.memory_space<vmem>>) attributes {dimension_semantics = [#tpu.dimension_semantics<parallel>], iteration_bounds = array<i64: 1>, scalar_prefetch = 0 : i64, scratch_operands = 0 : i64, tpu.core_type = #tpu.core_type<tc>, window_params = [{pipeline_mode = #tpu.pipeline_mode<synchronous>, transform_indices = @transform_0, window_bounds = array<i64: 16, 288>}, {transform_indices = @transform_1, window_bounds = array<i64: 288, 128>}, {pipeline_mode = #tpu.pipeline_mode<synchronous>, transform_indices = @transform_2, window_bounds = array<i64: 16, 1>}, {transform_indices = @transform_3, window_bounds = array<i64: 16, 128>}]} {
    %c0 = arith.constant 0 : index
    %c0_0 = arith.constant 0 : index
    %0 = vector.load %arg1[%c0, %c0_0] : memref<16x288xbf16, #tpu.memory_space<vmem>>, vector<16x288xbf16>
    %c0_1 = arith.constant 0 : index
    %c0_2 = arith.constant 0 : index
    %1 = vector.load %arg2[%c0_1, %c0_2] : memref<288x128xbf16, #tpu.memory_space<vmem>>, vector<288x128xbf16>
    %cst = arith.constant dense<0.000000e+00> : vector<16x128xf32>
    %2 = tpu.matmul %0, %1, %cst {dimension_numbers = #tpu.dot_dimension_numbers<[1], [0], [0], [1], [0, 0, 1, 1], [], []>} : vector<16x288xbf16>, vector<288x128xbf16>, vector<16x128xf32> -> vector<16x128xf32>
    %c0_3 = arith.constant 0 : index
    %c0_4 = arith.constant 0 : index
    %3 = vector.load %arg3[%c0_3, %c0_4] : memref<16x1xf32, #tpu.memory_space<vmem>>, vector<16x1xf32>
    %4 = vector.broadcast %3 : vector<16x1xf32> to vector<16x128xf32>
    %5 = arith.addf %2, %4 : vector<16x128xf32>
    %cst_5 = arith.constant 0.000000e+00 : f32
    %6 = vector.broadcast %cst_5 : f32 to vector<16x128xf32>
    %7 = arith.maximumf %5, %6 : vector<16x128xf32>
    %8 = arith.truncf %7 : vector<16x128xf32> to vector<16x128xbf16>
    %c0_6 = arith.constant 0 : index
    %c0_7 = arith.constant 0 : index
    %9 = vector.load %arg4[%c0_6, %c0_7] : memref<16x128xbf16, #tpu.memory_space<vmem>>, vector<16x128xbf16>
    tpu.vector_store %arg4[%c0_6, %c0_7], %8 {strides = array<i32>} : memref<16x128xbf16, #tpu.memory_space<vmem>>, vector<16x128xbf16>,
    return
  }
  func.func @transform_0(%arg0: i32) -> (i32, i32) {
    %c0_i32 = arith.constant 0 : i32
    %c0_i32_0 = arith.constant 0 : i32
    %c0_i32_1 = arith.constant 0 : i32
    return %c0_i32, %c0_i32_0 : i32, i32
  }
  func.func @transform_1(%arg0: i32) -> (i32, i32) {
    %c0_i32 = arith.constant 0 : i32
    %c0_i32_0 = arith.constant 0 : i32
    return %c0_i32, %arg0 : i32, i32
  }
  func.func @transform_2(%arg0: i32) -> (i32, i32) {
    %c0_i32 = arith.constant 0 : i32
    %c0_i32_0 = arith.constant 0 : i32
    %c0_i32_1 = arith.constant 0 : i32
    return %c0_i32, %c0_i32_0 : i32, i32
  }
  func.func @transform_3(%arg0: i32) -> (i32, i32) {
    %c0_i32 = arith.constant 0 : i32
    %c0_i32_0 = arith.constant 0 : i32
    return %c0_i32, %arg0 : i32, i32
  }
}

module attributes {stable_mosaic.version = 11 : i64} {
  func.func @_gemm_bias_kernel(%arg0: i32, %arg1: memref<16x144xbf16, #tpu.memory_space<vmem>>, %arg2: memref<144x128xbf16, #tpu.memory_space<vmem>>, %arg3: memref<16x1xf32, #tpu.memory_space<vmem>>, %arg4: memref<16x128xbf16, #tpu.memory_space<vmem>>) attributes {dimension_semantics = [#tpu.dimension_semantics<parallel>], iteration_bounds = array<i64: 1>, scalar_prefetch = 0 : i64, scratch_operands = 0 : i64, tpu.core_type = #tpu.core_type<tc>, window_params = [{pipeline_mode = #tpu.pipeline_mode<synchronous>, transform_indices = @transform_0, window_bounds = array<i64: 16, 144>}, {transform_indices = @transform_1, window_bounds = array<i64: 144, 128>}, {pipeline_mode = #tpu.pipeline_mode<synchronous>, transform_indices = @transform_2, window_bounds = array<i64: 16, 1>}, {transform_indices = @transform_3, window_bounds = array<i64: 16, 128>}]} {
    %c0 = arith.constant 0 : index
    %c0_0 = arith.constant 0 : index
    %0 = vector.load %arg1[%c0, %c0_0] : memref<16x144xbf16, #tpu.memory_space<vmem>>, vector<16x144xbf16>
    %c0_1 = arith.constant 0 : index
    %c0_2 = arith.constant 0 : index
    %1 = vector.load %arg2[%c0_1, %c0_2] : memref<144x128xbf16, #tpu.memory_space<vmem>>, vector<144x128xbf16>
    %cst = arith.constant dense<0.000000e+00> : vector<16x128xf32>
    %2 = tpu.matmul %0, %1, %cst {dimension_numbers = #tpu.dot_dimension_numbers<[1], [0], [0], [1], [0, 0, 1, 1], [], []>} : vector<16x144xbf16>, vector<144x128xbf16>, vector<16x128xf32> -> vector<16x128xf32>
    %c0_3 = arith.constant 0 : index
    %c0_4 = arith.constant 0 : index
    %3 = vector.load %arg3[%c0_3, %c0_4] : memref<16x1xf32, #tpu.memory_space<vmem>>, vector<16x1xf32>
    %4 = vector.broadcast %3 : vector<16x1xf32> to vector<16x128xf32>
    %5 = arith.addf %2, %4 : vector<16x128xf32>
    %cst_5 = arith.constant 0.000000e+00 : f32
    %6 = vector.broadcast %cst_5 : f32 to vector<16x128xf32>
    %7 = arith.maximumf %5, %6 : vector<16x128xf32>
    %8 = arith.truncf %7 : vector<16x128xf32> to vector<16x128xbf16>
    %c0_6 = arith.constant 0 : index
    %c0_7 = arith.constant 0 : index
    %9 = vector.load %arg4[%c0_6, %c0_7] : memref<16x128xbf16, #tpu.memory_space<vmem>>, vector<16x128xbf16>
    tpu.vector_store %arg4[%c0_6, %c0_7], %8 {strides = array<i32>} : memref<16x128xbf16, #tpu.memory_space<vmem>>, vector<16x128xbf16>,
    return
  }
  func.func @transform_0(%arg0: i32) -> (i32, i32) {
    %c0_i32 = arith.constant 0 : i32
    %c0_i32_0 = arith.constant 0 : i32
    %c0_i32_1 = arith.constant 0 : i32
    return %c0_i32, %c0_i32_0 : i32, i32
  }
  func.func @transform_1(%arg0: i32) -> (i32, i32) {
    %c0_i32 = arith.constant 0 : i32
    %c0_i32_0 = arith.constant 0 : i32
    return %c0_i32, %arg0 : i32, i32
  }
  func.func @transform_2(%arg0: i32) -> (i32, i32) {
    %c0_i32 = arith.constant 0 : i32
    %c0_i32_0 = arith.constant 0 : i32
    %c0_i32_1 = arith.constant 0 : i32
    return %c0_i32, %c0_i32_0 : i32, i32
  }
  func.func @transform_3(%arg0: i32) -> (i32, i32) {
    %c0_i32 = arith.constant 0 : i32
    %c0_i32_0 = arith.constant 0 : i32
    return %c0_i32, %arg0 : i32, i32
  }
}

module attributes {stable_mosaic.version = 11 : i64} {
  func.func @_gemm_bias_kernel(%arg0: i32, %arg1: memref<16x288xbf16, #tpu.memory_space<vmem>>, %arg2: memref<288x512xbf16, #tpu.memory_space<vmem>>, %arg3: memref<16x1xf32, #tpu.memory_space<vmem>>, %arg4: memref<16x512xbf16, #tpu.memory_space<vmem>>) attributes {dimension_semantics = [#tpu.dimension_semantics<parallel>], iteration_bounds = array<i64: 1>, scalar_prefetch = 0 : i64, scratch_operands = 0 : i64, tpu.core_type = #tpu.core_type<tc>, window_params = [{pipeline_mode = #tpu.pipeline_mode<synchronous>, transform_indices = @transform_0, window_bounds = array<i64: 16, 288>}, {transform_indices = @transform_1, window_bounds = array<i64: 288, 512>}, {pipeline_mode = #tpu.pipeline_mode<synchronous>, transform_indices = @transform_2, window_bounds = array<i64: 16, 1>}, {transform_indices = @transform_3, window_bounds = array<i64: 16, 512>}]} {
    %c0 = arith.constant 0 : index
    %c0_0 = arith.constant 0 : index
    %0 = vector.load %arg1[%c0, %c0_0] : memref<16x288xbf16, #tpu.memory_space<vmem>>, vector<16x288xbf16>
    %c0_1 = arith.constant 0 : index
    %c0_2 = arith.constant 0 : index
    %1 = vector.load %arg2[%c0_1, %c0_2] : memref<288x512xbf16, #tpu.memory_space<vmem>>, vector<288x512xbf16>
    %cst = arith.constant dense<0.000000e+00> : vector<16x512xf32>
    %2 = tpu.matmul %0, %1, %cst {dimension_numbers = #tpu.dot_dimension_numbers<[1], [0], [0], [1], [0, 0, 1, 1], [], []>} : vector<16x288xbf16>, vector<288x512xbf16>, vector<16x512xf32> -> vector<16x512xf32>
    %c0_3 = arith.constant 0 : index
    %c0_4 = arith.constant 0 : index
    %3 = vector.load %arg3[%c0_3, %c0_4] : memref<16x1xf32, #tpu.memory_space<vmem>>, vector<16x1xf32>
    %4 = vector.broadcast %3 : vector<16x1xf32> to vector<16x512xf32>
    %5 = arith.addf %2, %4 : vector<16x512xf32>
    %cst_5 = arith.constant 0.000000e+00 : f32
    %6 = vector.broadcast %cst_5 : f32 to vector<16x512xf32>
    %7 = arith.maximumf %5, %6 : vector<16x512xf32>
    %8 = arith.truncf %7 : vector<16x512xf32> to vector<16x512xbf16>
    %c0_6 = arith.constant 0 : index
    %c0_7 = arith.constant 0 : index
    %9 = vector.load %arg4[%c0_6, %c0_7] : memref<16x512xbf16, #tpu.memory_space<vmem>>, vector<16x512xbf16>
    tpu.vector_store %arg4[%c0_6, %c0_7], %8 {strides = array<i32>} : memref<16x512xbf16, #tpu.memory_space<vmem>>, vector<16x512xbf16>,
    return
  }
  func.func @transform_0(%arg0: i32) -> (i32, i32) {
    %c0_i32 = arith.constant 0 : i32
    %c0_i32_0 = arith.constant 0 : i32
    %c0_i32_1 = arith.constant 0 : i32
    return %c0_i32, %c0_i32_0 : i32, i32
  }
  func.func @transform_1(%arg0: i32) -> (i32, i32) {
    %c0_i32 = arith.constant 0 : i32
    %c0_i32_0 = arith.constant 0 : i32
    return %c0_i32, %arg0 : i32, i32
  }
  func.func @transform_2(%arg0: i32) -> (i32, i32) {
    %c0_i32 = arith.constant 0 : i32
    %c0_i32_0 = arith.constant 0 : i32
    %c0_i32_1 = arith.constant 0 : i32
    return %c0_i32, %c0_i32_0 : i32, i32
  }
  func.func @transform_3(%arg0: i32) -> (i32, i32) {
    %c0_i32 = arith.constant 0 : i32
    %c0_i32_0 = arith.constant 0 : i32
    return %c0_i32, %arg0 : i32, i32
  }
}

module attributes {stable_mosaic.version = 11 : i64} {
  func.func @_gemm_bias_kernel(%arg0: i32, %arg1: memref<16x144xbf16, #tpu.memory_space<vmem>>, %arg2: memref<144x512xbf16, #tpu.memory_space<vmem>>, %arg3: memref<16x1xf32, #tpu.memory_space<vmem>>, %arg4: memref<16x512xbf16, #tpu.memory_space<vmem>>) attributes {dimension_semantics = [#tpu.dimension_semantics<parallel>], iteration_bounds = array<i64: 1>, scalar_prefetch = 0 : i64, scratch_operands = 0 : i64, tpu.core_type = #tpu.core_type<tc>, window_params = [{pipeline_mode = #tpu.pipeline_mode<synchronous>, transform_indices = @transform_0, window_bounds = array<i64: 16, 144>}, {transform_indices = @transform_1, window_bounds = array<i64: 144, 512>}, {pipeline_mode = #tpu.pipeline_mode<synchronous>, transform_indices = @transform_2, window_bounds = array<i64: 16, 1>}, {transform_indices = @transform_3, window_bounds = array<i64: 16, 512>}]} {
    %c0 = arith.constant 0 : index
    %c0_0 = arith.constant 0 : index
    %0 = vector.load %arg1[%c0, %c0_0] : memref<16x144xbf16, #tpu.memory_space<vmem>>, vector<16x144xbf16>
    %c0_1 = arith.constant 0 : index
    %c0_2 = arith.constant 0 : index
    %1 = vector.load %arg2[%c0_1, %c0_2] : memref<144x512xbf16, #tpu.memory_space<vmem>>, vector<144x512xbf16>
    %cst = arith.constant dense<0.000000e+00> : vector<16x512xf32>
    %2 = tpu.matmul %0, %1, %cst {dimension_numbers = #tpu.dot_dimension_numbers<[1], [0], [0], [1], [0, 0, 1, 1], [], []>} : vector<16x144xbf16>, vector<144x512xbf16>, vector<16x512xf32> -> vector<16x512xf32>
    %c0_3 = arith.constant 0 : index
    %c0_4 = arith.constant 0 : index
    %3 = vector.load %arg3[%c0_3, %c0_4] : memref<16x1xf32, #tpu.memory_space<vmem>>, vector<16x1xf32>
    %4 = vector.broadcast %3 : vector<16x1xf32> to vector<16x512xf32>
    %5 = arith.addf %2, %4 : vector<16x512xf32>
    %cst_5 = arith.constant 0.000000e+00 : f32
    %6 = vector.broadcast %cst_5 : f32 to vector<16x512xf32>
    %7 = arith.maximumf %5, %6 : vector<16x512xf32>
    %8 = arith.truncf %7 : vector<16x512xf32> to vector<16x512xbf16>
    %c0_6 = arith.constant 0 : index
    %c0_7 = arith.constant 0 : index
    %9 = vector.load %arg4[%c0_6, %c0_7] : memref<16x512xbf16, #tpu.memory_space<vmem>>, vector<16x512xbf16>
    tpu.vector_store %arg4[%c0_6, %c0_7], %8 {strides = array<i32>} : memref<16x512xbf16, #tpu.memory_space<vmem>>, vector<16x512xbf16>,
    return
  }
  func.func @transform_0(%arg0: i32) -> (i32, i32) {
    %c0_i32 = arith.constant 0 : i32
    %c0_i32_0 = arith.constant 0 : i32
    %c0_i32_1 = arith.constant 0 : i32
    return %c0_i32, %c0_i32_0 : i32, i32
  }
  func.func @transform_1(%arg0: i32) -> (i32, i32) {
    %c0_i32 = arith.constant 0 : i32
    %c0_i32_0 = arith.constant 0 : i32
    return %c0_i32, %arg0 : i32, i32
  }
  func.func @transform_2(%arg0: i32) -> (i32, i32) {
    %c0_i32 = arith.constant 0 : i32
    %c0_i32_0 = arith.constant 0 : i32
    %c0_i32_1 = arith.constant 0 : i32
    return %c0_i32, %c0_i32_0 : i32, i32
  }
  func.func @transform_3(%arg0: i32) -> (i32, i32) {
    %c0_i32 = arith.constant 0 : i32
    %c0_i32_0 = arith.constant 0 : i32
    return %c0_i32, %arg0 : i32, i32
  }
}

module attributes {stable_mosaic.version = 11 : i64} {
  func.func @_gemm_bias_kernel(%arg0: i32, %arg1: memref<16x16xbf16, #tpu.memory_space<vmem>>, %arg2: memref<16x512xbf16, #tpu.memory_space<vmem>>, %arg3: memref<16x1xf32, #tpu.memory_space<vmem>>, %arg4: memref<16x512xf32, #tpu.memory_space<vmem>>) attributes {dimension_semantics = [#tpu.dimension_semantics<parallel>], iteration_bounds = array<i64: 1>, scalar_prefetch = 0 : i64, scratch_operands = 0 : i64, tpu.core_type = #tpu.core_type<tc>, window_params = [{pipeline_mode = #tpu.pipeline_mode<synchronous>, transform_indices = @transform_0, window_bounds = array<i64: 16, 16>}, {transform_indices = @transform_1, window_bounds = array<i64: 16, 512>}, {pipeline_mode = #tpu.pipeline_mode<synchronous>, transform_indices = @transform_2, window_bounds = array<i64: 16, 1>}, {transform_indices = @transform_3, window_bounds = array<i64: 16, 512>}]} {
    %c0 = arith.constant 0 : index
    %c0_0 = arith.constant 0 : index
    %0 = vector.load %arg1[%c0, %c0_0] : memref<16x16xbf16, #tpu.memory_space<vmem>>, vector<16x16xbf16>
    %c0_1 = arith.constant 0 : index
    %c0_2 = arith.constant 0 : index
    %1 = vector.load %arg2[%c0_1, %c0_2] : memref<16x512xbf16, #tpu.memory_space<vmem>>, vector<16x512xbf16>
    %cst = arith.constant dense<0.000000e+00> : vector<16x512xf32>
    %2 = tpu.matmul %0, %1, %cst {dimension_numbers = #tpu.dot_dimension_numbers<[1], [0], [0], [1], [0, 0, 1, 1], [], []>} : vector<16x16xbf16>, vector<16x512xbf16>, vector<16x512xf32> -> vector<16x512xf32>
    %c0_3 = arith.constant 0 : index
    %c0_4 = arith.constant 0 : index
    %3 = vector.load %arg3[%c0_3, %c0_4] : memref<16x1xf32, #tpu.memory_space<vmem>>, vector<16x1xf32>
    %4 = vector.broadcast %3 : vector<16x1xf32> to vector<16x512xf32>
    %5 = arith.addf %2, %4 : vector<16x512xf32>
    %c0_5 = arith.constant 0 : index
    %c0_6 = arith.constant 0 : index
    %6 = vector.load %arg4[%c0_5, %c0_6] : memref<16x512xf32, #tpu.memory_space<vmem>>, vector<16x512xf32>
    tpu.vector_store %arg4[%c0_5, %c0_6], %5 {strides = array<i32>} : memref<16x512xf32, #tpu.memory_space<vmem>>, vector<16x512xf32>,
    return
  }
  func.func @transform_0(%arg0: i32) -> (i32, i32) {
    %c0_i32 = arith.constant 0 : i32
    %c0_i32_0 = arith.constant 0 : i32
    %c0_i32_1 = arith.constant 0 : i32
    return %c0_i32, %c0_i32_0 : i32, i32
  }
  func.func @transform_1(%arg0: i32) -> (i32, i32) {
    %c0_i32 = arith.constant 0 : i32
    %c0_i32_0 = arith.constant 0 : i32
    return %c0_i32, %arg0 : i32, i32
  }
  func.func @transform_2(%arg0: i32) -> (i32, i32) {
    %c0_i32 = arith.constant 0 : i32
    %c0_i32_0 = arith.constant 0 : i32
    %c0_i32_1 = arith.constant 0 : i32
    return %c0_i32, %c0_i32_0 : i32, i32
  }
  func.func @transform_3(%arg0: i32) -> (i32, i32) {
    %c0_i32 = arith.constant 0 : i32
    %c0_i32_0 = arith.constant 0 : i32
    return %c0_i32, %arg0 : i32, i32
  }
}

module attributes {stable_mosaic.version = 11 : i64} {
  func.func @_gemm_bias_kernel(%arg0: i32, %arg1: memref<16x16xbf16, #tpu.memory_space<vmem>>, %arg2: memref<16x128xbf16, #tpu.memory_space<vmem>>, %arg3: memref<16x1xf32, #tpu.memory_space<vmem>>, %arg4: memref<16x128xf32, #tpu.memory_space<vmem>>) attributes {dimension_semantics = [#tpu.dimension_semantics<parallel>], iteration_bounds = array<i64: 1>, scalar_prefetch = 0 : i64, scratch_operands = 0 : i64, tpu.core_type = #tpu.core_type<tc>, window_params = [{pipeline_mode = #tpu.pipeline_mode<synchronous>, transform_indices = @transform_0, window_bounds = array<i64: 16, 16>}, {transform_indices = @transform_1, window_bounds = array<i64: 16, 128>}, {pipeline_mode = #tpu.pipeline_mode<synchronous>, transform_indices = @transform_2, window_bounds = array<i64: 16, 1>}, {transform_indices = @transform_3, window_bounds = array<i64: 16, 128>}]} {
    %c0 = arith.constant 0 : index
    %c0_0 = arith.constant 0 : index
    %0 = vector.load %arg1[%c0, %c0_0] : memref<16x16xbf16, #tpu.memory_space<vmem>>, vector<16x16xbf16>
    %c0_1 = arith.constant 0 : index
    %c0_2 = arith.constant 0 : index
    %1 = vector.load %arg2[%c0_1, %c0_2] : memref<16x128xbf16, #tpu.memory_space<vmem>>, vector<16x128xbf16>
    %cst = arith.constant dense<0.000000e+00> : vector<16x128xf32>
    %2 = tpu.matmul %0, %1, %cst {dimension_numbers = #tpu.dot_dimension_numbers<[1], [0], [0], [1], [0, 0, 1, 1], [], []>} : vector<16x16xbf16>, vector<16x128xbf16>, vector<16x128xf32> -> vector<16x128xf32>
    %c0_3 = arith.constant 0 : index
    %c0_4 = arith.constant 0 : index
    %3 = vector.load %arg3[%c0_3, %c0_4] : memref<16x1xf32, #tpu.memory_space<vmem>>, vector<16x1xf32>
    %4 = vector.broadcast %3 : vector<16x1xf32> to vector<16x128xf32>
    %5 = arith.addf %2, %4 : vector<16x128xf32>
    %c0_5 = arith.constant 0 : index
    %c0_6 = arith.constant 0 : index
    %6 = vector.load %arg4[%c0_5, %c0_6] : memref<16x128xf32, #tpu.memory_space<vmem>>, vector<16x128xf32>
    tpu.vector_store %arg4[%c0_5, %c0_6], %5 {strides = array<i32>} : memref<16x128xf32, #tpu.memory_space<vmem>>, vector<16x128xf32>,
    return
  }
  func.func @transform_0(%arg0: i32) -> (i32, i32) {
    %c0_i32 = arith.constant 0 : i32
    %c0_i32_0 = arith.constant 0 : i32
    %c0_i32_1 = arith.constant 0 : i32
    return %c0_i32, %c0_i32_0 : i32, i32
  }
  func.func @transform_1(%arg0: i32) -> (i32, i32) {
    %c0_i32 = arith.constant 0 : i32
    %c0_i32_0 = arith.constant 0 : i32
    return %c0_i32, %arg0 : i32, i32
  }
  func.func @transform_2(%arg0: i32) -> (i32, i32) {
    %c0_i32 = arith.constant 0 : i32
    %c0_i32_0 = arith.constant 0 : i32
    %c0_i32_1 = arith.constant 0 : i32
    return %c0_i32, %c0_i32_0 : i32, i32
  }
  func.func @transform_3(%arg0: i32) -> (i32, i32) {
    %c0_i32 = arith.constant 0 : i32
    %c0_i32_0 = arith.constant 0 : i32
    return %c0_i32, %arg0 : i32, i32
  }
}

</mosaic_0001>

<llo_original>
// kernel: sam2unet_forward.34
$region0: #{sam2unet_forward.34}
  #allocation0 [shape = 'u32[]', space=smem, size = 0x4, offset = 0x4, fixed_abs, tag = 'smem constant byte address 0x4 - core index']
  #allocation1 [shape = 'u32[144,128]{1,0:T(1,128)}', space=vmem, size = 0x12000, scoped, tag = 'internal scratch']
  %s0 = inlined_call_operand.vmem [shape: bf16[16,32], index: 0, kind: input, shape index: {}]
  %s1 = inlined_call_operand.vmem [shape: bf16[32,2048], index: 1, kind: input, shape index: {}]
  %s2 = inlined_call_operand.vmem [shape: f32[16,1], index: 2, kind: input, shape index: {}]
  %s3 = inlined_call_operand.vmem [shape: bf16[16,2048], index: 3, kind: output, shape index: {}]
  %s4 = sld [smem:[#allocation0]]
  $region87: #{sam2unet_forward.34} parent=0
    _
  %s6 = ssub.s32 1, %s4
  %s7 = scalar_select 0, %s6, %s4
  $region1: #{sam2unet_forward.34} parent=0
    #allocation2 [shape = 'u8[65536]{0}', space=vmem, size = 0x10000, scoped, tag = 'input window, operand 1']
    #allocation3 [shape = 'u8[32768]{0}', space=vmem, size = 0x8000, scoped, tag = 'output window, operand 0']
    loop: start=0, step=1, limit=6
    $region2: #{sam2unet_forward.34} parent=1 // loop_pre_header
      _
    $region3: #{sam2unet_forward.34} parent=1 // loop_header
      %s9 = sphi 0, %s13
      %p10 = scmp.ge.s32.totalorder %s9, 6
      %s17 = sphi 0, %s17
      %s19 = sphi 0, %s17
      %s20 = sphi 0, %s19
      %s34 = sphi 0, %s20
      %s40 = sphi 0, %s42
      %s43 = sphi 0, %s40
      %s44 = sphi 0, %s43
      %s60 = sphi 0, %s44
      %s64 = sphi 0, %s64
      %s66 = sphi 0, %s64
      %s67 = sphi 0, %s66
      %s81 = sphi 0, %s67
      %s87 = sphi 0, %s89
      %s90 = sphi 0, %s87
      %s91 = sphi 0, %s90
      %s107 = sphi 0, %s91
    $region4: #{sam2unet_forward.34} parent=1 // loop_header_branch
      %12 = sbr.rel (%p10) target = $region8
    $region5: #{sam2unet_forward.34} parent=1 // loop_body
      %s14 = ssub.s32 %s9, 1
      %s15 = ssub.s32 %s9, 2
      %s16 = sadd.s32 %s9, 1
      %s18 = sadd.s32 %s17, 1
      %p21 = scmp.eq.s32.totalorder %s9, 3
      %p22 = scmp.ne.s32.totalorder %s17, %s19
      %p23 = scmp.eq.s32.totalorder %s9, 0
      %p24 = por %p22, %p23
      %p25 = scmp.ne.s32.totalorder %s17, %s19
      %p26 = scmp.eq.s32.totalorder %s14, 3
      %p27 = por %p25, %p26
      %p28 = scmp.ne.s32.totalorder %s19, %s20
      %p29 = scmp.eq.s32.totalorder %s14, 0
      %p30 = por %p28, %p29
      %p31 = scmp.ne.s32.totalorder %s19, %s20
      %p32 = scmp.eq.s32.totalorder %s15, 3
      %p33 = por %p31, %p32
      %p35 = scmp.ne.s32.totalorder %s20, %s34
      %p36 = scmp.eq.s32.totalorder %s15, 0
      %p37 = por %p35, %p36
      %s38 = ssub.s32 %s9, %s16
      %p39 = scmp.eq.s32.totalorder %s38, 0
      %s41 = sadd.s32 %s40, 1
      %s42 = scalar_select %p39, %s40, %s41
      %p45 = pneg %p39
      %p46 = scmp.eq.s32.totalorder %s9, 3
      %p47 = por %p45, %p46
      %p48 = scmp.ne.s32.totalorder %s40, %s43
      %p49 = scmp.eq.s32.totalorder %s9, 0
      %p50 = por %p48, %p49
      %p51 = scmp.ne.s32.totalorder %s40, %s43
      %p52 = scmp.eq.s32.totalorder %s14, 3
      %p53 = por %p51, %p52
      %p54 = scmp.ne.s32.totalorder %s43, %s44
      %p55 = scmp.eq.s32.totalorder %s14, 0
      %p56 = por %p54, %p55
      %p57 = scmp.ne.s32.totalorder %s43, %s44
      %p58 = scmp.eq.s32.totalorder %s15, 3
      %p59 = por %p57, %p58
      %p61 = scmp.ne.s32.totalorder %s44, %s60
      %p62 = scmp.eq.s32.totalorder %s15, 0
      %p63 = por %p61, %p62
      %s65 = sadd.s32 %s64, 1
      %p68 = scmp.eq.s32.totalorder %s9, 3
      %p69 = scmp.ne.s32.totalorder %s64, %s66
      %p70 = scmp.eq.s32.totalorder %s9, 0
      %p71 = por %p69, %p70
      %p72 = scmp.ne.s32.totalorder %s64, %s66
      %p73 = scmp.eq.s32.totalorder %s14, 3
      %p74 = por %p72, %p73
      %p75 = scmp.ne.s32.totalorder %s66, %s67
      %p76 = scmp.eq.s32.totalorder %s14, 0
      %p77 = por %p75, %p76
      %p78 = scmp.ne.s32.totalorder %s66, %s67
      %p79 = scmp.eq.s32.totalorder %s15, 3
      %p80 = por %p78, %p79
      %p82 = scmp.ne.s32.totalorder %s67, %s81
      %p83 = scmp.eq.s32.totalorder %s15, 0
      %p84 = por %p82, %p83
      %s85 = ssub.s32 %s9, %s16
      %p86 = scmp.eq.s32.totalorder %s85, 0
      %s88 = sadd.s32 %s87, 1
      %s89 = scalar_select %p86, %s87, %s88
      %p92 = pneg %p86
      %p93 = scmp.eq.s32.totalorder %s9, 3
      %p94 = por %p92, %p93
      %p95 = scmp.ne.s32.totalorder %s87, %s90
      %p96 = scmp.eq.s32.totalorder %s9, 0
      %p97 = por %p95, %p96
      %p98 = scmp.ne.s32.totalorder %s87, %s90
      %p99 = scmp.eq.s32.totalorder %s14, 3
      %p100 = por %p98, %p99
      %p101 = scmp.ne.s32.totalorder %s90, %s91
      %p102 = scmp.eq.s32.totalorder %s14, 0
      %p103 = por %p101, %p102
      %p104 = scmp.ne.s32.totalorder %s90, %s91
      %p105 = scmp.eq.s32.totalorder %s15, 3
      %p106 = por %p104, %p105
      %p108 = scmp.ne.s32.totalorder %s91, %s107
      %p109 = scmp.eq.s32.totalorder %s15, 0
      %p110 = por %p108, %p109
      %p111 = scmp.le.s32.totalorder 1, %s9
      %p112 = scmp.lt.s32.totalorder %s9, 5
      %p113 = pnand %p111, %p112
      %p114 = pneg %p113
      // Predicated region
      $region9: #{sam2unet_forward.34} parent=5 // pred_check
        _
      $region10: #{sam2unet_forward.34} parent=5 // pred_check_branch
        %116 = sbr.rel (%p113) target = $region12
      $region11: #{sam2unet_forward.34} parent=5 // pred_region
        %s117 = ssub.s32 %s9, 1
        // Predicated region
        $region13: #{sam2unet_forward.34} parent=11 // pred_check
          %p118 = pneg %p30
        $region14: #{sam2unet_forward.34} parent=11 // pred_check_branch
          %120 = sbr.rel (%p118) target = $region16
        $region15: #{sam2unet_forward.34} parent=11 // pred_region
          _
        $region16: #{sam2unet_forward.34} parent=11 // pred_fallthru
          _
        // Predicated region
        $region17: #{sam2unet_forward.34} parent=11 // pred_check
          %p121 = pneg %p77
        $region18: #{sam2unet_forward.34} parent=11 // pred_check_branch
          %123 = sbr.rel (%p121) target = $region20
        $region19: #{sam2unet_forward.34} parent=11 // pred_region
          _
        $region20: #{sam2unet_forward.34} parent=11 // pred_fallthru
          _
      $region12: #{sam2unet_forward.34} parent=5 // pred_fallthru
        _
      %p124 = scmp.lt.s32.totalorder %s9, 4
      // Predicated region
      $region21: #{sam2unet_forward.34} parent=5 // pred_check
        %p125 = pneg %p124
      $region22: #{sam2unet_forward.34} parent=5 // pred_check_branch
        %127 = sbr.rel (%p125) target = $region24
      $region23: #{sam2unet_forward.34} parent=5 // pred_region
        // Predicated region
        $region25: #{sam2unet_forward.34} parent=23 // pred_check
          %p128 = pneg %p50
        $region26: #{sam2unet_forward.34} parent=23 // pred_check_branch
          %130 = sbr.rel (%p128) target = $region28
        $region27: #{sam2unet_forward.34} parent=23 // pred_region
          %s131 = sand.u32 %s40, 1
          %s132 = sand.u32 %s40, 1
          %s133 = smul.addr %s132, 64
          %s134 = scalar_lea.vmem [#allocation2], %s133
          %s135 = smul.u32 4, %s9
          %s136 = smul.addr %s135, 4
          %s137 = scalar_lea.vmem %s1, %s136
          // Predicated region
          $region29: #{sam2unet_forward.34} parent=27 // pred_check
            _
          $region30: #{sam2unet_forward.34} parent=27 // pred_check_branch
            %139 = sbr.rel (0) target = $region32
          $region31: #{sam2unet_forward.34} parent=27 // pred_region
            // Predicated region
            $region33: #{sam2unet_forward.34} parent=31 // pred_check
              _
            $region34: #{sam2unet_forward.34} parent=31 // pred_check_branch
              %141 = sbr.rel (0) target = $region36
            $region35: #{sam2unet_forward.34} parent=31 // pred_region
              loop: start=0, step=1, limit=1
              $region37: #{sam2unet_forward.34} parent=35 // loop_pre_header
                _
              $region38: #{sam2unet_forward.34} parent=35 // loop_header
                %s143 = sphi 0, %s147
                %p144 = scmp.ge.s32.totalorder %s143, 1
                %s148 = sphi %s137, %s137
                %s149 = sphi %s134, %s134
              $region39: #{sam2unet_forward.34} parent=35 // loop_header_branch
                %146 = sbr.rel (%p144) target = $region43
              $region40: #{sam2unet_forward.34} parent=35 // loop_body
                %v150 = vld [vmem:[%s148] sm:$0xff]
                %151 = vst [vmem:[%s149] sm:$0xff] %v150
                %v152 = vld [vmem:[%s148 + $0x8] sm:$0xff]
                %153 = vst [vmem:[%s149 + $0x8] sm:$0xff] %v152
                %v154 = vld [vmem:[%s148 + $0x40] sm:$0xff]
                %155 = vst [vmem:[%s149 + $0x10] sm:$0xff] %v154
                %v156 = vld [vmem:[%s148 + $0x48] sm:$0xff]
                %157 = vst [vmem:[%s149 + $0x18] sm:$0xff] %v156
                %v158 = vld [vmem:[%s148 + $0x80] sm:$0xff]
                %159 = vst [vmem:[%s149 + $0x20] sm:$0xff] %v158
                %v160 = vld [vmem:[%s148 + $0x88] sm:$0xff]
                %161 = vst [vmem:[%s149 + $0x28] sm:$0xff] %v160
                %v162 = vld [vmem:[%s148 + $0xc0] sm:$0xff]
                %163 = vst [vmem:[%s149 + $0x30] sm:$0xff] %v162
                %v164 = vld [vmem:[%s148 + $0xc8] sm:$0xff]
                %165 = vst [vmem:[%s149 + $0x38] sm:$0xff] %v164
              $region41: #{sam2unet_forward.34} parent=35 // loop_footer
                %s147 = sadd.s32 1, %s143
              $region42: #{sam2unet_forward.34} parent=35 // loop_footer_branch
                %142 = sbr.rel target = $region38
              $region43: #{sam2unet_forward.34} parent=35 // loop_exit
                _
            $region36: #{sam2unet_forward.34} parent=31 // pred_fallthru
              _
            // Predicated region
            $region44: #{sam2unet_forward.34} parent=31 // pred_check
              _
            $region45: #{sam2unet_forward.34} parent=31 // pred_check_branch
              %167 = sbr.rel target = $region47
            $region46: #{sam2unet_forward.34} parent=31 // pred_region
              _
            $region47: #{sam2unet_forward.34} parent=31 // pred_fallthru
              _
          $region32: #{sam2unet_forward.34} parent=27 // pred_fallthru
            _
          %168 = vnop
        $region28: #{sam2unet_forward.34} parent=23 // pred_fallthru
          _
      $region24: #{sam2unet_forward.34} parent=5 // pred_fallthru
        _
      %p169 = scmp.le.s32.totalorder 1, %s9
      %p170 = scmp.lt.s32.totalorder %s9, 5
      %p171 = pnand %p169, %p170
      %p172 = pneg %p171
      // Predicated region
      $region48: #{sam2unet_forward.34} parent=5 // pred_check
        _
      $region49: #{sam2unet_forward.34} parent=5 // pred_check_branch
        %174 = sbr.rel (%p171) target = $region51
      $region50: #{sam2unet_forward.34} parent=5 // pred_region
        %s175 = ssub.s32 %s9, 1
        %s176 = sand.u32 %s43, 1
        %s177 = sand.u32 %s43, 1
        %s178 = smul.addr %s177, 64
        %s179 = scalar_lea.vmem [#allocation2], %s178
        // Predicated region
        $region52: #{sam2unet_forward.34} parent=50 // pred_check
          %p180 = pneg %p56
        $region53: #{sam2unet_forward.34} parent=50 // pred_check_branch
          %182 = sbr.rel (%p180) target = $region55
        $region54: #{sam2unet_forward.34} parent=50 // pred_region
          _
        $region55: #{sam2unet_forward.34} parent=50 // pred_fallthru
          _
        %p183 = pneg %p30
        %p184 = pneg %p27
        %s185 = sand.u32 %s43, 1
        %s186 = sand.u32 %s43, 1
        %s187 = smul.addr %s186, 64
        %s188 = scalar_lea.vmem [#allocation2], %s187
        %p189 = pneg %p56
        %p190 = pneg %p53
        %p191 = pneg %p77
        %p192 = pneg %p74
        %p193 = pneg %p103
        %p194 = pneg %p100
        %s195 = sand.u32 %s90, 1
        %s196 = sand.u32 %s90, 1
        %s197 = smul.addr %s196, 32
        %s198 = scalar_lea.vmem [#allocation3], %s197
        %s199 = smul.u32 4, %s14
        %s200 = smul.u32 4, %s14
        %v202 = vld [vmem:[%s0] sm:$0xf]
        %v203 = vld [vmem:[%s0 + $0x4] sm:$0xf]
        %v204 = vld [vmem:[%s179] sm:$0xff]
        %v205 = vld [vmem:[%s179 + $0x8] sm:$0xff]
        %v206 = vld [vmem:[%s179 + $0x10] sm:$0xff]
        %v207 = vld [vmem:[%s179 + $0x18] sm:$0xff]
        %v208 = vld [vmem:[%s179 + $0x20] sm:$0xff]
        %v209 = vld [vmem:[%s179 + $0x28] sm:$0xff]
        %v210 = vld [vmem:[%s179 + $0x30] sm:$0xff]
        %v211 = vld [vmem:[%s179 + $0x38] sm:$0xff]
        %v212 = vld [vmem:[%s2] sm:$0xff]
        %v213 = vld [vmem:[%s2 + $0x8] sm:$0xff]
        %215 = vset.pattern.permute.xlu0 0
        %216 = vperm.xlu0 %215, %v212
        %v217 = vpop.permute.xlu0 %216
        %220 = vset.pattern.permute.xlu0 0
        %221 = vperm.xlu0 %220, %v213
        %v222 = vpop.permute.xlu0 %221
        %v226 = vunpack.c.l.b16 %v202
        %v227 = vunpack.c.l.b16 %v203
        %v228 = vpack.c.b16 %v227, %v226
        %v237 = vunpack.c.l.b16 %v204
        %v238 = vunpack.c.h.b16 %v204
        %v239 = vunpack.c.l.b16 %v205
        %v240 = vunpack.c.h.b16 %v205
        %v241 = vunpack.c.l.b16 %v206
        %v242 = vunpack.c.h.b16 %v206
        %v243 = vunpack.c.l.b16 %v207
        %v244 = vunpack.c.h.b16 %v207
        %v245 = vunpack.c.l.b16 %v208
        %v246 = vunpack.c.h.b16 %v208
        %v247 = vunpack.c.l.b16 %v209
        %v248 = vunpack.c.h.b16 %v209
        %v249 = vunpack.c.l.b16 %v210
        %v250 = vunpack.c.h.b16 %v210
        %v251 = vunpack.c.l.b16 %v211
        %v252 = vunpack.c.h.b16 %v211
        %v253 = vpack.c.b16 %v241, %v237
        %v254 = vpack.c.b16 %v242, %v238
        %v255 = vpack.c.b16 %v243, %v239
        %v256 = vpack.c.b16 %v244, %v240
        %v257 = vpack.c.b16 %v249, %v245
        %v258 = vpack.c.b16 %v250, %v246
        %v259 = vpack.c.b16 %v251, %v247
        %v260 = vpack.c.b16 %v252, %v248
        %vm269 = vcmask 261120
        %v271 = vsel %vm269, %v228, 0
        %273 = vmatprep.subr.bf16.mxu0 %v254
        %274 = vmatpush1.bf16.msra.mxu0 %v253
        %275 = vmatprep.subr.bf16.mxu0 %v258
        %276 = vmatpush1.bf16.msra.mxu0 %v257
        %277 = vmatprep.subr.bf16.mxu0 0
        %278 = vmatpush1.bf16.msra.mxu0 0
        %279 = vmatprep.subr.bf16.mxu0 0
        %280 = vmatpush1.bf16.msra.mxu0 0
        %281 = vmatprep.subr.bf16.mxu0 0
        %282 = vmatpush1.bf16.msra.mxu0 0
        %283 = vmatprep.subr.bf16.mxu0 0
        %284 = vmatpush1.bf16.msra.mxu0 0
        %285 = vmatprep.subr.bf16.mxu0 0
        %286 = vmatpush1.bf16.msra.mxu0 0
        %287 = vmatprep.subr.bf16.mxu0 0
        %288 = vmatpush1.bf16.msra.mxu0 0
        %289 = vmatprep.subr.bf16.mxu0 0
        %290 = vmatpush1.bf16.msra.mxu0 0
        %291 = vmatprep.subr.bf16.mxu0 0
        %292 = vmatpush1.bf16.msra.mxu0 0
        %293 = vmatprep.subr.bf16.mxu0 0
        %294 = vmatpush1.bf16.msra.mxu0 0
        %295 = vmatprep.subr.bf16.mxu0 0
        %296 = vmatpush1.bf16.msra.mxu0 0
        %297 = vmatprep.subr.bf16.mxu0 0
        %298 = vmatpush1.bf16.msra.mxu0 0
        %299 = vmatprep.subr.bf16.mxu0 0
        %300 = vmatpush1.bf16.msra.mxu0 0
        %301 = vmatprep.subr.bf16.mxu0 0
        %302 = vmatpush1.bf16.msra.mxu0 0
        %303 = vmatprep.subr.bf16.mxu0 0
        %304 = vmatpush1.bf16.msra.mxu0 0
        %305 = vmatprep.mubr.bf16.mxu0 0
        %306 = vmatmul.mubr.bf16.gmra.mrb[0].mxu0 %v271
        %v307 = vpop.f32.mrb[0].mxu0
        %v308 = vadd.f32 %v217, %v307
        %v309 = vpop.f32.mrb[0].mxu0
        %v310 = vadd.f32 %v217, %v309
        %v311 = vpop.f32.mrb[0].mxu0
        %v312 = vadd.f32 %v222, %v311
        %v313 = vpop.f32.mrb[0].mxu0
        %v314 = vadd.f32 %v222, %v313
        %315 = vdwg.mxu0
        %316 = vmatprep.subr.bf16.mxu0 %v256
        %317 = vmatpush1.bf16.msra.mxu0 %v255
        %318 = vmatprep.subr.bf16.mxu0 %v260
        %319 = vmatpush1.bf16.msra.mxu0 %v259
        %320 = vmatprep.subr.bf16.mxu0 0
        %321 = vmatpush1.bf16.msra.mxu0 0
        %322 = vmatprep.subr.bf16.mxu0 0
        %323 = vmatpush1.bf16.msra.mxu0 0
        %324 = vmatprep.subr.bf16.mxu0 0
        %325 = vmatpush1.bf16.msra.mxu0 0
        %326 = vmatprep.subr.bf16.mxu0 0
        %327 = vmatpush1.bf16.msra.mxu0 0
        %328 = vmatprep.subr.bf16.mxu0 0
        %329 = vmatpush1.bf16.msra.mxu0 0
        %330 = vmatprep.subr.bf16.mxu0 0
        %331 = vmatpush1.bf16.msra.mxu0 0
        %332 = vmatprep.subr.bf16.mxu0 0
        %333 = vmatpush1.bf16.msra.mxu0 0
        %334 = vmatprep.subr.bf16.mxu0 0
        %335 = vmatpush1.bf16.msra.mxu0 0
        %336 = vmatprep.subr.bf16.mxu0 0
        %337 = vmatpush1.bf16.msra.mxu0 0
        %338 = vmatprep.subr.bf16.mxu0 0
        %339 = vmatpush1.bf16.msra.mxu0 0
        %340 = vmatprep.subr.bf16.mxu0 0
        %341 = vmatpush1.bf16.msra.mxu0 0
        %342 = vmatprep.subr.bf16.mxu0 0
        %343 = vmatpush1.bf16.msra.mxu0 0
        %344 = vmatprep.subr.bf16.mxu0 0
        %345 = vmatpush1.bf16.msra.mxu0 0
        %346 = vmatprep.subr.bf16.mxu0 0
        %347 = vmatpush1.bf16.msra.mxu0 0
        %348 = vmatprep.mubr.bf16.mxu0 0
        %349 = vmatmul.mubr.bf16.gmra.mrb[0].mxu0 %v271
        %v350 = vpop.f32.mrb[0].mxu0
        %v351 = vadd.f32 %v217, %v350
        %v352 = vpop.f32.mrb[0].mxu0
        %v353 = vadd.f32 %v217, %v352
        %v354 = vpop.f32.mrb[0].mxu0
        %v355 = vadd.f32 %v222, %v354
        %v356 = vpop.f32.mrb[0].mxu0
        %v357 = vadd.f32 %v222, %v356
        %358 = vdwg.mxu0
        %v359 = vmax.f32 %v308, 0.0
        %v360 = vmax.f32 %v310, 0.0
        %v361 = vmax.f32 %v351, 0.0
        %v362 = vmax.f32 %v353, 0.0
        %v363 = vmax.f32 %v312, 0.0
        %v364 = vmax.f32 %v314, 0.0
        %v365 = vmax.f32 %v355, 0.0
        %v366 = vmax.f32 %v357, 0.0
        %v367 = vpack.c.bf16 %v363, %v359
        %v368 = vpack.c.bf16 %v364, %v360
        %v369 = vpack.c.bf16 %v365, %v361
        %v370 = vpack.c.bf16 %v366, %v362
        %v375 = vunpack.c.l.b16 %v367
        %v376 = vunpack.c.l.b16 %v368
        %v377 = vunpack.c.l.b16 %v369
        %v378 = vunpack.c.l.b16 %v370
        %v379 = vunpack.c.h.b16 %v367
        %v380 = vunpack.c.h.b16 %v368
        %v381 = vunpack.c.h.b16 %v369
        %v382 = vunpack.c.h.b16 %v370
        %v383 = vpack.c.b16 %v376, %v375
        %v384 = vpack.c.b16 %v378, %v377
        %v385 = vpack.c.b16 %v380, %v379
        %v386 = vpack.c.b16 %v382, %v381
        %391 = vst [vmem:[%s198] sm:$0xff] %v383
        %392 = vst [vmem:[%s198 + $0x8] sm:$0xff] %v384
        %393 = vst [vmem:[%s198 + $0x10] sm:$0xff] %v385
        %394 = vst [vmem:[%s198 + $0x18] sm:$0xff] %v386
        %s395 = sand.u32 %s90, 1
        %s396 = sand.u32 %s90, 1
        %s397 = smul.addr %s396, 32
        %s398 = scalar_lea.vmem [#allocation3], %s397
        // Predicated region
        $region56: #{sam2unet_forward.34} parent=50 // pred_check
          %p399 = pneg %p100
        $region57: #{sam2unet_forward.34} parent=50 // pred_check_branch
          %401 = sbr.rel (%p399) target = $region59
        $region58: #{sam2unet_forward.34} parent=50 // pred_region
          %s402 = smul.u32 4, %s14
          %s403 = smul.addr %s402, 4
          %s404 = scalar_lea.vmem %s3, %s403
          // Predicated region
          $region60: #{sam2unet_forward.34} parent=58 // pred_check
            _
          $region61: #{sam2unet_forward.34} parent=58 // pred_check_branch
            %406 = sbr.rel (0) target = $region63
          $region62: #{sam2unet_forward.34} parent=58 // pred_region
            // Predicated region
            $region64: #{sam2unet_forward.34} parent=62 // pred_check
              _
            $region65: #{sam2unet_forward.34} parent=62 // pred_check_branch
              %408 = sbr.rel (0) target = $region67
            $region66: #{sam2unet_forward.34} parent=62 // pred_region
              loop: start=0, step=1, limit=1
              $region68: #{sam2unet_forward.34} parent=66 // loop_pre_header
                _
              $region69: #{sam2unet_forward.34} parent=66 // loop_header
                %s410 = sphi 0, %s414
                %p411 = scmp.ge.s32.totalorder %s410, 1
                %s415 = sphi %s398, %s398
                %s416 = sphi %s404, %s404
              $region70: #{sam2unet_forward.34} parent=66 // loop_header_branch
                %413 = sbr.rel (%p411) target = $region74
              $region71: #{sam2unet_forward.34} parent=66 // loop_body
                %v417 = vld [vmem:[%s415] sm:$0xff]
                %418 = vst [vmem:[%s416] sm:$0xff] %v417
                %v419 = vld [vmem:[%s415 + $0x8] sm:$0xff]
                %420 = vst [vmem:[%s416 + $0x8] sm:$0xff] %v419
                %v421 = vld [vmem:[%s415 + $0x10] sm:$0xff]
                %422 = vst [vmem:[%s416 + $0x40] sm:$0xff] %v421
                %v423 = vld [vmem:[%s415 + $0x18] sm:$0xff]
                %424 = vst [vmem:[%s416 + $0x48] sm:$0xff] %v423
              $region72: #{sam2unet_forward.34} parent=66 // loop_footer
                %s414 = sadd.s32 1, %s410
              $region73: #{sam2unet_forward.34} parent=66 // loop_footer_branch
                %409 = sbr.rel target = $region69
              $region74: #{sam2unet_forward.34} parent=66 // loop_exit
                _
            $region67: #{sam2unet_forward.34} parent=62 // pred_fallthru
              _
            // Predicated region
            $region75: #{sam2unet_forward.34} parent=62 // pred_check
              _
            $region76: #{sam2unet_forward.34} parent=62 // pred_check_branch
              %426 = sbr.rel target = $region78
            $region77: #{sam2unet_forward.34} parent=62 // pred_region
              _
            $region78: #{sam2unet_forward.34} parent=62 // pred_fallthru
              _
          $region63: #{sam2unet_forward.34} parent=58 // pred_fallthru
            _
          %427 = vnop
        $region59: #{sam2unet_forward.34} parent=50 // pred_fallthru
          _
      $region51: #{sam2unet_forward.34} parent=5 // pred_fallthru
        _
      %p428 = scmp.le.s32.totalorder 2, %s9
      // Predicated region
      $region79: #{sam2unet_forward.34} parent=5 // pred_check
        %p429 = pneg %p428
      $region80: #{sam2unet_forward.34} parent=5 // pred_check_branch
        %431 = sbr.rel (%p429) target = $region82
      $region81: #{sam2unet_forward.34} parent=5 // pred_region
        %s432 = ssub.s32 %s9, 2
        // Predicated region
        $region83: #{sam2unet_forward.34} parent=81 // pred_check
          %p433 = pneg %p106
        $region84: #{sam2unet_forward.34} parent=81 // pred_check_branch
          %435 = sbr.rel (%p433) target = $region86
        $region85: #{sam2unet_forward.34} parent=81 // pred_region
          %s436 = sand.u32 %s91, 1
          %s437 = sand.u32 %s91, 1
          %s438 = smul.addr %s437, 32
          %s439 = scalar_lea.vmem [#allocation3], %s438
        $region86: #{sam2unet_forward.34} parent=81 // pred_fallthru
          _
      $region82: #{sam2unet_forward.34} parent=5 // pred_fallthru
        _
    $region6: #{sam2unet_forward.34} parent=1 // loop_footer
      %s13 = sadd.s32 1, %s9
    $region7: #{sam2unet_forward.34} parent=1 // loop_footer_branch
      %8 = sbr.rel target = $region3
    $region8: #{sam2unet_forward.34} parent=1 // loop_exit
      _

// kernel: sam2unet_forward.35
$region0: #{sam2unet_forward.35}
  #allocation0 [shape = 'u32[]', space=smem, size = 0x4, offset = 0x4, fixed_abs, tag = 'smem constant byte address 0x4 - core index']
  #allocation1 [shape = 'u32[144,128]{1,0:T(1,128)}', space=vmem, size = 0x12000, scoped, tag = 'internal scratch']
  %s0 = inlined_call_operand.vmem [shape: bf16[16,80], index: 0, kind: input, shape index: {}]
  %s1 = inlined_call_operand.vmem [shape: bf16[80,512], index: 1, kind: input, shape index: {}]
  %s2 = inlined_call_operand.vmem [shape: f32[16,1], index: 2, kind: input, shape index: {}]
  %s3 = inlined_call_operand.vmem [shape: bf16[16,512], index: 3, kind: output, shape index: {}]
  %s4 = sld [smem:[#allocation0]]
  $region22: #{sam2unet_forward.35} parent=0
    _
  %s6 = ssub.s32 1, %s4
  %s7 = scalar_select 0, %s6, %s4
  // Predicated region
  $region2: #{sam2unet_forward.35} parent=0 // pred_check
    _
  $region3: #{sam2unet_forward.35} parent=0 // pred_check_branch
    %9 = sbr.rel (0) target = $region5
  $region4: #{sam2unet_forward.35} parent=0 // pred_region
    _
  $region5: #{sam2unet_forward.35} parent=0 // pred_fallthru
    _
  // Predicated region
  $region6: #{sam2unet_forward.35} parent=0 // pred_check
    _
  $region7: #{sam2unet_forward.35} parent=0 // pred_check_branch
    %11 = sbr.rel (0) target = $region9
  $region8: #{sam2unet_forward.35} parent=0 // pred_region
    _
  $region9: #{sam2unet_forward.35} parent=0 // pred_fallthru
    _
  // Predicated region
  $region10: #{sam2unet_forward.35} parent=0 // pred_check
    _
  $region11: #{sam2unet_forward.35} parent=0 // pred_check_branch
    %13 = sbr.rel (0) target = $region13
  $region12: #{sam2unet_forward.35} parent=0 // pred_region
    _
  $region13: #{sam2unet_forward.35} parent=0 // pred_fallthru
    _
  %v15 = vld [vmem:[%s0] sm:$0xf]
  %v16 = vld [vmem:[%s0 + $0x4] sm:$0xf]
  %v17 = vld [vmem:[%s1] sm:$0xff]
  %v18 = vld [vmem:[%s1 + $0x8] sm:$0xff]
  %v19 = vld [vmem:[%s1 + $0x10] sm:$0xff]
  %v20 = vld [vmem:[%s1 + $0x18] sm:$0xff]
  %v21 = vld [vmem:[%s1 + $0x20] sm:$0xff]
  %v22 = vld [vmem:[%s1 + $0x28] sm:$0xff]
  %v23 = vld [vmem:[%s1 + $0x30] sm:$0xff]
  %v24 = vld [vmem:[%s1 + $0x38] sm:$0xff]
  %v25 = vld [vmem:[%s1 + $0x40] sm:$0xff]
  %v26 = vld [vmem:[%s1 + $0x48] sm:$0xff]
  %v27 = vld [vmem:[%s1 + $0x50] sm:$0xff]
  %v28 = vld [vmem:[%s1 + $0x58] sm:$0xff]
  %v29 = vld [vmem:[%s1 + $0x60] sm:$0xff]
  %v30 = vld [vmem:[%s1 + $0x68] sm:$0xff]
  %v31 = vld [vmem:[%s1 + $0x70] sm:$0xff]
  %v32 = vld [vmem:[%s1 + $0x78] sm:$0xff]
  %v33 = vld [vmem:[%s1 + $0x80] sm:$0xff]
  %v34 = vld [vmem:[%s1 + $0x88] sm:$0xff]
  %v35 = vld [vmem:[%s1 + $0x90] sm:$0xff]
  %v36 = vld [vmem:[%s1 + $0x98] sm:$0xff]
  %v37 = vld [vmem:[%s2] sm:$0xff]
  %v38 = vld [vmem:[%s2 + $0x8] sm:$0xff]
  %40 = vset.pattern.permute.xlu0 0
  %41 = vperm.xlu0 %40, %v37
  %v42 = vpop.permute.xlu0 %41
  %45 = vset.pattern.permute.xlu0 0
  %46 = vperm.xlu0 %45, %v38
  %v47 = vpop.permute.xlu0 %46
  %v51 = vunpack.c.l.b16 %v15
  %v52 = vunpack.c.l.b16 %v16
  %v53 = vpack.c.b16 %v52, %v51
  %v74 = vunpack.c.l.b16 %v17
  %v75 = vunpack.c.h.b16 %v17
  %v76 = vunpack.c.l.b16 %v18
  %v77 = vunpack.c.h.b16 %v18
  %v78 = vunpack.c.l.b16 %v19
  %v79 = vunpack.c.h.b16 %v19
  %v80 = vunpack.c.l.b16 %v20
  %v81 = vunpack.c.h.b16 %v20
  %v82 = vunpack.c.l.b16 %v21
  %v83 = vunpack.c.h.b16 %v21
  %v84 = vunpack.c.l.b16 %v22
  %v85 = vunpack.c.h.b16 %v22
  %v86 = vunpack.c.l.b16 %v23
  %v87 = vunpack.c.h.b16 %v23
  %v88 = vunpack.c.l.b16 %v24
  %v89 = vunpack.c.h.b16 %v24
  %v90 = vunpack.c.l.b16 %v25
  %v91 = vunpack.c.h.b16 %v25
  %v92 = vunpack.c.l.b16 %v26
  %v93 = vunpack.c.h.b16 %v26
  %v94 = vunpack.c.l.b16 %v27
  %v95 = vunpack.c.h.b16 %v27
  %v96 = vunpack.c.l.b16 %v28
  %v97 = vunpack.c.h.b16 %v28
  %v98 = vunpack.c.l.b16 %v29
  %v99 = vunpack.c.h.b16 %v29
  %v100 = vunpack.c.l.b16 %v30
  %v101 = vunpack.c.h.b16 %v30
  %v102 = vunpack.c.l.b16 %v31
  %v103 = vunpack.c.h.b16 %v31
  %v104 = vunpack.c.l.b16 %v32
  %v105 = vunpack.c.h.b16 %v32
  %v106 = vunpack.c.l.b16 %v33
  %v107 = vunpack.c.h.b16 %v33
  %v108 = vunpack.c.l.b16 %v34
  %v109 = vunpack.c.h.b16 %v34
  %v110 = vunpack.c.l.b16 %v35
  %v111 = vunpack.c.h.b16 %v35
  %v112 = vunpack.c.l.b16 %v36
  %v113 = vunpack.c.h.b16 %v36
  %v114 = vpack.c.b16 %v78, %v74
  %v115 = vpack.c.b16 %v79, %v75
  %v116 = vpack.c.b16 %v80, %v76
  %v117 = vpack.c.b16 %v81, %v77
  %v118 = vpack.c.b16 %v86, %v82
  %v119 = vpack.c.b16 %v87, %v83
  %v120 = vpack.c.b16 %v88, %v84
  %v121 = vpack.c.b16 %v89, %v85
  %v122 = vpack.c.b16 %v94, %v90
  %v123 = vpack.c.b16 %v95, %v91
  %v124 = vpack.c.b16 %v96, %v92
  %v125 = vpack.c.b16 %v97, %v93
  %v126 = vpack.c.b16 %v102, %v98
  %v127 = vpack.c.b16 %v103, %v99
  %v128 = vpack.c.b16 %v104, %v100
  %v129 = vpack.c.b16 %v105, %v101
  %v130 = vpack.c.b16 %v110, %v106
  %v131 = vpack.c.b16 %v111, %v107
  %v132 = vpack.c.b16 %v112, %v108
  %v133 = vpack.c.b16 %v113, %v109
  %vm154 = vcmask 654336
  %v156 = vsel %vm154, %v53, 0
  %158 = vmatprep.subr.bf16.mxu0 %v115
  %159 = vmatpush1.bf16.msra.mxu0 %v114
  %160 = vmatprep.subr.bf16.mxu0 %v119
  %161 = vmatpush1.bf16.msra.mxu0 %v118
  %162 = vmatprep.subr.bf16.mxu0 %v123
  %163 = vmatpush1.bf16.msra.mxu0 %v122
  %164 = vmatprep.subr.bf16.mxu0 %v127
  %165 = vmatpush1.bf16.msra.mxu0 %v126
  %166 = vmatprep.subr.bf16.mxu0 %v131
  %167 = vmatpush1.bf16.msra.mxu0 %v130
  %168 = vmatprep.subr.bf16.mxu0 0
  %169 = vmatpush1.bf16.msra.mxu0 0
  %170 = vmatprep.subr.bf16.mxu0 0
  %171 = vmatpush1.bf16.msra.mxu0 0
  %172 = vmatprep.subr.bf16.mxu0 0
  %173 = vmatpush1.bf16.msra.mxu0 0
  %174 = vmatprep.subr.bf16.mxu0 0
  %175 = vmatpush1.bf16.msra.mxu0 0
  %176 = vmatprep.subr.bf16.mxu0 0
  %177 = vmatpush1.bf16.msra.mxu0 0
  %178 = vmatprep.subr.bf16.mxu0 0
  %179 = vmatpush1.bf16.msra.mxu0 0
  %180 = vmatprep.subr.bf16.mxu0 0
  %181 = vmatpush1.bf16.msra.mxu0 0
  %182 = vmatprep.subr.bf16.mxu0 0
  %183 = vmatpush1.bf16.msra.mxu0 0
  %184 = vmatprep.subr.bf16.mxu0 0
  %185 = vmatpush1.bf16.msra.mxu0 0
  %186 = vmatprep.subr.bf16.mxu0 0
  %187 = vmatpush1.bf16.msra.mxu0 0
  %188 = vmatprep.subr.bf16.mxu0 0
  %189 = vmatpush1.bf16.msra.mxu0 0
  %190 = vmatprep.mubr.bf16.mxu0 0
  %191 = vmatmul.mubr.bf16.gmra.mrb[0].mxu0 %v156
  %v192 = vpop.f32.mrb[0].mxu0
  %v193 = vadd.f32 %v42, %v192
  %v194 = vpop.f32.mrb[0].mxu0
  %v195 = vadd.f32 %v42, %v194
  %v196 = vpop.f32.mrb[0].mxu0
  %v197 = vadd.f32 %v47, %v196
  %v198 = vpop.f32.mrb[0].mxu0
  %v199 = vadd.f32 %v47, %v198
  %200 = vdwg.mxu0
  %201 = vmatprep.subr.bf16.mxu0 %v117
  %202 = vmatpush1.bf16.msra.mxu0 %v116
  %203 = vmatprep.subr.bf16.mxu0 %v121
  %204 = vmatpush1.bf16.msra.mxu0 %v120
  %205 = vmatprep.subr.bf16.mxu0 %v125
  %206 = vmatpush1.bf16.msra.mxu0 %v124
  %207 = vmatprep.subr.bf16.mxu0 %v129
  %208 = vmatpush1.bf16.msra.mxu0 %v128
  %209 = vmatprep.subr.bf16.mxu0 %v133
  %210 = vmatpush1.bf16.msra.mxu0 %v132
  %211 = vmatprep.subr.bf16.mxu0 0
  %212 = vmatpush1.bf16.msra.mxu0 0
  %213 = vmatprep.subr.bf16.mxu0 0
  %214 = vmatpush1.bf16.msra.mxu0 0
  %215 = vmatprep.subr.bf16.mxu0 0
  %216 = vmatpush1.bf16.msra.mxu0 0
  %217 = vmatprep.subr.bf16.mxu0 0
  %218 = vmatpush1.bf16.msra.mxu0 0
  %219 = vmatprep.subr.bf16.mxu0 0
  %220 = vmatpush1.bf16.msra.mxu0 0
  %221 = vmatprep.subr.bf16.mxu0 0
  %222 = vmatpush1.bf16.msra.mxu0 0
  %223 = vmatprep.subr.bf16.mxu0 0
  %224 = vmatpush1.bf16.msra.mxu0 0
  %225 = vmatprep.subr.bf16.mxu0 0
  %226 = vmatpush1.bf16.msra.mxu0 0
  %227 = vmatprep.subr.bf16.mxu0 0
  %228 = vmatpush1.bf16.msra.mxu0 0
  %229 = vmatprep.subr.bf16.mxu0 0
  %230 = vmatpush1.bf16.msra.mxu0 0
  %231 = vmatprep.subr.bf16.mxu0 0
  %232 = vmatpush1.bf16.msra.mxu0 0
  %233 = vmatprep.mubr.bf16.mxu0 0
  %234 = vmatmul.mubr.bf16.gmra.mrb[0].mxu0 %v156
  %v235 = vpop.f32.mrb[0].mxu0
  %v236 = vadd.f32 %v42, %v235
  %v237 = vpop.f32.mrb[0].mxu0
  %v238 = vadd.f32 %v42, %v237
  %v239 = vpop.f32.mrb[0].mxu0
  %v240 = vadd.f32 %v47, %v239
  %v241 = vpop.f32.mrb[0].mxu0
  %v242 = vadd.f32 %v47, %v241
  %243 = vdwg.mxu0
  %v244 = vmax.f32 %v193, 0.0
  %v245 = vmax.f32 %v195, 0.0
  %v246 = vmax.f32 %v236, 0.0
  %v247 = vmax.f32 %v238, 0.0
  %v248 = vmax.f32 %v197, 0.0
  %v249 = vmax.f32 %v199, 0.0
  %v250 = vmax.f32 %v240, 0.0
  %v251 = vmax.f32 %v242, 0.0
  %v252 = vpack.c.bf16 %v248, %v244
  %v253 = vpack.c.bf16 %v249, %v245
  %v254 = vpack.c.bf16 %v250, %v246
  %v255 = vpack.c.bf16 %v251, %v247
  %v260 = vunpack.c.l.b16 %v252
  %v261 = vunpack.c.l.b16 %v253
  %v262 = vunpack.c.l.b16 %v254
  %v263 = vunpack.c.l.b16 %v255
  %v264 = vunpack.c.h.b16 %v252
  %v265 = vunpack.c.h.b16 %v253
  %v266 = vunpack.c.h.b16 %v254
  %v267 = vunpack.c.h.b16 %v255
  %v268 = vpack.c.b16 %v261, %v260
  %v269 = vpack.c.b16 %v263, %v262
  %v270 = vpack.c.b16 %v265, %v264
  %v271 = vpack.c.b16 %v267, %v266
  %276 = vst [vmem:[%s3] sm:$0xff] %v268
  %277 = vst [vmem:[%s3 + $0x8] sm:$0xff] %v269
  %278 = vst [vmem:[%s3 + $0x10] sm:$0xff] %v270
  %279 = vst [vmem:[%s3 + $0x18] sm:$0xff] %v271
  // Predicated region
  $region14: #{sam2unet_forward.35} parent=0 // pred_check
    _
  $region15: #{sam2unet_forward.35} parent=0 // pred_check_branch
    %281 = sbr.rel (0) target = $region17
  $region16: #{sam2unet_forward.35} parent=0 // pred_region
    _
  $region17: #{sam2unet_forward.35} parent=0 // pred_fallthru
    _
  // Predicated region
  $region18: #{sam2unet_forward.35} parent=0 // pred_check
    _
  $region19: #{sam2unet_forward.35} parent=0 // pred_check_branch
    %283 = sbr.rel (0) target = $region21
  $region20: #{sam2unet_forward.35} parent=0 // pred_region
    _
  $region21: #{sam2unet_forward.35} parent=0 // pred_fallthru
    _

// kernel: sam2unet_forward.39
$region0: #{sam2unet_forward.39}
  #allocation0 [shape = 'u32[]', space=smem, size = 0x4, offset = 0x4, fixed_abs, tag = 'smem constant byte address 0x4 - core index']
  #allocation1 [shape = 'u32[144,128]{1,0:T(1,128)}', space=vmem, size = 0x12000, scoped, tag = 'internal scratch']
  %s0 = inlined_call_operand.vmem [shape: bf16[80,16], index: 0, kind: input, shape index: {}]
  %s1 = inlined_call_operand.vmem [shape: bf16[16,512], index: 1, kind: input, shape index: {}]
  %s2 = inlined_call_operand.vmem [shape: f32[80,1], index: 2, kind: input, shape index: {}]
  %s3 = inlined_call_operand.vmem [shape: bf16[80,512], index: 3, kind: output, shape index: {}]
  %s4 = sld [smem:[#allocation0]]
  $region22: #{sam2unet_forward.39} parent=0
    _
  %s6 = ssub.s32 1, %s4
  %s7 = scalar_select 0, %s6, %s4
  // Predicated region
  $region2: #{sam2unet_forward.39} parent=0 // pred_check
    _
  $region3: #{sam2unet_forward.39} parent=0 // pred_check_branch
    %9 = sbr.rel (0) target = $region5
  $region4: #{sam2unet_forward.39} parent=0 // pred_region
    _
  $region5: #{sam2unet_forward.39} parent=0 // pred_fallthru
    _
  // Predicated region
  $region6: #{sam2unet_forward.39} parent=0 // pred_check
    _
  $region7: #{sam2unet_forward.39} parent=0 // pred_check_branch
    %11 = sbr.rel (0) target = $region9
  $region8: #{sam2unet_forward.39} parent=0 // pred_region
    _
  $region9: #{sam2unet_forward.39} parent=0 // pred_fallthru
    _
  // Predicated region
  $region10: #{sam2unet_forward.39} parent=0 // pred_check
    _
  $region11: #{sam2unet_forward.39} parent=0 // pred_check_branch
    %13 = sbr.rel (0) target = $region13
  $region12: #{sam2unet_forward.39} parent=0 // pred_region
    _
  $region13: #{sam2unet_forward.39} parent=0 // pred_fallthru
    _
  %v15 = vld [vmem:[%s0] sm:$0xf]
  %v16 = vld [vmem:[%s0 + $0x4] sm:$0xf]
  %v17 = vld [vmem:[%s0 + $0x8] sm:$0xf]
  %v18 = vld [vmem:[%s0 + $0xc] sm:$0xf]
  %v19 = vld [vmem:[%s0 + $0x10] sm:$0xf]
  %v20 = vld [vmem:[%s0 + $0x14] sm:$0xf]
  %v21 = vld [vmem:[%s0 + $0x18] sm:$0xf]
  %v22 = vld [vmem:[%s0 + $0x1c] sm:$0xf]
  %v23 = vld [vmem:[%s0 + $0x20] sm:$0xf]
  %v24 = vld [vmem:[%s0 + $0x24] sm:$0xf]
  %v25 = vld [vmem:[%s1] sm:$0xff]
  %v26 = vld [vmem:[%s1 + $0x8] sm:$0xff]
  %v27 = vld [vmem:[%s1 + $0x10] sm:$0xff]
  %v28 = vld [vmem:[%s1 + $0x18] sm:$0xff]
  %v29 = vld [vmem:[%s2] sm:$0xff]
  %v30 = vld [vmem:[%s2 + $0x8] sm:$0xff]
  %v31 = vld [vmem:[%s2 + $0x10] sm:$0xff]
  %v32 = vld [vmem:[%s2 + $0x18] sm:$0xff]
  %v33 = vld [vmem:[%s2 + $0x20] sm:$0xff]
  %v34 = vld [vmem:[%s2 + $0x28] sm:$0xff]
  %v35 = vld [vmem:[%s2 + $0x30] sm:$0xff]
  %v36 = vld [vmem:[%s2 + $0x38] sm:$0xff]
  %v37 = vld [vmem:[%s2 + $0x40] sm:$0xff]
  %v38 = vld [vmem:[%s2 + $0x48] sm:$0xff]
  %40 = vset.pattern.permute.xlu0 0
  %41 = vperm.xlu0 %40, %v29
  %v42 = vpop.permute.xlu0 %41
  %45 = vset.pattern.permute.xlu0 0
  %46 = vperm.xlu0 %45, %v30
  %v47 = vpop.permute.xlu0 %46
  %50 = vset.pattern.permute.xlu0 0
  %51 = vperm.xlu0 %50, %v31
  %v52 = vpop.permute.xlu0 %51
  %55 = vset.pattern.permute.xlu0 0
  %56 = vperm.xlu0 %55, %v32
  %v57 = vpop.permute.xlu0 %56
  %60 = vset.pattern.permute.xlu0 0
  %61 = vperm.xlu0 %60, %v33
  %v62 = vpop.permute.xlu0 %61
  %65 = vset.pattern.permute.xlu0 0
  %66 = vperm.xlu0 %65, %v34
  %v67 = vpop.permute.xlu0 %66
  %70 = vset.pattern.permute.xlu0 0
  %71 = vperm.xlu0 %70, %v35
  %v72 = vpop.permute.xlu0 %71
  %75 = vset.pattern.permute.xlu0 0
  %76 = vperm.xlu0 %75, %v36
  %v77 = vpop.permute.xlu0 %76
  %80 = vset.pattern.permute.xlu0 0
  %81 = vperm.xlu0 %80, %v37
  %v82 = vpop.permute.xlu0 %81
  %85 = vset.pattern.permute.xlu0 0
  %86 = vperm.xlu0 %85, %v38
  %v87 = vpop.permute.xlu0 %86
  %v99 = vunpack.c.l.b16 %v15
  %v100 = vunpack.c.l.b16 %v16
  %v101 = vunpack.c.l.b16 %v17
  %v102 = vunpack.c.l.b16 %v18
  %v103 = vunpack.c.l.b16 %v19
  %v104 = vunpack.c.l.b16 %v20
  %v105 = vunpack.c.l.b16 %v21
  %v106 = vunpack.c.l.b16 %v22
  %v107 = vunpack.c.l.b16 %v23
  %v108 = vunpack.c.l.b16 %v24
  %v109 = vpack.c.b16 %v100, %v99
  %v110 = vpack.c.b16 %v102, %v101
  %v111 = vpack.c.b16 %v104, %v103
  %v112 = vpack.c.b16 %v106, %v105
  %v113 = vpack.c.b16 %v108, %v107
  %v118 = vunpack.c.l.b16 %v25
  %v119 = vunpack.c.h.b16 %v25
  %v120 = vunpack.c.l.b16 %v26
  %v121 = vunpack.c.h.b16 %v26
  %v122 = vunpack.c.l.b16 %v27
  %v123 = vunpack.c.h.b16 %v27
  %v124 = vunpack.c.l.b16 %v28
  %v125 = vunpack.c.h.b16 %v28
  %v126 = vpack.c.b16 %v122, %v118
  %v127 = vpack.c.b16 %v123, %v119
  %v128 = vpack.c.b16 %v124, %v120
  %v129 = vpack.c.b16 %v125, %v121
  %vm134 = vcmask 130048
  %v136 = vsel %vm134, %v109, 0
  %v139 = vsel %vm134, %v110, 0
  %v142 = vsel %vm134, %v111, 0
  %v145 = vsel %vm134, %v112, 0
  %v148 = vsel %vm134, %v113, 0
  %150 = vmatprep.subr.bf16.mxu0 %v127
  %151 = vmatpush1.bf16.msra.mxu0 %v126
  %152 = vmatprep.subr.bf16.mxu0 0
  %153 = vmatpush1.bf16.msra.mxu0 0
  %154 = vmatprep.subr.bf16.mxu0 0
  %155 = vmatpush1.bf16.msra.mxu0 0
  %156 = vmatprep.subr.bf16.mxu0 0
  %157 = vmatpush1.bf16.msra.mxu0 0
  %158 = vmatprep.subr.bf16.mxu0 0
  %159 = vmatpush1.bf16.msra.mxu0 0
  %160 = vmatprep.subr.bf16.mxu0 0
  %161 = vmatpush1.bf16.msra.mxu0 0
  %162 = vmatprep.subr.bf16.mxu0 0
  %163 = vmatpush1.bf16.msra.mxu0 0
  %164 = vmatprep.subr.bf16.mxu0 0
  %165 = vmatpush1.bf16.msra.mxu0 0
  %166 = vmatprep.subr.bf16.mxu0 0
  %167 = vmatpush1.bf16.msra.mxu0 0
  %168 = vmatprep.subr.bf16.mxu0 0
  %169 = vmatpush1.bf16.msra.mxu0 0
  %170 = vmatprep.subr.bf16.mxu0 0
  %171 = vmatpush1.bf16.msra.mxu0 0
  %172 = vmatprep.subr.bf16.mxu0 0
  %173 = vmatpush1.bf16.msra.mxu0 0
  %174 = vmatprep.subr.bf16.mxu0 0
  %175 = vmatpush1.bf16.msra.mxu0 0
  %176 = vmatprep.subr.bf16.mxu0 0
  %177 = vmatpush1.bf16.msra.mxu0 0
  %178 = vmatprep.subr.bf16.mxu0 0
  %179 = vmatpush1.bf16.msra.mxu0 0
  %180 = vmatprep.subr.bf16.mxu0 0
  %181 = vmatpush1.bf16.msra.mxu0 0
  %182 = vmatprep.mubr.bf16.mxu0 0
  %183 = vmatmul.mubr.bf16.gmra.mrb[0].mxu0 %v136
  %v184 = vpop.f32.mrb[0].mxu0
  %v185 = vadd.f32 %v42, %v184
  %v186 = vpop.f32.mrb[0].mxu0
  %v187 = vadd.f32 %v42, %v186
  %v188 = vpop.f32.mrb[0].mxu0
  %v189 = vadd.f32 %v47, %v188
  %v190 = vpop.f32.mrb[0].mxu0
  %v191 = vadd.f32 %v47, %v190
  %192 = vmatprep.mubr.bf16.mxu0 0
  %193 = vmatmul.mubr.bf16.gmra.mrb[0].mxu0 %v139
  %v194 = vpop.f32.mrb[0].mxu0
  %v195 = vadd.f32 %v52, %v194
  %v196 = vpop.f32.mrb[0].mxu0
  %v197 = vadd.f32 %v52, %v196
  %v198 = vpop.f32.mrb[0].mxu0
  %v199 = vadd.f32 %v57, %v198
  %v200 = vpop.f32.mrb[0].mxu0
  %v201 = vadd.f32 %v57, %v200
  %202 = vmatprep.mubr.bf16.mxu0 0
  %203 = vmatmul.mubr.bf16.gmra.mrb[0].mxu0 %v142
  %v204 = vpop.f32.mrb[0].mxu0
  %v205 = vadd.f32 %v62, %v204
  %v206 = vpop.f32.mrb[0].mxu0
  %v207 = vadd.f32 %v62, %v206
  %v208 = vpop.f32.mrb[0].mxu0
  %v209 = vadd.f32 %v67, %v208
  %v210 = vpop.f32.mrb[0].mxu0
  %v211 = vadd.f32 %v67, %v210
  %212 = vmatprep.mubr.bf16.mxu0 0
  %213 = vmatmul.mubr.bf16.gmra.mrb[0].mxu0 %v145
  %v214 = vpop.f32.mrb[0].mxu0
  %v215 = vadd.f32 %v72, %v214
  %v216 = vpop.f32.mrb[0].mxu0
  %v217 = vadd.f32 %v72, %v216
  %v218 = vpop.f32.mrb[0].mxu0
  %v219 = vadd.f32 %v77, %v218
  %v220 = vpop.f32.mrb[0].mxu0
  %v221 = vadd.f32 %v77, %v220
  %222 = vmatprep.mubr.bf16.mxu0 0
  %223 = vmatmul.mubr.bf16.gmra.mrb[0].mxu0 %v148
  %v224 = vpop.f32.mrb[0].mxu0
  %v225 = vadd.f32 %v82, %v224
  %v226 = vpop.f32.mrb[0].mxu0
  %v227 = vadd.f32 %v82, %v226
  %v228 = vpop.f32.mrb[0].mxu0
  %v229 = vadd.f32 %v87, %v228
  %v230 = vpop.f32.mrb[0].mxu0
  %v231 = vadd.f32 %v87, %v230
  %232 = vdwg.mxu0
  %233 = vmatprep.subr.bf16.mxu0 %v129
  %234 = vmatpush1.bf16.msra.mxu0 %v128
  %235 = vmatprep.subr.bf16.mxu0 0
  %236 = vmatpush1.bf16.msra.mxu0 0
  %237 = vmatprep.subr.bf16.mxu0 0
  %238 = vmatpush1.bf16.msra.mxu0 0
  %239 = vmatprep.subr.bf16.mxu0 0
  %240 = vmatpush1.bf16.msra.mxu0 0
  %241 = vmatprep.subr.bf16.mxu0 0
  %242 = vmatpush1.bf16.msra.mxu0 0
  %243 = vmatprep.subr.bf16.mxu0 0
  %244 = vmatpush1.bf16.msra.mxu0 0
  %245 = vmatprep.subr.bf16.mxu0 0
  %246 = vmatpush1.bf16.msra.mxu0 0
  %247 = vmatprep.subr.bf16.mxu0 0
  %248 = vmatpush1.bf16.msra.mxu0 0
  %249 = vmatprep.subr.bf16.mxu0 0
  %250 = vmatpush1.bf16.msra.mxu0 0
  %251 = vmatprep.subr.bf16.mxu0 0
  %252 = vmatpush1.bf16.msra.mxu0 0
  %253 = vmatprep.subr.bf16.mxu0 0
  %254 = vmatpush1.bf16.msra.mxu0 0
  %255 = vmatprep.subr.bf16.mxu0 0
  %256 = vmatpush1.bf16.msra.mxu0 0
  %257 = vmatprep.subr.bf16.mxu0 0
  %258 = vmatpush1.bf16.msra.mxu0 0
  %259 = vmatprep.subr.bf16.mxu0 0
  %260 = vmatpush1.bf16.msra.mxu0 0
  %261 = vmatprep.subr.bf16.mxu0 0
  %262 = vmatpush1.bf16.msra.mxu0 0
  %263 = vmatprep.subr.bf16.mxu0 0
  %264 = vmatpush1.bf16.msra.mxu0 0
  %265 = vmatprep.mubr.bf16.mxu0 0
  %266 = vmatmul.mubr.bf16.gmra.mrb[0].mxu0 %v136
  %v267 = vpop.f32.mrb[0].mxu0
  %v268 = vadd.f32 %v42, %v267
  %v269 = vpop.f32.mrb[0].mxu0
  %v270 = vadd.f32 %v42, %v269
  %v271 = vpop.f32.mrb[0].mxu0
  %v272 = vadd.f32 %v47, %v271
  %v273 = vpop.f32.mrb[0].mxu0
  %v274 = vadd.f32 %v47, %v273
  %275 = vmatprep.mubr.bf16.mxu0 0
  %276 = vmatmul.mubr.bf16.gmra.mrb[0].mxu0 %v139
  %v277 = vpop.f32.mrb[0].mxu0
  %v278 = vadd.f32 %v52, %v277
  %v279 = vpop.f32.mrb[0].mxu0
  %v280 = vadd.f32 %v52, %v279
  %v281 = vpop.f32.mrb[0].mxu0
  %v282 = vadd.f32 %v57, %v281
  %v283 = vpop.f32.mrb[0].mxu0
  %v284 = vadd.f32 %v57, %v283
  %285 = vmatprep.mubr.bf16.mxu0 0
  %286 = vmatmul.mubr.bf16.gmra.mrb[0].mxu0 %v142
  %v287 = vpop.f32.mrb[0].mxu0
  %v288 = vadd.f32 %v62, %v287
  %v289 = vpop.f32.mrb[0].mxu0
  %v290 = vadd.f32 %v62, %v289
  %v291 = vpop.f32.mrb[0].mxu0
  %v292 = vadd.f32 %v67, %v291
  %v293 = vpop.f32.mrb[0].mxu0
  %v294 = vadd.f32 %v67, %v293
  %295 = vmatprep.mubr.bf16.mxu0 0
  %296 = vmatmul.mubr.bf16.gmra.mrb[0].mxu0 %v145
  %v297 = vpop.f32.mrb[0].mxu0
  %v298 = vadd.f32 %v72, %v297
  %v299 = vpop.f32.mrb[0].mxu0
  %v300 = vadd.f32 %v72, %v299
  %v301 = vpop.f32.mrb[0].mxu0
  %v302 = vadd.f32 %v77, %v301
  %v303 = vpop.f32.mrb[0].mxu0
  %v304 = vadd.f32 %v77, %v303
  %305 = vmatprep.mubr.bf16.mxu0 0
  %306 = vmatmul.mubr.bf16.gmra.mrb[0].mxu0 %v148
  %v307 = vpop.f32.mrb[0].mxu0
  %v308 = vadd.f32 %v82, %v307
  %v309 = vpop.f32.mrb[0].mxu0
  %v310 = vadd.f32 %v82, %v309
  %v311 = vpop.f32.mrb[0].mxu0
  %v312 = vadd.f32 %v87, %v311
  %v313 = vpop.f32.mrb[0].mxu0
  %v314 = vadd.f32 %v87, %v313
  %315 = vdwg.mxu0
  %v316 = vpack.c.bf16 %v189, %v185
  %v317 = vpack.c.bf16 %v191, %v187
  %v318 = vpack.c.bf16 %v272, %v268
  %v319 = vpack.c.bf16 %v274, %v270
  %v320 = vpack.c.bf16 %v199, %v195
  %v321 = vpack.c.bf16 %v201, %v197
  %v322 = vpack.c.bf16 %v282, %v278
  %v323 = vpack.c.bf16 %v284, %v280
  %v324 = vpack.c.bf16 %v209, %v205
  %v325 = vpack.c.bf16 %v211, %v207
  %v326 = vpack.c.bf16 %v292, %v288
  %v327 = vpack.c.bf16 %v294, %v290
  %v328 = vpack.c.bf16 %v219, %v215
  %v329 = vpack.c.bf16 %v221, %v217
  %v330 = vpack.c.bf16 %v302, %v298
  %v331 = vpack.c.bf16 %v304, %v300
  %v332 = vpack.c.bf16 %v229, %v225
  %v333 = vpack.c.bf16 %v231, %v227
  %v334 = vpack.c.bf16 %v312, %v308
  %v335 = vpack.c.bf16 %v314, %v310
  %v356 = vunpack.c.l.b16 %v316
  %v357 = vunpack.c.l.b16 %v317
  %v358 = vunpack.c.l.b16 %v318
  %v359 = vunpack.c.l.b16 %v319
  %v360 = vunpack.c.h.b16 %v316
  %v361 = vunpack.c.h.b16 %v317
  %v362 = vunpack.c.h.b16 %v318
  %v363 = vunpack.c.h.b16 %v319
  %v364 = vunpack.c.l.b16 %v320
  %v365 = vunpack.c.l.b16 %v321
  %v366 = vunpack.c.l.b16 %v322
  %v367 = vunpack.c.l.b16 %v323
  %v368 = vunpack.c.h.b16 %v320
  %v369 = vunpack.c.h.b16 %v321
  %v370 = vunpack.c.h.b16 %v322
  %v371 = vunpack.c.h.b16 %v323
  %v372 = vunpack.c.l.b16 %v324
  %v373 = vunpack.c.l.b16 %v325
  %v374 = vunpack.c.l.b16 %v326
  %v375 = vunpack.c.l.b16 %v327
  %v376 = vunpack.c.h.b16 %v324
  %v377 = vunpack.c.h.b16 %v325
  %v378 = vunpack.c.h.b16 %v326
  %v379 = vunpack.c.h.b16 %v327
  %v380 = vunpack.c.l.b16 %v328
  %v381 = vunpack.c.l.b16 %v329
  %v382 = vunpack.c.l.b16 %v330
  %v383 = vunpack.c.l.b16 %v331
  %v384 = vunpack.c.h.b16 %v328
  %v385 = vunpack.c.h.b16 %v329
  %v386 = vunpack.c.h.b16 %v330
  %v387 = vunpack.c.h.b16 %v331
  %v388 = vunpack.c.l.b16 %v332
  %v389 = vunpack.c.l.b16 %v333
  %v390 = vunpack.c.l.b16 %v334
  %v391 = vunpack.c.l.b16 %v335
  %v392 = vunpack.c.h.b16 %v332
  %v393 = vunpack.c.h.b16 %v333
  %v394 = vunpack.c.h.b16 %v334
  %v395 = vunpack.c.h.b16 %v335
  %v396 = vpack.c.b16 %v357, %v356
  %v397 = vpack.c.b16 %v359, %v358
  %v398 = vpack.c.b16 %v361, %v360
  %v399 = vpack.c.b16 %v363, %v362
  %v400 = vpack.c.b16 %v365, %v364
  %v401 = vpack.c.b16 %v367, %v366
  %v402 = vpack.c.b16 %v369, %v368
  %v403 = vpack.c.b16 %v371, %v370
  %v404 = vpack.c.b16 %v373, %v372
  %v405 = vpack.c.b16 %v375, %v374
  %v406 = vpack.c.b16 %v377, %v376
  %v407 = vpack.c.b16 %v379, %v378
  %v408 = vpack.c.b16 %v381, %v380
  %v409 = vpack.c.b16 %v383, %v382
  %v410 = vpack.c.b16 %v385, %v384
  %v411 = vpack.c.b16 %v387, %v386
  %v412 = vpack.c.b16 %v389, %v388
  %v413 = vpack.c.b16 %v391, %v390
  %v414 = vpack.c.b16 %v393, %v392
  %v415 = vpack.c.b16 %v395, %v394
  %436 = vst [vmem:[%s3] sm:$0xff] %v396
  %437 = vst [vmem:[%s3 + $0x8] sm:$0xff] %v397
  %438 = vst [vmem:[%s3 + $0x10] sm:$0xff] %v398
  %439 = vst [vmem:[%s3 + $0x18] sm:$0xff] %v399
  %440 = vst [vmem:[%s3 + $0x20] sm:$0xff] %v400
  %441 = vst [vmem:[%s3 + $0x28] sm:$0xff] %v401
  %442 = vst [vmem:[%s3 + $0x30] sm:$0xff] %v402
  %443 = vst [vmem:[%s3 + $0x38] sm:$0xff] %v403
  %444 = vst [vmem:[%s3 + $0x40] sm:$0xff] %v404
  %445 = vst [vmem:[%s3 + $0x48] sm:$0xff] %v405
  %446 = vst [vmem:[%s3 + $0x50] sm:$0xff] %v406
  %447 = vst [vmem:[%s3 + $0x58] sm:$0xff] %v407
  %448 = vst [vmem:[%s3 + $0x60] sm:$0xff] %v408
  %449 = vst [vmem:[%s3 + $0x68] sm:$0xff] %v409
  %450 = vst [vmem:[%s3 + $0x70] sm:$0xff] %v410
  %451 = vst [vmem:[%s3 + $0x78] sm:$0xff] %v411
  %452 = vst [vmem:[%s3 + $0x80] sm:$0xff] %v412
  %453 = vst [vmem:[%s3 + $0x88] sm:$0xff] %v413
  %454 = vst [vmem:[%s3 + $0x90] sm:$0xff] %v414
  %455 = vst [vmem:[%s3 + $0x98] sm:$0xff] %v415
  // Predicated region
  $region14: #{sam2unet_forward.39} parent=0 // pred_check
    _
  $region15: #{sam2unet_forward.39} parent=0 // pred_check_branch
    %457 = sbr.rel (0) target = $region17
  $region16: #{sam2unet_forward.39} parent=0 // pred_region
    _
  $region17: #{sam2unet_forward.39} parent=0 // pred_fallthru
    _
  // Predicated region
  $region18: #{sam2unet_forward.39} parent=0 // pred_check
    _
  $region19: #{sam2unet_forward.39} parent=0 // pred_check_branch
    %459 = sbr.rel (0) target = $region21
  $region20: #{sam2unet_forward.39} parent=0 // pred_region
    _
  $region21: #{sam2unet_forward.39} parent=0 // pred_fallthru
    _

// kernel: sam2unet_forward.40
$region0: #{sam2unet_forward.40}
  #allocation0 [shape = 'u32[]', space=smem, size = 0x4, offset = 0x4, fixed_abs, tag = 'smem constant byte address 0x4 - core index']
  #allocation1 [shape = 'u32[144,128]{1,0:T(1,128)}', space=vmem, size = 0x12000, scoped, tag = 'internal scratch']
  %s0 = inlined_call_operand.vmem [shape: bf16[48,240], index: 0, kind: input, shape index: {}]
  %s1 = inlined_call_operand.vmem [shape: bf16[240,512], index: 1, kind: input, shape index: {}]
  %s2 = inlined_call_operand.vmem [shape: f32[48,1], index: 2, kind: input, shape index: {}]
  %s3 = inlined_call_operand.vmem [shape: bf16[48,512], index: 3, kind: output, shape index: {}]
  %s4 = sld [smem:[#allocation0]]
  $region22: #{sam2unet_forward.40} parent=0
    _
  %s6 = ssub.s32 1, %s4
  %s7 = scalar_select 0, %s6, %s4
  // Predicated region
  $region2: #{sam2unet_forward.40} parent=0 // pred_check
    _
  $region3: #{sam2unet_forward.40} parent=0 // pred_check_branch
    %9 = sbr.rel (0) target = $region5
  $region4: #{sam2unet_forward.40} parent=0 // pred_region
    _
  $region5: #{sam2unet_forward.40} parent=0 // pred_fallthru
    _
  // Predicated region
  $region6: #{sam2unet_forward.40} parent=0 // pred_check
    _
  $region7: #{sam2unet_forward.40} parent=0 // pred_check_branch
    %11 = sbr.rel (0) target = $region9
  $region8: #{sam2unet_forward.40} parent=0 // pred_region
    _
  $region9: #{sam2unet_forward.40} parent=0 // pred_fallthru
    _
  // Predicated region
  $region10: #{sam2unet_forward.40} parent=0 // pred_check
    _
  $region11: #{sam2unet_forward.40} parent=0 // pred_check_branch
    %13 = sbr.rel (0) target = $region13
  $region12: #{sam2unet_forward.40} parent=0 // pred_region
    _
  $region13: #{sam2unet_forward.40} parent=0 // pred_fallthru
    _
  %v15 = vld [vmem:[%s0] sm:$0xff]
  %v16 = vld [vmem:[%s0 + $0x8] sm:$0xff]
  %v17 = vld [vmem:[%s0 + $0x10] sm:$0xff]
  %v18 = vld [vmem:[%s0 + $0x18] sm:$0xff]
  %v19 = vld [vmem:[%s0 + $0x20] sm:$0xff]
  %v20 = vld [vmem:[%s0 + $0x28] sm:$0xff]
  %v21 = vld [vmem:[%s1] sm:$0xff]
  %v22 = vld [vmem:[%s1 + $0x8] sm:$0xff]
  %v23 = vld [vmem:[%s1 + $0x10] sm:$0xff]
  %v24 = vld [vmem:[%s1 + $0x18] sm:$0xff]
  %v25 = vld [vmem:[%s1 + $0x20] sm:$0xff]
  %v26 = vld [vmem:[%s1 + $0x28] sm:$0xff]
  %v27 = vld [vmem:[%s1 + $0x30] sm:$0xff]
  %v28 = vld [vmem:[%s1 + $0x38] sm:$0xff]
  %v29 = vld [vmem:[%s1 + $0x40] sm:$0xff]
  %v30 = vld [vmem:[%s1 + $0x48] sm:$0xff]
  %v31 = vld [vmem:[%s1 + $0x50] sm:$0xff]
  %v32 = vld [vmem:[%s1 + $0x58] sm:$0xff]
  %v33 = vld [vmem:[%s1 + $0x60] sm:$0xff]
  %v34 = vld [vmem:[%s1 + $0x68] sm:$0xff]
  %v35 = vld [vmem:[%s1 + $0x70] sm:$0xff]
  %v36 = vld [vmem:[%s1 + $0x78] sm:$0xff]
  %v37 = vld [vmem:[%s1 + $0x80] sm:$0xff]
  %v38 = vld [vmem:[%s1 + $0x88] sm:$0xff]
  %v39 = vld [vmem:[%s1 + $0x90] sm:$0xff]
  %v40 = vld [vmem:[%s1 + $0x98] sm:$0xff]
  %v41 = vld [vmem:[%s1 + $0xa0] sm:$0xff]
  %v42 = vld [vmem:[%s1 + $0xa8] sm:$0xff]
  %v43 = vld [vmem:[%s1 + $0xb0] sm:$0xff]
  %v44 = vld [vmem:[%s1 + $0xb8] sm:$0xff]
  %v45 = vld [vmem:[%s1 + $0xc0] sm:$0xff]
  %v46 = vld [vmem:[%s1 + $0xc8] sm:$0xff]
  %v47 = vld [vmem:[%s1 + $0xd0] sm:$0xff]
  %v48 = vld [vmem:[%s1 + $0xd8] sm:$0xff]
  %v49 = vld [vmem:[%s1 + $0xe0] sm:$0xff]
  %v50 = vld [vmem:[%s1 + $0xe8] sm:$0xff]
  %v51 = vld [vmem:[%s1 + $0xf0] sm:$0xff]
  %v52 = vld [vmem:[%s1 + $0xf8] sm:$0xff]
  %v53 = vld [vmem:[%s1 + $0x100] sm:$0xff]
  %v54 = vld [vmem:[%s1 + $0x108] sm:$0xff]
  %v55 = vld [vmem:[%s1 + $0x110] sm:$0xff]
  %v56 = vld [vmem:[%s1 + $0x118] sm:$0xff]
  %v57 = vld [vmem:[%s1 + $0x120] sm:$0xff]
  %v58 = vld [vmem:[%s1 + $0x128] sm:$0xff]
  %v59 = vld [vmem:[%s1 + $0x130] sm:$0xff]
  %v60 = vld [vmem:[%s1 + $0x138] sm:$0xff]
  %v61 = vld [vmem:[%s1 + $0x140] sm:$0xff]
  %v62 = vld [vmem:[%s1 + $0x148] sm:$0xff]
  %v63 = vld [vmem:[%s1 + $0x150] sm:$0xff]
  %v64 = vld [vmem:[%s1 + $0x158] sm:$0xff]
  %v65 = vld [vmem:[%s1 + $0x160] sm:$0xff]
  %v66 = vld [vmem:[%s1 + $0x168] sm:$0xff]
  %v67 = vld [vmem:[%s1 + $0x170] sm:$0xff]
  %v68 = vld [vmem:[%s1 + $0x178] sm:$0xff]
  %v69 = vld [vmem:[%s1 + $0x180] sm:$0xff]
  %v70 = vld [vmem:[%s1 + $0x188] sm:$0xff]
  %v71 = vld [vmem:[%s1 + $0x190] sm:$0xff]
  %v72 = vld [vmem:[%s1 + $0x198] sm:$0xff]
  %v73 = vld [vmem:[%s1 + $0x1a0] sm:$0xff]
  %v74 = vld [vmem:[%s1 + $0x1a8] sm:$0xff]
  %v75 = vld [vmem:[%s1 + $0x1b0] sm:$0xff]
  %v76 = vld [vmem:[%s1 + $0x1b8] sm:$0xff]
  %v77 = vld [vmem:[%s1 + $0x1c0] sm:$0xff]
  %v78 = vld [vmem:[%s1 + $0x1c8] sm:$0xff]
  %v79 = vld [vmem:[%s1 + $0x1d0] sm:$0xff]
  %v80 = vld [vmem:[%s1 + $0x1d8] sm:$0xff]
  %v81 = vld [vmem:[%s2] sm:$0xff]
  %v82 = vld [vmem:[%s2 + $0x8] sm:$0xff]
  %v83 = vld [vmem:[%s2 + $0x10] sm:$0xff]
  %v84 = vld [vmem:[%s2 + $0x18] sm:$0xff]
  %v85 = vld [vmem:[%s2 + $0x20] sm:$0xff]
  %v86 = vld [vmem:[%s2 + $0x28] sm:$0xff]
  %88 = vset.pattern.permute.xlu0 0
  %89 = vperm.xlu0 %88, %v81
  %v90 = vpop.permute.xlu0 %89
  %93 = vset.pattern.permute.xlu0 0
  %94 = vperm.xlu0 %93, %v82
  %v95 = vpop.permute.xlu0 %94
  %98 = vset.pattern.permute.xlu0 0
  %99 = vperm.xlu0 %98, %v83
  %v100 = vpop.permute.xlu0 %99
  %103 = vset.pattern.permute.xlu0 0
  %104 = vperm.xlu0 %103, %v84
  %v105 = vpop.permute.xlu0 %104
  %108 = vset.pattern.permute.xlu0 0
  %109 = vperm.xlu0 %108, %v85
  %v110 = vpop.permute.xlu0 %109
  %113 = vset.pattern.permute.xlu0 0
  %114 = vperm.xlu0 %113, %v86
  %v115 = vpop.permute.xlu0 %114
  %v123 = vunpack.c.l.b16 %v15
  %v124 = vunpack.c.h.b16 %v15
  %v125 = vunpack.c.l.b16 %v16
  %v126 = vunpack.c.h.b16 %v16
  %v127 = vunpack.c.l.b16 %v17
  %v128 = vunpack.c.h.b16 %v17
  %v129 = vunpack.c.l.b16 %v18
  %v130 = vunpack.c.h.b16 %v18
  %v131 = vunpack.c.l.b16 %v19
  %v132 = vunpack.c.h.b16 %v19
  %v133 = vunpack.c.l.b16 %v20
  %v134 = vunpack.c.h.b16 %v20
  %v135 = vpack.c.b16 %v125, %v123
  %v136 = vpack.c.b16 %v126, %v124
  %v137 = vpack.c.b16 %v129, %v127
  %v138 = vpack.c.b16 %v130, %v128
  %v139 = vpack.c.b16 %v133, %v131
  %v140 = vpack.c.b16 %v134, %v132
  %v204 = vunpack.c.l.b16 %v21
  %v205 = vunpack.c.h.b16 %v21
  %v206 = vunpack.c.l.b16 %v22
  %v207 = vunpack.c.h.b16 %v22
  %v208 = vunpack.c.l.b16 %v23
  %v209 = vunpack.c.h.b16 %v23
  %v210 = vunpack.c.l.b16 %v24
  %v211 = vunpack.c.h.b16 %v24
  %v212 = vunpack.c.l.b16 %v25
  %v213 = vunpack.c.h.b16 %v25
  %v214 = vunpack.c.l.b16 %v26
  %v215 = vunpack.c.h.b16 %v26
  %v216 = vunpack.c.l.b16 %v27
  %v217 = vunpack.c.h.b16 %v27
  %v218 = vunpack.c.l.b16 %v28
  %v219 = vunpack.c.h.b16 %v28
  %v220 = vunpack.c.l.b16 %v29
  %v221 = vunpack.c.h.b16 %v29
  %v222 = vunpack.c.l.b16 %v30
  %v223 = vunpack.c.h.b16 %v30
  %v224 = vunpack.c.l.b16 %v31
  %v225 = vunpack.c.h.b16 %v31
  %v226 = vunpack.c.l.b16 %v32
  %v227 = vunpack.c.h.b16 %v32
  %v228 = vunpack.c.l.b16 %v33
  %v229 = vunpack.c.h.b16 %v33
  %v230 = vunpack.c.l.b16 %v34
  %v231 = vunpack.c.h.b16 %v34
  %v232 = vunpack.c.l.b16 %v35
  %v233 = vunpack.c.h.b16 %v35
  %v234 = vunpack.c.l.b16 %v36
  %v235 = vunpack.c.h.b16 %v36
  %v236 = vunpack.c.l.b16 %v37
  %v237 = vunpack.c.h.b16 %v37
  %v238 = vunpack.c.l.b16 %v38
  %v239 = vunpack.c.h.b16 %v38
  %v240 = vunpack.c.l.b16 %v39
  %v241 = vunpack.c.h.b16 %v39
  %v242 = vunpack.c.l.b16 %v40
  %v243 = vunpack.c.h.b16 %v40
  %v244 = vunpack.c.l.b16 %v41
  %v245 = vunpack.c.h.b16 %v41
  %v246 = vunpack.c.l.b16 %v42
  %v247 = vunpack.c.h.b16 %v42
  %v248 = vunpack.c.l.b16 %v43
  %v249 = vunpack.c.h.b16 %v43
  %v250 = vunpack.c.l.b16 %v44
  %v251 = vunpack.c.h.b16 %v44
  %v252 = vunpack.c.l.b16 %v45
  %v253 = vunpack.c.h.b16 %v45
  %v254 = vunpack.c.l.b16 %v46
  %v255 = vunpack.c.h.b16 %v46
  %v256 = vunpack.c.l.b16 %v47
  %v257 = vunpack.c.h.b16 %v47
  %v258 = vunpack.c.l.b16 %v48
  %v259 = vunpack.c.h.b16 %v48
  %v260 = vunpack.c.l.b16 %v49
  %v261 = vunpack.c.h.b16 %v49
  %v262 = vunpack.c.l.b16 %v50
  %v263 = vunpack.c.h.b16 %v50
  %v264 = vunpack.c.l.b16 %v51
  %v265 = vunpack.c.h.b16 %v51
  %v266 = vunpack.c.l.b16 %v52
  %v267 = vunpack.c.h.b16 %v52
  %v268 = vunpack.c.l.b16 %v53
  %v269 = vunpack.c.h.b16 %v53
  %v270 = vunpack.c.l.b16 %v54
  %v271 = vunpack.c.h.b16 %v54
  %v272 = vunpack.c.l.b16 %v55
  %v273 = vunpack.c.h.b16 %v55
  %v274 = vunpack.c.l.b16 %v56
  %v275 = vunpack.c.h.b16 %v56
  %v276 = vunpack.c.l.b16 %v57
  %v277 = vunpack.c.h.b16 %v57
  %v278 = vunpack.c.l.b16 %v58
  %v279 = vunpack.c.h.b16 %v58
  %v280 = vunpack.c.l.b16 %v59
  %v281 = vunpack.c.h.b16 %v59
  %v282 = vunpack.c.l.b16 %v60
  %v283 = vunpack.c.h.b16 %v60
  %v284 = vunpack.c.l.b16 %v61
  %v285 = vunpack.c.h.b16 %v61
  %v286 = vunpack.c.l.b16 %v62
  %v287 = vunpack.c.h.b16 %v62
  %v288 = vunpack.c.l.b16 %v63
  %v289 = vunpack.c.h.b16 %v63
  %v290 = vunpack.c.l.b16 %v64
  %v291 = vunpack.c.h.b16 %v64
  %v292 = vunpack.c.l.b16 %v65
  %v293 = vunpack.c.h.b16 %v65
  %v294 = vunpack.c.l.b16 %v66
  %v295 = vunpack.c.h.b16 %v66
  %v296 = vunpack.c.l.b16 %v67
  %v297 = vunpack.c.h.b16 %v67
  %v298 = vunpack.c.l.b16 %v68
  %v299 = vunpack.c.h.b16 %v68
  %v300 = vunpack.c.l.b16 %v69
  %v301 = vunpack.c.h.b16 %v69
  %v302 = vunpack.c.l.b16 %v70
  %v303 = vunpack.c.h.b16 %v70
  %v304 = vunpack.c.l.b16 %v71
  %v305 = vunpack.c.h.b16 %v71
  %v306 = vunpack.c.l.b16 %v72
  %v307 = vunpack.c.h.b16 %v72
  %v308 = vunpack.c.l.b16 %v73
  %v309 = vunpack.c.h.b16 %v73
  %v310 = vunpack.c.l.b16 %v74
  %v311 = vunpack.c.h.b16 %v74
  %v312 = vunpack.c.l.b16 %v75
  %v313 = vunpack.c.h.b16 %v75
  %v314 = vunpack.c.l.b16 %v76
  %v315 = vunpack.c.h.b16 %v76
  %v316 = vunpack.c.l.b16 %v77
  %v317 = vunpack.c.h.b16 %v77
  %v318 = vunpack.c.l.b16 %v78
  %v319 = vunpack.c.h.b16 %v78
  %v320 = vunpack.c.l.b16 %v79
  %v321 = vunpack.c.h.b16 %v79
  %v322 = vunpack.c.l.b16 %v80
  %v323 = vunpack.c.h.b16 %v80
  %v324 = vpack.c.b16 %v208, %v204
  %v325 = vpack.c.b16 %v209, %v205
  %v326 = vpack.c.b16 %v210, %v206
  %v327 = vpack.c.b16 %v211, %v207
  %v328 = vpack.c.b16 %v216, %v212
  %v329 = vpack.c.b16 %v217, %v213
  %v330 = vpack.c.b16 %v218, %v214
  %v331 = vpack.c.b16 %v219, %v215
  %v332 = vpack.c.b16 %v224, %v220
  %v333 = vpack.c.b16 %v225, %v221
  %v334 = vpack.c.b16 %v226, %v222
  %v335 = vpack.c.b16 %v227, %v223
  %v336 = vpack.c.b16 %v232, %v228
  %v337 = vpack.c.b16 %v233, %v229
  %v338 = vpack.c.b16 %v234, %v230
  %v339 = vpack.c.b16 %v235, %v231
  %v340 = vpack.c.b16 %v240, %v236
  %v341 = vpack.c.b16 %v241, %v237
  %v342 = vpack.c.b16 %v242, %v238
  %v343 = vpack.c.b16 %v243, %v239
  %v344 = vpack.c.b16 %v248, %v244
  %v345 = vpack.c.b16 %v249, %v245
  %v346 = vpack.c.b16 %v250, %v246
  %v347 = vpack.c.b16 %v251, %v247
  %v348 = vpack.c.b16 %v256, %v252
  %v349 = vpack.c.b16 %v257, %v253
  %v350 = vpack.c.b16 %v258, %v254
  %v351 = vpack.c.b16 %v259, %v255
  %v352 = vpack.c.b16 %v264, %v260
  %v353 = vpack.c.b16 %v265, %v261
  %v354 = vpack.c.b16 %v266, %v262
  %v355 = vpack.c.b16 %v267, %v263
  %v356 = vpack.c.b16 %v272, %v268
  %v357 = vpack.c.b16 %v273, %v269
  %v358 = vpack.c.b16 %v274, %v270
  %v359 = vpack.c.b16 %v275, %v271
  %v360 = vpack.c.b16 %v280, %v276
  %v361 = vpack.c.b16 %v281, %v277
  %v362 = vpack.c.b16 %v282, %v278
  %v363 = vpack.c.b16 %v283, %v279
  %v364 = vpack.c.b16 %v288, %v284
  %v365 = vpack.c.b16 %v289, %v285
  %v366 = vpack.c.b16 %v290, %v286
  %v367 = vpack.c.b16 %v291, %v287
  %v368 = vpack.c.b16 %v296, %v292
  %v369 = vpack.c.b16 %v297, %v293
  %v370 = vpack.c.b16 %v298, %v294
  %v371 = vpack.c.b16 %v299, %v295
  %v372 = vpack.c.b16 %v304, %v300
  %v373 = vpack.c.b16 %v305, %v301
  %v374 = vpack.c.b16 %v306, %v302
  %v375 = vpack.c.b16 %v307, %v303
  %v376 = vpack.c.b16 %v312, %v308
  %v377 = vpack.c.b16 %v313, %v309
  %v378 = vpack.c.b16 %v314, %v310
  %v379 = vpack.c.b16 %v315, %v311
  %v380 = vpack.c.b16 %v320, %v316
  %v381 = vpack.c.b16 %v321, %v317
  %v382 = vpack.c.b16 %v322, %v318
  %v383 = vpack.c.b16 %v323, %v319
  %vm444 = vcmask 916480
  %v446 = vsel %vm444, %v136, 0
  %v449 = vsel %vm444, %v138, 0
  %v452 = vsel %vm444, %v140, 0
  %454 = vmatprep.subr.bf16.mxu0 %v325
  %455 = vmatpush1.bf16.msra.mxu0 %v324
  %456 = vmatprep.subr.bf16.mxu0 %v329
  %457 = vmatpush1.bf16.msra.mxu0 %v328
  %458 = vmatprep.subr.bf16.mxu0 %v333
  %459 = vmatpush1.bf16.msra.mxu0 %v332
  %460 = vmatprep.subr.bf16.mxu0 %v337
  %461 = vmatpush1.bf16.msra.mxu0 %v336
  %462 = vmatprep.subr.bf16.mxu0 %v341
  %463 = vmatpush1.bf16.msra.mxu0 %v340
  %464 = vmatprep.subr.bf16.mxu0 %v345
  %465 = vmatpush1.bf16.msra.mxu0 %v344
  %466 = vmatprep.subr.bf16.mxu0 %v349
  %467 = vmatpush1.bf16.msra.mxu0 %v348
  %468 = vmatprep.subr.bf16.mxu0 %v353
  %469 = vmatpush1.bf16.msra.mxu0 %v352
  %470 = vmatprep.subr.bf16.mxu0 %v357
  %471 = vmatpush1.bf16.msra.mxu0 %v356
  %472 = vmatprep.subr.bf16.mxu0 %v361
  %473 = vmatpush1.bf16.msra.mxu0 %v360
  %474 = vmatprep.subr.bf16.mxu0 %v365
  %475 = vmatpush1.bf16.msra.mxu0 %v364
  %476 = vmatprep.subr.bf16.mxu0 %v369
  %477 = vmatpush1.bf16.msra.mxu0 %v368
  %478 = vmatprep.subr.bf16.mxu0 %v373
  %479 = vmatpush1.bf16.msra.mxu0 %v372
  %480 = vmatprep.subr.bf16.mxu0 %v377
  %481 = vmatpush1.bf16.msra.mxu0 %v376
  %482 = vmatprep.subr.bf16.mxu0 %v381
  %483 = vmatpush1.bf16.msra.mxu0 %v380
  %484 = vmatprep.subr.bf16.mxu0 0
  %485 = vmatpush1.bf16.msra.mxu0 0
  %486 = vmatprep.mubr.bf16.mxu0 %v446
  %487 = vmatmul.mubr.bf16.gmra.mrb[0].mxu0 %v135
  %v488 = vpop.f32.mrb[0].mxu0
  %v489 = vadd.f32 %v90, %v488
  %v490 = vpop.f32.mrb[0].mxu0
  %v491 = vadd.f32 %v90, %v490
  %v492 = vpop.f32.mrb[0].mxu0
  %v493 = vadd.f32 %v95, %v492
  %v494 = vpop.f32.mrb[0].mxu0
  %v495 = vadd.f32 %v95, %v494
  %496 = vmatprep.mubr.bf16.mxu0 %v449
  %497 = vmatmul.mubr.bf16.gmra.mrb[0].mxu0 %v137
  %v498 = vpop.f32.mrb[0].mxu0
  %v499 = vadd.f32 %v100, %v498
  %v500 = vpop.f32.mrb[0].mxu0
  %v501 = vadd.f32 %v100, %v500
  %v502 = vpop.f32.mrb[0].mxu0
  %v503 = vadd.f32 %v105, %v502
  %v504 = vpop.f32.mrb[0].mxu0
  %v505 = vadd.f32 %v105, %v504
  %506 = vmatprep.mubr.bf16.mxu0 %v452
  %507 = vmatmul.mubr.bf16.gmra.mrb[0].mxu0 %v139
  %v508 = vpop.f32.mrb[0].mxu0
  %v509 = vadd.f32 %v110, %v508
  %v510 = vpop.f32.mrb[0].mxu0
  %v511 = vadd.f32 %v110, %v510
  %v512 = vpop.f32.mrb[0].mxu0
  %v513 = vadd.f32 %v115, %v512
  %v514 = vpop.f32.mrb[0].mxu0
  %v515 = vadd.f32 %v115, %v514
  %516 = vdwg.mxu0
  %517 = vmatprep.subr.bf16.mxu0 %v327
  %518 = vmatpush1.bf16.msra.mxu0 %v326
  %519 = vmatprep.subr.bf16.mxu0 %v331
  %520 = vmatpush1.bf16.msra.mxu0 %v330
  %521 = vmatprep.subr.bf16.mxu0 %v335
  %522 = vmatpush1.bf16.msra.mxu0 %v334
  %523 = vmatprep.subr.bf16.mxu0 %v339
  %524 = vmatpush1.bf16.msra.mxu0 %v338
  %525 = vmatprep.subr.bf16.mxu0 %v343
  %526 = vmatpush1.bf16.msra.mxu0 %v342
  %527 = vmatprep.subr.bf16.mxu0 %v347
  %528 = vmatpush1.bf16.msra.mxu0 %v346
  %529 = vmatprep.subr.bf16.mxu0 %v351
  %530 = vmatpush1.bf16.msra.mxu0 %v350
  %531 = vmatprep.subr.bf16.mxu0 %v355
  %532 = vmatpush1.bf16.msra.mxu0 %v354
  %533 = vmatprep.subr.bf16.mxu0 %v359
  %534 = vmatpush1.bf16.msra.mxu0 %v358
  %535 = vmatprep.subr.bf16.mxu0 %v363
  %536 = vmatpush1.bf16.msra.mxu0 %v362
  %537 = vmatprep.subr.bf16.mxu0 %v367
  %538 = vmatpush1.bf16.msra.mxu0 %v366
  %539 = vmatprep.subr.bf16.mxu0 %v371
  %540 = vmatpush1.bf16.msra.mxu0 %v370
  %541 = vmatprep.subr.bf16.mxu0 %v375
  %542 = vmatpush1.bf16.msra.mxu0 %v374
  %543 = vmatprep.subr.bf16.mxu0 %v379
  %544 = vmatpush1.bf16.msra.mxu0 %v378
  %545 = vmatprep.subr.bf16.mxu0 %v383
  %546 = vmatpush1.bf16.msra.mxu0 %v382
  %547 = vmatprep.subr.bf16.mxu0 0
  %548 = vmatpush1.bf16.msra.mxu0 0
  %549 = vmatprep.mubr.bf16.mxu0 %v446
  %550 = vmatmul.mubr.bf16.gmra.mrb[0].mxu0 %v135
  %v551 = vpop.f32.mrb[0].mxu0
  %v552 = vadd.f32 %v90, %v551
  %v553 = vpop.f32.mrb[0].mxu0
  %v554 = vadd.f32 %v90, %v553
  %v555 = vpop.f32.mrb[0].mxu0
  %v556 = vadd.f32 %v95, %v555
  %v557 = vpop.f32.mrb[0].mxu0
  %v558 = vadd.f32 %v95, %v557
  %559 = vmatprep.mubr.bf16.mxu0 %v449
  %560 = vmatmul.mubr.bf16.gmra.mrb[0].mxu0 %v137
  %v561 = vpop.f32.mrb[0].mxu0
  %v562 = vadd.f32 %v100, %v561
  %v563 = vpop.f32.mrb[0].mxu0
  %v564 = vadd.f32 %v100, %v563
  %v565 = vpop.f32.mrb[0].mxu0
  %v566 = vadd.f32 %v105, %v565
  %v567 = vpop.f32.mrb[0].mxu0
  %v568 = vadd.f32 %v105, %v567
  %569 = vmatprep.mubr.bf16.mxu0 %v452
  %570 = vmatmul.mubr.bf16.gmra.mrb[0].mxu0 %v139
  %v571 = vpop.f32.mrb[0].mxu0
  %v572 = vadd.f32 %v110, %v571
  %v573 = vpop.f32.mrb[0].mxu0
  %v574 = vadd.f32 %v110, %v573
  %v575 = vpop.f32.mrb[0].mxu0
  %v576 = vadd.f32 %v115, %v575
  %v577 = vpop.f32.mrb[0].mxu0
  %v578 = vadd.f32 %v115, %v577
  %579 = vdwg.mxu0
  %v580 = vpack.c.bf16 %v493, %v489
  %v581 = vpack.c.bf16 %v495, %v491
  %v582 = vpack.c.bf16 %v556, %v552
  %v583 = vpack.c.bf16 %v558, %v554
  %v584 = vpack.c.bf16 %v503, %v499
  %v585 = vpack.c.bf16 %v505, %v501
  %v586 = vpack.c.bf16 %v566, %v562
  %v587 = vpack.c.bf16 %v568, %v564
  %v588 = vpack.c.bf16 %v513, %v509
  %v589 = vpack.c.bf16 %v515, %v511
  %v590 = vpack.c.bf16 %v576, %v572
  %v591 = vpack.c.bf16 %v578, %v574
  %v604 = vunpack.c.l.b16 %v580
  %v605 = vunpack.c.l.b16 %v581
  %v606 = vunpack.c.l.b16 %v582
  %v607 = vunpack.c.l.b16 %v583
  %v608 = vunpack.c.h.b16 %v580
  %v609 = vunpack.c.h.b16 %v581
  %v610 = vunpack.c.h.b16 %v582
  %v611 = vunpack.c.h.b16 %v583
  %v612 = vunpack.c.l.b16 %v584
  %v613 = vunpack.c.l.b16 %v585
  %v614 = vunpack.c.l.b16 %v586
  %v615 = vunpack.c.l.b16 %v587
  %v616 = vunpack.c.h.b16 %v584
  %v617 = vunpack.c.h.b16 %v585
  %v618 = vunpack.c.h.b16 %v586
  %v619 = vunpack.c.h.b16 %v587
  %v620 = vunpack.c.l.b16 %v588
  %v621 = vunpack.c.l.b16 %v589
  %v622 = vunpack.c.l.b16 %v590
  %v623 = vunpack.c.l.b16 %v591
  %v624 = vunpack.c.h.b16 %v588
  %v625 = vunpack.c.h.b16 %v589
  %v626 = vunpack.c.h.b16 %v590
  %v627 = vunpack.c.h.b16 %v591
  %v628 = vpack.c.b16 %v605, %v604
  %v629 = vpack.c.b16 %v607, %v606
  %v630 = vpack.c.b16 %v609, %v608
  %v631 = vpack.c.b16 %v611, %v610
  %v632 = vpack.c.b16 %v613, %v612
  %v633 = vpack.c.b16 %v615, %v614
  %v634 = vpack.c.b16 %v617, %v616
  %v635 = vpack.c.b16 %v619, %v618
  %v636 = vpack.c.b16 %v621, %v620
  %v637 = vpack.c.b16 %v623, %v622
  %v638 = vpack.c.b16 %v625, %v624
  %v639 = vpack.c.b16 %v627, %v626
  %652 = vst [vmem:[%s3] sm:$0xff] %v628
  %653 = vst [vmem:[%s3 + $0x8] sm:$0xff] %v629
  %654 = vst [vmem:[%s3 + $0x10] sm:$0xff] %v630
  %655 = vst [vmem:[%s3 + $0x18] sm:$0xff] %v631
  %656 = vst [vmem:[%s3 + $0x20] sm:$0xff] %v632
  %657 = vst [vmem:[%s3 + $0x28] sm:$0xff] %v633
  %658 = vst [vmem:[%s3 + $0x30] sm:$0xff] %v634
  %659 = vst [vmem:[%s3 + $0x38] sm:$0xff] %v635
  %660 = vst [vmem:[%s3 + $0x40] sm:$0xff] %v636
  %661 = vst [vmem:[%s3 + $0x48] sm:$0xff] %v637
  %662 = vst [vmem:[%s3 + $0x50] sm:$0xff] %v638
  %663 = vst [vmem:[%s3 + $0x58] sm:$0xff] %v639
  // Predicated region
  $region14: #{sam2unet_forward.40} parent=0 // pred_check
    _
  $region15: #{sam2unet_forward.40} parent=0 // pred_check_branch
    %665 = sbr.rel (0) target = $region17
  $region16: #{sam2unet_forward.40} parent=0 // pred_region
    _
  $region17: #{sam2unet_forward.40} parent=0 // pred_fallthru
    _
  // Predicated region
  $region18: #{sam2unet_forward.40} parent=0 // pred_check
    _
  $region19: #{sam2unet_forward.40} parent=0 // pred_check_branch
    %667 = sbr.rel (0) target = $region21
  $region20: #{sam2unet_forward.40} parent=0 // pred_region
    _
  $region21: #{sam2unet_forward.40} parent=0 // pred_fallthru
    _

// kernel: sam2unet_forward.42
$region0: #{sam2unet_forward.42}
  #allocation0 [shape = 'u32[]', space=smem, size = 0x4, offset = 0x4, fixed_abs, tag = 'smem constant byte address 0x4 - core index']
  #allocation1 [shape = 'u32[144,128]{1,0:T(1,128)}', space=vmem, size = 0x12000, scoped, tag = 'internal scratch']
  %s0 = inlined_call_operand.vmem [shape: bf16[48,432], index: 0, kind: input, shape index: {}]
  %s1 = inlined_call_operand.vmem [shape: bf16[432,512], index: 1, kind: input, shape index: {}]
  %s2 = inlined_call_operand.vmem [shape: f32[48,1], index: 2, kind: input, shape index: {}]
  %s3 = inlined_call_operand.vmem [shape: bf16[48,512], index: 3, kind: output, shape index: {}]
  %s4 = sld [smem:[#allocation0]]
  $region22: #{sam2unet_forward.42} parent=0
    _
  %s6 = ssub.s32 1, %s4
  %s7 = scalar_select 0, %s6, %s4
  // Predicated region
  $region2: #{sam2unet_forward.42} parent=0 // pred_check
    _
  $region3: #{sam2unet_forward.42} parent=0 // pred_check_branch
    %9 = sbr.rel (0) target = $region5
  $region4: #{sam2unet_forward.42} parent=0 // pred_region
    _
  $region5: #{sam2unet_forward.42} parent=0 // pred_fallthru
    _
  // Predicated region
  $region6: #{sam2unet_forward.42} parent=0 // pred_check
    _
  $region7: #{sam2unet_forward.42} parent=0 // pred_check_branch
    %11 = sbr.rel (0) target = $region9
  $region8: #{sam2unet_forward.42} parent=0 // pred_region
    _
  $region9: #{sam2unet_forward.42} parent=0 // pred_fallthru
    _
  // Predicated region
  $region10: #{sam2unet_forward.42} parent=0 // pred_check
    _
  $region11: #{sam2unet_forward.42} parent=0 // pred_check_branch
    %13 = sbr.rel (0) target = $region13
  $region12: #{sam2unet_forward.42} parent=0 // pred_region
    _
  $region13: #{sam2unet_forward.42} parent=0 // pred_fallthru
    _
  %v15 = vld [vmem:[%s0] sm:$0xff]
  %v16 = vld [vmem:[%s0 + $0x8] sm:$0xff]
  %v17 = vld [vmem:[%s0 + $0x10] sm:$0xff]
  %v18 = vld [vmem:[%s0 + $0x18] sm:$0xff]
  %v19 = vld [vmem:[%s0 + $0x20] sm:$0xff]
  %v20 = vld [vmem:[%s0 + $0x28] sm:$0xff]
  %v21 = vld [vmem:[%s0 + $0x30] sm:$0xff]
  %v22 = vld [vmem:[%s0 + $0x38] sm:$0xff]
  %v23 = vld [vmem:[%s0 + $0x40] sm:$0xff]
  %v24 = vld [vmem:[%s0 + $0x48] sm:$0xff]
  %v25 = vld [vmem:[%s0 + $0x50] sm:$0xff]
  %v26 = vld [vmem:[%s0 + $0x58] sm:$0xff]
  %v27 = vld [vmem:[%s1] sm:$0xff]
  %v28 = vld [vmem:[%s1 + $0x8] sm:$0xff]
  %v29 = vld [vmem:[%s1 + $0x10] sm:$0xff]
  %v30 = vld [vmem:[%s1 + $0x18] sm:$0xff]
  %v31 = vld [vmem:[%s1 + $0x20] sm:$0xff]
  %v32 = vld [vmem:[%s1 + $0x28] sm:$0xff]
  %v33 = vld [vmem:[%s1 + $0x30] sm:$0xff]
  %v34 = vld [vmem:[%s1 + $0x38] sm:$0xff]
  %v35 = vld [vmem:[%s1 + $0x40] sm:$0xff]
  %v36 = vld [vmem:[%s1 + $0x48] sm:$0xff]
  %v37 = vld [vmem:[%s1 + $0x50] sm:$0xff]
  %v38 = vld [vmem:[%s1 + $0x58] sm:$0xff]
  %v39 = vld [vmem:[%s1 + $0x60] sm:$0xff]
  %v40 = vld [vmem:[%s1 + $0x68] sm:$0xff]
  %v41 = vld [vmem:[%s1 + $0x70] sm:$0xff]
  %v42 = vld [vmem:[%s1 + $0x78] sm:$0xff]
  %v43 = vld [vmem:[%s1 + $0x80] sm:$0xff]
  %v44 = vld [vmem:[%s1 + $0x88] sm:$0xff]
  %v45 = vld [vmem:[%s1 + $0x90] sm:$0xff]
  %v46 = vld [vmem:[%s1 + $0x98] sm:$0xff]
  %v47 = vld [vmem:[%s1 + $0xa0] sm:$0xff]
  %v48 = vld [vmem:[%s1 + $0xa8] sm:$0xff]
  %v49 = vld [vmem:[%s1 + $0xb0] sm:$0xff]
  %v50 = vld [vmem:[%s1 + $0xb8] sm:$0xff]
  %v51 = vld [vmem:[%s1 + $0xc0] sm:$0xff]
  %v52 = vld [vmem:[%s1 + $0xc8] sm:$0xff]
  %v53 = vld [vmem:[%s1 + $0xd0] sm:$0xff]
  %v54 = vld [vmem:[%s1 + $0xd8] sm:$0xff]
  %v55 = vld [vmem:[%s1 + $0xe0] sm:$0xff]
  %v56 = vld [vmem:[%s1 + $0xe8] sm:$0xff]
  %v57 = vld [vmem:[%s1 + $0xf0] sm:$0xff]
  %v58 = vld [vmem:[%s1 + $0xf8] sm:$0xff]
  %v59 = vld [vmem:[%s1 + $0x100] sm:$0xff]
  %v60 = vld [vmem:[%s1 + $0x108] sm:$0xff]
  %v61 = vld [vmem:[%s1 + $0x110] sm:$0xff]
  %v62 = vld [vmem:[%s1 + $0x118] sm:$0xff]
  %v63 = vld [vmem:[%s1 + $0x120] sm:$0xff]
  %v64 = vld [vmem:[%s1 + $0x128] sm:$0xff]
  %v65 = vld [vmem:[%s1 + $0x130] sm:$0xff]
  %v66 = vld [vmem:[%s1 + $0x138] sm:$0xff]
  %v67 = vld [vmem:[%s1 + $0x140] sm:$0xff]
  %v68 = vld [vmem:[%s1 + $0x148] sm:$0xff]
  %v69 = vld [vmem:[%s1 + $0x150] sm:$0xff]
  %v70 = vld [vmem:[%s1 + $0x158] sm:$0xff]
  %v71 = vld [vmem:[%s1 + $0x160] sm:$0xff]
  %v72 = vld [vmem:[%s1 + $0x168] sm:$0xff]
  %v73 = vld [vmem:[%s1 + $0x170] sm:$0xff]
  %v74 = vld [vmem:[%s1 + $0x178] sm:$0xff]
  %v75 = vld [vmem:[%s1 + $0x180] sm:$0xff]
  %v76 = vld [vmem:[%s1 + $0x188] sm:$0xff]
  %v77 = vld [vmem:[%s1 + $0x190] sm:$0xff]
  %v78 = vld [vmem:[%s1 + $0x198] sm:$0xff]
  %v79 = vld [vmem:[%s1 + $0x1a0] sm:$0xff]
  %v80 = vld [vmem:[%s1 + $0x1a8] sm:$0xff]
  %v81 = vld [vmem:[%s1 + $0x1b0] sm:$0xff]
  %v82 = vld [vmem:[%s1 + $0x1b8] sm:$0xff]
  %v83 = vld [vmem:[%s1 + $0x1c0] sm:$0xff]
  %v84 = vld [vmem:[%s1 + $0x1c8] sm:$0xff]
  %v85 = vld [vmem:[%s1 + $0x1d0] sm:$0xff]
  %v86 = vld [vmem:[%s1 + $0x1d8] sm:$0xff]
  %v87 = vld [vmem:[%s1 + $0x1e0] sm:$0xff]
  %v88 = vld [vmem:[%s1 + $0x1e8] sm:$0xff]
  %v89 = vld [vmem:[%s1 + $0x1f0] sm:$0xff]
  %v90 = vld [vmem:[%s1 + $0x1f8] sm:$0xff]
  %v91 = vld [vmem:[%s1 + $0x200] sm:$0xff]
  %v92 = vld [vmem:[%s1 + $0x208] sm:$0xff]
  %v93 = vld [vmem:[%s1 + $0x210] sm:$0xff]
  %v94 = vld [vmem:[%s1 + $0x218] sm:$0xff]
  %v95 = vld [vmem:[%s1 + $0x220] sm:$0xff]
  %v96 = vld [vmem:[%s1 + $0x228] sm:$0xff]
  %v97 = vld [vmem:[%s1 + $0x230] sm:$0xff]
  %v98 = vld [vmem:[%s1 + $0x238] sm:$0xff]
  %v99 = vld [vmem:[%s1 + $0x240] sm:$0xff]
  %v100 = vld [vmem:[%s1 + $0x248] sm:$0xff]
  %v101 = vld [vmem:[%s1 + $0x250] sm:$0xff]
  %v102 = vld [vmem:[%s1 + $0x258] sm:$0xff]
  %v103 = vld [vmem:[%s1 + $0x260] sm:$0xff]
  %v104 = vld [vmem:[%s1 + $0x268] sm:$0xff]
  %v105 = vld [vmem:[%s1 + $0x270] sm:$0xff]
  %v106 = vld [vmem:[%s1 + $0x278] sm:$0xff]
  %v107 = vld [vmem:[%s1 + $0x280] sm:$0xff]
  %v108 = vld [vmem:[%s1 + $0x288] sm:$0xff]
  %v109 = vld [vmem:[%s1 + $0x290] sm:$0xff]
  %v110 = vld [vmem:[%s1 + $0x298] sm:$0xff]
  %v111 = vld [vmem:[%s1 + $0x2a0] sm:$0xff]
  %v112 = vld [vmem:[%s1 + $0x2a8] sm:$0xff]
  %v113 = vld [vmem:[%s1 + $0x2b0] sm:$0xff]
  %v114 = vld [vmem:[%s1 + $0x2b8] sm:$0xff]
  %v115 = vld [vmem:[%s1 + $0x2c0] sm:$0xff]
  %v116 = vld [vmem:[%s1 + $0x2c8] sm:$0xff]
  %v117 = vld [vmem:[%s1 + $0x2d0] sm:$0xff]
  %v118 = vld [vmem:[%s1 + $0x2d8] sm:$0xff]
  %v119 = vld [vmem:[%s1 + $0x2e0] sm:$0xff]
  %v120 = vld [vmem:[%s1 + $0x2e8] sm:$0xff]
  %v121 = vld [vmem:[%s1 + $0x2f0] sm:$0xff]
  %v122 = vld [vmem:[%s1 + $0x2f8] sm:$0xff]
  %v123 = vld [vmem:[%s1 + $0x300] sm:$0xff]
  %v124 = vld [vmem:[%s1 + $0x308] sm:$0xff]
  %v125 = vld [vmem:[%s1 + $0x310] sm:$0xff]
  %v126 = vld [vmem:[%s1 + $0x318] sm:$0xff]
  %v127 = vld [vmem:[%s1 + $0x320] sm:$0xff]
  %v128 = vld [vmem:[%s1 + $0x328] sm:$0xff]
  %v129 = vld [vmem:[%s1 + $0x330] sm:$0xff]
  %v130 = vld [vmem:[%s1 + $0x338] sm:$0xff]
  %v131 = vld [vmem:[%s1 + $0x340] sm:$0xff]
  %v132 = vld [vmem:[%s1 + $0x348] sm:$0xff]
  %v133 = vld [vmem:[%s1 + $0x350] sm:$0xff]
  %v134 = vld [vmem:[%s1 + $0x358] sm:$0xff]
  %v135 = vld [vmem:[%s2] sm:$0xff]
  %v136 = vld [vmem:[%s2 + $0x8] sm:$0xff]
  %v137 = vld [vmem:[%s2 + $0x10] sm:$0xff]
  %v138 = vld [vmem:[%s2 + $0x18] sm:$0xff]
  %v139 = vld [vmem:[%s2 + $0x20] sm:$0xff]
  %v140 = vld [vmem:[%s2 + $0x28] sm:$0xff]
  %142 = vset.pattern.permute.xlu0 0
  %143 = vperm.xlu0 %142, %v135
  %v144 = vpop.permute.xlu0 %143
  %147 = vset.pattern.permute.xlu0 0
  %148 = vperm.xlu0 %147, %v136
  %v149 = vpop.permute.xlu0 %148
  %152 = vset.pattern.permute.xlu0 0
  %153 = vperm.xlu0 %152, %v137
  %v154 = vpop.permute.xlu0 %153
  %157 = vset.pattern.permute.xlu0 0
  %158 = vperm.xlu0 %157, %v138
  %v159 = vpop.permute.xlu0 %158
  %162 = vset.pattern.permute.xlu0 0
  %163 = vperm.xlu0 %162, %v139
  %v164 = vpop.permute.xlu0 %163
  %167 = vset.pattern.permute.xlu0 0
  %168 = vperm.xlu0 %167, %v140
  %v169 = vpop.permute.xlu0 %168
  %v183 = vunpack.c.l.b16 %v15
  %v184 = vunpack.c.h.b16 %v15
  %v185 = vunpack.c.l.b16 %v16
  %v186 = vunpack.c.h.b16 %v16
  %v187 = vunpack.c.l.b16 %v17
  %v188 = vunpack.c.h.b16 %v17
  %v189 = vunpack.c.l.b16 %v18
  %v190 = vunpack.c.h.b16 %v18
  %v191 = vunpack.c.l.b16 %v19
  %v192 = vunpack.c.h.b16 %v19
  %v193 = vunpack.c.l.b16 %v20
  %v194 = vunpack.c.h.b16 %v20
  %v195 = vunpack.c.l.b16 %v21
  %v196 = vunpack.c.h.b16 %v21
  %v197 = vunpack.c.l.b16 %v22
  %v198 = vunpack.c.h.b16 %v22
  %v199 = vunpack.c.l.b16 %v23
  %v200 = vunpack.c.h.b16 %v23
  %v201 = vunpack.c.l.b16 %v24
  %v202 = vunpack.c.h.b16 %v24
  %v203 = vunpack.c.l.b16 %v25
  %v204 = vunpack.c.h.b16 %v25
  %v205 = vunpack.c.l.b16 %v26
  %v206 = vunpack.c.h.b16 %v26
  %v207 = vpack.c.b16 %v187, %v183
  %v208 = vpack.c.b16 %v188, %v184
  %v209 = vpack.c.b16 %v189, %v185
  %v210 = vpack.c.b16 %v190, %v186
  %v211 = vpack.c.b16 %v195, %v191
  %v212 = vpack.c.b16 %v196, %v192
  %v213 = vpack.c.b16 %v197, %v193
  %v214 = vpack.c.b16 %v198, %v194
  %v215 = vpack.c.b16 %v203, %v199
  %v216 = vpack.c.b16 %v204, %v200
  %v217 = vpack.c.b16 %v205, %v201
  %v218 = vpack.c.b16 %v206, %v202
  %v336 = vunpack.c.l.b16 %v27
  %v337 = vunpack.c.h.b16 %v27
  %v338 = vunpack.c.l.b16 %v28
  %v339 = vunpack.c.h.b16 %v28
  %v340 = vunpack.c.l.b16 %v29
  %v341 = vunpack.c.h.b16 %v29
  %v342 = vunpack.c.l.b16 %v30
  %v343 = vunpack.c.h.b16 %v30
  %v344 = vunpack.c.l.b16 %v31
  %v345 = vunpack.c.h.b16 %v31
  %v346 = vunpack.c.l.b16 %v32
  %v347 = vunpack.c.h.b16 %v32
  %v348 = vunpack.c.l.b16 %v33
  %v349 = vunpack.c.h.b16 %v33
  %v350 = vunpack.c.l.b16 %v34
  %v351 = vunpack.c.h.b16 %v34
  %v352 = vunpack.c.l.b16 %v35
  %v353 = vunpack.c.h.b16 %v35
  %v354 = vunpack.c.l.b16 %v36
  %v355 = vunpack.c.h.b16 %v36
  %v356 = vunpack.c.l.b16 %v37
  %v357 = vunpack.c.h.b16 %v37
  %v358 = vunpack.c.l.b16 %v38
  %v359 = vunpack.c.h.b16 %v38
  %v360 = vunpack.c.l.b16 %v39
  %v361 = vunpack.c.h.b16 %v39
  %v362 = vunpack.c.l.b16 %v40
  %v363 = vunpack.c.h.b16 %v40
  %v364 = vunpack.c.l.b16 %v41
  %v365 = vunpack.c.h.b16 %v41
  %v366 = vunpack.c.l.b16 %v42
  %v367 = vunpack.c.h.b16 %v42
  %v368 = vunpack.c.l.b16 %v43
  %v369 = vunpack.c.h.b16 %v43
  %v370 = vunpack.c.l.b16 %v44
  %v371 = vunpack.c.h.b16 %v44
  %v372 = vunpack.c.l.b16 %v45
  %v373 = vunpack.c.h.b16 %v45
  %v374 = vunpack.c.l.b16 %v46
  %v375 = vunpack.c.h.b16 %v46
  %v376 = vunpack.c.l.b16 %v47
  %v377 = vunpack.c.h.b16 %v47
  %v378 = vunpack.c.l.b16 %v48
  %v379 = vunpack.c.h.b16 %v48
  %v380 = vunpack.c.l.b16 %v49
  %v381 = vunpack.c.h.b16 %v49
  %v382 = vunpack.c.l.b16 %v50
  %v383 = vunpack.c.h.b16 %v50
  %v384 = vunpack.c.l.b16 %v51
  %v385 = vunpack.c.h.b16 %v51
  %v386 = vunpack.c.l.b16 %v52
  %v387 = vunpack.c.h.b16 %v52
  %v388 = vunpack.c.l.b16 %v53
  %v389 = vunpack.c.h.b16 %v53
  %v390 = vunpack.c.l.b16 %v54
  %v391 = vunpack.c.h.b16 %v54
  %v392 = vunpack.c.l.b16 %v55
  %v393 = vunpack.c.h.b16 %v55
  %v394 = vunpack.c.l.b16 %v56
  %v395 = vunpack.c.h.b16 %v56
  %v396 = vunpack.c.l.b16 %v57
  %v397 = vunpack.c.h.b16 %v57
  %v398 = vunpack.c.l.b16 %v58
  %v399 = vunpack.c.h.b16 %v58
  %v400 = vunpack.c.l.b16 %v59
  %v401 = vunpack.c.h.b16 %v59
  %v402 = vunpack.c.l.b16 %v60
  %v403 = vunpack.c.h.b16 %v60
  %v404 = vunpack.c.l.b16 %v61
  %v405 = vunpack.c.h.b16 %v61
  %v406 = vunpack.c.l.b16 %v62
  %v407 = vunpack.c.h.b16 %v62
  %v408 = vunpack.c.l.b16 %v63
  %v409 = vunpack.c.h.b16 %v63
  %v410 = vunpack.c.l.b16 %v64
  %v411 = vunpack.c.h.b16 %v64
  %v412 = vunpack.c.l.b16 %v65
  %v413 = vunpack.c.h.b16 %v65
  %v414 = vunpack.c.l.b16 %v66
  %v415 = vunpack.c.h.b16 %v66
  %v416 = vunpack.c.l.b16 %v67
  %v417 = vunpack.c.h.b16 %v67
  %v418 = vunpack.c.l.b16 %v68
  %v419 = vunpack.c.h.b16 %v68
  %v420 = vunpack.c.l.b16 %v69
  %v421 = vunpack.c.h.b16 %v69
  %v422 = vunpack.c.l.b16 %v70
  %v423 = vunpack.c.h.b16 %v70
  %v424 = vunpack.c.l.b16 %v71
  %v425 = vunpack.c.h.b16 %v71
  %v426 = vunpack.c.l.b16 %v72
  %v427 = vunpack.c.h.b16 %v72
  %v428 = vunpack.c.l.b16 %v73
  %v429 = vunpack.c.h.b16 %v73
  %v430 = vunpack.c.l.b16 %v74
  %v431 = vunpack.c.h.b16 %v74
  %v432 = vunpack.c.l.b16 %v75
  %v433 = vunpack.c.h.b16 %v75
  %v434 = vunpack.c.l.b16 %v76
  %v435 = vunpack.c.h.b16 %v76
  %v436 = vunpack.c.l.b16 %v77
  %v437 = vunpack.c.h.b16 %v77
  %v438 = vunpack.c.l.b16 %v78
  %v439 = vunpack.c.h.b16 %v78
  %v440 = vunpack.c.l.b16 %v79
  %v441 = vunpack.c.h.b16 %v79
  %v442 = vunpack.c.l.b16 %v80
  %v443 = vunpack.c.h.b16 %v80
  %v444 = vunpack.c.l.b16 %v81
  %v445 = vunpack.c.h.b16 %v81
  %v446 = vunpack.c.l.b16 %v82
  %v447 = vunpack.c.h.b16 %v82
  %v448 = vunpack.c.l.b16 %v83
  %v449 = vunpack.c.h.b16 %v83
  %v450 = vunpack.c.l.b16 %v84
  %v451 = vunpack.c.h.b16 %v84
  %v452 = vunpack.c.l.b16 %v85
  %v453 = vunpack.c.h.b16 %v85
  %v454 = vunpack.c.l.b16 %v86
  %v455 = vunpack.c.h.b16 %v86
  %v456 = vunpack.c.l.b16 %v87
  %v457 = vunpack.c.h.b16 %v87
  %v458 = vunpack.c.l.b16 %v88
  %v459 = vunpack.c.h.b16 %v88
  %v460 = vunpack.c.l.b16 %v89
  %v461 = vunpack.c.h.b16 %v89
  %v462 = vunpack.c.l.b16 %v90
  %v463 = vunpack.c.h.b16 %v90
  %v464 = vunpack.c.l.b16 %v91
  %v465 = vunpack.c.h.b16 %v91
  %v466 = vunpack.c.l.b16 %v92
  %v467 = vunpack.c.h.b16 %v92
  %v468 = vunpack.c.l.b16 %v93
  %v469 = vunpack.c.h.b16 %v93
  %v470 = vunpack.c.l.b16 %v94
  %v471 = vunpack.c.h.b16 %v94
  %v472 = vunpack.c.l.b16 %v95
  %v473 = vunpack.c.h.b16 %v95
  %v474 = vunpack.c.l.b16 %v96
  %v475 = vunpack.c.h.b16 %v96
  %v476 = vunpack.c.l.b16 %v97
  %v477 = vunpack.c.h.b16 %v97
  %v478 = vunpack.c.l.b16 %v98
  %v479 = vunpack.c.h.b16 %v98
  %v480 = vunpack.c.l.b16 %v99
  %v481 = vunpack.c.h.b16 %v99
  %v482 = vunpack.c.l.b16 %v100
  %v483 = vunpack.c.h.b16 %v100
  %v484 = vunpack.c.l.b16 %v101
  %v485 = vunpack.c.h.b16 %v101
  %v486 = vunpack.c.l.b16 %v102
  %v487 = vunpack.c.h.b16 %v102
  %v488 = vunpack.c.l.b16 %v103
  %v489 = vunpack.c.h.b16 %v103
  %v490 = vunpack.c.l.b16 %v104
  %v491 = vunpack.c.h.b16 %v104
  %v492 = vunpack.c.l.b16 %v105
  %v493 = vunpack.c.h.b16 %v105
  %v494 = vunpack.c.l.b16 %v106
  %v495 = vunpack.c.h.b16 %v106
  %v496 = vunpack.c.l.b16 %v107
  %v497 = vunpack.c.h.b16 %v107
  %v498 = vunpack.c.l.b16 %v108
  %v499 = vunpack.c.h.b16 %v108
  %v500 = vunpack.c.l.b16 %v109
  %v501 = vunpack.c.h.b16 %v109
  %v502 = vunpack.c.l.b16 %v110
  %v503 = vunpack.c.h.b16 %v110
  %v504 = vunpack.c.l.b16 %v111
  %v505 = vunpack.c.h.b16 %v111
  %v506 = vunpack.c.l.b16 %v112
  %v507 = vunpack.c.h.b16 %v112
  %v508 = vunpack.c.l.b16 %v113
  %v509 = vunpack.c.h.b16 %v113
  %v510 = vunpack.c.l.b16 %v114
  %v511 = vunpack.c.h.b16 %v114
  %v512 = vunpack.c.l.b16 %v115
  %v513 = vunpack.c.h.b16 %v115
  %v514 = vunpack.c.l.b16 %v116
  %v515 = vunpack.c.h.b16 %v116
  %v516 = vunpack.c.l.b16 %v117
  %v517 = vunpack.c.h.b16 %v117
  %v518 = vunpack.c.l.b16 %v118
  %v519 = vunpack.c.h.b16 %v118
  %v520 = vunpack.c.l.b16 %v119
  %v521 = vunpack.c.h.b16 %v119
  %v522 = vunpack.c.l.b16 %v120
  %v523 = vunpack.c.h.b16 %v120
  %v524 = vunpack.c.l.b16 %v121
  %v525 = vunpack.c.h.b16 %v121
  %v526 = vunpack.c.l.b16 %v122
  %v527 = vunpack.c.h.b16 %v122
  %v528 = vunpack.c.l.b16 %v123
  %v529 = vunpack.c.h.b16 %v123
  %v530 = vunpack.c.l.b16 %v124
  %v531 = vunpack.c.h.b16 %v124
  %v532 = vunpack.c.l.b16 %v125
  %v533 = vunpack.c.h.b16 %v125
  %v534 = vunpack.c.l.b16 %v126
  %v535 = vunpack.c.h.b16 %v126
  %v536 = vunpack.c.l.b16 %v127
  %v537 = vunpack.c.h.b16 %v127
  %v538 = vunpack.c.l.b16 %v128
  %v539 = vunpack.c.h.b16 %v128
  %v540 = vunpack.c.l.b16 %v129
  %v541 = vunpack.c.h.b16 %v129
  %v542 = vunpack.c.l.b16 %v130
  %v543 = vunpack.c.h.b16 %v130
  %v544 = vunpack.c.l.b16 %v131
  %v545 = vunpack.c.h.b16 %v131
  %v546 = vunpack.c.l.b16 %v132
  %v547 = vunpack.c.h.b16 %v132
  %v548 = vunpack.c.l.b16 %v133
  %v549 = vunpack.c.h.b16 %v133
  %v550 = vunpack.c.l.b16 %v134
  %v551 = vunpack.c.h.b16 %v134
  %v552 = vpack.c.b16 %v340, %v336
  %v553 = vpack.c.b16 %v341, %v337
  %v554 = vpack.c.b16 %v342, %v338
  %v555 = vpack.c.b16 %v343, %v339
  %v556 = vpack.c.b16 %v348, %v344
  %v557 = vpack.c.b16 %v349, %v345
  %v558 = vpack.c.b16 %v350, %v346
  %v559 = vpack.c.b16 %v351, %v347
  %v560 = vpack.c.b16 %v356, %v352
  %v561 = vpack.c.b16 %v357, %v353
  %v562 = vpack.c.b16 %v358, %v354
  %v563 = vpack.c.b16 %v359, %v355
  %v564 = vpack.c.b16 %v364, %v360
  %v565 = vpack.c.b16 %v365, %v361
  %v566 = vpack.c.b16 %v366, %v362
  %v567 = vpack.c.b16 %v367, %v363
  %v568 = vpack.c.b16 %v372, %v368
  %v569 = vpack.c.b16 %v373, %v369
  %v570 = vpack.c.b16 %v374, %v370
  %v571 = vpack.c.b16 %v375, %v371
  %v572 = vpack.c.b16 %v380, %v376
  %v573 = vpack.c.b16 %v381, %v377
  %v574 = vpack.c.b16 %v382, %v378
  %v575 = vpack.c.b16 %v383, %v379
  %v576 = vpack.c.b16 %v388, %v384
  %v577 = vpack.c.b16 %v389, %v385
  %v578 = vpack.c.b16 %v390, %v386
  %v579 = vpack.c.b16 %v391, %v387
  %v580 = vpack.c.b16 %v396, %v392
  %v581 = vpack.c.b16 %v397, %v393
  %v582 = vpack.c.b16 %v398, %v394
  %v583 = vpack.c.b16 %v399, %v395
  %v584 = vpack.c.b16 %v404, %v400
  %v585 = vpack.c.b16 %v405, %v401
  %v586 = vpack.c.b16 %v406, %v402
  %v587 = vpack.c.b16 %v407, %v403
  %v588 = vpack.c.b16 %v412, %v408
  %v589 = vpack.c.b16 %v413, %v409
  %v590 = vpack.c.b16 %v414, %v410
  %v591 = vpack.c.b16 %v415, %v411
  %v592 = vpack.c.b16 %v420, %v416
  %v593 = vpack.c.b16 %v421, %v417
  %v594 = vpack.c.b16 %v422, %v418
  %v595 = vpack.c.b16 %v423, %v419
  %v596 = vpack.c.b16 %v428, %v424
  %v597 = vpack.c.b16 %v429, %v425
  %v598 = vpack.c.b16 %v430, %v426
  %v599 = vpack.c.b16 %v431, %v427
  %v600 = vpack.c.b16 %v436, %v432
  %v601 = vpack.c.b16 %v437, %v433
  %v602 = vpack.c.b16 %v438, %v434
  %v603 = vpack.c.b16 %v439, %v435
  %v604 = vpack.c.b16 %v444, %v440
  %v605 = vpack.c.b16 %v445, %v441
  %v606 = vpack.c.b16 %v446, %v442
  %v607 = vpack.c.b16 %v447, %v443
  %v608 = vpack.c.b16 %v452, %v448
  %v609 = vpack.c.b16 %v453, %v449
  %v610 = vpack.c.b16 %v454, %v450
  %v611 = vpack.c.b16 %v455, %v451
  %v612 = vpack.c.b16 %v460, %v456
  %v613 = vpack.c.b16 %v461, %v457
  %v614 = vpack.c.b16 %v462, %v458
  %v615 = vpack.c.b16 %v463, %v459
  %v616 = vpack.c.b16 %v468, %v464
  %v617 = vpack.c.b16 %v469, %v465
  %v618 = vpack.c.b16 %v470, %v466
  %v619 = vpack.c.b16 %v471, %v467
  %v620 = vpack.c.b16 %v476, %v472
  %v621 = vpack.c.b16 %v477, %v473
  %v622 = vpack.c.b16 %v478, %v474
  %v623 = vpack.c.b16 %v479, %v475
  %v624 = vpack.c.b16 %v484, %v480
  %v625 = vpack.c.b16 %v485, %v481
  %v626 = vpack.c.b16 %v486, %v482
  %v627 = vpack.c.b16 %v487, %v483
  %v628 = vpack.c.b16 %v492, %v488
  %v629 = vpack.c.b16 %v493, %v489
  %v630 = vpack.c.b16 %v494, %v490
  %v631 = vpack.c.b16 %v495, %v491
  %v632 = vpack.c.b16 %v500, %v496
  %v633 = vpack.c.b16 %v501, %v497
  %v634 = vpack.c.b16 %v502, %v498
  %v635 = vpack.c.b16 %v503, %v499
  %v636 = vpack.c.b16 %v508, %v504
  %v637 = vpack.c.b16 %v509, %v505
  %v638 = vpack.c.b16 %v510, %v506
  %v639 = vpack.c.b16 %v511, %v507
  %v640 = vpack.c.b16 %v516, %v512
  %v641 = vpack.c.b16 %v517, %v513
  %v642 = vpack.c.b16 %v518, %v514
  %v643 = vpack.c.b16 %v519, %v515
  %v644 = vpack.c.b16 %v524, %v520
  %v645 = vpack.c.b16 %v525, %v521
  %v646 = vpack.c.b16 %v526, %v522
  %v647 = vpack.c.b16 %v527, %v523
  %v648 = vpack.c.b16 %v532, %v528
  %v649 = vpack.c.b16 %v533, %v529
  %v650 = vpack.c.b16 %v534, %v530
  %v651 = vpack.c.b16 %v535, %v531
  %v652 = vpack.c.b16 %v540, %v536
  %v653 = vpack.c.b16 %v541, %v537
  %v654 = vpack.c.b16 %v542, %v538
  %v655 = vpack.c.b16 %v543, %v539
  %v656 = vpack.c.b16 %v548, %v544
  %v657 = vpack.c.b16 %v549, %v545
  %v658 = vpack.c.b16 %v550, %v546
  %v659 = vpack.c.b16 %v551, %v547
  %vm768 = vcmask 392192
  %v770 = vsel %vm768, %v210, 0
  %v773 = vsel %vm768, %v214, 0
  %v776 = vsel %vm768, %v218, 0
  %778 = vmatprep.subr.bf16.mxu0 %v553
  %779 = vmatpush1.bf16.msra.mxu0 %v552
  %780 = vmatprep.subr.bf16.mxu0 %v557
  %781 = vmatpush1.bf16.msra.mxu0 %v556
  %782 = vmatprep.subr.bf16.mxu0 %v561
  %783 = vmatpush1.bf16.msra.mxu0 %v560
  %784 = vmatprep.subr.bf16.mxu0 %v565
  %785 = vmatpush1.bf16.msra.mxu0 %v564
  %786 = vmatprep.subr.bf16.mxu0 %v569
  %787 = vmatpush1.bf16.msra.mxu0 %v568
  %788 = vmatprep.subr.bf16.mxu0 %v573
  %789 = vmatpush1.bf16.msra.mxu0 %v572
  %790 = vmatprep.subr.bf16.mxu0 %v577
  %791 = vmatpush1.bf16.msra.mxu0 %v576
  %792 = vmatprep.subr.bf16.mxu0 %v581
  %793 = vmatpush1.bf16.msra.mxu0 %v580
  %794 = vmatprep.subr.bf16.mxu0 %v585
  %795 = vmatpush1.bf16.msra.mxu0 %v584
  %796 = vmatprep.subr.bf16.mxu0 %v589
  %797 = vmatpush1.bf16.msra.mxu0 %v588
  %798 = vmatprep.subr.bf16.mxu0 %v593
  %799 = vmatpush1.bf16.msra.mxu0 %v592
  %800 = vmatprep.subr.bf16.mxu0 %v597
  %801 = vmatpush1.bf16.msra.mxu0 %v596
  %802 = vmatprep.subr.bf16.mxu0 %v601
  %803 = vmatpush1.bf16.msra.mxu0 %v600
  %804 = vmatprep.subr.bf16.mxu0 %v605
  %805 = vmatpush1.bf16.msra.mxu0 %v604
  %806 = vmatprep.subr.bf16.mxu0 %v609
  %807 = vmatpush1.bf16.msra.mxu0 %v608
  %808 = vmatprep.subr.bf16.mxu0 %v613
  %809 = vmatpush1.bf16.msra.mxu0 %v612
  %810 = vmatprep.mubr.bf16.mxu0 %v208
  %811 = vmatmul.mubr.bf16.gmra.mrb[0].mxu0 %v207
  %v812 = vpop.f32.mrb[0].mxu0
  %v813 = vadd.f32 %v144, %v812
  %v814 = vpop.f32.mrb[0].mxu0
  %v815 = vadd.f32 %v144, %v814
  %v816 = vpop.f32.mrb[0].mxu0
  %v817 = vadd.f32 %v149, %v816
  %v818 = vpop.f32.mrb[0].mxu0
  %v819 = vadd.f32 %v149, %v818
  %820 = vmatprep.mubr.bf16.mxu0 %v212
  %821 = vmatmul.mubr.bf16.gmra.mrb[0].mxu0 %v211
  %v822 = vpop.f32.mrb[0].mxu0
  %v823 = vadd.f32 %v154, %v822
  %v824 = vpop.f32.mrb[0].mxu0
  %v825 = vadd.f32 %v154, %v824
  %v826 = vpop.f32.mrb[0].mxu0
  %v827 = vadd.f32 %v159, %v826
  %v828 = vpop.f32.mrb[0].mxu0
  %v829 = vadd.f32 %v159, %v828
  %830 = vmatprep.mubr.bf16.mxu0 %v216
  %831 = vmatmul.mubr.bf16.gmra.mrb[0].mxu0 %v215
  %v832 = vpop.f32.mrb[0].mxu0
  %v833 = vadd.f32 %v164, %v832
  %v834 = vpop.f32.mrb[0].mxu0
  %v835 = vadd.f32 %v164, %v834
  %v836 = vpop.f32.mrb[0].mxu0
  %v837 = vadd.f32 %v169, %v836
  %v838 = vpop.f32.mrb[0].mxu0
  %v839 = vadd.f32 %v169, %v838
  %840 = vdwg.mxu0
  %841 = vmatprep.subr.bf16.mxu0 %v617
  %842 = vmatpush1.bf16.msra.mxu0 %v616
  %843 = vmatprep.subr.bf16.mxu0 %v621
  %844 = vmatpush1.bf16.msra.mxu0 %v620
  %845 = vmatprep.subr.bf16.mxu0 %v625
  %846 = vmatpush1.bf16.msra.mxu0 %v624
  %847 = vmatprep.subr.bf16.mxu0 %v629
  %848 = vmatpush1.bf16.msra.mxu0 %v628
  %849 = vmatprep.subr.bf16.mxu0 %v633
  %850 = vmatpush1.bf16.msra.mxu0 %v632
  %851 = vmatprep.subr.bf16.mxu0 %v637
  %852 = vmatpush1.bf16.msra.mxu0 %v636
  %853 = vmatprep.subr.bf16.mxu0 %v641
  %854 = vmatpush1.bf16.msra.mxu0 %v640
  %855 = vmatprep.subr.bf16.mxu0 %v645
  %856 = vmatpush1.bf16.msra.mxu0 %v644
  %857 = vmatprep.subr.bf16.mxu0 %v649
  %858 = vmatpush1.bf16.msra.mxu0 %v648
  %859 = vmatprep.subr.bf16.mxu0 %v653
  %860 = vmatpush1.bf16.msra.mxu0 %v652
  %861 = vmatprep.subr.bf16.mxu0 %v657
  %862 = vmatpush1.bf16.msra.mxu0 %v656
  %863 = vmatprep.subr.bf16.mxu0 0
  %864 = vmatpush1.bf16.msra.mxu0 0
  %865 = vmatprep.subr.bf16.mxu0 0
  %866 = vmatpush1.bf16.msra.mxu0 0
  %867 = vmatprep.subr.bf16.mxu0 0
  %868 = vmatpush1.bf16.msra.mxu0 0
  %869 = vmatprep.subr.bf16.mxu0 0
  %870 = vmatpush1.bf16.msra.mxu0 0
  %871 = vmatprep.subr.bf16.mxu0 0
  %872 = vmatpush1.bf16.msra.mxu0 0
  %873 = vmatprep.mubr.bf16.mxu0 %v770
  %874 = vmatmul.mubr.bf16.gmra.mrb[0].mxu0 %v209
  %v875 = vpop.f32.mrb[0].mxu0
  %v876 = vadd.f32 %v813, %v875
  %v877 = vpop.f32.mrb[0].mxu0
  %v878 = vadd.f32 %v815, %v877
  %v879 = vpop.f32.mrb[0].mxu0
  %v880 = vadd.f32 %v817, %v879
  %v881 = vpop.f32.mrb[0].mxu0
  %v882 = vadd.f32 %v819, %v881
  %883 = vmatprep.mubr.bf16.mxu0 %v773
  %884 = vmatmul.mubr.bf16.gmra.mrb[0].mxu0 %v213
  %v885 = vpop.f32.mrb[0].mxu0
  %v886 = vadd.f32 %v823, %v885
  %v887 = vpop.f32.mrb[0].mxu0
  %v888 = vadd.f32 %v825, %v887
  %v889 = vpop.f32.mrb[0].mxu0
  %v890 = vadd.f32 %v827, %v889
  %v891 = vpop.f32.mrb[0].mxu0
  %v892 = vadd.f32 %v829, %v891
  %893 = vmatprep.mubr.bf16.mxu0 %v776
  %894 = vmatmul.mubr.bf16.gmra.mrb[0].mxu0 %v217
  %v895 = vpop.f32.mrb[0].mxu0
  %v896 = vadd.f32 %v833, %v895
  %v897 = vpop.f32.mrb[0].mxu0
  %v898 = vadd.f32 %v835, %v897
  %v899 = vpop.f32.mrb[0].mxu0
  %v900 = vadd.f32 %v837, %v899
  %v901 = vpop.f32.mrb[0].mxu0
  %v902 = vadd.f32 %v839, %v901
  %903 = vdwg.mxu0
  %904 = vmatprep.subr.bf16.mxu0 %v555
  %905 = vmatpush1.bf16.msra.mxu0 %v554
  %906 = vmatprep.subr.bf16.mxu0 %v559
  %907 = vmatpush1.bf16.msra.mxu0 %v558
  %908 = vmatprep.subr.bf16.mxu0 %v563
  %909 = vmatpush1.bf16.msra.mxu0 %v562
  %910 = vmatprep.subr.bf16.mxu0 %v567
  %911 = vmatpush1.bf16.msra.mxu0 %v566
  %912 = vmatprep.subr.bf16.mxu0 %v571
  %913 = vmatpush1.bf16.msra.mxu0 %v570
  %914 = vmatprep.subr.bf16.mxu0 %v575
  %915 = vmatpush1.bf16.msra.mxu0 %v574
  %916 = vmatprep.subr.bf16.mxu0 %v579
  %917 = vmatpush1.bf16.msra.mxu0 %v578
  %918 = vmatprep.subr.bf16.mxu0 %v583
  %919 = vmatpush1.bf16.msra.mxu0 %v582
  %920 = vmatprep.subr.bf16.mxu0 %v587
  %921 = vmatpush1.bf16.msra.mxu0 %v586
  %922 = vmatprep.subr.bf16.mxu0 %v591
  %923 = vmatpush1.bf16.msra.mxu0 %v590
  %924 = vmatprep.subr.bf16.mxu0 %v595
  %925 = vmatpush1.bf16.msra.mxu0 %v594
  %926 = vmatprep.subr.bf16.mxu0 %v599
  %927 = vmatpush1.bf16.msra.mxu0 %v598
  %928 = vmatprep.subr.bf16.mxu0 %v603
  %929 = vmatpush1.bf16.msra.mxu0 %v602
  %930 = vmatprep.subr.bf16.mxu0 %v607
  %931 = vmatpush1.bf16.msra.mxu0 %v606
  %932 = vmatprep.subr.bf16.mxu0 %v611
  %933 = vmatpush1.bf16.msra.mxu0 %v610
  %934 = vmatprep.subr.bf16.mxu0 %v615
  %935 = vmatpush1.bf16.msra.mxu0 %v614
  %936 = vmatprep.mubr.bf16.mxu0 %v208
  %937 = vmatmul.mubr.bf16.gmra.mrb[0].mxu0 %v207
  %v938 = vpop.f32.mrb[0].mxu0
  %v939 = vadd.f32 %v144, %v938
  %v940 = vpop.f32.mrb[0].mxu0
  %v941 = vadd.f32 %v144, %v940
  %v942 = vpop.f32.mrb[0].mxu0
  %v943 = vadd.f32 %v149, %v942
  %v944 = vpop.f32.mrb[0].mxu0
  %v945 = vadd.f32 %v149, %v944
  %946 = vmatprep.mubr.bf16.mxu0 %v212
  %947 = vmatmul.mubr.bf16.gmra.mrb[0].mxu0 %v211
  %v948 = vpop.f32.mrb[0].mxu0
  %v949 = vadd.f32 %v154, %v948
  %v950 = vpop.f32.mrb[0].mxu0
  %v951 = vadd.f32 %v154, %v950
  %v952 = vpop.f32.mrb[0].mxu0
  %v953 = vadd.f32 %v159, %v952
  %v954 = vpop.f32.mrb[0].mxu0
  %v955 = vadd.f32 %v159, %v954
  %956 = vmatprep.mubr.bf16.mxu0 %v216
  %957 = vmatmul.mubr.bf16.gmra.mrb[0].mxu0 %v215
  %v958 = vpop.f32.mrb[0].mxu0
  %v959 = vadd.f32 %v164, %v958
  %v960 = vpop.f32.mrb[0].mxu0
  %v961 = vadd.f32 %v164, %v960
  %v962 = vpop.f32.mrb[0].mxu0
  %v963 = vadd.f32 %v169, %v962
  %v964 = vpop.f32.mrb[0].mxu0
  %v965 = vadd.f32 %v169, %v964
  %966 = vdwg.mxu0
  %967 = vmatprep.subr.bf16.mxu0 %v619
  %968 = vmatpush1.bf16.msra.mxu0 %v618
  %969 = vmatprep.subr.bf16.mxu0 %v623
  %970 = vmatpush1.bf16.msra.mxu0 %v622
  %971 = vmatprep.subr.bf16.mxu0 %v627
  %972 = vmatpush1.bf16.msra.mxu0 %v626
  %973 = vmatprep.subr.bf16.mxu0 %v631
  %974 = vmatpush1.bf16.msra.mxu0 %v630
  %975 = vmatprep.subr.bf16.mxu0 %v635
  %976 = vmatpush1.bf16.msra.mxu0 %v634
  %977 = vmatprep.subr.bf16.mxu0 %v639
  %978 = vmatpush1.bf16.msra.mxu0 %v638
  %979 = vmatprep.subr.bf16.mxu0 %v643
  %980 = vmatpush1.bf16.msra.mxu0 %v642
  %981 = vmatprep.subr.bf16.mxu0 %v647
  %982 = vmatpush1.bf16.msra.mxu0 %v646
  %983 = vmatprep.subr.bf16.mxu0 %v651
  %984 = vmatpush1.bf16.msra.mxu0 %v650
  %985 = vmatprep.subr.bf16.mxu0 %v655
  %986 = vmatpush1.bf16.msra.mxu0 %v654
  %987 = vmatprep.subr.bf16.mxu0 %v659
  %988 = vmatpush1.bf16.msra.mxu0 %v658
  %989 = vmatprep.subr.bf16.mxu0 0
  %990 = vmatpush1.bf16.msra.mxu0 0
  %991 = vmatprep.subr.bf16.mxu0 0
  %992 = vmatpush1.bf16.msra.mxu0 0
  %993 = vmatprep.subr.bf16.mxu0 0
  %994 = vmatpush1.bf16.msra.mxu0 0
  %995 = vmatprep.subr.bf16.mxu0 0
  %996 = vmatpush1.bf16.msra.mxu0 0
  %997 = vmatprep.subr.bf16.mxu0 0
  %998 = vmatpush1.bf16.msra.mxu0 0
  %999 = vmatprep.mubr.bf16.mxu0 %v770
  %1000 = vmatmul.mubr.bf16.gmra.mrb[0].mxu0 %v209
  %v1001 = vpop.f32.mrb[0].mxu0
  %v1002 = vadd.f32 %v939, %v1001
  %v1003 = vpop.f32.mrb[0].mxu0
  %v1004 = vadd.f32 %v941, %v1003
  %v1005 = vpop.f32.mrb[0].mxu0
  %v1006 = vadd.f32 %v943, %v1005
  %v1007 = vpop.f32.mrb[0].mxu0
  %v1008 = vadd.f32 %v945, %v1007
  %1009 = vmatprep.mubr.bf16.mxu0 %v773
  %1010 = vmatmul.mubr.bf16.gmra.mrb[0].mxu0 %v213
  %v1011 = vpop.f32.mrb[0].mxu0
  %v1012 = vadd.f32 %v949, %v1011
  %v1013 = vpop.f32.mrb[0].mxu0
  %v1014 = vadd.f32 %v951, %v1013
  %v1015 = vpop.f32.mrb[0].mxu0
  %v1016 = vadd.f32 %v953, %v1015
  %v1017 = vpop.f32.mrb[0].mxu0
  %v1018 = vadd.f32 %v955, %v1017
  %1019 = vmatprep.mubr.bf16.mxu0 %v776
  %1020 = vmatmul.mubr.bf16.gmra.mrb[0].mxu0 %v217
  %v1021 = vpop.f32.mrb[0].mxu0
  %v1022 = vadd.f32 %v959, %v1021
  %v1023 = vpop.f32.mrb[0].mxu0
  %v1024 = vadd.f32 %v961, %v1023
  %v1025 = vpop.f32.mrb[0].mxu0
  %v1026 = vadd.f32 %v963, %v1025
  %v1027 = vpop.f32.mrb[0].mxu0
  %v1028 = vadd.f32 %v965, %v1027
  %1029 = vdwg.mxu0
  %v1030 = vpack.c.bf16 %v880, %v876
  %v1031 = vpack.c.bf16 %v882, %v878
  %v1032 = vpack.c.bf16 %v1006, %v1002
  %v1033 = vpack.c.bf16 %v1008, %v1004
  %v1034 = vpack.c.bf16 %v890, %v886
  %v1035 = vpack.c.bf16 %v892, %v888
  %v1036 = vpack.c.bf16 %v1016, %v1012
  %v1037 = vpack.c.bf16 %v1018, %v1014
  %v1038 = vpack.c.bf16 %v900, %v896
  %v1039 = vpack.c.bf16 %v902, %v898
  %v1040 = vpack.c.bf16 %v1026, %v1022
  %v1041 = vpack.c.bf16 %v1028, %v1024
  %v1054 = vunpack.c.l.b16 %v1030
  %v1055 = vunpack.c.l.b16 %v1031
  %v1056 = vunpack.c.l.b16 %v1032
  %v1057 = vunpack.c.l.b16 %v1033
  %v1058 = vunpack.c.h.b16 %v1030
  %v1059 = vunpack.c.h.b16 %v1031
  %v1060 = vunpack.c.h.b16 %v1032
  %v1061 = vunpack.c.h.b16 %v1033
  %v1062 = vunpack.c.l.b16 %v1034
  %v1063 = vunpack.c.l.b16 %v1035
  %v1064 = vunpack.c.l.b16 %v1036
  %v1065 = vunpack.c.l.b16 %v1037
  %v1066 = vunpack.c.h.b16 %v1034
  %v1067 = vunpack.c.h.b16 %v1035
  %v1068 = vunpack.c.h.b16 %v1036
  %v1069 = vunpack.c.h.b16 %v1037
  %v1070 = vunpack.c.l.b16 %v1038
  %v1071 = vunpack.c.l.b16 %v1039
  %v1072 = vunpack.c.l.b16 %v1040
  %v1073 = vunpack.c.l.b16 %v1041
  %v1074 = vunpack.c.h.b16 %v1038
  %v1075 = vunpack.c.h.b16 %v1039
  %v1076 = vunpack.c.h.b16 %v1040
  %v1077 = vunpack.c.h.b16 %v1041
  %v1078 = vpack.c.b16 %v1055, %v1054
  %v1079 = vpack.c.b16 %v1057, %v1056
  %v1080 = vpack.c.b16 %v1059, %v1058
  %v1081 = vpack.c.b16 %v1061, %v1060
  %v1082 = vpack.c.b16 %v1063, %v1062
  %v1083 = vpack.c.b16 %v1065, %v1064
  %v1084 = vpack.c.b16 %v1067, %v1066
  %v1085 = vpack.c.b16 %v1069, %v1068
  %v1086 = vpack.c.b16 %v1071, %v1070
  %v1087 = vpack.c.b16 %v1073, %v1072
  %v1088 = vpack.c.b16 %v1075, %v1074
  %v1089 = vpack.c.b16 %v1077, %v1076
  %1102 = vst [vmem:[%s3] sm:$0xff] %v1078
  %1103 = vst [vmem:[%s3 + $0x8] sm:$0xff] %v1079
  %1104 = vst [vmem:[%s3 + $0x10] sm:$0xff] %v1080
  %1105 = vst [vmem:[%s3 + $0x18] sm:$0xff] %v1081
  %1106 = vst [vmem:[%s3 + $0x20] sm:$0xff] %v1082
  %1107 = vst [vmem:[%s3 + $0x28] sm:$0xff] %v1083
  %1108 = vst [vmem:[%s3 + $0x30] sm:$0xff] %v1084
  %1109 = vst [vmem:[%s3 + $0x38] sm:$0xff] %v1085
  %1110 = vst [vmem:[%s3 + $0x40] sm:$0xff] %v1086
  %1111 = vst [vmem:[%s3 + $0x48] sm:$0xff] %v1087
  %1112 = vst [vmem:[%s3 + $0x50] sm:$0xff] %v1088
  %1113 = vst [vmem:[%s3 + $0x58] sm:$0xff] %v1089
  // Predicated region
  $region14: #{sam2unet_forward.42} parent=0 // pred_check
    _
  $region15: #{sam2unet_forward.42} parent=0 // pred_check_branch
    %1115 = sbr.rel (0) target = $region17
  $region16: #{sam2unet_forward.42} parent=0 // pred_region
    _
  $region17: #{sam2unet_forward.42} parent=0 // pred_fallthru
    _
  // Predicated region
  $region18: #{sam2unet_forward.42} parent=0 // pred_check
    _
  $region19: #{sam2unet_forward.42} parent=0 // pred_check_branch
    %1117 = sbr.rel (0) target = $region21
  $region20: #{sam2unet_forward.42} parent=0 // pred_region
    _
  $region21: #{sam2unet_forward.42} parent=0 // pred_fallthru
    _

// kernel: sam2unet_forward.43
$region0: #{sam2unet_forward.43}
  #allocation0 [shape = 'u32[]', space=smem, size = 0x4, offset = 0x4, fixed_abs, tag = 'smem constant byte address 0x4 - core index']
  #allocation1 [shape = 'u32[144,128]{1,0:T(1,128)}', space=vmem, size = 0x12000, scoped, tag = 'internal scratch']
  %s0 = inlined_call_operand.vmem [shape: bf16[16,576], index: 0, kind: input, shape index: {}]
  %s1 = inlined_call_operand.vmem [shape: bf16[576,512], index: 1, kind: input, shape index: {}]
  %s2 = inlined_call_operand.vmem [shape: f32[16,1], index: 2, kind: input, shape index: {}]
  %s3 = inlined_call_operand.vmem [shape: bf16[16,512], index: 3, kind: input, shape index: {}]
  %s4 = inlined_call_operand.vmem [shape: bf16[16,512], index: 4, kind: output, shape index: {}]
  %s5 = sld [smem:[#allocation0]]
  $region26: #{sam2unet_forward.43} parent=0
    _
  %s7 = ssub.s32 1, %s5
  %s8 = scalar_select 0, %s7, %s5
  // Predicated region
  $region2: #{sam2unet_forward.43} parent=0 // pred_check
    _
  $region3: #{sam2unet_forward.43} parent=0 // pred_check_branch
    %10 = sbr.rel (0) target = $region5
  $region4: #{sam2unet_forward.43} parent=0 // pred_region
    _
  $region5: #{sam2unet_forward.43} parent=0 // pred_fallthru
    _
  // Predicated region
  $region6: #{sam2unet_forward.43} parent=0 // pred_check
    _
  $region7: #{sam2unet_forward.43} parent=0 // pred_check_branch
    %12 = sbr.rel (0) target = $region9
  $region8: #{sam2unet_forward.43} parent=0 // pred_region
    _
  $region9: #{sam2unet_forward.43} parent=0 // pred_fallthru
    _
  // Predicated region
  $region10: #{sam2unet_forward.43} parent=0 // pred_check
    _
  $region11: #{sam2unet_forward.43} parent=0 // pred_check_branch
    %14 = sbr.rel (0) target = $region13
  $region12: #{sam2unet_forward.43} parent=0 // pred_region
    _
  $region13: #{sam2unet_forward.43} parent=0 // pred_fallthru
    _
  // Predicated region
  $region14: #{sam2unet_forward.43} parent=0 // pred_check
    _
  $region15: #{sam2unet_forward.43} parent=0 // pred_check_branch
    %16 = sbr.rel (0) target = $region17
  $region16: #{sam2unet_forward.43} parent=0 // pred_region
    _
  $region17: #{sam2unet_forward.43} parent=0 // pred_fallthru
    _
  %v18 = vld [vmem:[%s0] sm:$0xff]
  %v19 = vld [vmem:[%s0 + $0x8] sm:$0xff]
  %v20 = vld [vmem:[%s0 + $0x10] sm:$0xf]
  %v21 = vld [vmem:[%s0 + $0x14] sm:$0xff]
  %v22 = vld [vmem:[%s0 + $0x1c] sm:$0xff]
  %v23 = vld [vmem:[%s0 + $0x24] sm:$0xf]
  %v24 = vld [vmem:[%s1] sm:$0xff]
  %v25 = vld [vmem:[%s1 + $0x8] sm:$0xff]
  %v26 = vld [vmem:[%s1 + $0x10] sm:$0xff]
  %v27 = vld [vmem:[%s1 + $0x18] sm:$0xff]
  %v28 = vld [vmem:[%s1 + $0x20] sm:$0xff]
  %v29 = vld [vmem:[%s1 + $0x28] sm:$0xff]
  %v30 = vld [vmem:[%s1 + $0x30] sm:$0xff]
  %v31 = vld [vmem:[%s1 + $0x38] sm:$0xff]
  %v32 = vld [vmem:[%s1 + $0x40] sm:$0xff]
  %v33 = vld [vmem:[%s1 + $0x48] sm:$0xff]
  %v34 = vld [vmem:[%s1 + $0x50] sm:$0xff]
  %v35 = vld [vmem:[%s1 + $0x58] sm:$0xff]
  %v36 = vld [vmem:[%s1 + $0x60] sm:$0xff]
  %v37 = vld [vmem:[%s1 + $0x68] sm:$0xff]
  %v38 = vld [vmem:[%s1 + $0x70] sm:$0xff]
  %v39 = vld [vmem:[%s1 + $0x78] sm:$0xff]
  %v40 = vld [vmem:[%s1 + $0x80] sm:$0xff]
  %v41 = vld [vmem:[%s1 + $0x88] sm:$0xff]
  %v42 = vld [vmem:[%s1 + $0x90] sm:$0xff]
  %v43 = vld [vmem:[%s1 + $0x98] sm:$0xff]
  %v44 = vld [vmem:[%s1 + $0xa0] sm:$0xff]
  %v45 = vld [vmem:[%s1 + $0xa8] sm:$0xff]
  %v46 = vld [vmem:[%s1 + $0xb0] sm:$0xff]
  %v47 = vld [vmem:[%s1 + $0xb8] sm:$0xff]
  %v48 = vld [vmem:[%s1 + $0xc0] sm:$0xff]
  %v49 = vld [vmem:[%s1 + $0xc8] sm:$0xff]
  %v50 = vld [vmem:[%s1 + $0xd0] sm:$0xff]
  %v51 = vld [vmem:[%s1 + $0xd8] sm:$0xff]
  %v52 = vld [vmem:[%s1 + $0xe0] sm:$0xff]
  %v53 = vld [vmem:[%s1 + $0xe8] sm:$0xff]
  %v54 = vld [vmem:[%s1 + $0xf0] sm:$0xff]
  %v55 = vld [vmem:[%s1 + $0xf8] sm:$0xff]
  %v56 = vld [vmem:[%s1 + $0x100] sm:$0xff]
  %v57 = vld [vmem:[%s1 + $0x108] sm:$0xff]
  %v58 = vld [vmem:[%s1 + $0x110] sm:$0xff]
  %v59 = vld [vmem:[%s1 + $0x118] sm:$0xff]
  %v60 = vld [vmem:[%s1 + $0x120] sm:$0xff]
  %v61 = vld [vmem:[%s1 + $0x128] sm:$0xff]
  %v62 = vld [vmem:[%s1 + $0x130] sm:$0xff]
  %v63 = vld [vmem:[%s1 + $0x138] sm:$0xff]
  %v64 = vld [vmem:[%s1 + $0x140] sm:$0xff]
  %v65 = vld [vmem:[%s1 + $0x148] sm:$0xff]
  %v66 = vld [vmem:[%s1 + $0x150] sm:$0xff]
  %v67 = vld [vmem:[%s1 + $0x158] sm:$0xff]
  %v68 = vld [vmem:[%s1 + $0x160] sm:$0xff]
  %v69 = vld [vmem:[%s1 + $0x168] sm:$0xff]
  %v70 = vld [vmem:[%s1 + $0x170] sm:$0xff]
  %v71 = vld [vmem:[%s1 + $0x178] sm:$0xff]
  %v72 = vld [vmem:[%s1 + $0x180] sm:$0xff]
  %v73 = vld [vmem:[%s1 + $0x188] sm:$0xff]
  %v74 = vld [vmem:[%s1 + $0x190] sm:$0xff]
  %v75 = vld [vmem:[%s1 + $0x198] sm:$0xff]
  %v76 = vld [vmem:[%s1 + $0x1a0] sm:$0xff]
  %v77 = vld [vmem:[%s1 + $0x1a8] sm:$0xff]
  %v78 = vld [vmem:[%s1 + $0x1b0] sm:$0xff]
  %v79 = vld [vmem:[%s1 + $0x1b8] sm:$0xff]
  %v80 = vld [vmem:[%s1 + $0x1c0] sm:$0xff]
  %v81 = vld [vmem:[%s1 + $0x1c8] sm:$0xff]
  %v82 = vld [vmem:[%s1 + $0x1d0] sm:$0xff]
  %v83 = vld [vmem:[%s1 + $0x1d8] sm:$0xff]
  %v84 = vld [vmem:[%s1 + $0x1e0] sm:$0xff]
  %v85 = vld [vmem:[%s1 + $0x1e8] sm:$0xff]
  %v86 = vld [vmem:[%s1 + $0x1f0] sm:$0xff]
  %v87 = vld [vmem:[%s1 + $0x1f8] sm:$0xff]
  %v88 = vld [vmem:[%s1 + $0x200] sm:$0xff]
  %v89 = vld [vmem:[%s1 + $0x208] sm:$0xff]
  %v90 = vld [vmem:[%s1 + $0x210] sm:$0xff]
  %v91 = vld [vmem:[%s1 + $0x218] sm:$0xff]
  %v92 = vld [vmem:[%s1 + $0x220] sm:$0xff]
  %v93 = vld [vmem:[%s1 + $0x228] sm:$0xff]
  %v94 = vld [vmem:[%s1 + $0x230] sm:$0xff]
  %v95 = vld [vmem:[%s1 + $0x238] sm:$0xff]
  %v96 = vld [vmem:[%s1 + $0x240] sm:$0xff]
  %v97 = vld [vmem:[%s1 + $0x248] sm:$0xff]
  %v98 = vld [vmem:[%s1 + $0x250] sm:$0xff]
  %v99 = vld [vmem:[%s1 + $0x258] sm:$0xff]
  %v100 = vld [vmem:[%s1 + $0x260] sm:$0xff]
  %v101 = vld [vmem:[%s1 + $0x268] sm:$0xff]
  %v102 = vld [vmem:[%s1 + $0x270] sm:$0xff]
  %v103 = vld [vmem:[%s1 + $0x278] sm:$0xff]
  %v104 = vld [vmem:[%s1 + $0x280] sm:$0xff]
  %v105 = vld [vmem:[%s1 + $0x288] sm:$0xff]
  %v106 = vld [vmem:[%s1 + $0x290] sm:$0xff]
  %v107 = vld [vmem:[%s1 + $0x298] sm:$0xff]
  %v108 = vld [vmem:[%s1 + $0x2a0] sm:$0xff]
  %v109 = vld [vmem:[%s1 + $0x2a8] sm:$0xff]
  %v110 = vld [vmem:[%s1 + $0x2b0] sm:$0xff]
  %v111 = vld [vmem:[%s1 + $0x2b8] sm:$0xff]
  %v112 = vld [vmem:[%s1 + $0x2c0] sm:$0xff]
  %v113 = vld [vmem:[%s1 + $0x2c8] sm:$0xff]
  %v114 = vld [vmem:[%s1 + $0x2d0] sm:$0xff]
  %v115 = vld [vmem:[%s1 + $0x2d8] sm:$0xff]
  %v116 = vld [vmem:[%s1 + $0x2e0] sm:$0xff]
  %v117 = vld [vmem:[%s1 + $0x2e8] sm:$0xff]
  %v118 = vld [vmem:[%s1 + $0x2f0] sm:$0xff]
  %v119 = vld [vmem:[%s1 + $0x2f8] sm:$0xff]
  %v120 = vld [vmem:[%s1 + $0x300] sm:$0xff]
  %v121 = vld [vmem:[%s1 + $0x308] sm:$0xff]
  %v122 = vld [vmem:[%s1 + $0x310] sm:$0xff]
  %v123 = vld [vmem:[%s1 + $0x318] sm:$0xff]
  %v124 = vld [vmem:[%s1 + $0x320] sm:$0xff]
  %v125 = vld [vmem:[%s1 + $0x328] sm:$0xff]
  %v126 = vld [vmem:[%s1 + $0x330] sm:$0xff]
  %v127 = vld [vmem:[%s1 + $0x338] sm:$0xff]
  %v128 = vld [vmem:[%s1 + $0x340] sm:$0xff]
  %v129 = vld [vmem:[%s1 + $0x348] sm:$0xff]
  %v130 = vld [vmem:[%s1 + $0x350] sm:$0xff]
  %v131 = vld [vmem:[%s1 + $0x358] sm:$0xff]
  %v132 = vld [vmem:[%s1 + $0x360] sm:$0xff]
  %v133 = vld [vmem:[%s1 + $0x368] sm:$0xff]
  %v134 = vld [vmem:[%s1 + $0x370] sm:$0xff]
  %v135 = vld [vmem:[%s1 + $0x378] sm:$0xff]
  %v136 = vld [vmem:[%s1 + $0x380] sm:$0xff]
  %v137 = vld [vmem:[%s1 + $0x388] sm:$0xff]
  %v138 = vld [vmem:[%s1 + $0x390] sm:$0xff]
  %v139 = vld [vmem:[%s1 + $0x398] sm:$0xff]
  %v140 = vld [vmem:[%s1 + $0x3a0] sm:$0xff]
  %v141 = vld [vmem:[%s1 + $0x3a8] sm:$0xff]
  %v142 = vld [vmem:[%s1 + $0x3b0] sm:$0xff]
  %v143 = vld [vmem:[%s1 + $0x3b8] sm:$0xff]
  %v144 = vld [vmem:[%s1 + $0x3c0] sm:$0xff]
  %v145 = vld [vmem:[%s1 + $0x3c8] sm:$0xff]
  %v146 = vld [vmem:[%s1 + $0x3d0] sm:$0xff]
  %v147 = vld [vmem:[%s1 + $0x3d8] sm:$0xff]
  %v148 = vld [vmem:[%s1 + $0x3e0] sm:$0xff]
  %v149 = vld [vmem:[%s1 + $0x3e8] sm:$0xff]
  %v150 = vld [vmem:[%s1 + $0x3f0] sm:$0xff]
  %v151 = vld [vmem:[%s1 + $0x3f8] sm:$0xff]
  %v152 = vld [vmem:[%s1 + $0x400] sm:$0xff]
  %v153 = vld [vmem:[%s1 + $0x408] sm:$0xff]
  %v154 = vld [vmem:[%s1 + $0x410] sm:$0xff]
  %v155 = vld [vmem:[%s1 + $0x418] sm:$0xff]
  %v156 = vld [vmem:[%s1 + $0x420] sm:$0xff]
  %v157 = vld [vmem:[%s1 + $0x428] sm:$0xff]
  %v158 = vld [vmem:[%s1 + $0x430] sm:$0xff]
  %v159 = vld [vmem:[%s1 + $0x438] sm:$0xff]
  %v160 = vld [vmem:[%s1 + $0x440] sm:$0xff]
  %v161 = vld [vmem:[%s1 + $0x448] sm:$0xff]
  %v162 = vld [vmem:[%s1 + $0x450] sm:$0xff]
  %v163 = vld [vmem:[%s1 + $0x458] sm:$0xff]
  %v164 = vld [vmem:[%s1 + $0x460] sm:$0xff]
  %v165 = vld [vmem:[%s1 + $0x468] sm:$0xff]
  %v166 = vld [vmem:[%s1 + $0x470] sm:$0xff]
  %v167 = vld [vmem:[%s1 + $0x478] sm:$0xff]
  %v168 = vld [vmem:[%s2] sm:$0xff]
  %v169 = vld [vmem:[%s2 + $0x8] sm:$0xff]
  %171 = vset.pattern.permute.xlu0 0
  %172 = vperm.xlu0 %171, %v168
  %v173 = vpop.permute.xlu0 %172
  %176 = vset.pattern.permute.xlu0 0
  %177 = vperm.xlu0 %176, %v169
  %v178 = vpop.permute.xlu0 %177
  %v186 = vunpack.c.l.b16 %v18
  %v187 = vunpack.c.h.b16 %v18
  %v188 = vunpack.c.l.b16 %v19
  %v189 = vunpack.c.h.b16 %v19
  %v190 = vunpack.c.l.b16 %v20
  %v191 = vunpack.c.l.b16 %v21
  %v192 = vunpack.c.h.b16 %v21
  %v193 = vunpack.c.l.b16 %v22
  %v194 = vunpack.c.h.b16 %v22
  %v195 = vunpack.c.l.b16 %v23
  %v196 = vpack.c.b16 %v191, %v186
  %v197 = vpack.c.b16 %v192, %v187
  %v198 = vpack.c.b16 %v193, %v188
  %v199 = vpack.c.b16 %v194, %v189
  %v200 = vpack.c.b16 %v195, %v190
  %v349 = vunpack.c.l.b16 %v24
  %v350 = vunpack.c.h.b16 %v24
  %v351 = vunpack.c.l.b16 %v25
  %v352 = vunpack.c.h.b16 %v25
  %v353 = vunpack.c.l.b16 %v26
  %v354 = vunpack.c.h.b16 %v26
  %v355 = vunpack.c.l.b16 %v27
  %v356 = vunpack.c.h.b16 %v27
  %v357 = vunpack.c.l.b16 %v28
  %v358 = vunpack.c.h.b16 %v28
  %v359 = vunpack.c.l.b16 %v29
  %v360 = vunpack.c.h.b16 %v29
  %v361 = vunpack.c.l.b16 %v30
  %v362 = vunpack.c.h.b16 %v30
  %v363 = vunpack.c.l.b16 %v31
  %v364 = vunpack.c.h.b16 %v31
  %v365 = vunpack.c.l.b16 %v32
  %v366 = vunpack.c.h.b16 %v32
  %v367 = vunpack.c.l.b16 %v33
  %v368 = vunpack.c.h.b16 %v33
  %v369 = vunpack.c.l.b16 %v34
  %v370 = vunpack.c.h.b16 %v34
  %v371 = vunpack.c.l.b16 %v35
  %v372 = vunpack.c.h.b16 %v35
  %v373 = vunpack.c.l.b16 %v36
  %v374 = vunpack.c.h.b16 %v36
  %v375 = vunpack.c.l.b16 %v37
  %v376 = vunpack.c.h.b16 %v37
  %v377 = vunpack.c.l.b16 %v38
  %v378 = vunpack.c.h.b16 %v38
  %v379 = vunpack.c.l.b16 %v39
  %v380 = vunpack.c.h.b16 %v39
  %v381 = vunpack.c.l.b16 %v40
  %v382 = vunpack.c.h.b16 %v40
  %v383 = vunpack.c.l.b16 %v41
  %v384 = vunpack.c.h.b16 %v41
  %v385 = vunpack.c.l.b16 %v42
  %v386 = vunpack.c.h.b16 %v42
  %v387 = vunpack.c.l.b16 %v43
  %v388 = vunpack.c.h.b16 %v43
  %v389 = vunpack.c.l.b16 %v44
  %v390 = vunpack.c.h.b16 %v44
  %v391 = vunpack.c.l.b16 %v45
  %v392 = vunpack.c.h.b16 %v45
  %v393 = vunpack.c.l.b16 %v46
  %v394 = vunpack.c.h.b16 %v46
  %v395 = vunpack.c.l.b16 %v47
  %v396 = vunpack.c.h.b16 %v47
  %v397 = vunpack.c.l.b16 %v48
  %v398 = vunpack.c.h.b16 %v48
  %v399 = vunpack.c.l.b16 %v49
  %v400 = vunpack.c.h.b16 %v49
  %v401 = vunpack.c.l.b16 %v50
  %v402 = vunpack.c.h.b16 %v50
  %v403 = vunpack.c.l.b16 %v51
  %v404 = vunpack.c.h.b16 %v51
  %v405 = vunpack.c.l.b16 %v52
  %v406 = vunpack.c.h.b16 %v52
  %v407 = vunpack.c.l.b16 %v53
  %v408 = vunpack.c.h.b16 %v53
  %v409 = vunpack.c.l.b16 %v54
  %v410 = vunpack.c.h.b16 %v54
  %v411 = vunpack.c.l.b16 %v55
  %v412 = vunpack.c.h.b16 %v55
  %v413 = vunpack.c.l.b16 %v56
  %v414 = vunpack.c.h.b16 %v56
  %v415 = vunpack.c.l.b16 %v57
  %v416 = vunpack.c.h.b16 %v57
  %v417 = vunpack.c.l.b16 %v58
  %v418 = vunpack.c.h.b16 %v58
  %v419 = vunpack.c.l.b16 %v59
  %v420 = vunpack.c.h.b16 %v59
  %v421 = vunpack.c.l.b16 %v60
  %v422 = vunpack.c.h.b16 %v60
  %v423 = vunpack.c.l.b16 %v61
  %v424 = vunpack.c.h.b16 %v61
  %v425 = vunpack.c.l.b16 %v62
  %v426 = vunpack.c.h.b16 %v62
  %v427 = vunpack.c.l.b16 %v63
  %v428 = vunpack.c.h.b16 %v63
  %v429 = vunpack.c.l.b16 %v64
  %v430 = vunpack.c.h.b16 %v64
  %v431 = vunpack.c.l.b16 %v65
  %v432 = vunpack.c.h.b16 %v65
  %v433 = vunpack.c.l.b16 %v66
  %v434 = vunpack.c.h.b16 %v66
  %v435 = vunpack.c.l.b16 %v67
  %v436 = vunpack.c.h.b16 %v67
  %v437 = vunpack.c.l.b16 %v68
  %v438 = vunpack.c.h.b16 %v68
  %v439 = vunpack.c.l.b16 %v69
  %v440 = vunpack.c.h.b16 %v69
  %v441 = vunpack.c.l.b16 %v70
  %v442 = vunpack.c.h.b16 %v70
  %v443 = vunpack.c.l.b16 %v71
  %v444 = vunpack.c.h.b16 %v71
  %v445 = vunpack.c.l.b16 %v72
  %v446 = vunpack.c.h.b16 %v72
  %v447 = vunpack.c.l.b16 %v73
  %v448 = vunpack.c.h.b16 %v73
  %v449 = vunpack.c.l.b16 %v74
  %v450 = vunpack.c.h.b16 %v74
  %v451 = vunpack.c.l.b16 %v75
  %v452 = vunpack.c.h.b16 %v75
  %v453 = vunpack.c.l.b16 %v76
  %v454 = vunpack.c.h.b16 %v76
  %v455 = vunpack.c.l.b16 %v77
  %v456 = vunpack.c.h.b16 %v77
  %v457 = vunpack.c.l.b16 %v78
  %v458 = vunpack.c.h.b16 %v78
  %v459 = vunpack.c.l.b16 %v79
  %v460 = vunpack.c.h.b16 %v79
  %v461 = vunpack.c.l.b16 %v80
  %v462 = vunpack.c.h.b16 %v80
  %v463 = vunpack.c.l.b16 %v81
  %v464 = vunpack.c.h.b16 %v81
  %v465 = vunpack.c.l.b16 %v82
  %v466 = vunpack.c.h.b16 %v82
  %v467 = vunpack.c.l.b16 %v83
  %v468 = vunpack.c.h.b16 %v83
  %v469 = vunpack.c.l.b16 %v84
  %v470 = vunpack.c.h.b16 %v84
  %v471 = vunpack.c.l.b16 %v85
  %v472 = vunpack.c.h.b16 %v85
  %v473 = vunpack.c.l.b16 %v86
  %v474 = vunpack.c.h.b16 %v86
  %v475 = vunpack.c.l.b16 %v87
  %v476 = vunpack.c.h.b16 %v87
  %v477 = vunpack.c.l.b16 %v88
  %v478 = vunpack.c.h.b16 %v88
  %v479 = vunpack.c.l.b16 %v89
  %v480 = vunpack.c.h.b16 %v89
  %v481 = vunpack.c.l.b16 %v90
  %v482 = vunpack.c.h.b16 %v90
  %v483 = vunpack.c.l.b16 %v91
  %v484 = vunpack.c.h.b16 %v91
  %v485 = vunpack.c.l.b16 %v92
  %v486 = vunpack.c.h.b16 %v92
  %v487 = vunpack.c.l.b16 %v93
  %v488 = vunpack.c.h.b16 %v93
  %v489 = vunpack.c.l.b16 %v94
  %v490 = vunpack.c.h.b16 %v94
  %v491 = vunpack.c.l.b16 %v95
  %v492 = vunpack.c.h.b16 %v95
  %v493 = vunpack.c.l.b16 %v96
  %v494 = vunpack.c.h.b16 %v96
  %v495 = vunpack.c.l.b16 %v97
  %v496 = vunpack.c.h.b16 %v97
  %v497 = vunpack.c.l.b16 %v98
  %v498 = vunpack.c.h.b16 %v98
  %v499 = vunpack.c.l.b16 %v99
  %v500 = vunpack.c.h.b16 %v99
  %v501 = vunpack.c.l.b16 %v100
  %v502 = vunpack.c.h.b16 %v100
  %v503 = vunpack.c.l.b16 %v101
  %v504 = vunpack.c.h.b16 %v101
  %v505 = vunpack.c.l.b16 %v102
  %v506 = vunpack.c.h.b16 %v102
  %v507 = vunpack.c.l.b16 %v103
  %v508 = vunpack.c.h.b16 %v103
  %v509 = vunpack.c.l.b16 %v104
  %v510 = vunpack.c.h.b16 %v104
  %v511 = vunpack.c.l.b16 %v105
  %v512 = vunpack.c.h.b16 %v105
  %v513 = vunpack.c.l.b16 %v106
  %v514 = vunpack.c.h.b16 %v106
  %v515 = vunpack.c.l.b16 %v107
  %v516 = vunpack.c.h.b16 %v107
  %v517 = vunpack.c.l.b16 %v108
  %v518 = vunpack.c.h.b16 %v108
  %v519 = vunpack.c.l.b16 %v109
  %v520 = vunpack.c.h.b16 %v109
  %v521 = vunpack.c.l.b16 %v110
  %v522 = vunpack.c.h.b16 %v110
  %v523 = vunpack.c.l.b16 %v111
  %v524 = vunpack.c.h.b16 %v111
  %v525 = vunpack.c.l.b16 %v112
  %v526 = vunpack.c.h.b16 %v112
  %v527 = vunpack.c.l.b16 %v113
  %v528 = vunpack.c.h.b16 %v113
  %v529 = vunpack.c.l.b16 %v114
  %v530 = vunpack.c.h.b16 %v114
  %v531 = vunpack.c.l.b16 %v115
  %v532 = vunpack.c.h.b16 %v115
  %v533 = vunpack.c.l.b16 %v116
  %v534 = vunpack.c.h.b16 %v116
  %v535 = vunpack.c.l.b16 %v117
  %v536 = vunpack.c.h.b16 %v117
  %v537 = vunpack.c.l.b16 %v118
  %v538 = vunpack.c.h.b16 %v118
  %v539 = vunpack.c.l.b16 %v119
  %v540 = vunpack.c.h.b16 %v119
  %v541 = vunpack.c.l.b16 %v120
  %v542 = vunpack.c.h.b16 %v120
  %v543 = vunpack.c.l.b16 %v121
  %v544 = vunpack.c.h.b16 %v121
  %v545 = vunpack.c.l.b16 %v122
  %v546 = vunpack.c.h.b16 %v122
  %v547 = vunpack.c.l.b16 %v123
  %v548 = vunpack.c.h.b16 %v123
  %v549 = vunpack.c.l.b16 %v124
  %v550 = vunpack.c.h.b16 %v124
  %v551 = vunpack.c.l.b16 %v125
  %v552 = vunpack.c.h.b16 %v125
  %v553 = vunpack.c.l.b16 %v126
  %v554 = vunpack.c.h.b16 %v126
  %v555 = vunpack.c.l.b16 %v127
  %v556 = vunpack.c.h.b16 %v127
  %v557 = vunpack.c.l.b16 %v128
  %v558 = vunpack.c.h.b16 %v128
  %v559 = vunpack.c.l.b16 %v129
  %v560 = vunpack.c.h.b16 %v129
  %v561 = vunpack.c.l.b16 %v130
  %v562 = vunpack.c.h.b16 %v130
  %v563 = vunpack.c.l.b16 %v131
  %v564 = vunpack.c.h.b16 %v131
  %v565 = vunpack.c.l.b16 %v132
  %v566 = vunpack.c.h.b16 %v132
  %v567 = vunpack.c.l.b16 %v133
  %v568 = vunpack.c.h.b16 %v133
  %v569 = vunpack.c.l.b16 %v134
  %v570 = vunpack.c.h.b16 %v134
  %v571 = vunpack.c.l.b16 %v135
  %v572 = vunpack.c.h.b16 %v135
  %v573 = vunpack.c.l.b16 %v136
  %v574 = vunpack.c.h.b16 %v136
  %v575 = vunpack.c.l.b16 %v137
  %v576 = vunpack.c.h.b16 %v137
  %v577 = vunpack.c.l.b16 %v138
  %v578 = vunpack.c.h.b16 %v138
  %v579 = vunpack.c.l.b16 %v139
  %v580 = vunpack.c.h.b16 %v139
  %v581 = vunpack.c.l.b16 %v140
  %v582 = vunpack.c.h.b16 %v140
  %v583 = vunpack.c.l.b16 %v141
  %v584 = vunpack.c.h.b16 %v141
  %v585 = vunpack.c.l.b16 %v142
  %v586 = vunpack.c.h.b16 %v142
  %v587 = vunpack.c.l.b16 %v143
  %v588 = vunpack.c.h.b16 %v143
  %v589 = vunpack.c.l.b16 %v144
  %v590 = vunpack.c.h.b16 %v144
  %v591 = vunpack.c.l.b16 %v145
  %v592 = vunpack.c.h.b16 %v145
  %v593 = vunpack.c.l.b16 %v146
  %v594 = vunpack.c.h.b16 %v146
  %v595 = vunpack.c.l.b16 %v147
  %v596 = vunpack.c.h.b16 %v147
  %v597 = vunpack.c.l.b16 %v148
  %v598 = vunpack.c.h.b16 %v148
  %v599 = vunpack.c.l.b16 %v149
  %v600 = vunpack.c.h.b16 %v149
  %v601 = vunpack.c.l.b16 %v150
  %v602 = vunpack.c.h.b16 %v150
  %v603 = vunpack.c.l.b16 %v151
  %v604 = vunpack.c.h.b16 %v151
  %v605 = vunpack.c.l.b16 %v152
  %v606 = vunpack.c.h.b16 %v152
  %v607 = vunpack.c.l.b16 %v153
  %v608 = vunpack.c.h.b16 %v153
  %v609 = vunpack.c.l.b16 %v154
  %v610 = vunpack.c.h.b16 %v154
  %v611 = vunpack.c.l.b16 %v155
  %v612 = vunpack.c.h.b16 %v155
  %v613 = vunpack.c.l.b16 %v156
  %v614 = vunpack.c.h.b16 %v156
  %v615 = vunpack.c.l.b16 %v157
  %v616 = vunpack.c.h.b16 %v157
  %v617 = vunpack.c.l.b16 %v158
  %v618 = vunpack.c.h.b16 %v158
  %v619 = vunpack.c.l.b16 %v159
  %v620 = vunpack.c.h.b16 %v159
  %v621 = vunpack.c.l.b16 %v160
  %v622 = vunpack.c.h.b16 %v160
  %v623 = vunpack.c.l.b16 %v161
  %v624 = vunpack.c.h.b16 %v161
  %v625 = vunpack.c.l.b16 %v162
  %v626 = vunpack.c.h.b16 %v162
  %v627 = vunpack.c.l.b16 %v163
  %v628 = vunpack.c.h.b16 %v163
  %v629 = vunpack.c.l.b16 %v164
  %v630 = vunpack.c.h.b16 %v164
  %v631 = vunpack.c.l.b16 %v165
  %v632 = vunpack.c.h.b16 %v165
  %v633 = vunpack.c.l.b16 %v166
  %v634 = vunpack.c.h.b16 %v166
  %v635 = vunpack.c.l.b16 %v167
  %v636 = vunpack.c.h.b16 %v167
  %v637 = vpack.c.b16 %v353, %v349
  %v638 = vpack.c.b16 %v354, %v350
  %v639 = vpack.c.b16 %v355, %v351
  %v640 = vpack.c.b16 %v356, %v352
  %v641 = vpack.c.b16 %v361, %v357
  %v642 = vpack.c.b16 %v362, %v358
  %v643 = vpack.c.b16 %v363, %v359
  %v644 = vpack.c.b16 %v364, %v360
  %v645 = vpack.c.b16 %v369, %v365
  %v646 = vpack.c.b16 %v370, %v366
  %v647 = vpack.c.b16 %v371, %v367
  %v648 = vpack.c.b16 %v372, %v368
  %v649 = vpack.c.b16 %v377, %v373
  %v650 = vpack.c.b16 %v378, %v374
  %v651 = vpack.c.b16 %v379, %v375
  %v652 = vpack.c.b16 %v380, %v376
  %v653 = vpack.c.b16 %v385, %v381
  %v654 = vpack.c.b16 %v386, %v382
  %v655 = vpack.c.b16 %v387, %v383
  %v656 = vpack.c.b16 %v388, %v384
  %v657 = vpack.c.b16 %v393, %v389
  %v658 = vpack.c.b16 %v394, %v390
  %v659 = vpack.c.b16 %v395, %v391
  %v660 = vpack.c.b16 %v396, %v392
  %v661 = vpack.c.b16 %v401, %v397
  %v662 = vpack.c.b16 %v402, %v398
  %v663 = vpack.c.b16 %v403, %v399
  %v664 = vpack.c.b16 %v404, %v400
  %v665 = vpack.c.b16 %v409, %v405
  %v666 = vpack.c.b16 %v410, %v406
  %v667 = vpack.c.b16 %v411, %v407
  %v668 = vpack.c.b16 %v412, %v408
  %v669 = vpack.c.b16 %v417, %v413
  %v670 = vpack.c.b16 %v418, %v414
  %v671 = vpack.c.b16 %v419, %v415
  %v672 = vpack.c.b16 %v420, %v416
  %v673 = vpack.c.b16 %v425, %v421
  %v674 = vpack.c.b16 %v426, %v422
  %v675 = vpack.c.b16 %v427, %v423
  %v676 = vpack.c.b16 %v428, %v424
  %v677 = vpack.c.b16 %v433, %v429
  %v678 = vpack.c.b16 %v434, %v430
  %v679 = vpack.c.b16 %v435, %v431
  %v680 = vpack.c.b16 %v436, %v432
  %v681 = vpack.c.b16 %v441, %v437
  %v682 = vpack.c.b16 %v442, %v438
  %v683 = vpack.c.b16 %v443, %v439
  %v684 = vpack.c.b16 %v444, %v440
  %v685 = vpack.c.b16 %v449, %v445
  %v686 = vpack.c.b16 %v450, %v446
  %v687 = vpack.c.b16 %v451, %v447
  %v688 = vpack.c.b16 %v452, %v448
  %v689 = vpack.c.b16 %v457, %v453
  %v690 = vpack.c.b16 %v458, %v454
  %v691 = vpack.c.b16 %v459, %v455
  %v692 = vpack.c.b16 %v460, %v456
  %v693 = vpack.c.b16 %v465, %v461
  %v694 = vpack.c.b16 %v466, %v462
  %v695 = vpack.c.b16 %v467, %v463
  %v696 = vpack.c.b16 %v468, %v464
  %v697 = vpack.c.b16 %v473, %v469
  %v698 = vpack.c.b16 %v474, %v470
  %v699 = vpack.c.b16 %v475, %v471
  %v700 = vpack.c.b16 %v476, %v472
  %v701 = vpack.c.b16 %v481, %v477
  %v702 = vpack.c.b16 %v482, %v478
  %v703 = vpack.c.b16 %v483, %v479
  %v704 = vpack.c.b16 %v484, %v480
  %v705 = vpack.c.b16 %v489, %v485
  %v706 = vpack.c.b16 %v490, %v486
  %v707 = vpack.c.b16 %v491, %v487
  %v708 = vpack.c.b16 %v492, %v488
  %v709 = vpack.c.b16 %v497, %v493
  %v710 = vpack.c.b16 %v498, %v494
  %v711 = vpack.c.b16 %v499, %v495
  %v712 = vpack.c.b16 %v500, %v496
  %v713 = vpack.c.b16 %v505, %v501
  %v714 = vpack.c.b16 %v506, %v502
  %v715 = vpack.c.b16 %v507, %v503
  %v716 = vpack.c.b16 %v508, %v504
  %v717 = vpack.c.b16 %v513, %v509
  %v718 = vpack.c.b16 %v514, %v510
  %v719 = vpack.c.b16 %v515, %v511
  %v720 = vpack.c.b16 %v516, %v512
  %v721 = vpack.c.b16 %v521, %v517
  %v722 = vpack.c.b16 %v522, %v518
  %v723 = vpack.c.b16 %v523, %v519
  %v724 = vpack.c.b16 %v524, %v520
  %v725 = vpack.c.b16 %v529, %v525
  %v726 = vpack.c.b16 %v530, %v526
  %v727 = vpack.c.b16 %v531, %v527
  %v728 = vpack.c.b16 %v532, %v528
  %v729 = vpack.c.b16 %v537, %v533
  %v730 = vpack.c.b16 %v538, %v534
  %v731 = vpack.c.b16 %v539, %v535
  %v732 = vpack.c.b16 %v540, %v536
  %v733 = vpack.c.b16 %v545, %v541
  %v734 = vpack.c.b16 %v546, %v542
  %v735 = vpack.c.b16 %v547, %v543
  %v736 = vpack.c.b16 %v548, %v544
  %v737 = vpack.c.b16 %v553, %v549
  %v738 = vpack.c.b16 %v554, %v550
  %v739 = vpack.c.b16 %v555, %v551
  %v740 = vpack.c.b16 %v556, %v552
  %v741 = vpack.c.b16 %v561, %v557
  %v742 = vpack.c.b16 %v562, %v558
  %v743 = vpack.c.b16 %v563, %v559
  %v744 = vpack.c.b16 %v564, %v560
  %v745 = vpack.c.b16 %v569, %v565
  %v746 = vpack.c.b16 %v570, %v566
  %v747 = vpack.c.b16 %v571, %v567
  %v748 = vpack.c.b16 %v572, %v568
  %v749 = vpack.c.b16 %v577, %v573
  %v750 = vpack.c.b16 %v578, %v574
  %v751 = vpack.c.b16 %v579, %v575
  %v752 = vpack.c.b16 %v580, %v576
  %v753 = vpack.c.b16 %v585, %v581
  %v754 = vpack.c.b16 %v586, %v582
  %v755 = vpack.c.b16 %v587, %v583
  %v756 = vpack.c.b16 %v588, %v584
  %v757 = vpack.c.b16 %v593, %v589
  %v758 = vpack.c.b16 %v594, %v590
  %v759 = vpack.c.b16 %v595, %v591
  %v760 = vpack.c.b16 %v596, %v592
  %v761 = vpack.c.b16 %v601, %v597
  %v762 = vpack.c.b16 %v602, %v598
  %v763 = vpack.c.b16 %v603, %v599
  %v764 = vpack.c.b16 %v604, %v600
  %v765 = vpack.c.b16 %v609, %v605
  %v766 = vpack.c.b16 %v610, %v606
  %v767 = vpack.c.b16 %v611, %v607
  %v768 = vpack.c.b16 %v612, %v608
  %v769 = vpack.c.b16 %v617, %v613
  %v770 = vpack.c.b16 %v618, %v614
  %v771 = vpack.c.b16 %v619, %v615
  %v772 = vpack.c.b16 %v620, %v616
  %v773 = vpack.c.b16 %v625, %v621
  %v774 = vpack.c.b16 %v626, %v622
  %v775 = vpack.c.b16 %v627, %v623
  %v776 = vpack.c.b16 %v628, %v624
  %v777 = vpack.c.b16 %v633, %v629
  %v778 = vpack.c.b16 %v634, %v630
  %v779 = vpack.c.b16 %v635, %v631
  %v780 = vpack.c.b16 %v636, %v632
  %vm925 = vcmask 523264
  %v927 = vsel %vm925, %v200, 0
  %929 = vmatprep.subr.bf16.mxu0 %v638
  %930 = vmatpush1.bf16.msra.mxu0 %v637
  %931 = vmatprep.subr.bf16.mxu0 %v642
  %932 = vmatpush1.bf16.msra.mxu0 %v641
  %933 = vmatprep.subr.bf16.mxu0 %v646
  %934 = vmatpush1.bf16.msra.mxu0 %v645
  %935 = vmatprep.subr.bf16.mxu0 %v650
  %936 = vmatpush1.bf16.msra.mxu0 %v649
  %937 = vmatprep.subr.bf16.mxu0 %v654
  %938 = vmatpush1.bf16.msra.mxu0 %v653
  %939 = vmatprep.subr.bf16.mxu0 %v658
  %940 = vmatpush1.bf16.msra.mxu0 %v657
  %941 = vmatprep.subr.bf16.mxu0 %v662
  %942 = vmatpush1.bf16.msra.mxu0 %v661
  %943 = vmatprep.subr.bf16.mxu0 %v666
  %944 = vmatpush1.bf16.msra.mxu0 %v665
  %945 = vmatprep.subr.bf16.mxu0 %v670
  %946 = vmatpush1.bf16.msra.mxu0 %v669
  %947 = vmatprep.subr.bf16.mxu0 %v674
  %948 = vmatpush1.bf16.msra.mxu0 %v673
  %949 = vmatprep.subr.bf16.mxu0 %v678
  %950 = vmatpush1.bf16.msra.mxu0 %v677
  %951 = vmatprep.subr.bf16.mxu0 %v682
  %952 = vmatpush1.bf16.msra.mxu0 %v681
  %953 = vmatprep.subr.bf16.mxu0 %v686
  %954 = vmatpush1.bf16.msra.mxu0 %v685
  %955 = vmatprep.subr.bf16.mxu0 %v690
  %956 = vmatpush1.bf16.msra.mxu0 %v689
  %957 = vmatprep.subr.bf16.mxu0 %v694
  %958 = vmatpush1.bf16.msra.mxu0 %v693
  %959 = vmatprep.subr.bf16.mxu0 %v698
  %960 = vmatpush1.bf16.msra.mxu0 %v697
  %961 = vmatprep.mubr.bf16.mxu0 %v197
  %962 = vmatmul.mubr.bf16.gmra.mrb[0].mxu0 %v196
  %v963 = vpop.f32.mrb[0].mxu0
  %v964 = vadd.f32 %v173, %v963
  %v965 = vpop.f32.mrb[0].mxu0
  %v966 = vadd.f32 %v173, %v965
  %v967 = vpop.f32.mrb[0].mxu0
  %v968 = vadd.f32 %v178, %v967
  %v969 = vpop.f32.mrb[0].mxu0
  %v970 = vadd.f32 %v178, %v969
  %971 = vdwg.mxu0
  %972 = vmatprep.subr.bf16.mxu0 %v702
  %973 = vmatpush1.bf16.msra.mxu0 %v701
  %974 = vmatprep.subr.bf16.mxu0 %v706
  %975 = vmatpush1.bf16.msra.mxu0 %v705
  %976 = vmatprep.subr.bf16.mxu0 %v710
  %977 = vmatpush1.bf16.msra.mxu0 %v709
  %978 = vmatprep.subr.bf16.mxu0 %v714
  %979 = vmatpush1.bf16.msra.mxu0 %v713
  %980 = vmatprep.subr.bf16.mxu0 %v718
  %981 = vmatpush1.bf16.msra.mxu0 %v717
  %982 = vmatprep.subr.bf16.mxu0 %v722
  %983 = vmatpush1.bf16.msra.mxu0 %v721
  %984 = vmatprep.subr.bf16.mxu0 %v726
  %985 = vmatpush1.bf16.msra.mxu0 %v725
  %986 = vmatprep.subr.bf16.mxu0 %v730
  %987 = vmatpush1.bf16.msra.mxu0 %v729
  %988 = vmatprep.subr.bf16.mxu0 %v734
  %989 = vmatpush1.bf16.msra.mxu0 %v733
  %990 = vmatprep.subr.bf16.mxu0 %v738
  %991 = vmatpush1.bf16.msra.mxu0 %v737
  %992 = vmatprep.subr.bf16.mxu0 %v742
  %993 = vmatpush1.bf16.msra.mxu0 %v741
  %994 = vmatprep.subr.bf16.mxu0 %v746
  %995 = vmatpush1.bf16.msra.mxu0 %v745
  %996 = vmatprep.subr.bf16.mxu0 %v750
  %997 = vmatpush1.bf16.msra.mxu0 %v749
  %998 = vmatprep.subr.bf16.mxu0 %v754
  %999 = vmatpush1.bf16.msra.mxu0 %v753
  %1000 = vmatprep.subr.bf16.mxu0 %v758
  %1001 = vmatpush1.bf16.msra.mxu0 %v757
  %1002 = vmatprep.subr.bf16.mxu0 %v762
  %1003 = vmatpush1.bf16.msra.mxu0 %v761
  %1004 = vmatprep.mubr.bf16.mxu0 %v199
  %1005 = vmatmul.mubr.bf16.gmra.mrb[0].mxu0 %v198
  %v1006 = vpop.f32.mrb[0].mxu0
  %v1007 = vadd.f32 %v964, %v1006
  %v1008 = vpop.f32.mrb[0].mxu0
  %v1009 = vadd.f32 %v966, %v1008
  %v1010 = vpop.f32.mrb[0].mxu0
  %v1011 = vadd.f32 %v968, %v1010
  %v1012 = vpop.f32.mrb[0].mxu0
  %v1013 = vadd.f32 %v970, %v1012
  %1014 = vdwg.mxu0
  %1015 = vmatprep.subr.bf16.mxu0 %v766
  %1016 = vmatpush1.bf16.msra.mxu0 %v765
  %1017 = vmatprep.subr.bf16.mxu0 %v770
  %1018 = vmatpush1.bf16.msra.mxu0 %v769
  %1019 = vmatprep.subr.bf16.mxu0 %v774
  %1020 = vmatpush1.bf16.msra.mxu0 %v773
  %1021 = vmatprep.subr.bf16.mxu0 %v778
  %1022 = vmatpush1.bf16.msra.mxu0 %v777
  %1023 = vmatprep.subr.bf16.mxu0 0
  %1024 = vmatpush1.bf16.msra.mxu0 0
  %1025 = vmatprep.subr.bf16.mxu0 0
  %1026 = vmatpush1.bf16.msra.mxu0 0
  %1027 = vmatprep.subr.bf16.mxu0 0
  %1028 = vmatpush1.bf16.msra.mxu0 0
  %1029 = vmatprep.subr.bf16.mxu0 0
  %1030 = vmatpush1.bf16.msra.mxu0 0
  %1031 = vmatprep.subr.bf16.mxu0 0
  %1032 = vmatpush1.bf16.msra.mxu0 0
  %1033 = vmatprep.subr.bf16.mxu0 0
  %1034 = vmatpush1.bf16.msra.mxu0 0
  %1035 = vmatprep.subr.bf16.mxu0 0
  %1036 = vmatpush1.bf16.msra.mxu0 0
  %1037 = vmatprep.subr.bf16.mxu0 0
  %1038 = vmatpush1.bf16.msra.mxu0 0
  %1039 = vmatprep.subr.bf16.mxu0 0
  %1040 = vmatpush1.bf16.msra.mxu0 0
  %1041 = vmatprep.subr.bf16.mxu0 0
  %1042 = vmatpush1.bf16.msra.mxu0 0
  %1043 = vmatprep.subr.bf16.mxu0 0
  %1044 = vmatpush1.bf16.msra.mxu0 0
  %1045 = vmatprep.subr.bf16.mxu0 0
  %1046 = vmatpush1.bf16.msra.mxu0 0
  %1047 = vmatprep.mubr.bf16.mxu0 0
  %1048 = vmatmul.mubr.bf16.gmra.mrb[0].mxu0 %v927
  %v1049 = vpop.f32.mrb[0].mxu0
  %v1050 = vadd.f32 %v1007, %v1049
  %v1051 = vpop.f32.mrb[0].mxu0
  %v1052 = vadd.f32 %v1009, %v1051
  %v1053 = vpop.f32.mrb[0].mxu0
  %v1054 = vadd.f32 %v1011, %v1053
  %v1055 = vpop.f32.mrb[0].mxu0
  %v1056 = vadd.f32 %v1013, %v1055
  %1057 = vdwg.mxu0
  %1058 = vmatprep.subr.bf16.mxu0 %v640
  %1059 = vmatpush1.bf16.msra.mxu0 %v639
  %1060 = vmatprep.subr.bf16.mxu0 %v644
  %1061 = vmatpush1.bf16.msra.mxu0 %v643
  %1062 = vmatprep.subr.bf16.mxu0 %v648
  %1063 = vmatpush1.bf16.msra.mxu0 %v647
  %1064 = vmatprep.subr.bf16.mxu0 %v652
  %1065 = vmatpush1.bf16.msra.mxu0 %v651
  %1066 = vmatprep.subr.bf16.mxu0 %v656
  %1067 = vmatpush1.bf16.msra.mxu0 %v655
  %1068 = vmatprep.subr.bf16.mxu0 %v660
  %1069 = vmatpush1.bf16.msra.mxu0 %v659
  %1070 = vmatprep.subr.bf16.mxu0 %v664
  %1071 = vmatpush1.bf16.msra.mxu0 %v663
  %1072 = vmatprep.subr.bf16.mxu0 %v668
  %1073 = vmatpush1.bf16.msra.mxu0 %v667
  %1074 = vmatprep.subr.bf16.mxu0 %v672
  %1075 = vmatpush1.bf16.msra.mxu0 %v671
  %1076 = vmatprep.subr.bf16.mxu0 %v676
  %1077 = vmatpush1.bf16.msra.mxu0 %v675
  %1078 = vmatprep.subr.bf16.mxu0 %v680
  %1079 = vmatpush1.bf16.msra.mxu0 %v679
  %1080 = vmatprep.subr.bf16.mxu0 %v684
  %1081 = vmatpush1.bf16.msra.mxu0 %v683
  %1082 = vmatprep.subr.bf16.mxu0 %v688
  %1083 = vmatpush1.bf16.msra.mxu0 %v687
  %1084 = vmatprep.subr.bf16.mxu0 %v692
  %1085 = vmatpush1.bf16.msra.mxu0 %v691
  %1086 = vmatprep.subr.bf16.mxu0 %v696
  %1087 = vmatpush1.bf16.msra.mxu0 %v695
  %1088 = vmatprep.subr.bf16.mxu0 %v700
  %1089 = vmatpush1.bf16.msra.mxu0 %v699
  %1090 = vmatprep.mubr.bf16.mxu0 %v197
  %1091 = vmatmul.mubr.bf16.gmra.mrb[0].mxu0 %v196
  %v1092 = vpop.f32.mrb[0].mxu0
  %v1093 = vadd.f32 %v173, %v1092
  %v1094 = vpop.f32.mrb[0].mxu0
  %v1095 = vadd.f32 %v173, %v1094
  %v1096 = vpop.f32.mrb[0].mxu0
  %v1097 = vadd.f32 %v178, %v1096
  %v1098 = vpop.f32.mrb[0].mxu0
  %v1099 = vadd.f32 %v178, %v1098
  %1100 = vdwg.mxu0
  %1101 = vmatprep.subr.bf16.mxu0 %v704
  %1102 = vmatpush1.bf16.msra.mxu0 %v703
  %1103 = vmatprep.subr.bf16.mxu0 %v708
  %1104 = vmatpush1.bf16.msra.mxu0 %v707
  %1105 = vmatprep.subr.bf16.mxu0 %v712
  %1106 = vmatpush1.bf16.msra.mxu0 %v711
  %1107 = vmatprep.subr.bf16.mxu0 %v716
  %1108 = vmatpush1.bf16.msra.mxu0 %v715
  %1109 = vmatprep.subr.bf16.mxu0 %v720
  %1110 = vmatpush1.bf16.msra.mxu0 %v719
  %1111 = vmatprep.subr.bf16.mxu0 %v724
  %1112 = vmatpush1.bf16.msra.mxu0 %v723
  %1113 = vmatprep.subr.bf16.mxu0 %v728
  %1114 = vmatpush1.bf16.msra.mxu0 %v727
  %1115 = vmatprep.subr.bf16.mxu0 %v732
  %1116 = vmatpush1.bf16.msra.mxu0 %v731
  %1117 = vmatprep.subr.bf16.mxu0 %v736
  %1118 = vmatpush1.bf16.msra.mxu0 %v735
  %1119 = vmatprep.subr.bf16.mxu0 %v740
  %1120 = vmatpush1.bf16.msra.mxu0 %v739
  %1121 = vmatprep.subr.bf16.mxu0 %v744
  %1122 = vmatpush1.bf16.msra.mxu0 %v743
  %1123 = vmatprep.subr.bf16.mxu0 %v748
  %1124 = vmatpush1.bf16.msra.mxu0 %v747
  %1125 = vmatprep.subr.bf16.mxu0 %v752
  %1126 = vmatpush1.bf16.msra.mxu0 %v751
  %1127 = vmatprep.subr.bf16.mxu0 %v756
  %1128 = vmatpush1.bf16.msra.mxu0 %v755
  %1129 = vmatprep.subr.bf16.mxu0 %v760
  %1130 = vmatpush1.bf16.msra.mxu0 %v759
  %1131 = vmatprep.subr.bf16.mxu0 %v764
  %1132 = vmatpush1.bf16.msra.mxu0 %v763
  %1133 = vmatprep.mubr.bf16.mxu0 %v199
  %1134 = vmatmul.mubr.bf16.gmra.mrb[0].mxu0 %v198
  %v1135 = vpop.f32.mrb[0].mxu0
  %v1136 = vadd.f32 %v1093, %v1135
  %v1137 = vpop.f32.mrb[0].mxu0
  %v1138 = vadd.f32 %v1095, %v1137
  %v1139 = vpop.f32.mrb[0].mxu0
  %v1140 = vadd.f32 %v1097, %v1139
  %v1141 = vpop.f32.mrb[0].mxu0
  %v1142 = vadd.f32 %v1099, %v1141
  %1143 = vdwg.mxu0
  %1144 = vmatprep.subr.bf16.mxu0 %v768
  %1145 = vmatpush1.bf16.msra.mxu0 %v767
  %1146 = vmatprep.subr.bf16.mxu0 %v772
  %1147 = vmatpush1.bf16.msra.mxu0 %v771
  %1148 = vmatprep.subr.bf16.mxu0 %v776
  %1149 = vmatpush1.bf16.msra.mxu0 %v775
  %1150 = vmatprep.subr.bf16.mxu0 %v780
  %1151 = vmatpush1.bf16.msra.mxu0 %v779
  %1152 = vmatprep.subr.bf16.mxu0 0
  %1153 = vmatpush1.bf16.msra.mxu0 0
  %1154 = vmatprep.subr.bf16.mxu0 0
  %1155 = vmatpush1.bf16.msra.mxu0 0
  %1156 = vmatprep.subr.bf16.mxu0 0
  %1157 = vmatpush1.bf16.msra.mxu0 0
  %1158 = vmatprep.subr.bf16.mxu0 0
  %1159 = vmatpush1.bf16.msra.mxu0 0
  %1160 = vmatprep.subr.bf16.mxu0 0
  %1161 = vmatpush1.bf16.msra.mxu0 0
  %1162 = vmatprep.subr.bf16.mxu0 0
  %1163 = vmatpush1.bf16.msra.mxu0 0
  %1164 = vmatprep.subr.bf16.mxu0 0
  %1165 = vmatpush1.bf16.msra.mxu0 0
  %1166 = vmatprep.subr.bf16.mxu0 0
  %1167 = vmatpush1.bf16.msra.mxu0 0
  %1168 = vmatprep.subr.bf16.mxu0 0
  %1169 = vmatpush1.bf16.msra.mxu0 0
  %1170 = vmatprep.subr.bf16.mxu0 0
  %1171 = vmatpush1.bf16.msra.mxu0 0
  %1172 = vmatprep.subr.bf16.mxu0 0
  %1173 = vmatpush1.bf16.msra.mxu0 0
  %1174 = vmatprep.subr.bf16.mxu0 0
  %1175 = vmatpush1.bf16.msra.mxu0 0
  %1176 = vmatprep.mubr.bf16.mxu0 0
  %1177 = vmatmul.mubr.bf16.gmra.mrb[0].mxu0 %v927
  %v1178 = vpop.f32.mrb[0].mxu0
  %v1179 = vadd.f32 %v1136, %v1178
  %v1180 = vpop.f32.mrb[0].mxu0
  %v1181 = vadd.f32 %v1138, %v1180
  %v1182 = vpop.f32.mrb[0].mxu0
  %v1183 = vadd.f32 %v1140, %v1182
  %v1184 = vpop.f32.mrb[0].mxu0
  %v1185 = vadd.f32 %v1142, %v1184
  %1186 = vdwg.mxu0
  %v1187 = vld [vmem:[%s3] sm:$0xff]
  %v1188 = vld [vmem:[%s3 + $0x8] sm:$0xff]
  %v1189 = vld [vmem:[%s3 + $0x10] sm:$0xff]
  %v1190 = vld [vmem:[%s3 + $0x18] sm:$0xff]
  %v1191 = vunpack.c.l.bf16 %v1187
  %v1192 = vunpack.c.h.bf16 %v1187
  %v1193 = vunpack.c.l.bf16 %v1188
  %v1194 = vunpack.c.h.bf16 %v1188
  %v1195 = vunpack.c.l.bf16 %v1189
  %v1196 = vunpack.c.h.bf16 %v1189
  %v1197 = vunpack.c.l.bf16 %v1190
  %v1198 = vunpack.c.h.bf16 %v1190
  %v1199 = vadd.f32 %v1050, %v1191
  %v1200 = vadd.f32 %v1052, %v1192
  %v1201 = vadd.f32 %v1179, %v1193
  %v1202 = vadd.f32 %v1181, %v1194
  %v1203 = vadd.f32 %v1054, %v1195
  %v1204 = vadd.f32 %v1056, %v1196
  %v1205 = vadd.f32 %v1183, %v1197
  %v1206 = vadd.f32 %v1185, %v1198
  %v1207 = vmax.f32 %v1199, 0.0
  %v1208 = vmax.f32 %v1200, 0.0
  %v1209 = vmax.f32 %v1201, 0.0
  %v1210 = vmax.f32 %v1202, 0.0
  %v1211 = vmax.f32 %v1203, 0.0
  %v1212 = vmax.f32 %v1204, 0.0
  %v1213 = vmax.f32 %v1205, 0.0
  %v1214 = vmax.f32 %v1206, 0.0
  %v1215 = vpack.c.bf16 %v1211, %v1207
  %v1216 = vpack.c.bf16 %v1212, %v1208
  %v1217 = vpack.c.bf16 %v1213, %v1209
  %v1218 = vpack.c.bf16 %v1214, %v1210
  %v1223 = vunpack.c.l.b16 %v1215
  %v1224 = vunpack.c.l.b16 %v1216
  %v1225 = vunpack.c.l.b16 %v1217
  %v1226 = vunpack.c.l.b16 %v1218
  %v1227 = vunpack.c.h.b16 %v1215
  %v1228 = vunpack.c.h.b16 %v1216
  %v1229 = vunpack.c.h.b16 %v1217
  %v1230 = vunpack.c.h.b16 %v1218
  %v1231 = vpack.c.b16 %v1224, %v1223
  %v1232 = vpack.c.b16 %v1226, %v1225
  %v1233 = vpack.c.b16 %v1228, %v1227
  %v1234 = vpack.c.b16 %v1230, %v1229
  %1239 = vst [vmem:[%s4] sm:$0xff] %v1231
  %1240 = vst [vmem:[%s4 + $0x8] sm:$0xff] %v1232
  %1241 = vst [vmem:[%s4 + $0x10] sm:$0xff] %v1233
  %1242 = vst [vmem:[%s4 + $0x18] sm:$0xff] %v1234
  // Predicated region
  $region18: #{sam2unet_forward.43} parent=0 // pred_check
    _
  $region19: #{sam2unet_forward.43} parent=0 // pred_check_branch
    %1244 = sbr.rel (0) target = $region21
  $region20: #{sam2unet_forward.43} parent=0 // pred_region
    _
  $region21: #{sam2unet_forward.43} parent=0 // pred_fallthru
    _
  // Predicated region
  $region22: #{sam2unet_forward.43} parent=0 // pred_check
    _
  $region23: #{sam2unet_forward.43} parent=0 // pred_check_branch
    %1246 = sbr.rel (0) target = $region25
  $region24: #{sam2unet_forward.43} parent=0 // pred_region
    _
  $region25: #{sam2unet_forward.43} parent=0 // pred_fallthru
    _

// kernel: sam2unet_forward.36
$region0: #{sam2unet_forward.36}
  #allocation0 [shape = 'u32[]', space=smem, size = 0x4, offset = 0x4, fixed_abs, tag = 'smem constant byte address 0x4 - core index']
  #allocation1 [shape = 'u32[144,128]{1,0:T(1,128)}', space=vmem, size = 0x12000, scoped, tag = 'internal scratch']
  %s0 = inlined_call_operand.vmem [shape: bf16[16,80], index: 0, kind: input, shape index: {}]
  %s1 = inlined_call_operand.vmem [shape: bf16[80,128], index: 1, kind: input, shape index: {}]
  %s2 = inlined_call_operand.vmem [shape: f32[16,1], index: 2, kind: input, shape index: {}]
  %s3 = inlined_call_operand.vmem [shape: bf16[16,128], index: 3, kind: output, shape index: {}]
  %s4 = sld [smem:[#allocation0]]
  $region22: #{sam2unet_forward.36} parent=0
    _
  %s6 = ssub.s32 1, %s4
  %s7 = scalar_select 0, %s6, %s4
  // Predicated region
  $region2: #{sam2unet_forward.36} parent=0 // pred_check
    _
  $region3: #{sam2unet_forward.36} parent=0 // pred_check_branch
    %9 = sbr.rel (0) target = $region5
  $region4: #{sam2unet_forward.36} parent=0 // pred_region
    _
  $region5: #{sam2unet_forward.36} parent=0 // pred_fallthru
    _
  // Predicated region
  $region6: #{sam2unet_forward.36} parent=0 // pred_check
    _
  $region7: #{sam2unet_forward.36} parent=0 // pred_check_branch
    %11 = sbr.rel (0) target = $region9
  $region8: #{sam2unet_forward.36} parent=0 // pred_region
    _
  $region9: #{sam2unet_forward.36} parent=0 // pred_fallthru
    _
  // Predicated region
  $region10: #{sam2unet_forward.36} parent=0 // pred_check
    _
  $region11: #{sam2unet_forward.36} parent=0 // pred_check_branch
    %13 = sbr.rel (0) target = $region13
  $region12: #{sam2unet_forward.36} parent=0 // pred_region
    _
  $region13: #{sam2unet_forward.36} parent=0 // pred_fallthru
    _
  %v15 = vld [vmem:[%s0] sm:$0xf]
  %v16 = vld [vmem:[%s0 + $0x4] sm:$0xf]
  %v17 = vld [vmem:[%s1] sm:$0xf]
  %v18 = vld [vmem:[%s1 + $0x4] sm:$0xf]
  %v19 = vld [vmem:[%s1 + $0x8] sm:$0xf]
  %v20 = vld [vmem:[%s1 + $0xc] sm:$0xf]
  %v21 = vld [vmem:[%s1 + $0x10] sm:$0xf]
  %v22 = vld [vmem:[%s1 + $0x14] sm:$0xf]
  %v23 = vld [vmem:[%s1 + $0x18] sm:$0xf]
  %v24 = vld [vmem:[%s1 + $0x1c] sm:$0xf]
  %v25 = vld [vmem:[%s1 + $0x20] sm:$0xf]
  %v26 = vld [vmem:[%s1 + $0x24] sm:$0xf]
  %v27 = vld [vmem:[%s2] sm:$0xff]
  %v28 = vld [vmem:[%s2 + $0x8] sm:$0xff]
  %30 = vset.pattern.permute.xlu0 0
  %31 = vperm.xlu0 %30, %v27
  %v32 = vpop.permute.xlu0 %31
  %35 = vset.pattern.permute.xlu0 0
  %36 = vperm.xlu0 %35, %v28
  %v37 = vpop.permute.xlu0 %36
  %v41 = vunpack.c.l.b16 %v15
  %v42 = vunpack.c.l.b16 %v16
  %v43 = vpack.c.b16 %v42, %v41
  %v54 = vunpack.c.l.b16 %v17
  %v55 = vunpack.c.l.b16 %v18
  %v56 = vunpack.c.l.b16 %v19
  %v57 = vunpack.c.l.b16 %v20
  %v58 = vunpack.c.l.b16 %v21
  %v59 = vunpack.c.l.b16 %v22
  %v60 = vunpack.c.l.b16 %v23
  %v61 = vunpack.c.l.b16 %v24
  %v62 = vunpack.c.l.b16 %v25
  %v63 = vunpack.c.l.b16 %v26
  %v64 = vpack.c.b16 %v55, %v54
  %v65 = vpack.c.b16 %v57, %v56
  %v66 = vpack.c.b16 %v59, %v58
  %v67 = vpack.c.b16 %v61, %v60
  %v68 = vpack.c.b16 %v63, %v62
  %vm74 = vcmask 654336
  %v76 = vsel %vm74, %v43, 0
  %78 = vmatprep.subr.bf16.mxu0 0
  %79 = vmatpush1.bf16.msra.mxu0 %v64
  %80 = vmatprep.subr.bf16.mxu0 0
  %81 = vmatpush1.bf16.msra.mxu0 %v65
  %82 = vmatprep.subr.bf16.mxu0 0
  %83 = vmatpush1.bf16.msra.mxu0 %v66
  %84 = vmatprep.subr.bf16.mxu0 0
  %85 = vmatpush1.bf16.msra.mxu0 %v67
  %86 = vmatprep.subr.bf16.mxu0 0
  %87 = vmatpush1.bf16.msra.mxu0 %v68
  %88 = vmatprep.subr.bf16.mxu0 0
  %89 = vmatpush1.bf16.msra.mxu0 0
  %90 = vmatprep.subr.bf16.mxu0 0
  %91 = vmatpush1.bf16.msra.mxu0 0
  %92 = vmatprep.subr.bf16.mxu0 0
  %93 = vmatpush1.bf16.msra.mxu0 0
  %94 = vmatprep.subr.bf16.mxu0 0
  %95 = vmatpush1.bf16.msra.mxu0 0
  %96 = vmatprep.subr.bf16.mxu0 0
  %97 = vmatpush1.bf16.msra.mxu0 0
  %98 = vmatprep.subr.bf16.mxu0 0
  %99 = vmatpush1.bf16.msra.mxu0 0
  %100 = vmatprep.subr.bf16.mxu0 0
  %101 = vmatpush1.bf16.msra.mxu0 0
  %102 = vmatprep.subr.bf16.mxu0 0
  %103 = vmatpush1.bf16.msra.mxu0 0
  %104 = vmatprep.subr.bf16.mxu0 0
  %105 = vmatpush1.bf16.msra.mxu0 0
  %106 = vmatprep.subr.bf16.mxu0 0
  %107 = vmatpush1.bf16.msra.mxu0 0
  %108 = vmatprep.subr.bf16.mxu0 0
  %109 = vmatpush1.bf16.msra.mxu0 0
  %110 = vmatprep.mubr.bf16.mxu0 0
  %111 = vmatmul.mubr.bf16.gmra.mrb[0].mxu0 %v76
  %v112 = vpop.f32.mrb[0].mxu0
  %v113 = vadd.f32 %v32, %v112
  %v114 = vpop.f32.mrb[0].mxu0
  %v115 = vpop.f32.mrb[0].mxu0
  %v116 = vadd.f32 %v37, %v115
  %v117 = vpop.f32.mrb[0].mxu0
  %118 = vdwg.mxu0
  %v119 = vmax.f32 %v113, 0.0
  %v120 = vmax.f32 %v116, 0.0
  %v121 = vpack.c.bf16 %v120, %v119
  %v123 = vunpack.c.l.b16 %v121
  %v124 = vunpack.c.h.b16 %v121
  %v125 = vpack.c.b16 %v123, %v123
  %v126 = vpack.c.b16 %v124, %v124
  %129 = vst [vmem:[%s3] sm:$0xf] %v125
  %130 = vst [vmem:[%s3 + $0x4] sm:$0xf] %v126
  // Predicated region
  $region14: #{sam2unet_forward.36} parent=0 // pred_check
    _
  $region15: #{sam2unet_forward.36} parent=0 // pred_check_branch
    %132 = sbr.rel (0) target = $region17
  $region16: #{sam2unet_forward.36} parent=0 // pred_region
    _
  $region17: #{sam2unet_forward.36} parent=0 // pred_fallthru
    _
  // Predicated region
  $region18: #{sam2unet_forward.36} parent=0 // pred_check
    _
  $region19: #{sam2unet_forward.36} parent=0 // pred_check_branch
    %134 = sbr.rel (0) target = $region21
  $region20: #{sam2unet_forward.36} parent=0 // pred_region
    _
  $region21: #{sam2unet_forward.36} parent=0 // pred_fallthru
    _

// kernel: sam2unet_forward.44
$region0: #{sam2unet_forward.44}
  #allocation0 [shape = 'u32[]', space=smem, size = 0x4, offset = 0x4, fixed_abs, tag = 'smem constant byte address 0x4 - core index']
  #allocation1 [shape = 'u32[144,128]{1,0:T(1,128)}', space=vmem, size = 0x12000, scoped, tag = 'internal scratch']
  %s0 = inlined_call_operand.vmem [shape: bf16[80,16], index: 0, kind: input, shape index: {}]
  %s1 = inlined_call_operand.vmem [shape: bf16[16,128], index: 1, kind: input, shape index: {}]
  %s2 = inlined_call_operand.vmem [shape: f32[80,1], index: 2, kind: input, shape index: {}]
  %s3 = inlined_call_operand.vmem [shape: bf16[80,128], index: 3, kind: output, shape index: {}]
  %s4 = sld [smem:[#allocation0]]
  $region22: #{sam2unet_forward.44} parent=0
    _
  %s6 = ssub.s32 1, %s4
  %s7 = scalar_select 0, %s6, %s4
  // Predicated region
  $region2: #{sam2unet_forward.44} parent=0 // pred_check
    _
  $region3: #{sam2unet_forward.44} parent=0 // pred_check_branch
    %9 = sbr.rel (0) target = $region5
  $region4: #{sam2unet_forward.44} parent=0 // pred_region
    _
  $region5: #{sam2unet_forward.44} parent=0 // pred_fallthru
    _
  // Predicated region
  $region6: #{sam2unet_forward.44} parent=0 // pred_check
    _
  $region7: #{sam2unet_forward.44} parent=0 // pred_check_branch
    %11 = sbr.rel (0) target = $region9
  $region8: #{sam2unet_forward.44} parent=0 // pred_region
    _
  $region9: #{sam2unet_forward.44} parent=0 // pred_fallthru
    _
  // Predicated region
  $region10: #{sam2unet_forward.44} parent=0 // pred_check
    _
  $region11: #{sam2unet_forward.44} parent=0 // pred_check_branch
    %13 = sbr.rel (0) target = $region13
  $region12: #{sam2unet_forward.44} parent=0 // pred_region
    _
  $region13: #{sam2unet_forward.44} parent=0 // pred_fallthru
    _
  %v15 = vld [vmem:[%s0] sm:$0xf]
  %v16 = vld [vmem:[%s0 + $0x4] sm:$0xf]
  %v17 = vld [vmem:[%s0 + $0x8] sm:$0xf]
  %v18 = vld [vmem:[%s0 + $0xc] sm:$0xf]
  %v19 = vld [vmem:[%s0 + $0x10] sm:$0xf]
  %v20 = vld [vmem:[%s0 + $0x14] sm:$0xf]
  %v21 = vld [vmem:[%s0 + $0x18] sm:$0xf]
  %v22 = vld [vmem:[%s0 + $0x1c] sm:$0xf]
  %v23 = vld [vmem:[%s0 + $0x20] sm:$0xf]
  %v24 = vld [vmem:[%s0 + $0x24] sm:$0xf]
  %v25 = vld [vmem:[%s1] sm:$0xf]
  %v26 = vld [vmem:[%s1 + $0x4] sm:$0xf]
  %v27 = vld [vmem:[%s2] sm:$0xff]
  %v28 = vld [vmem:[%s2 + $0x8] sm:$0xff]
  %v29 = vld [vmem:[%s2 + $0x10] sm:$0xff]
  %v30 = vld [vmem:[%s2 + $0x18] sm:$0xff]
  %v31 = vld [vmem:[%s2 + $0x20] sm:$0xff]
  %v32 = vld [vmem:[%s2 + $0x28] sm:$0xff]
  %v33 = vld [vmem:[%s2 + $0x30] sm:$0xff]
  %v34 = vld [vmem:[%s2 + $0x38] sm:$0xff]
  %v35 = vld [vmem:[%s2 + $0x40] sm:$0xff]
  %v36 = vld [vmem:[%s2 + $0x48] sm:$0xff]
  %38 = vset.pattern.permute.xlu0 0
  %39 = vperm.xlu0 %38, %v27
  %v40 = vpop.permute.xlu0 %39
  %43 = vset.pattern.permute.xlu0 0
  %44 = vperm.xlu0 %43, %v28
  %v45 = vpop.permute.xlu0 %44
  %48 = vset.pattern.permute.xlu0 0
  %49 = vperm.xlu0 %48, %v29
  %v50 = vpop.permute.xlu0 %49
  %53 = vset.pattern.permute.xlu0 0
  %54 = vperm.xlu0 %53, %v30
  %v55 = vpop.permute.xlu0 %54
  %58 = vset.pattern.permute.xlu0 0
  %59 = vperm.xlu0 %58, %v31
  %v60 = vpop.permute.xlu0 %59
  %63 = vset.pattern.permute.xlu0 0
  %64 = vperm.xlu0 %63, %v32
  %v65 = vpop.permute.xlu0 %64
  %68 = vset.pattern.permute.xlu0 0
  %69 = vperm.xlu0 %68, %v33
  %v70 = vpop.permute.xlu0 %69
  %73 = vset.pattern.permute.xlu0 0
  %74 = vperm.xlu0 %73, %v34
  %v75 = vpop.permute.xlu0 %74
  %78 = vset.pattern.permute.xlu0 0
  %79 = vperm.xlu0 %78, %v35
  %v80 = vpop.permute.xlu0 %79
  %83 = vset.pattern.permute.xlu0 0
  %84 = vperm.xlu0 %83, %v36
  %v85 = vpop.permute.xlu0 %84
  %v97 = vunpack.c.l.b16 %v15
  %v98 = vunpack.c.l.b16 %v16
  %v99 = vunpack.c.l.b16 %v17
  %v100 = vunpack.c.l.b16 %v18
  %v101 = vunpack.c.l.b16 %v19
  %v102 = vunpack.c.l.b16 %v20
  %v103 = vunpack.c.l.b16 %v21
  %v104 = vunpack.c.l.b16 %v22
  %v105 = vunpack.c.l.b16 %v23
  %v106 = vunpack.c.l.b16 %v24
  %v107 = vpack.c.b16 %v98, %v97
  %v108 = vpack.c.b16 %v100, %v99
  %v109 = vpack.c.b16 %v102, %v101
  %v110 = vpack.c.b16 %v104, %v103
  %v111 = vpack.c.b16 %v106, %v105
  %v114 = vunpack.c.l.b16 %v25
  %v115 = vunpack.c.l.b16 %v26
  %v116 = vpack.c.b16 %v115, %v114
  %vm118 = vcmask 130048
  %v120 = vsel %vm118, %v107, 0
  %v123 = vsel %vm118, %v108, 0
  %v126 = vsel %vm118, %v109, 0
  %v129 = vsel %vm118, %v110, 0
  %v132 = vsel %vm118, %v111, 0
  %134 = vmatprep.subr.bf16.mxu0 0
  %135 = vmatpush1.bf16.msra.mxu0 %v116
  %136 = vmatprep.subr.bf16.mxu0 0
  %137 = vmatpush1.bf16.msra.mxu0 0
  %138 = vmatprep.subr.bf16.mxu0 0
  %139 = vmatpush1.bf16.msra.mxu0 0
  %140 = vmatprep.subr.bf16.mxu0 0
  %141 = vmatpush1.bf16.msra.mxu0 0
  %142 = vmatprep.subr.bf16.mxu0 0
  %143 = vmatpush1.bf16.msra.mxu0 0
  %144 = vmatprep.subr.bf16.mxu0 0
  %145 = vmatpush1.bf16.msra.mxu0 0
  %146 = vmatprep.subr.bf16.mxu0 0
  %147 = vmatpush1.bf16.msra.mxu0 0
  %148 = vmatprep.subr.bf16.mxu0 0
  %149 = vmatpush1.bf16.msra.mxu0 0
  %150 = vmatprep.subr.bf16.mxu0 0
  %151 = vmatpush1.bf16.msra.mxu0 0
  %152 = vmatprep.subr.bf16.mxu0 0
  %153 = vmatpush1.bf16.msra.mxu0 0
  %154 = vmatprep.subr.bf16.mxu0 0
  %155 = vmatpush1.bf16.msra.mxu0 0
  %156 = vmatprep.subr.bf16.mxu0 0
  %157 = vmatpush1.bf16.msra.mxu0 0
  %158 = vmatprep.subr.bf16.mxu0 0
  %159 = vmatpush1.bf16.msra.mxu0 0
  %160 = vmatprep.subr.bf16.mxu0 0
  %161 = vmatpush1.bf16.msra.mxu0 0
  %162 = vmatprep.subr.bf16.mxu0 0
  %163 = vmatpush1.bf16.msra.mxu0 0
  %164 = vmatprep.subr.bf16.mxu0 0
  %165 = vmatpush1.bf16.msra.mxu0 0
  %166 = vmatprep.mubr.bf16.mxu0 0
  %167 = vmatmul.mubr.bf16.gmra.mrb[0].mxu0 %v120
  %v168 = vpop.f32.mrb[0].mxu0
  %v169 = vadd.f32 %v40, %v168
  %v170 = vpop.f32.mrb[0].mxu0
  %v171 = vpop.f32.mrb[0].mxu0
  %v172 = vadd.f32 %v45, %v171
  %v173 = vpop.f32.mrb[0].mxu0
  %174 = vmatprep.mubr.bf16.mxu0 0
  %175 = vmatmul.mubr.bf16.gmra.mrb[0].mxu0 %v123
  %v176 = vpop.f32.mrb[0].mxu0
  %v177 = vadd.f32 %v50, %v176
  %v178 = vpop.f32.mrb[0].mxu0
  %v179 = vpop.f32.mrb[0].mxu0
  %v180 = vadd.f32 %v55, %v179
  %v181 = vpop.f32.mrb[0].mxu0
  %182 = vmatprep.mubr.bf16.mxu0 0
  %183 = vmatmul.mubr.bf16.gmra.mrb[0].mxu0 %v126
  %v184 = vpop.f32.mrb[0].mxu0
  %v185 = vadd.f32 %v60, %v184
  %v186 = vpop.f32.mrb[0].mxu0
  %v187 = vpop.f32.mrb[0].mxu0
  %v188 = vadd.f32 %v65, %v187
  %v189 = vpop.f32.mrb[0].mxu0
  %190 = vmatprep.mubr.bf16.mxu0 0
  %191 = vmatmul.mubr.bf16.gmra.mrb[0].mxu0 %v129
  %v192 = vpop.f32.mrb[0].mxu0
  %v193 = vadd.f32 %v70, %v192
  %v194 = vpop.f32.mrb[0].mxu0
  %v195 = vpop.f32.mrb[0].mxu0
  %v196 = vadd.f32 %v75, %v195
  %v197 = vpop.f32.mrb[0].mxu0
  %198 = vmatprep.mubr.bf16.mxu0 0
  %199 = vmatmul.mubr.bf16.gmra.mrb[0].mxu0 %v132
  %v200 = vpop.f32.mrb[0].mxu0
  %v201 = vadd.f32 %v80, %v200
  %v202 = vpop.f32.mrb[0].mxu0
  %v203 = vpop.f32.mrb[0].mxu0
  %v204 = vadd.f32 %v85, %v203
  %v205 = vpop.f32.mrb[0].mxu0
  %206 = vdwg.mxu0
  %v207 = vpack.c.bf16 %v172, %v169
  %v208 = vpack.c.bf16 %v180, %v177
  %v209 = vpack.c.bf16 %v188, %v185
  %v210 = vpack.c.bf16 %v196, %v193
  %v211 = vpack.c.bf16 %v204, %v201
  %v217 = vunpack.c.l.b16 %v207
  %v218 = vunpack.c.h.b16 %v207
  %v219 = vunpack.c.l.b16 %v208
  %v220 = vunpack.c.h.b16 %v208
  %v221 = vunpack.c.l.b16 %v209
  %v222 = vunpack.c.h.b16 %v209
  %v223 = vunpack.c.l.b16 %v210
  %v224 = vunpack.c.h.b16 %v210
  %v225 = vunpack.c.l.b16 %v211
  %v226 = vunpack.c.h.b16 %v211
  %v227 = vpack.c.b16 %v217, %v217
  %v228 = vpack.c.b16 %v218, %v218
  %v229 = vpack.c.b16 %v219, %v219
  %v230 = vpack.c.b16 %v220, %v220
  %v231 = vpack.c.b16 %v221, %v221
  %v232 = vpack.c.b16 %v222, %v222
  %v233 = vpack.c.b16 %v223, %v223
  %v234 = vpack.c.b16 %v224, %v224
  %v235 = vpack.c.b16 %v225, %v225
  %v236 = vpack.c.b16 %v226, %v226
  %247 = vst [vmem:[%s3] sm:$0xf] %v227
  %248 = vst [vmem:[%s3 + $0x4] sm:$0xf] %v228
  %249 = vst [vmem:[%s3 + $0x8] sm:$0xf] %v229
  %250 = vst [vmem:[%s3 + $0xc] sm:$0xf] %v230
  %251 = vst [vmem:[%s3 + $0x10] sm:$0xf] %v231
  %252 = vst [vmem:[%s3 + $0x14] sm:$0xf] %v232
  %253 = vst [vmem:[%s3 + $0x18] sm:$0xf] %v233
  %254 = vst [vmem:[%s3 + $0x1c] sm:$0xf] %v234
  %255 = vst [vmem:[%s3 + $0x20] sm:$0xf] %v235
  %256 = vst [vmem:[%s3 + $0x24] sm:$0xf] %v236
  // Predicated region
  $region14: #{sam2unet_forward.44} parent=0 // pred_check
    _
  $region15: #{sam2unet_forward.44} parent=0 // pred_check_branch
    %258 = sbr.rel (0) target = $region17
  $region16: #{sam2unet_forward.44} parent=0 // pred_region
    _
  $region17: #{sam2unet_forward.44} parent=0 // pred_fallthru
    _
  // Predicated region
  $region18: #{sam2unet_forward.44} parent=0 // pred_check
    _
  $region19: #{sam2unet_forward.44} parent=0 // pred_check_branch
    %260 = sbr.rel (0) target = $region21
  $region20: #{sam2unet_forward.44} parent=0 // pred_region
    _
  $region21: #{sam2unet_forward.44} parent=0 // pred_fallthru
    _

// kernel: sam2unet_forward.45
$region0: #{sam2unet_forward.45}
  #allocation0 [shape = 'u32[]', space=smem, size = 0x4, offset = 0x4, fixed_abs, tag = 'smem constant byte address 0x4 - core index']
  #allocation1 [shape = 'u32[144,128]{1,0:T(1,128)}', space=vmem, size = 0x12000, scoped, tag = 'internal scratch']
  %s0 = inlined_call_operand.vmem [shape: bf16[48,240], index: 0, kind: input, shape index: {}]
  %s1 = inlined_call_operand.vmem [shape: bf16[240,128], index: 1, kind: input, shape index: {}]
  %s2 = inlined_call_operand.vmem [shape: f32[48,1], index: 2, kind: input, shape index: {}]
  %s3 = inlined_call_operand.vmem [shape: bf16[48,128], index: 3, kind: output, shape index: {}]
  %s4 = sld [smem:[#allocation0]]
  $region22: #{sam2unet_forward.45} parent=0
    _
  %s6 = ssub.s32 1, %s4
  %s7 = scalar_select 0, %s6, %s4
  // Predicated region
  $region2: #{sam2unet_forward.45} parent=0 // pred_check
    _
  $region3: #{sam2unet_forward.45} parent=0 // pred_check_branch
    %9 = sbr.rel (0) target = $region5
  $region4: #{sam2unet_forward.45} parent=0 // pred_region
    _
  $region5: #{sam2unet_forward.45} parent=0 // pred_fallthru
    _
  // Predicated region
  $region6: #{sam2unet_forward.45} parent=0 // pred_check
    _
  $region7: #{sam2unet_forward.45} parent=0 // pred_check_branch
    %11 = sbr.rel (0) target = $region9
  $region8: #{sam2unet_forward.45} parent=0 // pred_region
    _
  $region9: #{sam2unet_forward.45} parent=0 // pred_fallthru
    _
  // Predicated region
  $region10: #{sam2unet_forward.45} parent=0 // pred_check
    _
  $region11: #{sam2unet_forward.45} parent=0 // pred_check_branch
    %13 = sbr.rel (0) target = $region13
  $region12: #{sam2unet_forward.45} parent=0 // pred_region
    _
  $region13: #{sam2unet_forward.45} parent=0 // pred_fallthru
    _
  %v15 = vld [vmem:[%s0] sm:$0xff]
  %v16 = vld [vmem:[%s0 + $0x8] sm:$0xff]
  %v17 = vld [vmem:[%s0 + $0x10] sm:$0xff]
  %v18 = vld [vmem:[%s0 + $0x18] sm:$0xff]
  %v19 = vld [vmem:[%s0 + $0x20] sm:$0xff]
  %v20 = vld [vmem:[%s0 + $0x28] sm:$0xff]
  %v21 = vld [vmem:[%s1] sm:$0xf]
  %v22 = vld [vmem:[%s1 + $0x4] sm:$0xf]
  %v23 = vld [vmem:[%s1 + $0x8] sm:$0xf]
  %v24 = vld [vmem:[%s1 + $0xc] sm:$0xf]
  %v25 = vld [vmem:[%s1 + $0x10] sm:$0xf]
  %v26 = vld [vmem:[%s1 + $0x14] sm:$0xf]
  %v27 = vld [vmem:[%s1 + $0x18] sm:$0xf]
  %v28 = vld [vmem:[%s1 + $0x1c] sm:$0xf]
  %v29 = vld [vmem:[%s1 + $0x20] sm:$0xf]
  %v30 = vld [vmem:[%s1 + $0x24] sm:$0xf]
  %v31 = vld [vmem:[%s1 + $0x28] sm:$0xf]
  %v32 = vld [vmem:[%s1 + $0x2c] sm:$0xf]
  %v33 = vld [vmem:[%s1 + $0x30] sm:$0xf]
  %v34 = vld [vmem:[%s1 + $0x34] sm:$0xf]
  %v35 = vld [vmem:[%s1 + $0x38] sm:$0xf]
  %v36 = vld [vmem:[%s1 + $0x3c] sm:$0xf]
  %v37 = vld [vmem:[%s1 + $0x40] sm:$0xf]
  %v38 = vld [vmem:[%s1 + $0x44] sm:$0xf]
  %v39 = vld [vmem:[%s1 + $0x48] sm:$0xf]
  %v40 = vld [vmem:[%s1 + $0x4c] sm:$0xf]
  %v41 = vld [vmem:[%s1 + $0x50] sm:$0xf]
  %v42 = vld [vmem:[%s1 + $0x54] sm:$0xf]
  %v43 = vld [vmem:[%s1 + $0x58] sm:$0xf]
  %v44 = vld [vmem:[%s1 + $0x5c] sm:$0xf]
  %v45 = vld [vmem:[%s1 + $0x60] sm:$0xf]
  %v46 = vld [vmem:[%s1 + $0x64] sm:$0xf]
  %v47 = vld [vmem:[%s1 + $0x68] sm:$0xf]
  %v48 = vld [vmem:[%s1 + $0x6c] sm:$0xf]
  %v49 = vld [vmem:[%s1 + $0x70] sm:$0xf]
  %v50 = vld [vmem:[%s1 + $0x74] sm:$0xf]
  %v51 = vld [vmem:[%s2] sm:$0xff]
  %v52 = vld [vmem:[%s2 + $0x8] sm:$0xff]
  %v53 = vld [vmem:[%s2 + $0x10] sm:$0xff]
  %v54 = vld [vmem:[%s2 + $0x18] sm:$0xff]
  %v55 = vld [vmem:[%s2 + $0x20] sm:$0xff]
  %v56 = vld [vmem:[%s2 + $0x28] sm:$0xff]
  %58 = vset.pattern.permute.xlu0 0
  %59 = vperm.xlu0 %58, %v51
  %v60 = vpop.permute.xlu0 %59
  %63 = vset.pattern.permute.xlu0 0
  %64 = vperm.xlu0 %63, %v52
  %v65 = vpop.permute.xlu0 %64
  %68 = vset.pattern.permute.xlu0 0
  %69 = vperm.xlu0 %68, %v53
  %v70 = vpop.permute.xlu0 %69
  %73 = vset.pattern.permute.xlu0 0
  %74 = vperm.xlu0 %73, %v54
  %v75 = vpop.permute.xlu0 %74
  %78 = vset.pattern.permute.xlu0 0
  %79 = vperm.xlu0 %78, %v55
  %v80 = vpop.permute.xlu0 %79
  %83 = vset.pattern.permute.xlu0 0
  %84 = vperm.xlu0 %83, %v56
  %v85 = vpop.permute.xlu0 %84
  %v93 = vunpack.c.l.b16 %v15
  %v94 = vunpack.c.h.b16 %v15
  %v95 = vunpack.c.l.b16 %v16
  %v96 = vunpack.c.h.b16 %v16
  %v97 = vunpack.c.l.b16 %v17
  %v98 = vunpack.c.h.b16 %v17
  %v99 = vunpack.c.l.b16 %v18
  %v100 = vunpack.c.h.b16 %v18
  %v101 = vunpack.c.l.b16 %v19
  %v102 = vunpack.c.h.b16 %v19
  %v103 = vunpack.c.l.b16 %v20
  %v104 = vunpack.c.h.b16 %v20
  %v105 = vpack.c.b16 %v95, %v93
  %v106 = vpack.c.b16 %v96, %v94
  %v107 = vpack.c.b16 %v99, %v97
  %v108 = vpack.c.b16 %v100, %v98
  %v109 = vpack.c.b16 %v103, %v101
  %v110 = vpack.c.b16 %v104, %v102
  %v144 = vunpack.c.l.b16 %v21
  %v145 = vunpack.c.l.b16 %v22
  %v146 = vunpack.c.l.b16 %v23
  %v147 = vunpack.c.l.b16 %v24
  %v148 = vunpack.c.l.b16 %v25
  %v149 = vunpack.c.l.b16 %v26
  %v150 = vunpack.c.l.b16 %v27
  %v151 = vunpack.c.l.b16 %v28
  %v152 = vunpack.c.l.b16 %v29
  %v153 = vunpack.c.l.b16 %v30
  %v154 = vunpack.c.l.b16 %v31
  %v155 = vunpack.c.l.b16 %v32
  %v156 = vunpack.c.l.b16 %v33
  %v157 = vunpack.c.l.b16 %v34
  %v158 = vunpack.c.l.b16 %v35
  %v159 = vunpack.c.l.b16 %v36
  %v160 = vunpack.c.l.b16 %v37
  %v161 = vunpack.c.l.b16 %v38
  %v162 = vunpack.c.l.b16 %v39
  %v163 = vunpack.c.l.b16 %v40
  %v164 = vunpack.c.l.b16 %v41
  %v165 = vunpack.c.l.b16 %v42
  %v166 = vunpack.c.l.b16 %v43
  %v167 = vunpack.c.l.b16 %v44
  %v168 = vunpack.c.l.b16 %v45
  %v169 = vunpack.c.l.b16 %v46
  %v170 = vunpack.c.l.b16 %v47
  %v171 = vunpack.c.l.b16 %v48
  %v172 = vunpack.c.l.b16 %v49
  %v173 = vunpack.c.l.b16 %v50
  %v174 = vpack.c.b16 %v145, %v144
  %v175 = vpack.c.b16 %v147, %v146
  %v176 = vpack.c.b16 %v149, %v148
  %v177 = vpack.c.b16 %v151, %v150
  %v178 = vpack.c.b16 %v153, %v152
  %v179 = vpack.c.b16 %v155, %v154
  %v180 = vpack.c.b16 %v157, %v156
  %v181 = vpack.c.b16 %v159, %v158
  %v182 = vpack.c.b16 %v161, %v160
  %v183 = vpack.c.b16 %v163, %v162
  %v184 = vpack.c.b16 %v165, %v164
  %v185 = vpack.c.b16 %v167, %v166
  %v186 = vpack.c.b16 %v169, %v168
  %v187 = vpack.c.b16 %v171, %v170
  %v188 = vpack.c.b16 %v173, %v172
  %vm204 = vcmask 916480
  %v206 = vsel %vm204, %v106, 0
  %v209 = vsel %vm204, %v108, 0
  %v212 = vsel %vm204, %v110, 0
  %214 = vmatprep.subr.bf16.mxu0 0
  %215 = vmatpush1.bf16.msra.mxu0 %v174
  %216 = vmatprep.subr.bf16.mxu0 0
  %217 = vmatpush1.bf16.msra.mxu0 %v175
  %218 = vmatprep.subr.bf16.mxu0 0
  %219 = vmatpush1.bf16.msra.mxu0 %v176
  %220 = vmatprep.subr.bf16.mxu0 0
  %221 = vmatpush1.bf16.msra.mxu0 %v177
  %222 = vmatprep.subr.bf16.mxu0 0
  %223 = vmatpush1.bf16.msra.mxu0 %v178
  %224 = vmatprep.subr.bf16.mxu0 0
  %225 = vmatpush1.bf16.msra.mxu0 %v179
  %226 = vmatprep.subr.bf16.mxu0 0
  %227 = vmatpush1.bf16.msra.mxu0 %v180
  %228 = vmatprep.subr.bf16.mxu0 0
  %229 = vmatpush1.bf16.msra.mxu0 %v181
  %230 = vmatprep.subr.bf16.mxu0 0
  %231 = vmatpush1.bf16.msra.mxu0 %v182
  %232 = vmatprep.subr.bf16.mxu0 0
  %233 = vmatpush1.bf16.msra.mxu0 %v183
  %234 = vmatprep.subr.bf16.mxu0 0
  %235 = vmatpush1.bf16.msra.mxu0 %v184
  %236 = vmatprep.subr.bf16.mxu0 0
  %237 = vmatpush1.bf16.msra.mxu0 %v185
  %238 = vmatprep.subr.bf16.mxu0 0
  %239 = vmatpush1.bf16.msra.mxu0 %v186
  %240 = vmatprep.subr.bf16.mxu0 0
  %241 = vmatpush1.bf16.msra.mxu0 %v187
  %242 = vmatprep.subr.bf16.mxu0 0
  %243 = vmatpush1.bf16.msra.mxu0 %v188
  %244 = vmatprep.subr.bf16.mxu0 0
  %245 = vmatpush1.bf16.msra.mxu0 0
  %246 = vmatprep.mubr.bf16.mxu0 %v206
  %247 = vmatmul.mubr.bf16.gmra.mrb[0].mxu0 %v105
  %v248 = vpop.f32.mrb[0].mxu0
  %v249 = vadd.f32 %v60, %v248
  %v250 = vpop.f32.mrb[0].mxu0
  %v251 = vpop.f32.mrb[0].mxu0
  %v252 = vadd.f32 %v65, %v251
  %v253 = vpop.f32.mrb[0].mxu0
  %254 = vmatprep.mubr.bf16.mxu0 %v209
  %255 = vmatmul.mubr.bf16.gmra.mrb[0].mxu0 %v107
  %v256 = vpop.f32.mrb[0].mxu0
  %v257 = vadd.f32 %v70, %v256
  %v258 = vpop.f32.mrb[0].mxu0
  %v259 = vpop.f32.mrb[0].mxu0
  %v260 = vadd.f32 %v75, %v259
  %v261 = vpop.f32.mrb[0].mxu0
  %262 = vmatprep.mubr.bf16.mxu0 %v212
  %263 = vmatmul.mubr.bf16.gmra.mrb[0].mxu0 %v109
  %v264 = vpop.f32.mrb[0].mxu0
  %v265 = vadd.f32 %v80, %v264
  %v266 = vpop.f32.mrb[0].mxu0
  %v267 = vpop.f32.mrb[0].mxu0
  %v268 = vadd.f32 %v85, %v267
  %v269 = vpop.f32.mrb[0].mxu0
  %270 = vdwg.mxu0
  %v271 = vpack.c.bf16 %v252, %v249
  %v272 = vpack.c.bf16 %v260, %v257
  %v273 = vpack.c.bf16 %v268, %v265
  %v277 = vunpack.c.l.b16 %v271
  %v278 = vunpack.c.h.b16 %v271
  %v279 = vunpack.c.l.b16 %v272
  %v280 = vunpack.c.h.b16 %v272
  %v281 = vunpack.c.l.b16 %v273
  %v282 = vunpack.c.h.b16 %v273
  %v283 = vpack.c.b16 %v277, %v277
  %v284 = vpack.c.b16 %v278, %v278
  %v285 = vpack.c.b16 %v279, %v279
  %v286 = vpack.c.b16 %v280, %v280
  %v287 = vpack.c.b16 %v281, %v281
  %v288 = vpack.c.b16 %v282, %v282
  %295 = vst [vmem:[%s3] sm:$0xf] %v283
  %296 = vst [vmem:[%s3 + $0x4] sm:$0xf] %v284
  %297 = vst [vmem:[%s3 + $0x8] sm:$0xf] %v285
  %298 = vst [vmem:[%s3 + $0xc] sm:$0xf] %v286
  %299 = vst [vmem:[%s3 + $0x10] sm:$0xf] %v287
  %300 = vst [vmem:[%s3 + $0x14] sm:$0xf] %v288
  // Predicated region
  $region14: #{sam2unet_forward.45} parent=0 // pred_check
    _
  $region15: #{sam2unet_forward.45} parent=0 // pred_check_branch
    %302 = sbr.rel (0) target = $region17
  $region16: #{sam2unet_forward.45} parent=0 // pred_region
    _
  $region17: #{sam2unet_forward.45} parent=0 // pred_fallthru
    _
  // Predicated region
  $region18: #{sam2unet_forward.45} parent=0 // pred_check
    _
  $region19: #{sam2unet_forward.45} parent=0 // pred_check_branch
    %304 = sbr.rel (0) target = $region21
  $region20: #{sam2unet_forward.45} parent=0 // pred_region
    _
  $region21: #{sam2unet_forward.45} parent=0 // pred_fallthru
    _

// kernel: sam2unet_forward.47
$region0: #{sam2unet_forward.47}
  #allocation0 [shape = 'u32[]', space=smem, size = 0x4, offset = 0x4, fixed_abs, tag = 'smem constant byte address 0x4 - core index']
  #allocation1 [shape = 'u32[144,128]{1,0:T(1,128)}', space=vmem, size = 0x12000, scoped, tag = 'internal scratch']
  %s0 = inlined_call_operand.vmem [shape: bf16[48,432], index: 0, kind: input, shape index: {}]
  %s1 = inlined_call_operand.vmem [shape: bf16[432,128], index: 1, kind: input, shape index: {}]
  %s2 = inlined_call_operand.vmem [shape: f32[48,1], index: 2, kind: input, shape index: {}]
  %s3 = inlined_call_operand.vmem [shape: bf16[48,128], index: 3, kind: output, shape index: {}]
  %s4 = sld [smem:[#allocation0]]
  $region22: #{sam2unet_forward.47} parent=0
    _
  %s6 = ssub.s32 1, %s4
  %s7 = scalar_select 0, %s6, %s4
  // Predicated region
  $region2: #{sam2unet_forward.47} parent=0 // pred_check
    _
  $region3: #{sam2unet_forward.47} parent=0 // pred_check_branch
    %9 = sbr.rel (0) target = $region5
  $region4: #{sam2unet_forward.47} parent=0 // pred_region
    _
  $region5: #{sam2unet_forward.47} parent=0 // pred_fallthru
    _
  // Predicated region
  $region6: #{sam2unet_forward.47} parent=0 // pred_check
    _
  $region7: #{sam2unet_forward.47} parent=0 // pred_check_branch
    %11 = sbr.rel (0) target = $region9
  $region8: #{sam2unet_forward.47} parent=0 // pred_region
    _
  $region9: #{sam2unet_forward.47} parent=0 // pred_fallthru
    _
  // Predicated region
  $region10: #{sam2unet_forward.47} parent=0 // pred_check
    _
  $region11: #{sam2unet_forward.47} parent=0 // pred_check_branch
    %13 = sbr.rel (0) target = $region13
  $region12: #{sam2unet_forward.47} parent=0 // pred_region
    _
  $region13: #{sam2unet_forward.47} parent=0 // pred_fallthru
    _
  %v15 = vld [vmem:[%s0] sm:$0xff]
  %v16 = vld [vmem:[%s0 + $0x8] sm:$0xff]
  %v17 = vld [vmem:[%s0 + $0x10] sm:$0xff]
  %v18 = vld [vmem:[%s0 + $0x18] sm:$0xff]
  %v19 = vld [vmem:[%s0 + $0x20] sm:$0xff]
  %v20 = vld [vmem:[%s0 + $0x28] sm:$0xff]
  %v21 = vld [vmem:[%s0 + $0x30] sm:$0xff]
  %v22 = vld [vmem:[%s0 + $0x38] sm:$0xff]
  %v23 = vld [vmem:[%s0 + $0x40] sm:$0xff]
  %v24 = vld [vmem:[%s0 + $0x48] sm:$0xff]
  %v25 = vld [vmem:[%s0 + $0x50] sm:$0xff]
  %v26 = vld [vmem:[%s0 + $0x58] sm:$0xff]
  %v27 = vld [vmem:[%s1] sm:$0xf]
  %v28 = vld [vmem:[%s1 + $0x4] sm:$0xf]
  %v29 = vld [vmem:[%s1 + $0x8] sm:$0xf]
  %v30 = vld [vmem:[%s1 + $0xc] sm:$0xf]
  %v31 = vld [vmem:[%s1 + $0x10] sm:$0xf]
  %v32 = vld [vmem:[%s1 + $0x14] sm:$0xf]
  %v33 = vld [vmem:[%s1 + $0x18] sm:$0xf]
  %v34 = vld [vmem:[%s1 + $0x1c] sm:$0xf]
  %v35 = vld [vmem:[%s1 + $0x20] sm:$0xf]
  %v36 = vld [vmem:[%s1 + $0x24] sm:$0xf]
  %v37 = vld [vmem:[%s1 + $0x28] sm:$0xf]
  %v38 = vld [vmem:[%s1 + $0x2c] sm:$0xf]
  %v39 = vld [vmem:[%s1 + $0x30] sm:$0xf]
  %v40 = vld [vmem:[%s1 + $0x34] sm:$0xf]
  %v41 = vld [vmem:[%s1 + $0x38] sm:$0xf]
  %v42 = vld [vmem:[%s1 + $0x3c] sm:$0xf]
  %v43 = vld [vmem:[%s1 + $0x40] sm:$0xf]
  %v44 = vld [vmem:[%s1 + $0x44] sm:$0xf]
  %v45 = vld [vmem:[%s1 + $0x48] sm:$0xf]
  %v46 = vld [vmem:[%s1 + $0x4c] sm:$0xf]
  %v47 = vld [vmem:[%s1 + $0x50] sm:$0xf]
  %v48 = vld [vmem:[%s1 + $0x54] sm:$0xf]
  %v49 = vld [vmem:[%s1 + $0x58] sm:$0xf]
  %v50 = vld [vmem:[%s1 + $0x5c] sm:$0xf]
  %v51 = vld [vmem:[%s1 + $0x60] sm:$0xf]
  %v52 = vld [vmem:[%s1 + $0x64] sm:$0xf]
  %v53 = vld [vmem:[%s1 + $0x68] sm:$0xf]
  %v54 = vld [vmem:[%s1 + $0x6c] sm:$0xf]
  %v55 = vld [vmem:[%s1 + $0x70] sm:$0xf]
  %v56 = vld [vmem:[%s1 + $0x74] sm:$0xf]
  %v57 = vld [vmem:[%s1 + $0x78] sm:$0xf]
  %v58 = vld [vmem:[%s1 + $0x7c] sm:$0xf]
  %v59 = vld [vmem:[%s1 + $0x80] sm:$0xf]
  %v60 = vld [vmem:[%s1 + $0x84] sm:$0xf]
  %v61 = vld [vmem:[%s1 + $0x88] sm:$0xf]
  %v62 = vld [vmem:[%s1 + $0x8c] sm:$0xf]
  %v63 = vld [vmem:[%s1 + $0x90] sm:$0xf]
  %v64 = vld [vmem:[%s1 + $0x94] sm:$0xf]
  %v65 = vld [vmem:[%s1 + $0x98] sm:$0xf]
  %v66 = vld [vmem:[%s1 + $0x9c] sm:$0xf]
  %v67 = vld [vmem:[%s1 + $0xa0] sm:$0xf]
  %v68 = vld [vmem:[%s1 + $0xa4] sm:$0xf]
  %v69 = vld [vmem:[%s1 + $0xa8] sm:$0xf]
  %v70 = vld [vmem:[%s1 + $0xac] sm:$0xf]
  %v71 = vld [vmem:[%s1 + $0xb0] sm:$0xf]
  %v72 = vld [vmem:[%s1 + $0xb4] sm:$0xf]
  %v73 = vld [vmem:[%s1 + $0xb8] sm:$0xf]
  %v74 = vld [vmem:[%s1 + $0xbc] sm:$0xf]
  %v75 = vld [vmem:[%s1 + $0xc0] sm:$0xf]
  %v76 = vld [vmem:[%s1 + $0xc4] sm:$0xf]
  %v77 = vld [vmem:[%s1 + $0xc8] sm:$0xf]
  %v78 = vld [vmem:[%s1 + $0xcc] sm:$0xf]
  %v79 = vld [vmem:[%s1 + $0xd0] sm:$0xf]
  %v80 = vld [vmem:[%s1 + $0xd4] sm:$0xf]
  %v81 = vld [vmem:[%s2] sm:$0xff]
  %v82 = vld [vmem:[%s2 + $0x8] sm:$0xff]
  %v83 = vld [vmem:[%s2 + $0x10] sm:$0xff]
  %v84 = vld [vmem:[%s2 + $0x18] sm:$0xff]
  %v85 = vld [vmem:[%s2 + $0x20] sm:$0xff]
  %v86 = vld [vmem:[%s2 + $0x28] sm:$0xff]
  %88 = vset.pattern.permute.xlu0 0
  %89 = vperm.xlu0 %88, %v81
  %v90 = vpop.permute.xlu0 %89
  %93 = vset.pattern.permute.xlu0 0
  %94 = vperm.xlu0 %93, %v82
  %v95 = vpop.permute.xlu0 %94
  %98 = vset.pattern.permute.xlu0 0
  %99 = vperm.xlu0 %98, %v83
  %v100 = vpop.permute.xlu0 %99
  %103 = vset.pattern.permute.xlu0 0
  %104 = vperm.xlu0 %103, %v84
  %v105 = vpop.permute.xlu0 %104
  %108 = vset.pattern.permute.xlu0 0
  %109 = vperm.xlu0 %108, %v85
  %v110 = vpop.permute.xlu0 %109
  %113 = vset.pattern.permute.xlu0 0
  %114 = vperm.xlu0 %113, %v86
  %v115 = vpop.permute.xlu0 %114
  %v129 = vunpack.c.l.b16 %v15
  %v130 = vunpack.c.h.b16 %v15
  %v131 = vunpack.c.l.b16 %v16
  %v132 = vunpack.c.h.b16 %v16
  %v133 = vunpack.c.l.b16 %v17
  %v134 = vunpack.c.h.b16 %v17
  %v135 = vunpack.c.l.b16 %v18
  %v136 = vunpack.c.h.b16 %v18
  %v137 = vunpack.c.l.b16 %v19
  %v138 = vunpack.c.h.b16 %v19
  %v139 = vunpack.c.l.b16 %v20
  %v140 = vunpack.c.h.b16 %v20
  %v141 = vunpack.c.l.b16 %v21
  %v142 = vunpack.c.h.b16 %v21
  %v143 = vunpack.c.l.b16 %v22
  %v144 = vunpack.c.h.b16 %v22
  %v145 = vunpack.c.l.b16 %v23
  %v146 = vunpack.c.h.b16 %v23
  %v147 = vunpack.c.l.b16 %v24
  %v148 = vunpack.c.h.b16 %v24
  %v149 = vunpack.c.l.b16 %v25
  %v150 = vunpack.c.h.b16 %v25
  %v151 = vunpack.c.l.b16 %v26
  %v152 = vunpack.c.h.b16 %v26
  %v153 = vpack.c.b16 %v133, %v129
  %v154 = vpack.c.b16 %v134, %v130
  %v155 = vpack.c.b16 %v135, %v131
  %v156 = vpack.c.b16 %v136, %v132
  %v157 = vpack.c.b16 %v141, %v137
  %v158 = vpack.c.b16 %v142, %v138
  %v159 = vpack.c.b16 %v143, %v139
  %v160 = vpack.c.b16 %v144, %v140
  %v161 = vpack.c.b16 %v149, %v145
  %v162 = vpack.c.b16 %v150, %v146
  %v163 = vpack.c.b16 %v151, %v147
  %v164 = vpack.c.b16 %v152, %v148
  %v228 = vunpack.c.l.b16 %v27
  %v229 = vunpack.c.l.b16 %v28
  %v230 = vunpack.c.l.b16 %v29
  %v231 = vunpack.c.l.b16 %v30
  %v232 = vunpack.c.l.b16 %v31
  %v233 = vunpack.c.l.b16 %v32
  %v234 = vunpack.c.l.b16 %v33
  %v235 = vunpack.c.l.b16 %v34
  %v236 = vunpack.c.l.b16 %v35
  %v237 = vunpack.c.l.b16 %v36
  %v238 = vunpack.c.l.b16 %v37
  %v239 = vunpack.c.l.b16 %v38
  %v240 = vunpack.c.l.b16 %v39
  %v241 = vunpack.c.l.b16 %v40
  %v242 = vunpack.c.l.b16 %v41
  %v243 = vunpack.c.l.b16 %v42
  %v244 = vunpack.c.l.b16 %v43
  %v245 = vunpack.c.l.b16 %v44
  %v246 = vunpack.c.l.b16 %v45
  %v247 = vunpack.c.l.b16 %v46
  %v248 = vunpack.c.l.b16 %v47
  %v249 = vunpack.c.l.b16 %v48
  %v250 = vunpack.c.l.b16 %v49
  %v251 = vunpack.c.l.b16 %v50
  %v252 = vunpack.c.l.b16 %v51
  %v253 = vunpack.c.l.b16 %v52
  %v254 = vunpack.c.l.b16 %v53
  %v255 = vunpack.c.l.b16 %v54
  %v256 = vunpack.c.l.b16 %v55
  %v257 = vunpack.c.l.b16 %v56
  %v258 = vunpack.c.l.b16 %v57
  %v259 = vunpack.c.l.b16 %v58
  %v260 = vunpack.c.l.b16 %v59
  %v261 = vunpack.c.l.b16 %v60
  %v262 = vunpack.c.l.b16 %v61
  %v263 = vunpack.c.l.b16 %v62
  %v264 = vunpack.c.l.b16 %v63
  %v265 = vunpack.c.l.b16 %v64
  %v266 = vunpack.c.l.b16 %v65
  %v267 = vunpack.c.l.b16 %v66
  %v268 = vunpack.c.l.b16 %v67
  %v269 = vunpack.c.l.b16 %v68
  %v270 = vunpack.c.l.b16 %v69
  %v271 = vunpack.c.l.b16 %v70
  %v272 = vunpack.c.l.b16 %v71
  %v273 = vunpack.c.l.b16 %v72
  %v274 = vunpack.c.l.b16 %v73
  %v275 = vunpack.c.l.b16 %v74
  %v276 = vunpack.c.l.b16 %v75
  %v277 = vunpack.c.l.b16 %v76
  %v278 = vunpack.c.l.b16 %v77
  %v279 = vunpack.c.l.b16 %v78
  %v280 = vunpack.c.l.b16 %v79
  %v281 = vunpack.c.l.b16 %v80
  %v282 = vpack.c.b16 %v229, %v228
  %v283 = vpack.c.b16 %v231, %v230
  %v284 = vpack.c.b16 %v233, %v232
  %v285 = vpack.c.b16 %v235, %v234
  %v286 = vpack.c.b16 %v237, %v236
  %v287 = vpack.c.b16 %v239, %v238
  %v288 = vpack.c.b16 %v241, %v240
  %v289 = vpack.c.b16 %v243, %v242
  %v290 = vpack.c.b16 %v245, %v244
  %v291 = vpack.c.b16 %v247, %v246
  %v292 = vpack.c.b16 %v249, %v248
  %v293 = vpack.c.b16 %v251, %v250
  %v294 = vpack.c.b16 %v253, %v252
  %v295 = vpack.c.b16 %v255, %v254
  %v296 = vpack.c.b16 %v257, %v256
  %v297 = vpack.c.b16 %v259, %v258
  %v298 = vpack.c.b16 %v261, %v260
  %v299 = vpack.c.b16 %v263, %v262
  %v300 = vpack.c.b16 %v265, %v264
  %v301 = vpack.c.b16 %v267, %v266
  %v302 = vpack.c.b16 %v269, %v268
  %v303 = vpack.c.b16 %v271, %v270
  %v304 = vpack.c.b16 %v273, %v272
  %v305 = vpack.c.b16 %v275, %v274
  %v306 = vpack.c.b16 %v277, %v276
  %v307 = vpack.c.b16 %v279, %v278
  %v308 = vpack.c.b16 %v281, %v280
  %vm336 = vcmask 392192
  %v338 = vsel %vm336, %v156, 0
  %v341 = vsel %vm336, %v160, 0
  %v344 = vsel %vm336, %v164, 0
  %346 = vmatprep.subr.bf16.mxu0 0
  %347 = vmatpush1.bf16.msra.mxu0 %v282
  %348 = vmatprep.subr.bf16.mxu0 0
  %349 = vmatpush1.bf16.msra.mxu0 %v283
  %350 = vmatprep.subr.bf16.mxu0 0
  %351 = vmatpush1.bf16.msra.mxu0 %v284
  %352 = vmatprep.subr.bf16.mxu0 0
  %353 = vmatpush1.bf16.msra.mxu0 %v285
  %354 = vmatprep.subr.bf16.mxu0 0
  %355 = vmatpush1.bf16.msra.mxu0 %v286
  %356 = vmatprep.subr.bf16.mxu0 0
  %357 = vmatpush1.bf16.msra.mxu0 %v287
  %358 = vmatprep.subr.bf16.mxu0 0
  %359 = vmatpush1.bf16.msra.mxu0 %v288
  %360 = vmatprep.subr.bf16.mxu0 0
  %361 = vmatpush1.bf16.msra.mxu0 %v289
  %362 = vmatprep.subr.bf16.mxu0 0
  %363 = vmatpush1.bf16.msra.mxu0 %v290
  %364 = vmatprep.subr.bf16.mxu0 0
  %365 = vmatpush1.bf16.msra.mxu0 %v291
  %366 = vmatprep.subr.bf16.mxu0 0
  %367 = vmatpush1.bf16.msra.mxu0 %v292
  %368 = vmatprep.subr.bf16.mxu0 0
  %369 = vmatpush1.bf16.msra.mxu0 %v293
  %370 = vmatprep.subr.bf16.mxu0 0
  %371 = vmatpush1.bf16.msra.mxu0 %v294
  %372 = vmatprep.subr.bf16.mxu0 0
  %373 = vmatpush1.bf16.msra.mxu0 %v295
  %374 = vmatprep.subr.bf16.mxu0 0
  %375 = vmatpush1.bf16.msra.mxu0 %v296
  %376 = vmatprep.subr.bf16.mxu0 0
  %377 = vmatpush1.bf16.msra.mxu0 %v297
  %378 = vmatprep.mubr.bf16.mxu0 %v154
  %379 = vmatmul.mubr.bf16.gmra.mrb[0].mxu0 %v153
  %v380 = vpop.f32.mrb[0].mxu0
  %v381 = vadd.f32 %v90, %v380
  %v382 = vpop.f32.mrb[0].mxu0
  %v383 = vpop.f32.mrb[0].mxu0
  %v384 = vadd.f32 %v95, %v383
  %v385 = vpop.f32.mrb[0].mxu0
  %386 = vmatprep.mubr.bf16.mxu0 %v158
  %387 = vmatmul.mubr.bf16.gmra.mrb[0].mxu0 %v157
  %v388 = vpop.f32.mrb[0].mxu0
  %v389 = vadd.f32 %v100, %v388
  %v390 = vpop.f32.mrb[0].mxu0
  %v391 = vpop.f32.mrb[0].mxu0
  %v392 = vadd.f32 %v105, %v391
  %v393 = vpop.f32.mrb[0].mxu0
  %394 = vmatprep.mubr.bf16.mxu0 %v162
  %395 = vmatmul.mubr.bf16.gmra.mrb[0].mxu0 %v161
  %v396 = vpop.f32.mrb[0].mxu0
  %v397 = vadd.f32 %v110, %v396
  %v398 = vpop.f32.mrb[0].mxu0
  %v399 = vpop.f32.mrb[0].mxu0
  %v400 = vadd.f32 %v115, %v399
  %v401 = vpop.f32.mrb[0].mxu0
  %402 = vdwg.mxu0
  %403 = vmatprep.subr.bf16.mxu0 0
  %404 = vmatpush1.bf16.msra.mxu0 %v298
  %405 = vmatprep.subr.bf16.mxu0 0
  %406 = vmatpush1.bf16.msra.mxu0 %v299
  %407 = vmatprep.subr.bf16.mxu0 0
  %408 = vmatpush1.bf16.msra.mxu0 %v300
  %409 = vmatprep.subr.bf16.mxu0 0
  %410 = vmatpush1.bf16.msra.mxu0 %v301
  %411 = vmatprep.subr.bf16.mxu0 0
  %412 = vmatpush1.bf16.msra.mxu0 %v302
  %413 = vmatprep.subr.bf16.mxu0 0
  %414 = vmatpush1.bf16.msra.mxu0 %v303
  %415 = vmatprep.subr.bf16.mxu0 0
  %416 = vmatpush1.bf16.msra.mxu0 %v304
  %417 = vmatprep.subr.bf16.mxu0 0
  %418 = vmatpush1.bf16.msra.mxu0 %v305
  %419 = vmatprep.subr.bf16.mxu0 0
  %420 = vmatpush1.bf16.msra.mxu0 %v306
  %421 = vmatprep.subr.bf16.mxu0 0
  %422 = vmatpush1.bf16.msra.mxu0 %v307
  %423 = vmatprep.subr.bf16.mxu0 0
  %424 = vmatpush1.bf16.msra.mxu0 %v308
  %425 = vmatprep.subr.bf16.mxu0 0
  %426 = vmatpush1.bf16.msra.mxu0 0
  %427 = vmatprep.subr.bf16.mxu0 0
  %428 = vmatpush1.bf16.msra.mxu0 0
  %429 = vmatprep.subr.bf16.mxu0 0
  %430 = vmatpush1.bf16.msra.mxu0 0
  %431 = vmatprep.subr.bf16.mxu0 0
  %432 = vmatpush1.bf16.msra.mxu0 0
  %433 = vmatprep.subr.bf16.mxu0 0
  %434 = vmatpush1.bf16.msra.mxu0 0
  %435 = vmatprep.mubr.bf16.mxu0 %v338
  %436 = vmatmul.mubr.bf16.gmra.mrb[0].mxu0 %v155
  %v437 = vpop.f32.mrb[0].mxu0
  %v438 = vadd.f32 %v381, %v437
  %v439 = vpop.f32.mrb[0].mxu0
  %v440 = vpop.f32.mrb[0].mxu0
  %v441 = vadd.f32 %v384, %v440
  %v442 = vpop.f32.mrb[0].mxu0
  %443 = vmatprep.mubr.bf16.mxu0 %v341
  %444 = vmatmul.mubr.bf16.gmra.mrb[0].mxu0 %v159
  %v445 = vpop.f32.mrb[0].mxu0
  %v446 = vadd.f32 %v389, %v445
  %v447 = vpop.f32.mrb[0].mxu0
  %v448 = vpop.f32.mrb[0].mxu0
  %v449 = vadd.f32 %v392, %v448
  %v450 = vpop.f32.mrb[0].mxu0
  %451 = vmatprep.mubr.bf16.mxu0 %v344
  %452 = vmatmul.mubr.bf16.gmra.mrb[0].mxu0 %v163
  %v453 = vpop.f32.mrb[0].mxu0
  %v454 = vadd.f32 %v397, %v453
  %v455 = vpop.f32.mrb[0].mxu0
  %v456 = vpop.f32.mrb[0].mxu0
  %v457 = vadd.f32 %v400, %v456
  %v458 = vpop.f32.mrb[0].mxu0
  %459 = vdwg.mxu0
  %v460 = vpack.c.bf16 %v441, %v438
  %v461 = vpack.c.bf16 %v449, %v446
  %v462 = vpack.c.bf16 %v457, %v454
  %v466 = vunpack.c.l.b16 %v460
  %v467 = vunpack.c.h.b16 %v460
  %v468 = vunpack.c.l.b16 %v461
  %v469 = vunpack.c.h.b16 %v461
  %v470 = vunpack.c.l.b16 %v462
  %v471 = vunpack.c.h.b16 %v462
  %v472 = vpack.c.b16 %v466, %v466
  %v473 = vpack.c.b16 %v467, %v467
  %v474 = vpack.c.b16 %v468, %v468
  %v475 = vpack.c.b16 %v469, %v469
  %v476 = vpack.c.b16 %v470, %v470
  %v477 = vpack.c.b16 %v471, %v471
  %484 = vst [vmem:[%s3] sm:$0xf] %v472
  %485 = vst [vmem:[%s3 + $0x4] sm:$0xf] %v473
  %486 = vst [vmem:[%s3 + $0x8] sm:$0xf] %v474
  %487 = vst [vmem:[%s3 + $0xc] sm:$0xf] %v475
  %488 = vst [vmem:[%s3 + $0x10] sm:$0xf] %v476
  %489 = vst [vmem:[%s3 + $0x14] sm:$0xf] %v477
  // Predicated region
  $region14: #{sam2unet_forward.47} parent=0 // pred_check
    _
  $region15: #{sam2unet_forward.47} parent=0 // pred_check_branch
    %491 = sbr.rel (0) target = $region17
  $region16: #{sam2unet_forward.47} parent=0 // pred_region
    _
  $region17: #{sam2unet_forward.47} parent=0 // pred_fallthru
    _
  // Predicated region
  $region18: #{sam2unet_forward.47} parent=0 // pred_check
    _
  $region19: #{sam2unet_forward.47} parent=0 // pred_check_branch
    %493 = sbr.rel (0) target = $region21
  $region20: #{sam2unet_forward.47} parent=0 // pred_region
    _
  $region21: #{sam2unet_forward.47} parent=0 // pred_fallthru
    _

// kernel: sam2unet_forward.37
$region0: #{sam2unet_forward.37}
  #allocation0 [shape = 'u32[]', space=smem, size = 0x4, offset = 0x4, fixed_abs, tag = 'smem constant byte address 0x4 - core index']
  #allocation1 [shape = 'u32[144,128]{1,0:T(1,128)}', space=vmem, size = 0x12000, scoped, tag = 'internal scratch']
  %s0 = inlined_call_operand.vmem [shape: bf16[32,144], index: 0, kind: input, shape index: {}]
  %s1 = inlined_call_operand.vmem [shape: bf16[144,128], index: 1, kind: input, shape index: {}]
  %s2 = inlined_call_operand.vmem [shape: f32[32,1], index: 2, kind: input, shape index: {}]
  %s3 = inlined_call_operand.vmem [shape: bf16[32,128], index: 3, kind: output, shape index: {}]
  %s4 = sld [smem:[#allocation0]]
  $region22: #{sam2unet_forward.37} parent=0
    _
  %s6 = ssub.s32 1, %s4
  %s7 = scalar_select 0, %s6, %s4
  // Predicated region
  $region2: #{sam2unet_forward.37} parent=0 // pred_check
    _
  $region3: #{sam2unet_forward.37} parent=0 // pred_check_branch
    %9 = sbr.rel (0) target = $region5
  $region4: #{sam2unet_forward.37} parent=0 // pred_region
    _
  $region5: #{sam2unet_forward.37} parent=0 // pred_fallthru
    _
  // Predicated region
  $region6: #{sam2unet_forward.37} parent=0 // pred_check
    _
  $region7: #{sam2unet_forward.37} parent=0 // pred_check_branch
    %11 = sbr.rel (0) target = $region9
  $region8: #{sam2unet_forward.37} parent=0 // pred_region
    _
  $region9: #{sam2unet_forward.37} parent=0 // pred_fallthru
    _
  // Predicated region
  $region10: #{sam2unet_forward.37} parent=0 // pred_check
    _
  $region11: #{sam2unet_forward.37} parent=0 // pred_check_branch
    %13 = sbr.rel (0) target = $region13
  $region12: #{sam2unet_forward.37} parent=0 // pred_region
    _
  $region13: #{sam2unet_forward.37} parent=0 // pred_fallthru
    _
  %v15 = vld [vmem:[%s0] sm:$0xff]
  %v16 = vld [vmem:[%s0 + $0x8] sm:$0xff]
  %v17 = vld [vmem:[%s0 + $0x10] sm:$0xff]
  %v18 = vld [vmem:[%s0 + $0x18] sm:$0xff]
  %v19 = vld [vmem:[%s1] sm:$0xf]
  %v20 = vld [vmem:[%s1 + $0x4] sm:$0xf]
  %v21 = vld [vmem:[%s1 + $0x8] sm:$0xf]
  %v22 = vld [vmem:[%s1 + $0xc] sm:$0xf]
  %v23 = vld [vmem:[%s1 + $0x10] sm:$0xf]
  %v24 = vld [vmem:[%s1 + $0x14] sm:$0xf]
  %v25 = vld [vmem:[%s1 + $0x18] sm:$0xf]
  %v26 = vld [vmem:[%s1 + $0x1c] sm:$0xf]
  %v27 = vld [vmem:[%s1 + $0x20] sm:$0xf]
  %v28 = vld [vmem:[%s1 + $0x24] sm:$0xf]
  %v29 = vld [vmem:[%s1 + $0x28] sm:$0xf]
  %v30 = vld [vmem:[%s1 + $0x2c] sm:$0xf]
  %v31 = vld [vmem:[%s1 + $0x30] sm:$0xf]
  %v32 = vld [vmem:[%s1 + $0x34] sm:$0xf]
  %v33 = vld [vmem:[%s1 + $0x38] sm:$0xf]
  %v34 = vld [vmem:[%s1 + $0x3c] sm:$0xf]
  %v35 = vld [vmem:[%s1 + $0x40] sm:$0xf]
  %v36 = vld [vmem:[%s1 + $0x44] sm:$0xf]
  %v37 = vld [vmem:[%s2] sm:$0xff]
  %v38 = vld [vmem:[%s2 + $0x8] sm:$0xff]
  %v39 = vld [vmem:[%s2 + $0x10] sm:$0xff]
  %v40 = vld [vmem:[%s2 + $0x18] sm:$0xff]
  %42 = vset.pattern.permute.xlu0 0
  %43 = vperm.xlu0 %42, %v37
  %v44 = vpop.permute.xlu0 %43
  %47 = vset.pattern.permute.xlu0 0
  %48 = vperm.xlu0 %47, %v38
  %v49 = vpop.permute.xlu0 %48
  %52 = vset.pattern.permute.xlu0 0
  %53 = vperm.xlu0 %52, %v39
  %v54 = vpop.permute.xlu0 %53
  %57 = vset.pattern.permute.xlu0 0
  %58 = vperm.xlu0 %57, %v40
  %v59 = vpop.permute.xlu0 %58
  %v65 = vunpack.c.l.b16 %v15
  %v66 = vunpack.c.h.b16 %v15
  %v67 = vunpack.c.l.b16 %v16
  %v68 = vunpack.c.h.b16 %v16
  %v69 = vunpack.c.l.b16 %v17
  %v70 = vunpack.c.h.b16 %v17
  %v71 = vunpack.c.l.b16 %v18
  %v72 = vunpack.c.h.b16 %v18
  %v73 = vpack.c.b16 %v67, %v65
  %v74 = vpack.c.b16 %v68, %v66
  %v75 = vpack.c.b16 %v71, %v69
  %v76 = vpack.c.b16 %v72, %v70
  %v97 = vunpack.c.l.b16 %v19
  %v98 = vunpack.c.l.b16 %v20
  %v99 = vunpack.c.l.b16 %v21
  %v100 = vunpack.c.l.b16 %v22
  %v101 = vunpack.c.l.b16 %v23
  %v102 = vunpack.c.l.b16 %v24
  %v103 = vunpack.c.l.b16 %v25
  %v104 = vunpack.c.l.b16 %v26
  %v105 = vunpack.c.l.b16 %v27
  %v106 = vunpack.c.l.b16 %v28
  %v107 = vunpack.c.l.b16 %v29
  %v108 = vunpack.c.l.b16 %v30
  %v109 = vunpack.c.l.b16 %v31
  %v110 = vunpack.c.l.b16 %v32
  %v111 = vunpack.c.l.b16 %v33
  %v112 = vunpack.c.l.b16 %v34
  %v113 = vunpack.c.l.b16 %v35
  %v114 = vunpack.c.l.b16 %v36
  %v115 = vpack.c.b16 %v98, %v97
  %v116 = vpack.c.b16 %v100, %v99
  %v117 = vpack.c.b16 %v102, %v101
  %v118 = vpack.c.b16 %v104, %v103
  %v119 = vpack.c.b16 %v106, %v105
  %v120 = vpack.c.b16 %v108, %v107
  %v121 = vpack.c.b16 %v110, %v109
  %v122 = vpack.c.b16 %v112, %v111
  %v123 = vpack.c.b16 %v114, %v113
  %vm133 = vcmask 130048
  %v135 = vsel %vm133, %v74, 0
  %v138 = vsel %vm133, %v76, 0
  %140 = vmatprep.subr.bf16.mxu0 0
  %141 = vmatpush1.bf16.msra.mxu0 %v115
  %142 = vmatprep.subr.bf16.mxu0 0
  %143 = vmatpush1.bf16.msra.mxu0 %v116
  %144 = vmatprep.subr.bf16.mxu0 0
  %145 = vmatpush1.bf16.msra.mxu0 %v117
  %146 = vmatprep.subr.bf16.mxu0 0
  %147 = vmatpush1.bf16.msra.mxu0 %v118
  %148 = vmatprep.subr.bf16.mxu0 0
  %149 = vmatpush1.bf16.msra.mxu0 %v119
  %150 = vmatprep.subr.bf16.mxu0 0
  %151 = vmatpush1.bf16.msra.mxu0 %v120
  %152 = vmatprep.subr.bf16.mxu0 0
  %153 = vmatpush1.bf16.msra.mxu0 %v121
  %154 = vmatprep.subr.bf16.mxu0 0
  %155 = vmatpush1.bf16.msra.mxu0 %v122
  %156 = vmatprep.subr.bf16.mxu0 0
  %157 = vmatpush1.bf16.msra.mxu0 %v123
  %158 = vmatprep.subr.bf16.mxu0 0
  %159 = vmatpush1.bf16.msra.mxu0 0
  %160 = vmatprep.subr.bf16.mxu0 0
  %161 = vmatpush1.bf16.msra.mxu0 0
  %162 = vmatprep.subr.bf16.mxu0 0
  %163 = vmatpush1.bf16.msra.mxu0 0
  %164 = vmatprep.subr.bf16.mxu0 0
  %165 = vmatpush1.bf16.msra.mxu0 0
  %166 = vmatprep.subr.bf16.mxu0 0
  %167 = vmatpush1.bf16.msra.mxu0 0
  %168 = vmatprep.subr.bf16.mxu0 0
  %169 = vmatpush1.bf16.msra.mxu0 0
  %170 = vmatprep.subr.bf16.mxu0 0
  %171 = vmatpush1.bf16.msra.mxu0 0
  %172 = vmatprep.mubr.bf16.mxu0 %v135
  %173 = vmatmul.mubr.bf16.gmra.mrb[0].mxu0 %v73
  %v174 = vpop.f32.mrb[0].mxu0
  %v175 = vadd.f32 %v44, %v174
  %v176 = vpop.f32.mrb[0].mxu0
  %v177 = vpop.f32.mrb[0].mxu0
  %v178 = vadd.f32 %v49, %v177
  %v179 = vpop.f32.mrb[0].mxu0
  %180 = vmatprep.mubr.bf16.mxu0 %v138
  %181 = vmatmul.mubr.bf16.gmra.mrb[0].mxu0 %v75
  %v182 = vpop.f32.mrb[0].mxu0
  %v183 = vadd.f32 %v54, %v182
  %v184 = vpop.f32.mrb[0].mxu0
  %v185 = vpop.f32.mrb[0].mxu0
  %v186 = vadd.f32 %v59, %v185
  %v187 = vpop.f32.mrb[0].mxu0
  %188 = vdwg.mxu0
  %v189 = vmax.f32 %v175, 0.0
  %v190 = vmax.f32 %v178, 0.0
  %v191 = vmax.f32 %v183, 0.0
  %v192 = vmax.f32 %v186, 0.0
  %v193 = vpack.c.bf16 %v190, %v189
  %v194 = vpack.c.bf16 %v192, %v191
  %v197 = vunpack.c.l.b16 %v193
  %v198 = vunpack.c.h.b16 %v193
  %v199 = vunpack.c.l.b16 %v194
  %v200 = vunpack.c.h.b16 %v194
  %v201 = vpack.c.b16 %v197, %v197
  %v202 = vpack.c.b16 %v198, %v198
  %v203 = vpack.c.b16 %v199, %v199
  %v204 = vpack.c.b16 %v200, %v200
  %209 = vst [vmem:[%s3] sm:$0xf] %v201
  %210 = vst [vmem:[%s3 + $0x4] sm:$0xf] %v202
  %211 = vst [vmem:[%s3 + $0x8] sm:$0xf] %v203
  %212 = vst [vmem:[%s3 + $0xc] sm:$0xf] %v204
  // Predicated region
  $region14: #{sam2unet_forward.37} parent=0 // pred_check
    _
  $region15: #{sam2unet_forward.37} parent=0 // pred_check_branch
    %214 = sbr.rel (0) target = $region17
  $region16: #{sam2unet_forward.37} parent=0 // pred_region
    _
  $region17: #{sam2unet_forward.37} parent=0 // pred_fallthru
    _
  // Predicated region
  $region18: #{sam2unet_forward.37} parent=0 // pred_check
    _
  $region19: #{sam2unet_forward.37} parent=0 // pred_check_branch
    %216 = sbr.rel (0) target = $region21
  $region20: #{sam2unet_forward.37} parent=0 // pred_region
    _
  $region21: #{sam2unet_forward.37} parent=0 // pred_fallthru
    _

// kernel: sam2unet_forward.48
$region0: #{sam2unet_forward.48}
  #allocation0 [shape = 'u32[]', space=smem, size = 0x4, offset = 0x4, fixed_abs, tag = 'smem constant byte address 0x4 - core index']
  #allocation1 [shape = 'u32[144,128]{1,0:T(1,128)}', space=vmem, size = 0x12000, scoped, tag = 'internal scratch']
  %s0 = inlined_call_operand.vmem [shape: bf16[16,576], index: 0, kind: input, shape index: {}]
  %s1 = inlined_call_operand.vmem [shape: bf16[576,128], index: 1, kind: input, shape index: {}]
  %s2 = inlined_call_operand.vmem [shape: f32[16,1], index: 2, kind: input, shape index: {}]
  %s3 = inlined_call_operand.vmem [shape: bf16[16,128], index: 3, kind: input, shape index: {}]
  %s4 = inlined_call_operand.vmem [shape: bf16[16,128], index: 4, kind: output, shape index: {}]
  %s5 = sld [smem:[#allocation0]]
  $region26: #{sam2unet_forward.48} parent=0
    _
  %s7 = ssub.s32 1, %s5
  %s8 = scalar_select 0, %s7, %s5
  // Predicated region
  $region2: #{sam2unet_forward.48} parent=0 // pred_check
    _
  $region3: #{sam2unet_forward.48} parent=0 // pred_check_branch
    %10 = sbr.rel (0) target = $region5
  $region4: #{sam2unet_forward.48} parent=0 // pred_region
    _
  $region5: #{sam2unet_forward.48} parent=0 // pred_fallthru
    _
  // Predicated region
  $region6: #{sam2unet_forward.48} parent=0 // pred_check
    _
  $region7: #{sam2unet_forward.48} parent=0 // pred_check_branch
    %12 = sbr.rel (0) target = $region9
  $region8: #{sam2unet_forward.48} parent=0 // pred_region
    _
  $region9: #{sam2unet_forward.48} parent=0 // pred_fallthru
    _
  // Predicated region
  $region10: #{sam2unet_forward.48} parent=0 // pred_check
    _
  $region11: #{sam2unet_forward.48} parent=0 // pred_check_branch
    %14 = sbr.rel (0) target = $region13
  $region12: #{sam2unet_forward.48} parent=0 // pred_region
    _
  $region13: #{sam2unet_forward.48} parent=0 // pred_fallthru
    _
  // Predicated region
  $region14: #{sam2unet_forward.48} parent=0 // pred_check
    _
  $region15: #{sam2unet_forward.48} parent=0 // pred_check_branch
    %16 = sbr.rel (0) target = $region17
  $region16: #{sam2unet_forward.48} parent=0 // pred_region
    _
  $region17: #{sam2unet_forward.48} parent=0 // pred_fallthru
    _
  %v18 = vld [vmem:[%s0] sm:$0xff]
  %v19 = vld [vmem:[%s0 + $0x8] sm:$0xff]
  %v20 = vld [vmem:[%s0 + $0x10] sm:$0xf]
  %v21 = vld [vmem:[%s0 + $0x14] sm:$0xff]
  %v22 = vld [vmem:[%s0 + $0x1c] sm:$0xff]
  %v23 = vld [vmem:[%s0 + $0x24] sm:$0xf]
  %v24 = vld [vmem:[%s1] sm:$0xf]
  %v25 = vld [vmem:[%s1 + $0x4] sm:$0xf]
  %v26 = vld [vmem:[%s1 + $0x8] sm:$0xf]
  %v27 = vld [vmem:[%s1 + $0xc] sm:$0xf]
  %v28 = vld [vmem:[%s1 + $0x10] sm:$0xf]
  %v29 = vld [vmem:[%s1 + $0x14] sm:$0xf]
  %v30 = vld [vmem:[%s1 + $0x18] sm:$0xf]
  %v31 = vld [vmem:[%s1 + $0x1c] sm:$0xf]
  %v32 = vld [vmem:[%s1 + $0x20] sm:$0xf]
  %v33 = vld [vmem:[%s1 + $0x24] sm:$0xf]
  %v34 = vld [vmem:[%s1 + $0x28] sm:$0xf]
  %v35 = vld [vmem:[%s1 + $0x2c] sm:$0xf]
  %v36 = vld [vmem:[%s1 + $0x30] sm:$0xf]
  %v37 = vld [vmem:[%s1 + $0x34] sm:$0xf]
  %v38 = vld [vmem:[%s1 + $0x38] sm:$0xf]
  %v39 = vld [vmem:[%s1 + $0x3c] sm:$0xf]
  %v40 = vld [vmem:[%s1 + $0x40] sm:$0xf]
  %v41 = vld [vmem:[%s1 + $0x44] sm:$0xf]
  %v42 = vld [vmem:[%s1 + $0x48] sm:$0xf]
  %v43 = vld [vmem:[%s1 + $0x4c] sm:$0xf]
  %v44 = vld [vmem:[%s1 + $0x50] sm:$0xf]
  %v45 = vld [vmem:[%s1 + $0x54] sm:$0xf]
  %v46 = vld [vmem:[%s1 + $0x58] sm:$0xf]
  %v47 = vld [vmem:[%s1 + $0x5c] sm:$0xf]
  %v48 = vld [vmem:[%s1 + $0x60] sm:$0xf]
  %v49 = vld [vmem:[%s1 + $0x64] sm:$0xf]
  %v50 = vld [vmem:[%s1 + $0x68] sm:$0xf]
  %v51 = vld [vmem:[%s1 + $0x6c] sm:$0xf]
  %v52 = vld [vmem:[%s1 + $0x70] sm:$0xf]
  %v53 = vld [vmem:[%s1 + $0x74] sm:$0xf]
  %v54 = vld [vmem:[%s1 + $0x78] sm:$0xf]
  %v55 = vld [vmem:[%s1 + $0x7c] sm:$0xf]
  %v56 = vld [vmem:[%s1 + $0x80] sm:$0xf]
  %v57 = vld [vmem:[%s1 + $0x84] sm:$0xf]
  %v58 = vld [vmem:[%s1 + $0x88] sm:$0xf]
  %v59 = vld [vmem:[%s1 + $0x8c] sm:$0xf]
  %v60 = vld [vmem:[%s1 + $0x90] sm:$0xf]
  %v61 = vld [vmem:[%s1 + $0x94] sm:$0xf]
  %v62 = vld [vmem:[%s1 + $0x98] sm:$0xf]
  %v63 = vld [vmem:[%s1 + $0x9c] sm:$0xf]
  %v64 = vld [vmem:[%s1 + $0xa0] sm:$0xf]
  %v65 = vld [vmem:[%s1 + $0xa4] sm:$0xf]
  %v66 = vld [vmem:[%s1 + $0xa8] sm:$0xf]
  %v67 = vld [vmem:[%s1 + $0xac] sm:$0xf]
  %v68 = vld [vmem:[%s1 + $0xb0] sm:$0xf]
  %v69 = vld [vmem:[%s1 + $0xb4] sm:$0xf]
  %v70 = vld [vmem:[%s1 + $0xb8] sm:$0xf]
  %v71 = vld [vmem:[%s1 + $0xbc] sm:$0xf]
  %v72 = vld [vmem:[%s1 + $0xc0] sm:$0xf]
  %v73 = vld [vmem:[%s1 + $0xc4] sm:$0xf]
  %v74 = vld [vmem:[%s1 + $0xc8] sm:$0xf]
  %v75 = vld [vmem:[%s1 + $0xcc] sm:$0xf]
  %v76 = vld [vmem:[%s1 + $0xd0] sm:$0xf]
  %v77 = vld [vmem:[%s1 + $0xd4] sm:$0xf]
  %v78 = vld [vmem:[%s1 + $0xd8] sm:$0xf]
  %v79 = vld [vmem:[%s1 + $0xdc] sm:$0xf]
  %v80 = vld [vmem:[%s1 + $0xe0] sm:$0xf]
  %v81 = vld [vmem:[%s1 + $0xe4] sm:$0xf]
  %v82 = vld [vmem:[%s1 + $0xe8] sm:$0xf]
  %v83 = vld [vmem:[%s1 + $0xec] sm:$0xf]
  %v84 = vld [vmem:[%s1 + $0xf0] sm:$0xf]
  %v85 = vld [vmem:[%s1 + $0xf4] sm:$0xf]
  %v86 = vld [vmem:[%s1 + $0xf8] sm:$0xf]
  %v87 = vld [vmem:[%s1 + $0xfc] sm:$0xf]
  %v88 = vld [vmem:[%s1 + $0x100] sm:$0xf]
  %v89 = vld [vmem:[%s1 + $0x104] sm:$0xf]
  %v90 = vld [vmem:[%s1 + $0x108] sm:$0xf]
  %v91 = vld [vmem:[%s1 + $0x10c] sm:$0xf]
  %v92 = vld [vmem:[%s1 + $0x110] sm:$0xf]
  %v93 = vld [vmem:[%s1 + $0x114] sm:$0xf]
  %v94 = vld [vmem:[%s1 + $0x118] sm:$0xf]
  %v95 = vld [vmem:[%s1 + $0x11c] sm:$0xf]
  %v96 = vld [vmem:[%s2] sm:$0xff]
  %v97 = vld [vmem:[%s2 + $0x8] sm:$0xff]
  %99 = vset.pattern.permute.xlu0 0
  %100 = vperm.xlu0 %99, %v96
  %v101 = vpop.permute.xlu0 %100
  %104 = vset.pattern.permute.xlu0 0
  %105 = vperm.xlu0 %104, %v97
  %v106 = vpop.permute.xlu0 %105
  %v114 = vunpack.c.l.b16 %v18
  %v115 = vunpack.c.h.b16 %v18
  %v116 = vunpack.c.l.b16 %v19
  %v117 = vunpack.c.h.b16 %v19
  %v118 = vunpack.c.l.b16 %v20
  %v119 = vunpack.c.l.b16 %v21
  %v120 = vunpack.c.h.b16 %v21
  %v121 = vunpack.c.l.b16 %v22
  %v122 = vunpack.c.h.b16 %v22
  %v123 = vunpack.c.l.b16 %v23
  %v124 = vpack.c.b16 %v119, %v114
  %v125 = vpack.c.b16 %v120, %v115
  %v126 = vpack.c.b16 %v121, %v116
  %v127 = vpack.c.b16 %v122, %v117
  %v128 = vpack.c.b16 %v123, %v118
  %v205 = vunpack.c.l.b16 %v24
  %v206 = vunpack.c.l.b16 %v25
  %v207 = vunpack.c.l.b16 %v26
  %v208 = vunpack.c.l.b16 %v27
  %v209 = vunpack.c.l.b16 %v28
  %v210 = vunpack.c.l.b16 %v29
  %v211 = vunpack.c.l.b16 %v30
  %v212 = vunpack.c.l.b16 %v31
  %v213 = vunpack.c.l.b16 %v32
  %v214 = vunpack.c.l.b16 %v33
  %v215 = vunpack.c.l.b16 %v34
  %v216 = vunpack.c.l.b16 %v35
  %v217 = vunpack.c.l.b16 %v36
  %v218 = vunpack.c.l.b16 %v37
  %v219 = vunpack.c.l.b16 %v38
  %v220 = vunpack.c.l.b16 %v39
  %v221 = vunpack.c.l.b16 %v40
  %v222 = vunpack.c.l.b16 %v41
  %v223 = vunpack.c.l.b16 %v42
  %v224 = vunpack.c.l.b16 %v43
  %v225 = vunpack.c.l.b16 %v44
  %v226 = vunpack.c.l.b16 %v45
  %v227 = vunpack.c.l.b16 %v46
  %v228 = vunpack.c.l.b16 %v47
  %v229 = vunpack.c.l.b16 %v48
  %v230 = vunpack.c.l.b16 %v49
  %v231 = vunpack.c.l.b16 %v50
  %v232 = vunpack.c.l.b16 %v51
  %v233 = vunpack.c.l.b16 %v52
  %v234 = vunpack.c.l.b16 %v53
  %v235 = vunpack.c.l.b16 %v54
  %v236 = vunpack.c.l.b16 %v55
  %v237 = vunpack.c.l.b16 %v56
  %v238 = vunpack.c.l.b16 %v57
  %v239 = vunpack.c.l.b16 %v58
  %v240 = vunpack.c.l.b16 %v59
  %v241 = vunpack.c.l.b16 %v60
  %v242 = vunpack.c.l.b16 %v61
  %v243 = vunpack.c.l.b16 %v62
  %v244 = vunpack.c.l.b16 %v63
  %v245 = vunpack.c.l.b16 %v64
  %v246 = vunpack.c.l.b16 %v65
  %v247 = vunpack.c.l.b16 %v66
  %v248 = vunpack.c.l.b16 %v67
  %v249 = vunpack.c.l.b16 %v68
  %v250 = vunpack.c.l.b16 %v69
  %v251 = vunpack.c.l.b16 %v70
  %v252 = vunpack.c.l.b16 %v71
  %v253 = vunpack.c.l.b16 %v72
  %v254 = vunpack.c.l.b16 %v73
  %v255 = vunpack.c.l.b16 %v74
  %v256 = vunpack.c.l.b16 %v75
  %v257 = vunpack.c.l.b16 %v76
  %v258 = vunpack.c.l.b16 %v77
  %v259 = vunpack.c.l.b16 %v78
  %v260 = vunpack.c.l.b16 %v79
  %v261 = vunpack.c.l.b16 %v80
  %v262 = vunpack.c.l.b16 %v81
  %v263 = vunpack.c.l.b16 %v82
  %v264 = vunpack.c.l.b16 %v83
  %v265 = vunpack.c.l.b16 %v84
  %v266 = vunpack.c.l.b16 %v85
  %v267 = vunpack.c.l.b16 %v86
  %v268 = vunpack.c.l.b16 %v87
  %v269 = vunpack.c.l.b16 %v88
  %v270 = vunpack.c.l.b16 %v89
  %v271 = vunpack.c.l.b16 %v90
  %v272 = vunpack.c.l.b16 %v91
  %v273 = vunpack.c.l.b16 %v92
  %v274 = vunpack.c.l.b16 %v93
  %v275 = vunpack.c.l.b16 %v94
  %v276 = vunpack.c.l.b16 %v95
  %v277 = vpack.c.b16 %v206, %v205
  %v278 = vpack.c.b16 %v208, %v207
  %v279 = vpack.c.b16 %v210, %v209
  %v280 = vpack.c.b16 %v212, %v211
  %v281 = vpack.c.b16 %v214, %v213
  %v282 = vpack.c.b16 %v216, %v215
  %v283 = vpack.c.b16 %v218, %v217
  %v284 = vpack.c.b16 %v220, %v219
  %v285 = vpack.c.b16 %v222, %v221
  %v286 = vpack.c.b16 %v224, %v223
  %v287 = vpack.c.b16 %v226, %v225
  %v288 = vpack.c.b16 %v228, %v227
  %v289 = vpack.c.b16 %v230, %v229
  %v290 = vpack.c.b16 %v232, %v231
  %v291 = vpack.c.b16 %v234, %v233
  %v292 = vpack.c.b16 %v236, %v235
  %v293 = vpack.c.b16 %v238, %v237
  %v294 = vpack.c.b16 %v240, %v239
  %v295 = vpack.c.b16 %v242, %v241
  %v296 = vpack.c.b16 %v244, %v243
  %v297 = vpack.c.b16 %v246, %v245
  %v298 = vpack.c.b16 %v248, %v247
  %v299 = vpack.c.b16 %v250, %v249
  %v300 = vpack.c.b16 %v252, %v251
  %v301 = vpack.c.b16 %v254, %v253
  %v302 = vpack.c.b16 %v256, %v255
  %v303 = vpack.c.b16 %v258, %v257
  %v304 = vpack.c.b16 %v260, %v259
  %v305 = vpack.c.b16 %v262, %v261
  %v306 = vpack.c.b16 %v264, %v263
  %v307 = vpack.c.b16 %v266, %v265
  %v308 = vpack.c.b16 %v268, %v267
  %v309 = vpack.c.b16 %v270, %v269
  %v310 = vpack.c.b16 %v272, %v271
  %v311 = vpack.c.b16 %v274, %v273
  %v312 = vpack.c.b16 %v276, %v275
  %vm349 = vcmask 523264
  %v351 = vsel %vm349, %v128, 0
  %353 = vmatprep.subr.bf16.mxu0 0
  %354 = vmatpush1.bf16.msra.mxu0 %v277
  %355 = vmatprep.subr.bf16.mxu0 0
  %356 = vmatpush1.bf16.msra.mxu0 %v278
  %357 = vmatprep.subr.bf16.mxu0 0
  %358 = vmatpush1.bf16.msra.mxu0 %v279
  %359 = vmatprep.subr.bf16.mxu0 0
  %360 = vmatpush1.bf16.msra.mxu0 %v280
  %361 = vmatprep.subr.bf16.mxu0 0
  %362 = vmatpush1.bf16.msra.mxu0 %v281
  %363 = vmatprep.subr.bf16.mxu0 0
  %364 = vmatpush1.bf16.msra.mxu0 %v282
  %365 = vmatprep.subr.bf16.mxu0 0
  %366 = vmatpush1.bf16.msra.mxu0 %v283
  %367 = vmatprep.subr.bf16.mxu0 0
  %368 = vmatpush1.bf16.msra.mxu0 %v284
  %369 = vmatprep.subr.bf16.mxu0 0
  %370 = vmatpush1.bf16.msra.mxu0 %v285
  %371 = vmatprep.subr.bf16.mxu0 0
  %372 = vmatpush1.bf16.msra.mxu0 %v286
  %373 = vmatprep.subr.bf16.mxu0 0
  %374 = vmatpush1.bf16.msra.mxu0 %v287
  %375 = vmatprep.subr.bf16.mxu0 0
  %376 = vmatpush1.bf16.msra.mxu0 %v288
  %377 = vmatprep.subr.bf16.mxu0 0
  %378 = vmatpush1.bf16.msra.mxu0 %v289
  %379 = vmatprep.subr.bf16.mxu0 0
  %380 = vmatpush1.bf16.msra.mxu0 %v290
  %381 = vmatprep.subr.bf16.mxu0 0
  %382 = vmatpush1.bf16.msra.mxu0 %v291
  %383 = vmatprep.subr.bf16.mxu0 0
  %384 = vmatpush1.bf16.msra.mxu0 %v292
  %385 = vmatprep.mubr.bf16.mxu0 %v125
  %386 = vmatmul.mubr.bf16.gmra.mrb[0].mxu0 %v124
  %v387 = vpop.f32.mrb[0].mxu0
  %v388 = vadd.f32 %v101, %v387
  %v389 = vpop.f32.mrb[0].mxu0
  %v390 = vpop.f32.mrb[0].mxu0
  %v391 = vadd.f32 %v106, %v390
  %v392 = vpop.f32.mrb[0].mxu0
  %393 = vdwg.mxu0
  %394 = vmatprep.subr.bf16.mxu0 0
  %395 = vmatpush1.bf16.msra.mxu0 %v293
  %396 = vmatprep.subr.bf16.mxu0 0
  %397 = vmatpush1.bf16.msra.mxu0 %v294
  %398 = vmatprep.subr.bf16.mxu0 0
  %399 = vmatpush1.bf16.msra.mxu0 %v295
  %400 = vmatprep.subr.bf16.mxu0 0
  %401 = vmatpush1.bf16.msra.mxu0 %v296
  %402 = vmatprep.subr.bf16.mxu0 0
  %403 = vmatpush1.bf16.msra.mxu0 %v297
  %404 = vmatprep.subr.bf16.mxu0 0
  %405 = vmatpush1.bf16.msra.mxu0 %v298
  %406 = vmatprep.subr.bf16.mxu0 0
  %407 = vmatpush1.bf16.msra.mxu0 %v299
  %408 = vmatprep.subr.bf16.mxu0 0
  %409 = vmatpush1.bf16.msra.mxu0 %v300
  %410 = vmatprep.subr.bf16.mxu0 0
  %411 = vmatpush1.bf16.msra.mxu0 %v301
  %412 = vmatprep.subr.bf16.mxu0 0
  %413 = vmatpush1.bf16.msra.mxu0 %v302
  %414 = vmatprep.subr.bf16.mxu0 0
  %415 = vmatpush1.bf16.msra.mxu0 %v303
  %416 = vmatprep.subr.bf16.mxu0 0
  %417 = vmatpush1.bf16.msra.mxu0 %v304
  %418 = vmatprep.subr.bf16.mxu0 0
  %419 = vmatpush1.bf16.msra.mxu0 %v305
  %420 = vmatprep.subr.bf16.mxu0 0
  %421 = vmatpush1.bf16.msra.mxu0 %v306
  %422 = vmatprep.subr.bf16.mxu0 0
  %423 = vmatpush1.bf16.msra.mxu0 %v307
  %424 = vmatprep.subr.bf16.mxu0 0
  %425 = vmatpush1.bf16.msra.mxu0 %v308
  %426 = vmatprep.mubr.bf16.mxu0 %v127
  %427 = vmatmul.mubr.bf16.gmra.mrb[0].mxu0 %v126
  %v428 = vpop.f32.mrb[0].mxu0
  %v429 = vadd.f32 %v388, %v428
  %v430 = vpop.f32.mrb[0].mxu0
  %v431 = vpop.f32.mrb[0].mxu0
  %v432 = vadd.f32 %v391, %v431
  %v433 = vpop.f32.mrb[0].mxu0
  %434 = vdwg.mxu0
  %435 = vmatprep.subr.bf16.mxu0 0
  %436 = vmatpush1.bf16.msra.mxu0 %v309
  %437 = vmatprep.subr.bf16.mxu0 0
  %438 = vmatpush1.bf16.msra.mxu0 %v310
  %439 = vmatprep.subr.bf16.mxu0 0
  %440 = vmatpush1.bf16.msra.mxu0 %v311
  %441 = vmatprep.subr.bf16.mxu0 0
  %442 = vmatpush1.bf16.msra.mxu0 %v312
  %443 = vmatprep.subr.bf16.mxu0 0
  %444 = vmatpush1.bf16.msra.mxu0 0
  %445 = vmatprep.subr.bf16.mxu0 0
  %446 = vmatpush1.bf16.msra.mxu0 0
  %447 = vmatprep.subr.bf16.mxu0 0
  %448 = vmatpush1.bf16.msra.mxu0 0
  %449 = vmatprep.subr.bf16.mxu0 0
  %450 = vmatpush1.bf16.msra.mxu0 0
  %451 = vmatprep.subr.bf16.mxu0 0
  %452 = vmatpush1.bf16.msra.mxu0 0
  %453 = vmatprep.subr.bf16.mxu0 0
  %454 = vmatpush1.bf16.msra.mxu0 0
  %455 = vmatprep.subr.bf16.mxu0 0
  %456 = vmatpush1.bf16.msra.mxu0 0
  %457 = vmatprep.subr.bf16.mxu0 0
  %458 = vmatpush1.bf16.msra.mxu0 0
  %459 = vmatprep.subr.bf16.mxu0 0
  %460 = vmatpush1.bf16.msra.mxu0 0
  %461 = vmatprep.subr.bf16.mxu0 0
  %462 = vmatpush1.bf16.msra.mxu0 0
  %463 = vmatprep.subr.bf16.mxu0 0
  %464 = vmatpush1.bf16.msra.mxu0 0
  %465 = vmatprep.subr.bf16.mxu0 0
  %466 = vmatpush1.bf16.msra.mxu0 0
  %467 = vmatprep.mubr.bf16.mxu0 0
  %468 = vmatmul.mubr.bf16.gmra.mrb[0].mxu0 %v351
  %v469 = vpop.f32.mrb[0].mxu0
  %v470 = vadd.f32 %v429, %v469
  %v471 = vpop.f32.mrb[0].mxu0
  %v472 = vpop.f32.mrb[0].mxu0
  %v473 = vadd.f32 %v432, %v472
  %v474 = vpop.f32.mrb[0].mxu0
  %475 = vdwg.mxu0
  %v476 = vld [vmem:[%s3] sm:$0xf]
  %v477 = vld [vmem:[%s3 + $0x4] sm:$0xf]
  %v478 = vunpack.c.l.bf16 %v476
  %v479 = vunpack.c.l.bf16 %v477
  %v480 = vadd.f32 %v470, %v478
  %v481 = vadd.f32 %v473, %v479
  %v482 = vmax.f32 %v480, 0.0
  %v483 = vmax.f32 %v481, 0.0
  %v484 = vpack.c.bf16 %v483, %v482
  %v486 = vunpack.c.l.b16 %v484
  %v487 = vunpack.c.h.b16 %v484
  %v488 = vpack.c.b16 %v486, %v486
  %v489 = vpack.c.b16 %v487, %v487
  %492 = vst [vmem:[%s4] sm:$0xf] %v488
  %493 = vst [vmem:[%s4 + $0x4] sm:$0xf] %v489
  // Predicated region
  $region18: #{sam2unet_forward.48} parent=0 // pred_check
    _
  $region19: #{sam2unet_forward.48} parent=0 // pred_check_branch
    %495 = sbr.rel (0) target = $region21
  $region20: #{sam2unet_forward.48} parent=0 // pred_region
    _
  $region21: #{sam2unet_forward.48} parent=0 // pred_fallthru
    _
  // Predicated region
  $region22: #{sam2unet_forward.48} parent=0 // pred_check
    _
  $region23: #{sam2unet_forward.48} parent=0 // pred_check_branch
    %497 = sbr.rel (0) target = $region25
  $region24: #{sam2unet_forward.48} parent=0 // pred_region
    _
  $region25: #{sam2unet_forward.48} parent=0 // pred_fallthru
    _

// kernel: sam2unet_forward.49
$region0: #{sam2unet_forward.49}
  #allocation0 [shape = 'u32[]', space=smem, size = 0x4, offset = 0x4, fixed_abs, tag = 'smem constant byte address 0x4 - core index']
  #allocation1 [shape = 'u32[144,128]{1,0:T(1,128)}', space=vmem, size = 0x12000, scoped, tag = 'internal scratch']
  %s0 = inlined_call_operand.vmem [shape: bf16[80,32], index: 0, kind: input, shape index: {}]
  %s1 = inlined_call_operand.vmem [shape: bf16[32,128], index: 1, kind: input, shape index: {}]
  %s2 = inlined_call_operand.vmem [shape: f32[80,1], index: 2, kind: input, shape index: {}]
  %s3 = inlined_call_operand.vmem [shape: bf16[80,128], index: 3, kind: output, shape index: {}]
  %s4 = sld [smem:[#allocation0]]
  $region22: #{sam2unet_forward.49} parent=0
    _
  %s6 = ssub.s32 1, %s4
  %s7 = scalar_select 0, %s6, %s4
  // Predicated region
  $region2: #{sam2unet_forward.49} parent=0 // pred_check
    _
  $region3: #{sam2unet_forward.49} parent=0 // pred_check_branch
    %9 = sbr.rel (0) target = $region5
  $region4: #{sam2unet_forward.49} parent=0 // pred_region
    _
  $region5: #{sam2unet_forward.49} parent=0 // pred_fallthru
    _
  // Predicated region
  $region6: #{sam2unet_forward.49} parent=0 // pred_check
    _
  $region7: #{sam2unet_forward.49} parent=0 // pred_check_branch
    %11 = sbr.rel (0) target = $region9
  $region8: #{sam2unet_forward.49} parent=0 // pred_region
    _
  $region9: #{sam2unet_forward.49} parent=0 // pred_fallthru
    _
  // Predicated region
  $region10: #{sam2unet_forward.49} parent=0 // pred_check
    _
  $region11: #{sam2unet_forward.49} parent=0 // pred_check_branch
    %13 = sbr.rel (0) target = $region13
  $region12: #{sam2unet_forward.49} parent=0 // pred_region
    _
  $region13: #{sam2unet_forward.49} parent=0 // pred_fallthru
    _
  %v15 = vld [vmem:[%s0] sm:$0xf]
  %v16 = vld [vmem:[%s0 + $0x4] sm:$0xf]
  %v17 = vld [vmem:[%s0 + $0x8] sm:$0xf]
  %v18 = vld [vmem:[%s0 + $0xc] sm:$0xf]
  %v19 = vld [vmem:[%s0 + $0x10] sm:$0xf]
  %v20 = vld [vmem:[%s0 + $0x14] sm:$0xf]
  %v21 = vld [vmem:[%s0 + $0x18] sm:$0xf]
  %v22 = vld [vmem:[%s0 + $0x1c] sm:$0xf]
  %v23 = vld [vmem:[%s0 + $0x20] sm:$0xf]
  %v24 = vld [vmem:[%s0 + $0x24] sm:$0xf]
  %v25 = vld [vmem:[%s1] sm:$0xf]
  %v26 = vld [vmem:[%s1 + $0x4] sm:$0xf]
  %v27 = vld [vmem:[%s1 + $0x8] sm:$0xf]
  %v28 = vld [vmem:[%s1 + $0xc] sm:$0xf]
  %v29 = vld [vmem:[%s2] sm:$0xff]
  %v30 = vld [vmem:[%s2 + $0x8] sm:$0xff]
  %v31 = vld [vmem:[%s2 + $0x10] sm:$0xff]
  %v32 = vld [vmem:[%s2 + $0x18] sm:$0xff]
  %v33 = vld [vmem:[%s2 + $0x20] sm:$0xff]
  %v34 = vld [vmem:[%s2 + $0x28] sm:$0xff]
  %v35 = vld [vmem:[%s2 + $0x30] sm:$0xff]
  %v36 = vld [vmem:[%s2 + $0x38] sm:$0xff]
  %v37 = vld [vmem:[%s2 + $0x40] sm:$0xff]
  %v38 = vld [vmem:[%s2 + $0x48] sm:$0xff]
  %40 = vset.pattern.permute.xlu0 0
  %41 = vperm.xlu0 %40, %v29
  %v42 = vpop.permute.xlu0 %41
  %45 = vset.pattern.permute.xlu0 0
  %46 = vperm.xlu0 %45, %v30
  %v47 = vpop.permute.xlu0 %46
  %50 = vset.pattern.permute.xlu0 0
  %51 = vperm.xlu0 %50, %v31
  %v52 = vpop.permute.xlu0 %51
  %55 = vset.pattern.permute.xlu0 0
  %56 = vperm.xlu0 %55, %v32
  %v57 = vpop.permute.xlu0 %56
  %60 = vset.pattern.permute.xlu0 0
  %61 = vperm.xlu0 %60, %v33
  %v62 = vpop.permute.xlu0 %61
  %65 = vset.pattern.permute.xlu0 0
  %66 = vperm.xlu0 %65, %v34
  %v67 = vpop.permute.xlu0 %66
  %70 = vset.pattern.permute.xlu0 0
  %71 = vperm.xlu0 %70, %v35
  %v72 = vpop.permute.xlu0 %71
  %75 = vset.pattern.permute.xlu0 0
  %76 = vperm.xlu0 %75, %v36
  %v77 = vpop.permute.xlu0 %76
  %80 = vset.pattern.permute.xlu0 0
  %81 = vperm.xlu0 %80, %v37
  %v82 = vpop.permute.xlu0 %81
  %85 = vset.pattern.permute.xlu0 0
  %86 = vperm.xlu0 %85, %v38
  %v87 = vpop.permute.xlu0 %86
  %v99 = vunpack.c.l.b16 %v15
  %v100 = vunpack.c.l.b16 %v16
  %v101 = vunpack.c.l.b16 %v17
  %v102 = vunpack.c.l.b16 %v18
  %v103 = vunpack.c.l.b16 %v19
  %v104 = vunpack.c.l.b16 %v20
  %v105 = vunpack.c.l.b16 %v21
  %v106 = vunpack.c.l.b16 %v22
  %v107 = vunpack.c.l.b16 %v23
  %v108 = vunpack.c.l.b16 %v24
  %v109 = vpack.c.b16 %v100, %v99
  %v110 = vpack.c.b16 %v102, %v101
  %v111 = vpack.c.b16 %v104, %v103
  %v112 = vpack.c.b16 %v106, %v105
  %v113 = vpack.c.b16 %v108, %v107
  %v118 = vunpack.c.l.b16 %v25
  %v119 = vunpack.c.l.b16 %v26
  %v120 = vunpack.c.l.b16 %v27
  %v121 = vunpack.c.l.b16 %v28
  %v122 = vpack.c.b16 %v119, %v118
  %v123 = vpack.c.b16 %v121, %v120
  %vm126 = vcmask 261120
  %v128 = vsel %vm126, %v109, 0
  %v131 = vsel %vm126, %v110, 0
  %v134 = vsel %vm126, %v111, 0
  %v137 = vsel %vm126, %v112, 0
  %v140 = vsel %vm126, %v113, 0
  %142 = vmatprep.subr.bf16.mxu0 0
  %143 = vmatpush1.bf16.msra.mxu0 %v122
  %144 = vmatprep.subr.bf16.mxu0 0
  %145 = vmatpush1.bf16.msra.mxu0 %v123
  %146 = vmatprep.subr.bf16.mxu0 0
  %147 = vmatpush1.bf16.msra.mxu0 0
  %148 = vmatprep.subr.bf16.mxu0 0
  %149 = vmatpush1.bf16.msra.mxu0 0
  %150 = vmatprep.subr.bf16.mxu0 0
  %151 = vmatpush1.bf16.msra.mxu0 0
  %152 = vmatprep.subr.bf16.mxu0 0
  %153 = vmatpush1.bf16.msra.mxu0 0
  %154 = vmatprep.subr.bf16.mxu0 0
  %155 = vmatpush1.bf16.msra.mxu0 0
  %156 = vmatprep.subr.bf16.mxu0 0
  %157 = vmatpush1.bf16.msra.mxu0 0
  %158 = vmatprep.subr.bf16.mxu0 0
  %159 = vmatpush1.bf16.msra.mxu0 0
  %160 = vmatprep.subr.bf16.mxu0 0
  %161 = vmatpush1.bf16.msra.mxu0 0
  %162 = vmatprep.subr.bf16.mxu0 0
  %163 = vmatpush1.bf16.msra.mxu0 0
  %164 = vmatprep.subr.bf16.mxu0 0
  %165 = vmatpush1.bf16.msra.mxu0 0
  %166 = vmatprep.subr.bf16.mxu0 0
  %167 = vmatpush1.bf16.msra.mxu0 0
  %168 = vmatprep.subr.bf16.mxu0 0
  %169 = vmatpush1.bf16.msra.mxu0 0
  %170 = vmatprep.subr.bf16.mxu0 0
  %171 = vmatpush1.bf16.msra.mxu0 0
  %172 = vmatprep.subr.bf16.mxu0 0
  %173 = vmatpush1.bf16.msra.mxu0 0
  %174 = vmatprep.mubr.bf16.mxu0 0
  %175 = vmatmul.mubr.bf16.gmra.mrb[0].mxu0 %v128
  %v176 = vpop.f32.mrb[0].mxu0
  %v177 = vadd.f32 %v42, %v176
  %v178 = vpop.f32.mrb[0].mxu0
  %v179 = vpop.f32.mrb[0].mxu0
  %v180 = vadd.f32 %v47, %v179
  %v181 = vpop.f32.mrb[0].mxu0
  %182 = vmatprep.mubr.bf16.mxu0 0
  %183 = vmatmul.mubr.bf16.gmra.mrb[0].mxu0 %v131
  %v184 = vpop.f32.mrb[0].mxu0
  %v185 = vadd.f32 %v52, %v184
  %v186 = vpop.f32.mrb[0].mxu0
  %v187 = vpop.f32.mrb[0].mxu0
  %v188 = vadd.f32 %v57, %v187
  %v189 = vpop.f32.mrb[0].mxu0
  %190 = vmatprep.mubr.bf16.mxu0 0
  %191 = vmatmul.mubr.bf16.gmra.mrb[0].mxu0 %v134
  %v192 = vpop.f32.mrb[0].mxu0
  %v193 = vadd.f32 %v62, %v192
  %v194 = vpop.f32.mrb[0].mxu0
  %v195 = vpop.f32.mrb[0].mxu0
  %v196 = vadd.f32 %v67, %v195
  %v197 = vpop.f32.mrb[0].mxu0
  %198 = vmatprep.mubr.bf16.mxu0 0
  %199 = vmatmul.mubr.bf16.gmra.mrb[0].mxu0 %v137
  %v200 = vpop.f32.mrb[0].mxu0
  %v201 = vadd.f32 %v72, %v200
  %v202 = vpop.f32.mrb[0].mxu0
  %v203 = vpop.f32.mrb[0].mxu0
  %v204 = vadd.f32 %v77, %v203
  %v205 = vpop.f32.mrb[0].mxu0
  %206 = vmatprep.mubr.bf16.mxu0 0
  %207 = vmatmul.mubr.bf16.gmra.mrb[0].mxu0 %v140
  %v208 = vpop.f32.mrb[0].mxu0
  %v209 = vadd.f32 %v82, %v208
  %v210 = vpop.f32.mrb[0].mxu0
  %v211 = vpop.f32.mrb[0].mxu0
  %v212 = vadd.f32 %v87, %v211
  %v213 = vpop.f32.mrb[0].mxu0
  %214 = vdwg.mxu0
  %v215 = vpack.c.bf16 %v180, %v177
  %v216 = vpack.c.bf16 %v188, %v185
  %v217 = vpack.c.bf16 %v196, %v193
  %v218 = vpack.c.bf16 %v204, %v201
  %v219 = vpack.c.bf16 %v212, %v209
  %v225 = vunpack.c.l.b16 %v215
  %v226 = vunpack.c.h.b16 %v215
  %v227 = vunpack.c.l.b16 %v216
  %v228 = vunpack.c.h.b16 %v216
  %v229 = vunpack.c.l.b16 %v217
  %v230 = vunpack.c.h.b16 %v217
  %v231 = vunpack.c.l.b16 %v218
  %v232 = vunpack.c.h.b16 %v218
  %v233 = vunpack.c.l.b16 %v219
  %v234 = vunpack.c.h.b16 %v219
  %v235 = vpack.c.b16 %v225, %v225
  %v236 = vpack.c.b16 %v226, %v226
  %v237 = vpack.c.b16 %v227, %v227
  %v238 = vpack.c.b16 %v228, %v228
  %v239 = vpack.c.b16 %v229, %v229
  %v240 = vpack.c.b16 %v230, %v230
  %v241 = vpack.c.b16 %v231, %v231
  %v242 = vpack.c.b16 %v232, %v232
  %v243 = vpack.c.b16 %v233, %v233
  %v244 = vpack.c.b16 %v234, %v234
  %255 = vst [vmem:[%s3] sm:$0xf] %v235
  %256 = vst [vmem:[%s3 + $0x4] sm:$0xf] %v236
  %257 = vst [vmem:[%s3 + $0x8] sm:$0xf] %v237
  %258 = vst [vmem:[%s3 + $0xc] sm:$0xf] %v238
  %259 = vst [vmem:[%s3 + $0x10] sm:$0xf] %v239
  %260 = vst [vmem:[%s3 + $0x14] sm:$0xf] %v240
  %261 = vst [vmem:[%s3 + $0x18] sm:$0xf] %v241
  %262 = vst [vmem:[%s3 + $0x1c] sm:$0xf] %v242
  %263 = vst [vmem:[%s3 + $0x20] sm:$0xf] %v243
  %264 = vst [vmem:[%s3 + $0x24] sm:$0xf] %v244
  // Predicated region
  $region14: #{sam2unet_forward.49} parent=0 // pred_check
    _
  $region15: #{sam2unet_forward.49} parent=0 // pred_check_branch
    %266 = sbr.rel (0) target = $region17
  $region16: #{sam2unet_forward.49} parent=0 // pred_region
    _
  $region17: #{sam2unet_forward.49} parent=0 // pred_fallthru
    _
  // Predicated region
  $region18: #{sam2unet_forward.49} parent=0 // pred_check
    _
  $region19: #{sam2unet_forward.49} parent=0 // pred_check_branch
    %268 = sbr.rel (0) target = $region21
  $region20: #{sam2unet_forward.49} parent=0 // pred_region
    _
  $region21: #{sam2unet_forward.49} parent=0 // pred_fallthru
    _

// kernel: sam2unet_forward.38
$region0: #{sam2unet_forward.38}
  #allocation0 [shape = 'u32[]', space=smem, size = 0x4, offset = 0x4, fixed_abs, tag = 'smem constant byte address 0x4 - core index']
  #allocation1 [shape = 'u32[144,128]{1,0:T(1,128)}', space=vmem, size = 0x12000, scoped, tag = 'internal scratch']
  %s0 = inlined_call_operand.vmem [shape: bf16[32,224], index: 0, kind: input, shape index: {}]
  %s1 = inlined_call_operand.vmem [shape: bf16[224,128], index: 1, kind: input, shape index: {}]
  %s2 = inlined_call_operand.vmem [shape: f32[32,1], index: 2, kind: input, shape index: {}]
  %s3 = inlined_call_operand.vmem [shape: bf16[32,128], index: 3, kind: output, shape index: {}]
  %s4 = sld [smem:[#allocation0]]
  $region22: #{sam2unet_forward.38} parent=0
    _
  %s6 = ssub.s32 1, %s4
  %s7 = scalar_select 0, %s6, %s4
  // Predicated region
  $region2: #{sam2unet_forward.38} parent=0 // pred_check
    _
  $region3: #{sam2unet_forward.38} parent=0 // pred_check_branch
    %9 = sbr.rel (0) target = $region5
  $region4: #{sam2unet_forward.38} parent=0 // pred_region
    _
  $region5: #{sam2unet_forward.38} parent=0 // pred_fallthru
    _
  // Predicated region
  $region6: #{sam2unet_forward.38} parent=0 // pred_check
    _
  $region7: #{sam2unet_forward.38} parent=0 // pred_check_branch
    %11 = sbr.rel (0) target = $region9
  $region8: #{sam2unet_forward.38} parent=0 // pred_region
    _
  $region9: #{sam2unet_forward.38} parent=0 // pred_fallthru
    _
  // Predicated region
  $region10: #{sam2unet_forward.38} parent=0 // pred_check
    _
  $region11: #{sam2unet_forward.38} parent=0 // pred_check_branch
    %13 = sbr.rel (0) target = $region13
  $region12: #{sam2unet_forward.38} parent=0 // pred_region
    _
  $region13: #{sam2unet_forward.38} parent=0 // pred_fallthru
    _
  %v15 = vld [vmem:[%s0] sm:$0xff]
  %v16 = vld [vmem:[%s0 + $0x8] sm:$0xff]
  %v17 = vld [vmem:[%s0 + $0x10] sm:$0xff]
  %v18 = vld [vmem:[%s0 + $0x18] sm:$0xff]
  %v19 = vld [vmem:[%s1] sm:$0xf]
  %v20 = vld [vmem:[%s1 + $0x4] sm:$0xf]
  %v21 = vld [vmem:[%s1 + $0x8] sm:$0xf]
  %v22 = vld [vmem:[%s1 + $0xc] sm:$0xf]
  %v23 = vld [vmem:[%s1 + $0x10] sm:$0xf]
  %v24 = vld [vmem:[%s1 + $0x14] sm:$0xf]
  %v25 = vld [vmem:[%s1 + $0x18] sm:$0xf]
  %v26 = vld [vmem:[%s1 + $0x1c] sm:$0xf]
  %v27 = vld [vmem:[%s1 + $0x20] sm:$0xf]
  %v28 = vld [vmem:[%s1 + $0x24] sm:$0xf]
  %v29 = vld [vmem:[%s1 + $0x28] sm:$0xf]
  %v30 = vld [vmem:[%s1 + $0x2c] sm:$0xf]
  %v31 = vld [vmem:[%s1 + $0x30] sm:$0xf]
  %v32 = vld [vmem:[%s1 + $0x34] sm:$0xf]
  %v33 = vld [vmem:[%s1 + $0x38] sm:$0xf]
  %v34 = vld [vmem:[%s1 + $0x3c] sm:$0xf]
  %v35 = vld [vmem:[%s1 + $0x40] sm:$0xf]
  %v36 = vld [vmem:[%s1 + $0x44] sm:$0xf]
  %v37 = vld [vmem:[%s1 + $0x48] sm:$0xf]
  %v38 = vld [vmem:[%s1 + $0x4c] sm:$0xf]
  %v39 = vld [vmem:[%s1 + $0x50] sm:$0xf]
  %v40 = vld [vmem:[%s1 + $0x54] sm:$0xf]
  %v41 = vld [vmem:[%s1 + $0x58] sm:$0xf]
  %v42 = vld [vmem:[%s1 + $0x5c] sm:$0xf]
  %v43 = vld [vmem:[%s1 + $0x60] sm:$0xf]
  %v44 = vld [vmem:[%s1 + $0x64] sm:$0xf]
  %v45 = vld [vmem:[%s1 + $0x68] sm:$0xf]
  %v46 = vld [vmem:[%s1 + $0x6c] sm:$0xf]
  %v47 = vld [vmem:[%s2] sm:$0xff]
  %v48 = vld [vmem:[%s2 + $0x8] sm:$0xff]
  %v49 = vld [vmem:[%s2 + $0x10] sm:$0xff]
  %v50 = vld [vmem:[%s2 + $0x18] sm:$0xff]
  %52 = vset.pattern.permute.xlu0 0
  %53 = vperm.xlu0 %52, %v47
  %v54 = vpop.permute.xlu0 %53
  %57 = vset.pattern.permute.xlu0 0
  %58 = vperm.xlu0 %57, %v48
  %v59 = vpop.permute.xlu0 %58
  %62 = vset.pattern.permute.xlu0 0
  %63 = vperm.xlu0 %62, %v49
  %v64 = vpop.permute.xlu0 %63
  %67 = vset.pattern.permute.xlu0 0
  %68 = vperm.xlu0 %67, %v50
  %v69 = vpop.permute.xlu0 %68
  %v75 = vunpack.c.l.b16 %v15
  %v76 = vunpack.c.h.b16 %v15
  %v77 = vunpack.c.l.b16 %v16
  %v78 = vunpack.c.h.b16 %v16
  %v79 = vunpack.c.l.b16 %v17
  %v80 = vunpack.c.h.b16 %v17
  %v81 = vunpack.c.l.b16 %v18
  %v82 = vunpack.c.h.b16 %v18
  %v83 = vpack.c.b16 %v77, %v75
  %v84 = vpack.c.b16 %v78, %v76
  %v85 = vpack.c.b16 %v81, %v79
  %v86 = vpack.c.b16 %v82, %v80
  %v117 = vunpack.c.l.b16 %v19
  %v118 = vunpack.c.l.b16 %v20
  %v119 = vunpack.c.l.b16 %v21
  %v120 = vunpack.c.l.b16 %v22
  %v121 = vunpack.c.l.b16 %v23
  %v122 = vunpack.c.l.b16 %v24
  %v123 = vunpack.c.l.b16 %v25
  %v124 = vunpack.c.l.b16 %v26
  %v125 = vunpack.c.l.b16 %v27
  %v126 = vunpack.c.l.b16 %v28
  %v127 = vunpack.c.l.b16 %v29
  %v128 = vunpack.c.l.b16 %v30
  %v129 = vunpack.c.l.b16 %v31
  %v130 = vunpack.c.l.b16 %v32
  %v131 = vunpack.c.l.b16 %v33
  %v132 = vunpack.c.l.b16 %v34
  %v133 = vunpack.c.l.b16 %v35
  %v134 = vunpack.c.l.b16 %v36
  %v135 = vunpack.c.l.b16 %v37
  %v136 = vunpack.c.l.b16 %v38
  %v137 = vunpack.c.l.b16 %v39
  %v138 = vunpack.c.l.b16 %v40
  %v139 = vunpack.c.l.b16 %v41
  %v140 = vunpack.c.l.b16 %v42
  %v141 = vunpack.c.l.b16 %v43
  %v142 = vunpack.c.l.b16 %v44
  %v143 = vunpack.c.l.b16 %v45
  %v144 = vunpack.c.l.b16 %v46
  %v145 = vpack.c.b16 %v118, %v117
  %v146 = vpack.c.b16 %v120, %v119
  %v147 = vpack.c.b16 %v122, %v121
  %v148 = vpack.c.b16 %v124, %v123
  %v149 = vpack.c.b16 %v126, %v125
  %v150 = vpack.c.b16 %v128, %v127
  %v151 = vpack.c.b16 %v130, %v129
  %v152 = vpack.c.b16 %v132, %v131
  %v153 = vpack.c.b16 %v134, %v133
  %v154 = vpack.c.b16 %v136, %v135
  %v155 = vpack.c.b16 %v138, %v137
  %v156 = vpack.c.b16 %v140, %v139
  %v157 = vpack.c.b16 %v142, %v141
  %v158 = vpack.c.b16 %v144, %v143
  %vm173 = vcmask 785408
  %v175 = vsel %vm173, %v84, 0
  %v178 = vsel %vm173, %v86, 0
  %180 = vmatprep.subr.bf16.mxu0 0
  %181 = vmatpush1.bf16.msra.mxu0 %v145
  %182 = vmatprep.subr.bf16.mxu0 0
  %183 = vmatpush1.bf16.msra.mxu0 %v146
  %184 = vmatprep.subr.bf16.mxu0 0
  %185 = vmatpush1.bf16.msra.mxu0 %v147
  %186 = vmatprep.subr.bf16.mxu0 0
  %187 = vmatpush1.bf16.msra.mxu0 %v148
  %188 = vmatprep.subr.bf16.mxu0 0
  %189 = vmatpush1.bf16.msra.mxu0 %v149
  %190 = vmatprep.subr.bf16.mxu0 0
  %191 = vmatpush1.bf16.msra.mxu0 %v150
  %192 = vmatprep.subr.bf16.mxu0 0
  %193 = vmatpush1.bf16.msra.mxu0 %v151
  %194 = vmatprep.subr.bf16.mxu0 0
  %195 = vmatpush1.bf16.msra.mxu0 %v152
  %196 = vmatprep.subr.bf16.mxu0 0
  %197 = vmatpush1.bf16.msra.mxu0 %v153
  %198 = vmatprep.subr.bf16.mxu0 0
  %199 = vmatpush1.bf16.msra.mxu0 %v154
  %200 = vmatprep.subr.bf16.mxu0 0
  %201 = vmatpush1.bf16.msra.mxu0 %v155
  %202 = vmatprep.subr.bf16.mxu0 0
  %203 = vmatpush1.bf16.msra.mxu0 %v156
  %204 = vmatprep.subr.bf16.mxu0 0
  %205 = vmatpush1.bf16.msra.mxu0 %v157
  %206 = vmatprep.subr.bf16.mxu0 0
  %207 = vmatpush1.bf16.msra.mxu0 %v158
  %208 = vmatprep.subr.bf16.mxu0 0
  %209 = vmatpush1.bf16.msra.mxu0 0
  %210 = vmatprep.subr.bf16.mxu0 0
  %211 = vmatpush1.bf16.msra.mxu0 0
  %212 = vmatprep.mubr.bf16.mxu0 %v175
  %213 = vmatmul.mubr.bf16.gmra.mrb[0].mxu0 %v83
  %v214 = vpop.f32.mrb[0].mxu0
  %v215 = vadd.f32 %v54, %v214
  %v216 = vpop.f32.mrb[0].mxu0
  %v217 = vpop.f32.mrb[0].mxu0
  %v218 = vadd.f32 %v59, %v217
  %v219 = vpop.f32.mrb[0].mxu0
  %220 = vmatprep.mubr.bf16.mxu0 %v178
  %221 = vmatmul.mubr.bf16.gmra.mrb[0].mxu0 %v85
  %v222 = vpop.f32.mrb[0].mxu0
  %v223 = vadd.f32 %v64, %v222
  %v224 = vpop.f32.mrb[0].mxu0
  %v225 = vpop.f32.mrb[0].mxu0
  %v226 = vadd.f32 %v69, %v225
  %v227 = vpop.f32.mrb[0].mxu0
  %228 = vdwg.mxu0
  %v229 = vmax.f32 %v215, 0.0
  %v230 = vmax.f32 %v218, 0.0
  %v231 = vmax.f32 %v223, 0.0
  %v232 = vmax.f32 %v226, 0.0
  %v233 = vpack.c.bf16 %v230, %v229
  %v234 = vpack.c.bf16 %v232, %v231
  %v237 = vunpack.c.l.b16 %v233
  %v238 = vunpack.c.h.b16 %v233
  %v239 = vunpack.c.l.b16 %v234
  %v240 = vunpack.c.h.b16 %v234
  %v241 = vpack.c.b16 %v237, %v237
  %v242 = vpack.c.b16 %v238, %v238
  %v243 = vpack.c.b16 %v239, %v239
  %v244 = vpack.c.b16 %v240, %v240
  %249 = vst [vmem:[%s3] sm:$0xf] %v241
  %250 = vst [vmem:[%s3 + $0x4] sm:$0xf] %v242
  %251 = vst [vmem:[%s3 + $0x8] sm:$0xf] %v243
  %252 = vst [vmem:[%s3 + $0xc] sm:$0xf] %v244
  // Predicated region
  $region14: #{sam2unet_forward.38} parent=0 // pred_check
    _
  $region15: #{sam2unet_forward.38} parent=0 // pred_check_branch
    %254 = sbr.rel (0) target = $region17
  $region16: #{sam2unet_forward.38} parent=0 // pred_region
    _
  $region17: #{sam2unet_forward.38} parent=0 // pred_fallthru
    _
  // Predicated region
  $region18: #{sam2unet_forward.38} parent=0 // pred_check
    _
  $region19: #{sam2unet_forward.38} parent=0 // pred_check_branch
    %256 = sbr.rel (0) target = $region21
  $region20: #{sam2unet_forward.38} parent=0 // pred_region
    _
  $region21: #{sam2unet_forward.38} parent=0 // pred_fallthru
    _

// kernel: sam2unet_forward.59
$region0: #{sam2unet_forward.59}
  #allocation0 [shape = 'u32[]', space=smem, size = 0x4, offset = 0x4, fixed_abs, tag = 'smem constant byte address 0x4 - core index']
  #allocation1 [shape = 'u32[144,128]{1,0:T(1,128)}', space=vmem, size = 0x12000, scoped, tag = 'internal scratch']
  %s0 = inlined_call_operand.vmem [shape: bf16[16,288], index: 0, kind: input, shape index: {}]
  %s1 = inlined_call_operand.vmem [shape: bf16[288,128], index: 1, kind: input, shape index: {}]
  %s2 = inlined_call_operand.vmem [shape: f32[16,1], index: 2, kind: input, shape index: {}]
  %s3 = inlined_call_operand.vmem [shape: bf16[16,128], index: 3, kind: output, shape index: {}]
  %s4 = sld [smem:[#allocation0]]
  $region22: #{sam2unet_forward.59} parent=0
    _
  %s6 = ssub.s32 1, %s4
  %s7 = scalar_select 0, %s6, %s4
  // Predicated region
  $region2: #{sam2unet_forward.59} parent=0 // pred_check
    _
  $region3: #{sam2unet_forward.59} parent=0 // pred_check_branch
    %9 = sbr.rel (0) target = $region5
  $region4: #{sam2unet_forward.59} parent=0 // pred_region
    _
  $region5: #{sam2unet_forward.59} parent=0 // pred_fallthru
    _
  // Predicated region
  $region6: #{sam2unet_forward.59} parent=0 // pred_check
    _
  $region7: #{sam2unet_forward.59} parent=0 // pred_check_branch
    %11 = sbr.rel (0) target = $region9
  $region8: #{sam2unet_forward.59} parent=0 // pred_region
    _
  $region9: #{sam2unet_forward.59} parent=0 // pred_fallthru
    _
  // Predicated region
  $region10: #{sam2unet_forward.59} parent=0 // pred_check
    _
  $region11: #{sam2unet_forward.59} parent=0 // pred_check_branch
    %13 = sbr.rel (0) target = $region13
  $region12: #{sam2unet_forward.59} parent=0 // pred_region
    _
  $region13: #{sam2unet_forward.59} parent=0 // pred_fallthru
    _
  %v15 = vld [vmem:[%s0] sm:$0xff]
  %v16 = vld [vmem:[%s0 + $0x8] sm:$0xf]
  %v17 = vld [vmem:[%s0 + $0xc] sm:$0xff]
  %v18 = vld [vmem:[%s0 + $0x14] sm:$0xf]
  %v19 = vld [vmem:[%s1] sm:$0xf]
  %v20 = vld [vmem:[%s1 + $0x4] sm:$0xf]
  %v21 = vld [vmem:[%s1 + $0x8] sm:$0xf]
  %v22 = vld [vmem:[%s1 + $0xc] sm:$0xf]
  %v23 = vld [vmem:[%s1 + $0x10] sm:$0xf]
  %v24 = vld [vmem:[%s1 + $0x14] sm:$0xf]
  %v25 = vld [vmem:[%s1 + $0x18] sm:$0xf]
  %v26 = vld [vmem:[%s1 + $0x1c] sm:$0xf]
  %v27 = vld [vmem:[%s1 + $0x20] sm:$0xf]
  %v28 = vld [vmem:[%s1 + $0x24] sm:$0xf]
  %v29 = vld [vmem:[%s1 + $0x28] sm:$0xf]
  %v30 = vld [vmem:[%s1 + $0x2c] sm:$0xf]
  %v31 = vld [vmem:[%s1 + $0x30] sm:$0xf]
  %v32 = vld [vmem:[%s1 + $0x34] sm:$0xf]
  %v33 = vld [vmem:[%s1 + $0x38] sm:$0xf]
  %v34 = vld [vmem:[%s1 + $0x3c] sm:$0xf]
  %v35 = vld [vmem:[%s1 + $0x40] sm:$0xf]
  %v36 = vld [vmem:[%s1 + $0x44] sm:$0xf]
  %v37 = vld [vmem:[%s1 + $0x48] sm:$0xf]
  %v38 = vld [vmem:[%s1 + $0x4c] sm:$0xf]
  %v39 = vld [vmem:[%s1 + $0x50] sm:$0xf]
  %v40 = vld [vmem:[%s1 + $0x54] sm:$0xf]
  %v41 = vld [vmem:[%s1 + $0x58] sm:$0xf]
  %v42 = vld [vmem:[%s1 + $0x5c] sm:$0xf]
  %v43 = vld [vmem:[%s1 + $0x60] sm:$0xf]
  %v44 = vld [vmem:[%s1 + $0x64] sm:$0xf]
  %v45 = vld [vmem:[%s1 + $0x68] sm:$0xf]
  %v46 = vld [vmem:[%s1 + $0x6c] sm:$0xf]
  %v47 = vld [vmem:[%s1 + $0x70] sm:$0xf]
  %v48 = vld [vmem:[%s1 + $0x74] sm:$0xf]
  %v49 = vld [vmem:[%s1 + $0x78] sm:$0xf]
  %v50 = vld [vmem:[%s1 + $0x7c] sm:$0xf]
  %v51 = vld [vmem:[%s1 + $0x80] sm:$0xf]
  %v52 = vld [vmem:[%s1 + $0x84] sm:$0xf]
  %v53 = vld [vmem:[%s1 + $0x88] sm:$0xf]
  %v54 = vld [vmem:[%s1 + $0x8c] sm:$0xf]
  %v55 = vld [vmem:[%s2] sm:$0xff]
  %v56 = vld [vmem:[%s2 + $0x8] sm:$0xff]
  %58 = vset.pattern.permute.xlu0 0
  %59 = vperm.xlu0 %58, %v55
  %v60 = vpop.permute.xlu0 %59
  %63 = vset.pattern.permute.xlu0 0
  %64 = vperm.xlu0 %63, %v56
  %v65 = vpop.permute.xlu0 %64
  %v71 = vunpack.c.l.b16 %v15
  %v72 = vunpack.c.h.b16 %v15
  %v73 = vunpack.c.l.b16 %v16
  %v74 = vunpack.c.l.b16 %v17
  %v75 = vunpack.c.h.b16 %v17
  %v76 = vunpack.c.l.b16 %v18
  %v77 = vpack.c.b16 %v74, %v71
  %v78 = vpack.c.b16 %v75, %v72
  %v79 = vpack.c.b16 %v76, %v73
  %v118 = vunpack.c.l.b16 %v19
  %v119 = vunpack.c.l.b16 %v20
  %v120 = vunpack.c.l.b16 %v21
  %v121 = vunpack.c.l.b16 %v22
  %v122 = vunpack.c.l.b16 %v23
  %v123 = vunpack.c.l.b16 %v24
  %v124 = vunpack.c.l.b16 %v25
  %v125 = vunpack.c.l.b16 %v26
  %v126 = vunpack.c.l.b16 %v27
  %v127 = vunpack.c.l.b16 %v28
  %v128 = vunpack.c.l.b16 %v29
  %v129 = vunpack.c.l.b16 %v30
  %v130 = vunpack.c.l.b16 %v31
  %v131 = vunpack.c.l.b16 %v32
  %v132 = vunpack.c.l.b16 %v33
  %v133 = vunpack.c.l.b16 %v34
  %v134 = vunpack.c.l.b16 %v35
  %v135 = vunpack.c.l.b16 %v36
  %v136 = vunpack.c.l.b16 %v37
  %v137 = vunpack.c.l.b16 %v38
  %v138 = vunpack.c.l.b16 %v39
  %v139 = vunpack.c.l.b16 %v40
  %v140 = vunpack.c.l.b16 %v41
  %v141 = vunpack.c.l.b16 %v42
  %v142 = vunpack.c.l.b16 %v43
  %v143 = vunpack.c.l.b16 %v44
  %v144 = vunpack.c.l.b16 %v45
  %v145 = vunpack.c.l.b16 %v46
  %v146 = vunpack.c.l.b16 %v47
  %v147 = vunpack.c.l.b16 %v48
  %v148 = vunpack.c.l.b16 %v49
  %v149 = vunpack.c.l.b16 %v50
  %v150 = vunpack.c.l.b16 %v51
  %v151 = vunpack.c.l.b16 %v52
  %v152 = vunpack.c.l.b16 %v53
  %v153 = vunpack.c.l.b16 %v54
  %v154 = vpack.c.b16 %v119, %v118
  %v155 = vpack.c.b16 %v121, %v120
  %v156 = vpack.c.b16 %v123, %v122
  %v157 = vpack.c.b16 %v125, %v124
  %v158 = vpack.c.b16 %v127, %v126
  %v159 = vpack.c.b16 %v129, %v128
  %v160 = vpack.c.b16 %v131, %v130
  %v161 = vpack.c.b16 %v133, %v132
  %v162 = vpack.c.b16 %v135, %v134
  %v163 = vpack.c.b16 %v137, %v136
  %v164 = vpack.c.b16 %v139, %v138
  %v165 = vpack.c.b16 %v141, %v140
  %v166 = vpack.c.b16 %v143, %v142
  %v167 = vpack.c.b16 %v145, %v144
  %v168 = vpack.c.b16 %v147, %v146
  %v169 = vpack.c.b16 %v149, %v148
  %v170 = vpack.c.b16 %v151, %v150
  %v171 = vpack.c.b16 %v153, %v152
  %vm190 = vcmask 261120
  %v192 = vsel %vm190, %v79, 0
  %194 = vmatprep.subr.bf16.mxu0 0
  %195 = vmatpush1.bf16.msra.mxu0 %v154
  %196 = vmatprep.subr.bf16.mxu0 0
  %197 = vmatpush1.bf16.msra.mxu0 %v155
  %198 = vmatprep.subr.bf16.mxu0 0
  %199 = vmatpush1.bf16.msra.mxu0 %v156
  %200 = vmatprep.subr.bf16.mxu0 0
  %201 = vmatpush1.bf16.msra.mxu0 %v157
  %202 = vmatprep.subr.bf16.mxu0 0
  %203 = vmatpush1.bf16.msra.mxu0 %v158
  %204 = vmatprep.subr.bf16.mxu0 0
  %205 = vmatpush1.bf16.msra.mxu0 %v159
  %206 = vmatprep.subr.bf16.mxu0 0
  %207 = vmatpush1.bf16.msra.mxu0 %v160
  %208 = vmatprep.subr.bf16.mxu0 0
  %209 = vmatpush1.bf16.msra.mxu0 %v161
  %210 = vmatprep.subr.bf16.mxu0 0
  %211 = vmatpush1.bf16.msra.mxu0 %v162
  %212 = vmatprep.subr.bf16.mxu0 0
  %213 = vmatpush1.bf16.msra.mxu0 %v163
  %214 = vmatprep.subr.bf16.mxu0 0
  %215 = vmatpush1.bf16.msra.mxu0 %v164
  %216 = vmatprep.subr.bf16.mxu0 0
  %217 = vmatpush1.bf16.msra.mxu0 %v165
  %218 = vmatprep.subr.bf16.mxu0 0
  %219 = vmatpush1.bf16.msra.mxu0 %v166
  %220 = vmatprep.subr.bf16.mxu0 0
  %221 = vmatpush1.bf16.msra.mxu0 %v167
  %222 = vmatprep.subr.bf16.mxu0 0
  %223 = vmatpush1.bf16.msra.mxu0 %v168
  %224 = vmatprep.subr.bf16.mxu0 0
  %225 = vmatpush1.bf16.msra.mxu0 %v169
  %226 = vmatprep.mubr.bf16.mxu0 %v78
  %227 = vmatmul.mubr.bf16.gmra.mrb[0].mxu0 %v77
  %v228 = vpop.f32.mrb[0].mxu0
  %v229 = vadd.f32 %v60, %v228
  %v230 = vpop.f32.mrb[0].mxu0
  %v231 = vpop.f32.mrb[0].mxu0
  %v232 = vadd.f32 %v65, %v231
  %v233 = vpop.f32.mrb[0].mxu0
  %234 = vdwg.mxu0
  %235 = vmatprep.subr.bf16.mxu0 0
  %236 = vmatpush1.bf16.msra.mxu0 %v170
  %237 = vmatprep.subr.bf16.mxu0 0
  %238 = vmatpush1.bf16.msra.mxu0 %v171
  %239 = vmatprep.subr.bf16.mxu0 0
  %240 = vmatpush1.bf16.msra.mxu0 0
  %241 = vmatprep.subr.bf16.mxu0 0
  %242 = vmatpush1.bf16.msra.mxu0 0
  %243 = vmatprep.subr.bf16.mxu0 0
  %244 = vmatpush1.bf16.msra.mxu0 0
  %245 = vmatprep.subr.bf16.mxu0 0
  %246 = vmatpush1.bf16.msra.mxu0 0
  %247 = vmatprep.subr.bf16.mxu0 0
  %248 = vmatpush1.bf16.msra.mxu0 0
  %249 = vmatprep.subr.bf16.mxu0 0
  %250 = vmatpush1.bf16.msra.mxu0 0
  %251 = vmatprep.subr.bf16.mxu0 0
  %252 = vmatpush1.bf16.msra.mxu0 0
  %253 = vmatprep.subr.bf16.mxu0 0
  %254 = vmatpush1.bf16.msra.mxu0 0
  %255 = vmatprep.subr.bf16.mxu0 0
  %256 = vmatpush1.bf16.msra.mxu0 0
  %257 = vmatprep.subr.bf16.mxu0 0
  %258 = vmatpush1.bf16.msra.mxu0 0
  %259 = vmatprep.subr.bf16.mxu0 0
  %260 = vmatpush1.bf16.msra.mxu0 0
  %261 = vmatprep.subr.bf16.mxu0 0
  %262 = vmatpush1.bf16.msra.mxu0 0
  %263 = vmatprep.subr.bf16.mxu0 0
  %264 = vmatpush1.bf16.msra.mxu0 0
  %265 = vmatprep.subr.bf16.mxu0 0
  %266 = vmatpush1.bf16.msra.mxu0 0
  %267 = vmatprep.mubr.bf16.mxu0 0
  %268 = vmatmul.mubr.bf16.gmra.mrb[0].mxu0 %v192
  %v269 = vpop.f32.mrb[0].mxu0
  %v270 = vadd.f32 %v229, %v269
  %v271 = vpop.f32.mrb[0].mxu0
  %v272 = vpop.f32.mrb[0].mxu0
  %v273 = vadd.f32 %v232, %v272
  %v274 = vpop.f32.mrb[0].mxu0
  %275 = vdwg.mxu0
  %v276 = vmax.f32 %v270, 0.0
  %v277 = vmax.f32 %v273, 0.0
  %v278 = vpack.c.bf16 %v277, %v276
  %v280 = vunpack.c.l.b16 %v278
  %v281 = vunpack.c.h.b16 %v278
  %v282 = vpack.c.b16 %v280, %v280
  %v283 = vpack.c.b16 %v281, %v281
  %286 = vst [vmem:[%s3] sm:$0xf] %v282
  %287 = vst [vmem:[%s3 + $0x4] sm:$0xf] %v283
  // Predicated region
  $region14: #{sam2unet_forward.59} parent=0 // pred_check
    _
  $region15: #{sam2unet_forward.59} parent=0 // pred_check_branch
    %289 = sbr.rel (0) target = $region17
  $region16: #{sam2unet_forward.59} parent=0 // pred_region
    _
  $region17: #{sam2unet_forward.59} parent=0 // pred_fallthru
    _
  // Predicated region
  $region18: #{sam2unet_forward.59} parent=0 // pred_check
    _
  $region19: #{sam2unet_forward.59} parent=0 // pred_check_branch
    %291 = sbr.rel (0) target = $region21
  $region20: #{sam2unet_forward.59} parent=0 // pred_region
    _
  $region21: #{sam2unet_forward.59} parent=0 // pred_fallthru
    _

// kernel: sam2unet_forward.60
$region0: #{sam2unet_forward.60}
  #allocation0 [shape = 'u32[]', space=smem, size = 0x4, offset = 0x4, fixed_abs, tag = 'smem constant byte address 0x4 - core index']
  #allocation1 [shape = 'u32[144,128]{1,0:T(1,128)}', space=vmem, size = 0x12000, scoped, tag = 'internal scratch']
  %s0 = inlined_call_operand.vmem [shape: bf16[16,144], index: 0, kind: input, shape index: {}]
  %s1 = inlined_call_operand.vmem [shape: bf16[144,128], index: 1, kind: input, shape index: {}]
  %s2 = inlined_call_operand.vmem [shape: f32[16,1], index: 2, kind: input, shape index: {}]
  %s3 = inlined_call_operand.vmem [shape: bf16[16,128], index: 3, kind: output, shape index: {}]
  %s4 = sld [smem:[#allocation0]]
  $region22: #{sam2unet_forward.60} parent=0
    _
  %s6 = ssub.s32 1, %s4
  %s7 = scalar_select 0, %s6, %s4
  // Predicated region
  $region2: #{sam2unet_forward.60} parent=0 // pred_check
    _
  $region3: #{sam2unet_forward.60} parent=0 // pred_check_branch
    %9 = sbr.rel (0) target = $region5
  $region4: #{sam2unet_forward.60} parent=0 // pred_region
    _
  $region5: #{sam2unet_forward.60} parent=0 // pred_fallthru
    _
  // Predicated region
  $region6: #{sam2unet_forward.60} parent=0 // pred_check
    _
  $region7: #{sam2unet_forward.60} parent=0 // pred_check_branch
    %11 = sbr.rel (0) target = $region9
  $region8: #{sam2unet_forward.60} parent=0 // pred_region
    _
  $region9: #{sam2unet_forward.60} parent=0 // pred_fallthru
    _
  // Predicated region
  $region10: #{sam2unet_forward.60} parent=0 // pred_check
    _
  $region11: #{sam2unet_forward.60} parent=0 // pred_check_branch
    %13 = sbr.rel (0) target = $region13
  $region12: #{sam2unet_forward.60} parent=0 // pred_region
    _
  $region13: #{sam2unet_forward.60} parent=0 // pred_fallthru
    _
  %v15 = vld [vmem:[%s0] sm:$0xff]
  %v16 = vld [vmem:[%s0 + $0x8] sm:$0xff]
  %v17 = vld [vmem:[%s1] sm:$0xf]
  %v18 = vld [vmem:[%s1 + $0x4] sm:$0xf]
  %v19 = vld [vmem:[%s1 + $0x8] sm:$0xf]
  %v20 = vld [vmem:[%s1 + $0xc] sm:$0xf]
  %v21 = vld [vmem:[%s1 + $0x10] sm:$0xf]
  %v22 = vld [vmem:[%s1 + $0x14] sm:$0xf]
  %v23 = vld [vmem:[%s1 + $0x18] sm:$0xf]
  %v24 = vld [vmem:[%s1 + $0x1c] sm:$0xf]
  %v25 = vld [vmem:[%s1 + $0x20] sm:$0xf]
  %v26 = vld [vmem:[%s1 + $0x24] sm:$0xf]
  %v27 = vld [vmem:[%s1 + $0x28] sm:$0xf]
  %v28 = vld [vmem:[%s1 + $0x2c] sm:$0xf]
  %v29 = vld [vmem:[%s1 + $0x30] sm:$0xf]
  %v30 = vld [vmem:[%s1 + $0x34] sm:$0xf]
  %v31 = vld [vmem:[%s1 + $0x38] sm:$0xf]
  %v32 = vld [vmem:[%s1 + $0x3c] sm:$0xf]
  %v33 = vld [vmem:[%s1 + $0x40] sm:$0xf]
  %v34 = vld [vmem:[%s1 + $0x44] sm:$0xf]
  %v35 = vld [vmem:[%s2] sm:$0xff]
  %v36 = vld [vmem:[%s2 + $0x8] sm:$0xff]
  %38 = vset.pattern.permute.xlu0 0
  %39 = vperm.xlu0 %38, %v35
  %v40 = vpop.permute.xlu0 %39
  %43 = vset.pattern.permute.xlu0 0
  %44 = vperm.xlu0 %43, %v36
  %v45 = vpop.permute.xlu0 %44
  %v49 = vunpack.c.l.b16 %v15
  %v50 = vunpack.c.h.b16 %v15
  %v51 = vunpack.c.l.b16 %v16
  %v52 = vunpack.c.h.b16 %v16
  %v53 = vpack.c.b16 %v51, %v49
  %v54 = vpack.c.b16 %v52, %v50
  %v74 = vunpack.c.l.b16 %v17
  %v75 = vunpack.c.l.b16 %v18
  %v76 = vunpack.c.l.b16 %v19
  %v77 = vunpack.c.l.b16 %v20
  %v78 = vunpack.c.l.b16 %v21
  %v79 = vunpack.c.l.b16 %v22
  %v80 = vunpack.c.l.b16 %v23
  %v81 = vunpack.c.l.b16 %v24
  %v82 = vunpack.c.l.b16 %v25
  %v83 = vunpack.c.l.b16 %v26
  %v84 = vunpack.c.l.b16 %v27
  %v85 = vunpack.c.l.b16 %v28
  %v86 = vunpack.c.l.b16 %v29
  %v87 = vunpack.c.l.b16 %v30
  %v88 = vunpack.c.l.b16 %v31
  %v89 = vunpack.c.l.b16 %v32
  %v90 = vunpack.c.l.b16 %v33
  %v91 = vunpack.c.l.b16 %v34
  %v92 = vpack.c.b16 %v75, %v74
  %v93 = vpack.c.b16 %v77, %v76
  %v94 = vpack.c.b16 %v79, %v78
  %v95 = vpack.c.b16 %v81, %v80
  %v96 = vpack.c.b16 %v83, %v82
  %v97 = vpack.c.b16 %v85, %v84
  %v98 = vpack.c.b16 %v87, %v86
  %v99 = vpack.c.b16 %v89, %v88
  %v100 = vpack.c.b16 %v91, %v90
  %vm110 = vcmask 130048
  %v112 = vsel %vm110, %v54, 0
  %114 = vmatprep.subr.bf16.mxu0 0
  %115 = vmatpush1.bf16.msra.mxu0 %v92
  %116 = vmatprep.subr.bf16.mxu0 0
  %117 = vmatpush1.bf16.msra.mxu0 %v93
  %118 = vmatprep.subr.bf16.mxu0 0
  %119 = vmatpush1.bf16.msra.mxu0 %v94
  %120 = vmatprep.subr.bf16.mxu0 0
  %121 = vmatpush1.bf16.msra.mxu0 %v95
  %122 = vmatprep.subr.bf16.mxu0 0
  %123 = vmatpush1.bf16.msra.mxu0 %v96
  %124 = vmatprep.subr.bf16.mxu0 0
  %125 = vmatpush1.bf16.msra.mxu0 %v97
  %126 = vmatprep.subr.bf16.mxu0 0
  %127 = vmatpush1.bf16.msra.mxu0 %v98
  %128 = vmatprep.subr.bf16.mxu0 0
  %129 = vmatpush1.bf16.msra.mxu0 %v99
  %130 = vmatprep.subr.bf16.mxu0 0
  %131 = vmatpush1.bf16.msra.mxu0 %v100
  %132 = vmatprep.subr.bf16.mxu0 0
  %133 = vmatpush1.bf16.msra.mxu0 0
  %134 = vmatprep.subr.bf16.mxu0 0
  %135 = vmatpush1.bf16.msra.mxu0 0
  %136 = vmatprep.subr.bf16.mxu0 0
  %137 = vmatpush1.bf16.msra.mxu0 0
  %138 = vmatprep.subr.bf16.mxu0 0
  %139 = vmatpush1.bf16.msra.mxu0 0
  %140 = vmatprep.subr.bf16.mxu0 0
  %141 = vmatpush1.bf16.msra.mxu0 0
  %142 = vmatprep.subr.bf16.mxu0 0
  %143 = vmatpush1.bf16.msra.mxu0 0
  %144 = vmatprep.subr.bf16.mxu0 0
  %145 = vmatpush1.bf16.msra.mxu0 0
  %146 = vmatprep.mubr.bf16.mxu0 %v112
  %147 = vmatmul.mubr.bf16.gmra.mrb[0].mxu0 %v53
  %v148 = vpop.f32.mrb[0].mxu0
  %v149 = vadd.f32 %v40, %v148
  %v150 = vpop.f32.mrb[0].mxu0
  %v151 = vpop.f32.mrb[0].mxu0
  %v152 = vadd.f32 %v45, %v151
  %v153 = vpop.f32.mrb[0].mxu0
  %154 = vdwg.mxu0
  %v155 = vmax.f32 %v149, 0.0
  %v156 = vmax.f32 %v152, 0.0
  %v157 = vpack.c.bf16 %v156, %v155
  %v159 = vunpack.c.l.b16 %v157
  %v160 = vunpack.c.h.b16 %v157
  %v161 = vpack.c.b16 %v159, %v159
  %v162 = vpack.c.b16 %v160, %v160
  %165 = vst [vmem:[%s3] sm:$0xf] %v161
  %166 = vst [vmem:[%s3 + $0x4] sm:$0xf] %v162
  // Predicated region
  $region14: #{sam2unet_forward.60} parent=0 // pred_check
    _
  $region15: #{sam2unet_forward.60} parent=0 // pred_check_branch
    %168 = sbr.rel (0) target = $region17
  $region16: #{sam2unet_forward.60} parent=0 // pred_region
    _
  $region17: #{sam2unet_forward.60} parent=0 // pred_fallthru
    _
  // Predicated region
  $region18: #{sam2unet_forward.60} parent=0 // pred_check
    _
  $region19: #{sam2unet_forward.60} parent=0 // pred_check_branch
    %170 = sbr.rel (0) target = $region21
  $region20: #{sam2unet_forward.60} parent=0 // pred_region
    _
  $region21: #{sam2unet_forward.60} parent=0 // pred_fallthru
    _

// kernel: sam2unet_forward.65
$region0: #{sam2unet_forward.65}
  #allocation0 [shape = 'u32[]', space=smem, size = 0x4, offset = 0x4, fixed_abs, tag = 'smem constant byte address 0x4 - core index']
  #allocation1 [shape = 'u32[144,128]{1,0:T(1,128)}', space=vmem, size = 0x12000, scoped, tag = 'internal scratch']
  %s0 = inlined_call_operand.vmem [shape: bf16[16,288], index: 0, kind: input, shape index: {}]
  %s1 = inlined_call_operand.vmem [shape: bf16[288,512], index: 1, kind: input, shape index: {}]
  %s2 = inlined_call_operand.vmem [shape: f32[16,1], index: 2, kind: input, shape index: {}]
  %s3 = inlined_call_operand.vmem [shape: bf16[16,512], index: 3, kind: output, shape index: {}]
  %s4 = sld [smem:[#allocation0]]
  $region22: #{sam2unet_forward.65} parent=0
    _
  %s6 = ssub.s32 1, %s4
  %s7 = scalar_select 0, %s6, %s4
  // Predicated region
  $region2: #{sam2unet_forward.65} parent=0 // pred_check
    _
  $region3: #{sam2unet_forward.65} parent=0 // pred_check_branch
    %9 = sbr.rel (0) target = $region5
  $region4: #{sam2unet_forward.65} parent=0 // pred_region
    _
  $region5: #{sam2unet_forward.65} parent=0 // pred_fallthru
    _
  // Predicated region
  $region6: #{sam2unet_forward.65} parent=0 // pred_check
    _
  $region7: #{sam2unet_forward.65} parent=0 // pred_check_branch
    %11 = sbr.rel (0) target = $region9
  $region8: #{sam2unet_forward.65} parent=0 // pred_region
    _
  $region9: #{sam2unet_forward.65} parent=0 // pred_fallthru
    _
  // Predicated region
  $region10: #{sam2unet_forward.65} parent=0 // pred_check
    _
  $region11: #{sam2unet_forward.65} parent=0 // pred_check_branch
    %13 = sbr.rel (0) target = $region13
  $region12: #{sam2unet_forward.65} parent=0 // pred_region
    _
  $region13: #{sam2unet_forward.65} parent=0 // pred_fallthru
    _
  %v15 = vld [vmem:[%s0] sm:$0xff]
  %v16 = vld [vmem:[%s0 + $0x8] sm:$0xf]
  %v17 = vld [vmem:[%s0 + $0xc] sm:$0xff]
  %v18 = vld [vmem:[%s0 + $0x14] sm:$0xf]
  %v19 = vld [vmem:[%s1] sm:$0xff]
  %v20 = vld [vmem:[%s1 + $0x8] sm:$0xff]
  %v21 = vld [vmem:[%s1 + $0x10] sm:$0xff]
  %v22 = vld [vmem:[%s1 + $0x18] sm:$0xff]
  %v23 = vld [vmem:[%s1 + $0x20] sm:$0xff]
  %v24 = vld [vmem:[%s1 + $0x28] sm:$0xff]
  %v25 = vld [vmem:[%s1 + $0x30] sm:$0xff]
  %v26 = vld [vmem:[%s1 + $0x38] sm:$0xff]
  %v27 = vld [vmem:[%s1 + $0x40] sm:$0xff]
  %v28 = vld [vmem:[%s1 + $0x48] sm:$0xff]
  %v29 = vld [vmem:[%s1 + $0x50] sm:$0xff]
  %v30 = vld [vmem:[%s1 + $0x58] sm:$0xff]
  %v31 = vld [vmem:[%s1 + $0x60] sm:$0xff]
  %v32 = vld [vmem:[%s1 + $0x68] sm:$0xff]
  %v33 = vld [vmem:[%s1 + $0x70] sm:$0xff]
  %v34 = vld [vmem:[%s1 + $0x78] sm:$0xff]
  %v35 = vld [vmem:[%s1 + $0x80] sm:$0xff]
  %v36 = vld [vmem:[%s1 + $0x88] sm:$0xff]
  %v37 = vld [vmem:[%s1 + $0x90] sm:$0xff]
  %v38 = vld [vmem:[%s1 + $0x98] sm:$0xff]
  %v39 = vld [vmem:[%s1 + $0xa0] sm:$0xff]
  %v40 = vld [vmem:[%s1 + $0xa8] sm:$0xff]
  %v41 = vld [vmem:[%s1 + $0xb0] sm:$0xff]
  %v42 = vld [vmem:[%s1 + $0xb8] sm:$0xff]
  %v43 = vld [vmem:[%s1 + $0xc0] sm:$0xff]
  %v44 = vld [vmem:[%s1 + $0xc8] sm:$0xff]
  %v45 = vld [vmem:[%s1 + $0xd0] sm:$0xff]
  %v46 = vld [vmem:[%s1 + $0xd8] sm:$0xff]
  %v47 = vld [vmem:[%s1 + $0xe0] sm:$0xff]
  %v48 = vld [vmem:[%s1 + $0xe8] sm:$0xff]
  %v49 = vld [vmem:[%s1 + $0xf0] sm:$0xff]
  %v50 = vld [vmem:[%s1 + $0xf8] sm:$0xff]
  %v51 = vld [vmem:[%s1 + $0x100] sm:$0xff]
  %v52 = vld [vmem:[%s1 + $0x108] sm:$0xff]
  %v53 = vld [vmem:[%s1 + $0x110] sm:$0xff]
  %v54 = vld [vmem:[%s1 + $0x118] sm:$0xff]
  %v55 = vld [vmem:[%s1 + $0x120] sm:$0xff]
  %v56 = vld [vmem:[%s1 + $0x128] sm:$0xff]
  %v57 = vld [vmem:[%s1 + $0x130] sm:$0xff]
  %v58 = vld [vmem:[%s1 + $0x138] sm:$0xff]
  %v59 = vld [vmem:[%s1 + $0x140] sm:$0xff]
  %v60 = vld [vmem:[%s1 + $0x148] sm:$0xff]
  %v61 = vld [vmem:[%s1 + $0x150] sm:$0xff]
  %v62 = vld [vmem:[%s1 + $0x158] sm:$0xff]
  %v63 = vld [vmem:[%s1 + $0x160] sm:$0xff]
  %v64 = vld [vmem:[%s1 + $0x168] sm:$0xff]
  %v65 = vld [vmem:[%s1 + $0x170] sm:$0xff]
  %v66 = vld [vmem:[%s1 + $0x178] sm:$0xff]
  %v67 = vld [vmem:[%s1 + $0x180] sm:$0xff]
  %v68 = vld [vmem:[%s1 + $0x188] sm:$0xff]
  %v69 = vld [vmem:[%s1 + $0x190] sm:$0xff]
  %v70 = vld [vmem:[%s1 + $0x198] sm:$0xff]
  %v71 = vld [vmem:[%s1 + $0x1a0] sm:$0xff]
  %v72 = vld [vmem:[%s1 + $0x1a8] sm:$0xff]
  %v73 = vld [vmem:[%s1 + $0x1b0] sm:$0xff]
  %v74 = vld [vmem:[%s1 + $0x1b8] sm:$0xff]
  %v75 = vld [vmem:[%s1 + $0x1c0] sm:$0xff]
  %v76 = vld [vmem:[%s1 + $0x1c8] sm:$0xff]
  %v77 = vld [vmem:[%s1 + $0x1d0] sm:$0xff]
  %v78 = vld [vmem:[%s1 + $0x1d8] sm:$0xff]
  %v79 = vld [vmem:[%s1 + $0x1e0] sm:$0xff]
  %v80 = vld [vmem:[%s1 + $0x1e8] sm:$0xff]
  %v81 = vld [vmem:[%s1 + $0x1f0] sm:$0xff]
  %v82 = vld [vmem:[%s1 + $0x1f8] sm:$0xff]
  %v83 = vld [vmem:[%s1 + $0x200] sm:$0xff]
  %v84 = vld [vmem:[%s1 + $0x208] sm:$0xff]
  %v85 = vld [vmem:[%s1 + $0x210] sm:$0xff]
  %v86 = vld [vmem:[%s1 + $0x218] sm:$0xff]
  %v87 = vld [vmem:[%s1 + $0x220] sm:$0xff]
  %v88 = vld [vmem:[%s1 + $0x228] sm:$0xff]
  %v89 = vld [vmem:[%s1 + $0x230] sm:$0xff]
  %v90 = vld [vmem:[%s1 + $0x238] sm:$0xff]
  %v91 = vld [vmem:[%s2] sm:$0xff]
  %v92 = vld [vmem:[%s2 + $0x8] sm:$0xff]
  %94 = vset.pattern.permute.xlu0 0
  %95 = vperm.xlu0 %94, %v91
  %v96 = vpop.permute.xlu0 %95
  %99 = vset.pattern.permute.xlu0 0
  %100 = vperm.xlu0 %99, %v92
  %v101 = vpop.permute.xlu0 %100
  %v107 = vunpack.c.l.b16 %v15
  %v108 = vunpack.c.h.b16 %v15
  %v109 = vunpack.c.l.b16 %v16
  %v110 = vunpack.c.l.b16 %v17
  %v111 = vunpack.c.h.b16 %v17
  %v112 = vunpack.c.l.b16 %v18
  %v113 = vpack.c.b16 %v110, %v107
  %v114 = vpack.c.b16 %v111, %v108
  %v115 = vpack.c.b16 %v112, %v109
  %v190 = vunpack.c.l.b16 %v19
  %v191 = vunpack.c.h.b16 %v19
  %v192 = vunpack.c.l.b16 %v20
  %v193 = vunpack.c.h.b16 %v20
  %v194 = vunpack.c.l.b16 %v21
  %v195 = vunpack.c.h.b16 %v21
  %v196 = vunpack.c.l.b16 %v22
  %v197 = vunpack.c.h.b16 %v22
  %v198 = vunpack.c.l.b16 %v23
  %v199 = vunpack.c.h.b16 %v23
  %v200 = vunpack.c.l.b16 %v24
  %v201 = vunpack.c.h.b16 %v24
  %v202 = vunpack.c.l.b16 %v25
  %v203 = vunpack.c.h.b16 %v25
  %v204 = vunpack.c.l.b16 %v26
  %v205 = vunpack.c.h.b16 %v26
  %v206 = vunpack.c.l.b16 %v27
  %v207 = vunpack.c.h.b16 %v27
  %v208 = vunpack.c.l.b16 %v28
  %v209 = vunpack.c.h.b16 %v28
  %v210 = vunpack.c.l.b16 %v29
  %v211 = vunpack.c.h.b16 %v29
  %v212 = vunpack.c.l.b16 %v30
  %v213 = vunpack.c.h.b16 %v30
  %v214 = vunpack.c.l.b16 %v31
  %v215 = vunpack.c.h.b16 %v31
  %v216 = vunpack.c.l.b16 %v32
  %v217 = vunpack.c.h.b16 %v32
  %v218 = vunpack.c.l.b16 %v33
  %v219 = vunpack.c.h.b16 %v33
  %v220 = vunpack.c.l.b16 %v34
  %v221 = vunpack.c.h.b16 %v34
  %v222 = vunpack.c.l.b16 %v35
  %v223 = vunpack.c.h.b16 %v35
  %v224 = vunpack.c.l.b16 %v36
  %v225 = vunpack.c.h.b16 %v36
  %v226 = vunpack.c.l.b16 %v37
  %v227 = vunpack.c.h.b16 %v37
  %v228 = vunpack.c.l.b16 %v38
  %v229 = vunpack.c.h.b16 %v38
  %v230 = vunpack.c.l.b16 %v39
  %v231 = vunpack.c.h.b16 %v39
  %v232 = vunpack.c.l.b16 %v40
  %v233 = vunpack.c.h.b16 %v40
  %v234 = vunpack.c.l.b16 %v41
  %v235 = vunpack.c.h.b16 %v41
  %v236 = vunpack.c.l.b16 %v42
  %v237 = vunpack.c.h.b16 %v42
  %v238 = vunpack.c.l.b16 %v43
  %v239 = vunpack.c.h.b16 %v43
  %v240 = vunpack.c.l.b16 %v44
  %v241 = vunpack.c.h.b16 %v44
  %v242 = vunpack.c.l.b16 %v45
  %v243 = vunpack.c.h.b16 %v45
  %v244 = vunpack.c.l.b16 %v46
  %v245 = vunpack.c.h.b16 %v46
  %v246 = vunpack.c.l.b16 %v47
  %v247 = vunpack.c.h.b16 %v47
  %v248 = vunpack.c.l.b16 %v48
  %v249 = vunpack.c.h.b16 %v48
  %v250 = vunpack.c.l.b16 %v49
  %v251 = vunpack.c.h.b16 %v49
  %v252 = vunpack.c.l.b16 %v50
  %v253 = vunpack.c.h.b16 %v50
  %v254 = vunpack.c.l.b16 %v51
  %v255 = vunpack.c.h.b16 %v51
  %v256 = vunpack.c.l.b16 %v52
  %v257 = vunpack.c.h.b16 %v52
  %v258 = vunpack.c.l.b16 %v53
  %v259 = vunpack.c.h.b16 %v53
  %v260 = vunpack.c.l.b16 %v54
  %v261 = vunpack.c.h.b16 %v54
  %v262 = vunpack.c.l.b16 %v55
  %v263 = vunpack.c.h.b16 %v55
  %v264 = vunpack.c.l.b16 %v56
  %v265 = vunpack.c.h.b16 %v56
  %v266 = vunpack.c.l.b16 %v57
  %v267 = vunpack.c.h.b16 %v57
  %v268 = vunpack.c.l.b16 %v58
  %v269 = vunpack.c.h.b16 %v58
  %v270 = vunpack.c.l.b16 %v59
  %v271 = vunpack.c.h.b16 %v59
  %v272 = vunpack.c.l.b16 %v60
  %v273 = vunpack.c.h.b16 %v60
  %v274 = vunpack.c.l.b16 %v61
  %v275 = vunpack.c.h.b16 %v61
  %v276 = vunpack.c.l.b16 %v62
  %v277 = vunpack.c.h.b16 %v62
  %v278 = vunpack.c.l.b16 %v63
  %v279 = vunpack.c.h.b16 %v63
  %v280 = vunpack.c.l.b16 %v64
  %v281 = vunpack.c.h.b16 %v64
  %v282 = vunpack.c.l.b16 %v65
  %v283 = vunpack.c.h.b16 %v65
  %v284 = vunpack.c.l.b16 %v66
  %v285 = vunpack.c.h.b16 %v66
  %v286 = vunpack.c.l.b16 %v67
  %v287 = vunpack.c.h.b16 %v67
  %v288 = vunpack.c.l.b16 %v68
  %v289 = vunpack.c.h.b16 %v68
  %v290 = vunpack.c.l.b16 %v69
  %v291 = vunpack.c.h.b16 %v69
  %v292 = vunpack.c.l.b16 %v70
  %v293 = vunpack.c.h.b16 %v70
  %v294 = vunpack.c.l.b16 %v71
  %v295 = vunpack.c.h.b16 %v71
  %v296 = vunpack.c.l.b16 %v72
  %v297 = vunpack.c.h.b16 %v72
  %v298 = vunpack.c.l.b16 %v73
  %v299 = vunpack.c.h.b16 %v73
  %v300 = vunpack.c.l.b16 %v74
  %v301 = vunpack.c.h.b16 %v74
  %v302 = vunpack.c.l.b16 %v75
  %v303 = vunpack.c.h.b16 %v75
  %v304 = vunpack.c.l.b16 %v76
  %v305 = vunpack.c.h.b16 %v76
  %v306 = vunpack.c.l.b16 %v77
  %v307 = vunpack.c.h.b16 %v77
  %v308 = vunpack.c.l.b16 %v78
  %v309 = vunpack.c.h.b16 %v78
  %v310 = vunpack.c.l.b16 %v79
  %v311 = vunpack.c.h.b16 %v79
  %v312 = vunpack.c.l.b16 %v80
  %v313 = vunpack.c.h.b16 %v80
  %v314 = vunpack.c.l.b16 %v81
  %v315 = vunpack.c.h.b16 %v81
  %v316 = vunpack.c.l.b16 %v82
  %v317 = vunpack.c.h.b16 %v82
  %v318 = vunpack.c.l.b16 %v83
  %v319 = vunpack.c.h.b16 %v83
  %v320 = vunpack.c.l.b16 %v84
  %v321 = vunpack.c.h.b16 %v84
  %v322 = vunpack.c.l.b16 %v85
  %v323 = vunpack.c.h.b16 %v85
  %v324 = vunpack.c.l.b16 %v86
  %v325 = vunpack.c.h.b16 %v86
  %v326 = vunpack.c.l.b16 %v87
  %v327 = vunpack.c.h.b16 %v87
  %v328 = vunpack.c.l.b16 %v88
  %v329 = vunpack.c.h.b16 %v88
  %v330 = vunpack.c.l.b16 %v89
  %v331 = vunpack.c.h.b16 %v89
  %v332 = vunpack.c.l.b16 %v90
  %v333 = vunpack.c.h.b16 %v90
  %v334 = vpack.c.b16 %v194, %v190
  %v335 = vpack.c.b16 %v195, %v191
  %v336 = vpack.c.b16 %v196, %v192
  %v337 = vpack.c.b16 %v197, %v193
  %v338 = vpack.c.b16 %v202, %v198
  %v339 = vpack.c.b16 %v203, %v199
  %v340 = vpack.c.b16 %v204, %v200
  %v341 = vpack.c.b16 %v205, %v201
  %v342 = vpack.c.b16 %v210, %v206
  %v343 = vpack.c.b16 %v211, %v207
  %v344 = vpack.c.b16 %v212, %v208
  %v345 = vpack.c.b16 %v213, %v209
  %v346 = vpack.c.b16 %v218, %v214
  %v347 = vpack.c.b16 %v219, %v215
  %v348 = vpack.c.b16 %v220, %v216
  %v349 = vpack.c.b16 %v221, %v217
  %v350 = vpack.c.b16 %v226, %v222
  %v351 = vpack.c.b16 %v227, %v223
  %v352 = vpack.c.b16 %v228, %v224
  %v353 = vpack.c.b16 %v229, %v225
  %v354 = vpack.c.b16 %v234, %v230
  %v355 = vpack.c.b16 %v235, %v231
  %v356 = vpack.c.b16 %v236, %v232
  %v357 = vpack.c.b16 %v237, %v233
  %v358 = vpack.c.b16 %v242, %v238
  %v359 = vpack.c.b16 %v243, %v239
  %v360 = vpack.c.b16 %v244, %v240
  %v361 = vpack.c.b16 %v245, %v241
  %v362 = vpack.c.b16 %v250, %v246
  %v363 = vpack.c.b16 %v251, %v247
  %v364 = vpack.c.b16 %v252, %v248
  %v365 = vpack.c.b16 %v253, %v249
  %v366 = vpack.c.b16 %v258, %v254
  %v367 = vpack.c.b16 %v259, %v255
  %v368 = vpack.c.b16 %v260, %v256
  %v369 = vpack.c.b16 %v261, %v257
  %v370 = vpack.c.b16 %v266, %v262
  %v371 = vpack.c.b16 %v267, %v263
  %v372 = vpack.c.b16 %v268, %v264
  %v373 = vpack.c.b16 %v269, %v265
  %v374 = vpack.c.b16 %v274, %v270
  %v375 = vpack.c.b16 %v275, %v271
  %v376 = vpack.c.b16 %v276, %v272
  %v377 = vpack.c.b16 %v277, %v273
  %v378 = vpack.c.b16 %v282, %v278
  %v379 = vpack.c.b16 %v283, %v279
  %v380 = vpack.c.b16 %v284, %v280
  %v381 = vpack.c.b16 %v285, %v281
  %v382 = vpack.c.b16 %v290, %v286
  %v383 = vpack.c.b16 %v291, %v287
  %v384 = vpack.c.b16 %v292, %v288
  %v385 = vpack.c.b16 %v293, %v289
  %v386 = vpack.c.b16 %v298, %v294
  %v387 = vpack.c.b16 %v299, %v295
  %v388 = vpack.c.b16 %v300, %v296
  %v389 = vpack.c.b16 %v301, %v297
  %v390 = vpack.c.b16 %v306, %v302
  %v391 = vpack.c.b16 %v307, %v303
  %v392 = vpack.c.b16 %v308, %v304
  %v393 = vpack.c.b16 %v309, %v305
  %v394 = vpack.c.b16 %v314, %v310
  %v395 = vpack.c.b16 %v315, %v311
  %v396 = vpack.c.b16 %v316, %v312
  %v397 = vpack.c.b16 %v317, %v313
  %v398 = vpack.c.b16 %v322, %v318
  %v399 = vpack.c.b16 %v323, %v319
  %v400 = vpack.c.b16 %v324, %v320
  %v401 = vpack.c.b16 %v325, %v321
  %v402 = vpack.c.b16 %v330, %v326
  %v403 = vpack.c.b16 %v331, %v327
  %v404 = vpack.c.b16 %v332, %v328
  %v405 = vpack.c.b16 %v333, %v329
  %vm478 = vcmask 261120
  %v480 = vsel %vm478, %v115, 0
  %482 = vmatprep.subr.bf16.mxu0 %v335
  %483 = vmatpush1.bf16.msra.mxu0 %v334
  %484 = vmatprep.subr.bf16.mxu0 %v339
  %485 = vmatpush1.bf16.msra.mxu0 %v338
  %486 = vmatprep.subr.bf16.mxu0 %v343
  %487 = vmatpush1.bf16.msra.mxu0 %v342
  %488 = vmatprep.subr.bf16.mxu0 %v347
  %489 = vmatpush1.bf16.msra.mxu0 %v346
  %490 = vmatprep.subr.bf16.mxu0 %v351
  %491 = vmatpush1.bf16.msra.mxu0 %v350
  %492 = vmatprep.subr.bf16.mxu0 %v355
  %493 = vmatpush1.bf16.msra.mxu0 %v354
  %494 = vmatprep.subr.bf16.mxu0 %v359
  %495 = vmatpush1.bf16.msra.mxu0 %v358
  %496 = vmatprep.subr.bf16.mxu0 %v363
  %497 = vmatpush1.bf16.msra.mxu0 %v362
  %498 = vmatprep.subr.bf16.mxu0 %v367
  %499 = vmatpush1.bf16.msra.mxu0 %v366
  %500 = vmatprep.subr.bf16.mxu0 %v371
  %501 = vmatpush1.bf16.msra.mxu0 %v370
  %502 = vmatprep.subr.bf16.mxu0 %v375
  %503 = vmatpush1.bf16.msra.mxu0 %v374
  %504 = vmatprep.subr.bf16.mxu0 %v379
  %505 = vmatpush1.bf16.msra.mxu0 %v378
  %506 = vmatprep.subr.bf16.mxu0 %v383
  %507 = vmatpush1.bf16.msra.mxu0 %v382
  %508 = vmatprep.subr.bf16.mxu0 %v387
  %509 = vmatpush1.bf16.msra.mxu0 %v386
  %510 = vmatprep.subr.bf16.mxu0 %v391
  %511 = vmatpush1.bf16.msra.mxu0 %v390
  %512 = vmatprep.subr.bf16.mxu0 %v395
  %513 = vmatpush1.bf16.msra.mxu0 %v394
  %514 = vmatprep.mubr.bf16.mxu0 %v114
  %515 = vmatmul.mubr.bf16.gmra.mrb[0].mxu0 %v113
  %v516 = vpop.f32.mrb[0].mxu0
  %v517 = vadd.f32 %v96, %v516
  %v518 = vpop.f32.mrb[0].mxu0
  %v519 = vadd.f32 %v96, %v518
  %v520 = vpop.f32.mrb[0].mxu0
  %v521 = vadd.f32 %v101, %v520
  %v522 = vpop.f32.mrb[0].mxu0
  %v523 = vadd.f32 %v101, %v522
  %524 = vdwg.mxu0
  %525 = vmatprep.subr.bf16.mxu0 %v399
  %526 = vmatpush1.bf16.msra.mxu0 %v398
  %527 = vmatprep.subr.bf16.mxu0 %v403
  %528 = vmatpush1.bf16.msra.mxu0 %v402
  %529 = vmatprep.subr.bf16.mxu0 0
  %530 = vmatpush1.bf16.msra.mxu0 0
  %531 = vmatprep.subr.bf16.mxu0 0
  %532 = vmatpush1.bf16.msra.mxu0 0
  %533 = vmatprep.subr.bf16.mxu0 0
  %534 = vmatpush1.bf16.msra.mxu0 0
  %535 = vmatprep.subr.bf16.mxu0 0
  %536 = vmatpush1.bf16.msra.mxu0 0
  %537 = vmatprep.subr.bf16.mxu0 0
  %538 = vmatpush1.bf16.msra.mxu0 0
  %539 = vmatprep.subr.bf16.mxu0 0
  %540 = vmatpush1.bf16.msra.mxu0 0
  %541 = vmatprep.subr.bf16.mxu0 0
  %542 = vmatpush1.bf16.msra.mxu0 0
  %543 = vmatprep.subr.bf16.mxu0 0
  %544 = vmatpush1.bf16.msra.mxu0 0
  %545 = vmatprep.subr.bf16.mxu0 0
  %546 = vmatpush1.bf16.msra.mxu0 0
  %547 = vmatprep.subr.bf16.mxu0 0
  %548 = vmatpush1.bf16.msra.mxu0 0
  %549 = vmatprep.subr.bf16.mxu0 0
  %550 = vmatpush1.bf16.msra.mxu0 0
  %551 = vmatprep.subr.bf16.mxu0 0
  %552 = vmatpush1.bf16.msra.mxu0 0
  %553 = vmatprep.subr.bf16.mxu0 0
  %554 = vmatpush1.bf16.msra.mxu0 0
  %555 = vmatprep.subr.bf16.mxu0 0
  %556 = vmatpush1.bf16.msra.mxu0 0
  %557 = vmatprep.mubr.bf16.mxu0 0
  %558 = vmatmul.mubr.bf16.gmra.mrb[0].mxu0 %v480
  %v559 = vpop.f32.mrb[0].mxu0
  %v560 = vadd.f32 %v517, %v559
  %v561 = vpop.f32.mrb[0].mxu0
  %v562 = vadd.f32 %v519, %v561
  %v563 = vpop.f32.mrb[0].mxu0
  %v564 = vadd.f32 %v521, %v563
  %v565 = vpop.f32.mrb[0].mxu0
  %v566 = vadd.f32 %v523, %v565
  %567 = vdwg.mxu0
  %568 = vmatprep.subr.bf16.mxu0 %v337
  %569 = vmatpush1.bf16.msra.mxu0 %v336
  %570 = vmatprep.subr.bf16.mxu0 %v341
  %571 = vmatpush1.bf16.msra.mxu0 %v340
  %572 = vmatprep.subr.bf16.mxu0 %v345
  %573 = vmatpush1.bf16.msra.mxu0 %v344
  %574 = vmatprep.subr.bf16.mxu0 %v349
  %575 = vmatpush1.bf16.msra.mxu0 %v348
  %576 = vmatprep.subr.bf16.mxu0 %v353
  %577 = vmatpush1.bf16.msra.mxu0 %v352
  %578 = vmatprep.subr.bf16.mxu0 %v357
  %579 = vmatpush1.bf16.msra.mxu0 %v356
  %580 = vmatprep.subr.bf16.mxu0 %v361
  %581 = vmatpush1.bf16.msra.mxu0 %v360
  %582 = vmatprep.subr.bf16.mxu0 %v365
  %583 = vmatpush1.bf16.msra.mxu0 %v364
  %584 = vmatprep.subr.bf16.mxu0 %v369
  %585 = vmatpush1.bf16.msra.mxu0 %v368
  %586 = vmatprep.subr.bf16.mxu0 %v373
  %587 = vmatpush1.bf16.msra.mxu0 %v372
  %588 = vmatprep.subr.bf16.mxu0 %v377
  %589 = vmatpush1.bf16.msra.mxu0 %v376
  %590 = vmatprep.subr.bf16.mxu0 %v381
  %591 = vmatpush1.bf16.msra.mxu0 %v380
  %592 = vmatprep.subr.bf16.mxu0 %v385
  %593 = vmatpush1.bf16.msra.mxu0 %v384
  %594 = vmatprep.subr.bf16.mxu0 %v389
  %595 = vmatpush1.bf16.msra.mxu0 %v388
  %596 = vmatprep.subr.bf16.mxu0 %v393
  %597 = vmatpush1.bf16.msra.mxu0 %v392
  %598 = vmatprep.subr.bf16.mxu0 %v397
  %599 = vmatpush1.bf16.msra.mxu0 %v396
  %600 = vmatprep.mubr.bf16.mxu0 %v114
  %601 = vmatmul.mubr.bf16.gmra.mrb[0].mxu0 %v113
  %v602 = vpop.f32.mrb[0].mxu0
  %v603 = vadd.f32 %v96, %v602
  %v604 = vpop.f32.mrb[0].mxu0
  %v605 = vadd.f32 %v96, %v604
  %v606 = vpop.f32.mrb[0].mxu0
  %v607 = vadd.f32 %v101, %v606
  %v608 = vpop.f32.mrb[0].mxu0
  %v609 = vadd.f32 %v101, %v608
  %610 = vdwg.mxu0
  %611 = vmatprep.subr.bf16.mxu0 %v401
  %612 = vmatpush1.bf16.msra.mxu0 %v400
  %613 = vmatprep.subr.bf16.mxu0 %v405
  %614 = vmatpush1.bf16.msra.mxu0 %v404
  %615 = vmatprep.subr.bf16.mxu0 0
  %616 = vmatpush1.bf16.msra.mxu0 0
  %617 = vmatprep.subr.bf16.mxu0 0
  %618 = vmatpush1.bf16.msra.mxu0 0
  %619 = vmatprep.subr.bf16.mxu0 0
  %620 = vmatpush1.bf16.msra.mxu0 0
  %621 = vmatprep.subr.bf16.mxu0 0
  %622 = vmatpush1.bf16.msra.mxu0 0
  %623 = vmatprep.subr.bf16.mxu0 0
  %624 = vmatpush1.bf16.msra.mxu0 0
  %625 = vmatprep.subr.bf16.mxu0 0
  %626 = vmatpush1.bf16.msra.mxu0 0
  %627 = vmatprep.subr.bf16.mxu0 0
  %628 = vmatpush1.bf16.msra.mxu0 0
  %629 = vmatprep.subr.bf16.mxu0 0
  %630 = vmatpush1.bf16.msra.mxu0 0
  %631 = vmatprep.subr.bf16.mxu0 0
  %632 = vmatpush1.bf16.msra.mxu0 0
  %633 = vmatprep.subr.bf16.mxu0 0
  %634 = vmatpush1.bf16.msra.mxu0 0
  %635 = vmatprep.subr.bf16.mxu0 0
  %636 = vmatpush1.bf16.msra.mxu0 0
  %637 = vmatprep.subr.bf16.mxu0 0
  %638 = vmatpush1.bf16.msra.mxu0 0
  %639 = vmatprep.subr.bf16.mxu0 0
  %640 = vmatpush1.bf16.msra.mxu0 0
  %641 = vmatprep.subr.bf16.mxu0 0
  %642 = vmatpush1.bf16.msra.mxu0 0
  %643 = vmatprep.mubr.bf16.mxu0 0
  %644 = vmatmul.mubr.bf16.gmra.mrb[0].mxu0 %v480
  %v645 = vpop.f32.mrb[0].mxu0
  %v646 = vadd.f32 %v603, %v645
  %v647 = vpop.f32.mrb[0].mxu0
  %v648 = vadd.f32 %v605, %v647
  %v649 = vpop.f32.mrb[0].mxu0
  %v650 = vadd.f32 %v607, %v649
  %v651 = vpop.f32.mrb[0].mxu0
  %v652 = vadd.f32 %v609, %v651
  %653 = vdwg.mxu0
  %v654 = vmax.f32 %v560, 0.0
  %v655 = vmax.f32 %v562, 0.0
  %v656 = vmax.f32 %v646, 0.0
  %v657 = vmax.f32 %v648, 0.0
  %v658 = vmax.f32 %v564, 0.0
  %v659 = vmax.f32 %v566, 0.0
  %v660 = vmax.f32 %v650, 0.0
  %v661 = vmax.f32 %v652, 0.0
  %v662 = vpack.c.bf16 %v658, %v654
  %v663 = vpack.c.bf16 %v659, %v655
  %v664 = vpack.c.bf16 %v660, %v656
  %v665 = vpack.c.bf16 %v661, %v657
  %v670 = vunpack.c.l.b16 %v662
  %v671 = vunpack.c.l.b16 %v663
  %v672 = vunpack.c.l.b16 %v664
  %v673 = vunpack.c.l.b16 %v665
  %v674 = vunpack.c.h.b16 %v662
  %v675 = vunpack.c.h.b16 %v663
  %v676 = vunpack.c.h.b16 %v664
  %v677 = vunpack.c.h.b16 %v665
  %v678 = vpack.c.b16 %v671, %v670
  %v679 = vpack.c.b16 %v673, %v672
  %v680 = vpack.c.b16 %v675, %v674
  %v681 = vpack.c.b16 %v677, %v676
  %686 = vst [vmem:[%s3] sm:$0xff] %v678
  %687 = vst [vmem:[%s3 + $0x8] sm:$0xff] %v679
  %688 = vst [vmem:[%s3 + $0x10] sm:$0xff] %v680
  %689 = vst [vmem:[%s3 + $0x18] sm:$0xff] %v681
  // Predicated region
  $region14: #{sam2unet_forward.65} parent=0 // pred_check
    _
  $region15: #{sam2unet_forward.65} parent=0 // pred_check_branch
    %691 = sbr.rel (0) target = $region17
  $region16: #{sam2unet_forward.65} parent=0 // pred_region
    _
  $region17: #{sam2unet_forward.65} parent=0 // pred_fallthru
    _
  // Predicated region
  $region18: #{sam2unet_forward.65} parent=0 // pred_check
    _
  $region19: #{sam2unet_forward.65} parent=0 // pred_check_branch
    %693 = sbr.rel (0) target = $region21
  $region20: #{sam2unet_forward.65} parent=0 // pred_region
    _
  $region21: #{sam2unet_forward.65} parent=0 // pred_fallthru
    _

// kernel: sam2unet_forward.66
$region0: #{sam2unet_forward.66}
  #allocation0 [shape = 'u32[]', space=smem, size = 0x4, offset = 0x4, fixed_abs, tag = 'smem constant byte address 0x4 - core index']
  #allocation1 [shape = 'u32[144,128]{1,0:T(1,128)}', space=vmem, size = 0x12000, scoped, tag = 'internal scratch']
  %s0 = inlined_call_operand.vmem [shape: bf16[16,144], index: 0, kind: input, shape index: {}]
  %s1 = inlined_call_operand.vmem [shape: bf16[144,512], index: 1, kind: input, shape index: {}]
  %s2 = inlined_call_operand.vmem [shape: f32[16,1], index: 2, kind: input, shape index: {}]
  %s3 = inlined_call_operand.vmem [shape: bf16[16,512], index: 3, kind: output, shape index: {}]
  %s4 = sld [smem:[#allocation0]]
  $region22: #{sam2unet_forward.66} parent=0
    _
  %s6 = ssub.s32 1, %s4
  %s7 = scalar_select 0, %s6, %s4
  // Predicated region
  $region2: #{sam2unet_forward.66} parent=0 // pred_check
    _
  $region3: #{sam2unet_forward.66} parent=0 // pred_check_branch
    %9 = sbr.rel (0) target = $region5
  $region4: #{sam2unet_forward.66} parent=0 // pred_region
    _
  $region5: #{sam2unet_forward.66} parent=0 // pred_fallthru
    _
  // Predicated region
  $region6: #{sam2unet_forward.66} parent=0 // pred_check
    _
  $region7: #{sam2unet_forward.66} parent=0 // pred_check_branch
    %11 = sbr.rel (0) target = $region9
  $region8: #{sam2unet_forward.66} parent=0 // pred_region
    _
  $region9: #{sam2unet_forward.66} parent=0 // pred_fallthru
    _
  // Predicated region
  $region10: #{sam2unet_forward.66} parent=0 // pred_check
    _
  $region11: #{sam2unet_forward.66} parent=0 // pred_check_branch
    %13 = sbr.rel (0) target = $region13
  $region12: #{sam2unet_forward.66} parent=0 // pred_region
    _
  $region13: #{sam2unet_forward.66} parent=0 // pred_fallthru
    _
  %v15 = vld [vmem:[%s0] sm:$0xff]
  %v16 = vld [vmem:[%s0 + $0x8] sm:$0xff]
  %v17 = vld [vmem:[%s1] sm:$0xff]
  %v18 = vld [vmem:[%s1 + $0x8] sm:$0xff]
  %v19 = vld [vmem:[%s1 + $0x10] sm:$0xff]
  %v20 = vld [vmem:[%s1 + $0x18] sm:$0xff]
  %v21 = vld [vmem:[%s1 + $0x20] sm:$0xff]
  %v22 = vld [vmem:[%s1 + $0x28] sm:$0xff]
  %v23 = vld [vmem:[%s1 + $0x30] sm:$0xff]
  %v24 = vld [vmem:[%s1 + $0x38] sm:$0xff]
  %v25 = vld [vmem:[%s1 + $0x40] sm:$0xff]
  %v26 = vld [vmem:[%s1 + $0x48] sm:$0xff]
  %v27 = vld [vmem:[%s1 + $0x50] sm:$0xff]
  %v28 = vld [vmem:[%s1 + $0x58] sm:$0xff]
  %v29 = vld [vmem:[%s1 + $0x60] sm:$0xff]
  %v30 = vld [vmem:[%s1 + $0x68] sm:$0xff]
  %v31 = vld [vmem:[%s1 + $0x70] sm:$0xff]
  %v32 = vld [vmem:[%s1 + $0x78] sm:$0xff]
  %v33 = vld [vmem:[%s1 + $0x80] sm:$0xff]
  %v34 = vld [vmem:[%s1 + $0x88] sm:$0xff]
  %v35 = vld [vmem:[%s1 + $0x90] sm:$0xff]
  %v36 = vld [vmem:[%s1 + $0x98] sm:$0xff]
  %v37 = vld [vmem:[%s1 + $0xa0] sm:$0xff]
  %v38 = vld [vmem:[%s1 + $0xa8] sm:$0xff]
  %v39 = vld [vmem:[%s1 + $0xb0] sm:$0xff]
  %v40 = vld [vmem:[%s1 + $0xb8] sm:$0xff]
  %v41 = vld [vmem:[%s1 + $0xc0] sm:$0xff]
  %v42 = vld [vmem:[%s1 + $0xc8] sm:$0xff]
  %v43 = vld [vmem:[%s1 + $0xd0] sm:$0xff]
  %v44 = vld [vmem:[%s1 + $0xd8] sm:$0xff]
  %v45 = vld [vmem:[%s1 + $0xe0] sm:$0xff]
  %v46 = vld [vmem:[%s1 + $0xe8] sm:$0xff]
  %v47 = vld [vmem:[%s1 + $0xf0] sm:$0xff]
  %v48 = vld [vmem:[%s1 + $0xf8] sm:$0xff]
  %v49 = vld [vmem:[%s1 + $0x100] sm:$0xff]
  %v50 = vld [vmem:[%s1 + $0x108] sm:$0xff]
  %v51 = vld [vmem:[%s1 + $0x110] sm:$0xff]
  %v52 = vld [vmem:[%s1 + $0x118] sm:$0xff]
  %v53 = vld [vmem:[%s2] sm:$0xff]
  %v54 = vld [vmem:[%s2 + $0x8] sm:$0xff]
  %56 = vset.pattern.permute.xlu0 0
  %57 = vperm.xlu0 %56, %v53
  %v58 = vpop.permute.xlu0 %57
  %61 = vset.pattern.permute.xlu0 0
  %62 = vperm.xlu0 %61, %v54
  %v63 = vpop.permute.xlu0 %62
  %v67 = vunpack.c.l.b16 %v15
  %v68 = vunpack.c.h.b16 %v15
  %v69 = vunpack.c.l.b16 %v16
  %v70 = vunpack.c.h.b16 %v16
  %v71 = vpack.c.b16 %v69, %v67
  %v72 = vpack.c.b16 %v70, %v68
  %v110 = vunpack.c.l.b16 %v17
  %v111 = vunpack.c.h.b16 %v17
  %v112 = vunpack.c.l.b16 %v18
  %v113 = vunpack.c.h.b16 %v18
  %v114 = vunpack.c.l.b16 %v19
  %v115 = vunpack.c.h.b16 %v19
  %v116 = vunpack.c.l.b16 %v20
  %v117 = vunpack.c.h.b16 %v20
  %v118 = vunpack.c.l.b16 %v21
  %v119 = vunpack.c.h.b16 %v21
  %v120 = vunpack.c.l.b16 %v22
  %v121 = vunpack.c.h.b16 %v22
  %v122 = vunpack.c.l.b16 %v23
  %v123 = vunpack.c.h.b16 %v23
  %v124 = vunpack.c.l.b16 %v24
  %v125 = vunpack.c.h.b16 %v24
  %v126 = vunpack.c.l.b16 %v25
  %v127 = vunpack.c.h.b16 %v25
  %v128 = vunpack.c.l.b16 %v26
  %v129 = vunpack.c.h.b16 %v26
  %v130 = vunpack.c.l.b16 %v27
  %v131 = vunpack.c.h.b16 %v27
  %v132 = vunpack.c.l.b16 %v28
  %v133 = vunpack.c.h.b16 %v28
  %v134 = vunpack.c.l.b16 %v29
  %v135 = vunpack.c.h.b16 %v29
  %v136 = vunpack.c.l.b16 %v30
  %v137 = vunpack.c.h.b16 %v30
  %v138 = vunpack.c.l.b16 %v31
  %v139 = vunpack.c.h.b16 %v31
  %v140 = vunpack.c.l.b16 %v32
  %v141 = vunpack.c.h.b16 %v32
  %v142 = vunpack.c.l.b16 %v33
  %v143 = vunpack.c.h.b16 %v33
  %v144 = vunpack.c.l.b16 %v34
  %v145 = vunpack.c.h.b16 %v34
  %v146 = vunpack.c.l.b16 %v35
  %v147 = vunpack.c.h.b16 %v35
  %v148 = vunpack.c.l.b16 %v36
  %v149 = vunpack.c.h.b16 %v36
  %v150 = vunpack.c.l.b16 %v37
  %v151 = vunpack.c.h.b16 %v37
  %v152 = vunpack.c.l.b16 %v38
  %v153 = vunpack.c.h.b16 %v38
  %v154 = vunpack.c.l.b16 %v39
  %v155 = vunpack.c.h.b16 %v39
  %v156 = vunpack.c.l.b16 %v40
  %v157 = vunpack.c.h.b16 %v40
  %v158 = vunpack.c.l.b16 %v41
  %v159 = vunpack.c.h.b16 %v41
  %v160 = vunpack.c.l.b16 %v42
  %v161 = vunpack.c.h.b16 %v42
  %v162 = vunpack.c.l.b16 %v43
  %v163 = vunpack.c.h.b16 %v43
  %v164 = vunpack.c.l.b16 %v44
  %v165 = vunpack.c.h.b16 %v44
  %v166 = vunpack.c.l.b16 %v45
  %v167 = vunpack.c.h.b16 %v45
  %v168 = vunpack.c.l.b16 %v46
  %v169 = vunpack.c.h.b16 %v46
  %v170 = vunpack.c.l.b16 %v47
  %v171 = vunpack.c.h.b16 %v47
  %v172 = vunpack.c.l.b16 %v48
  %v173 = vunpack.c.h.b16 %v48
  %v174 = vunpack.c.l.b16 %v49
  %v175 = vunpack.c.h.b16 %v49
  %v176 = vunpack.c.l.b16 %v50
  %v177 = vunpack.c.h.b16 %v50
  %v178 = vunpack.c.l.b16 %v51
  %v179 = vunpack.c.h.b16 %v51
  %v180 = vunpack.c.l.b16 %v52
  %v181 = vunpack.c.h.b16 %v52
  %v182 = vpack.c.b16 %v114, %v110
  %v183 = vpack.c.b16 %v115, %v111
  %v184 = vpack.c.b16 %v116, %v112
  %v185 = vpack.c.b16 %v117, %v113
  %v186 = vpack.c.b16 %v122, %v118
  %v187 = vpack.c.b16 %v123, %v119
  %v188 = vpack.c.b16 %v124, %v120
  %v189 = vpack.c.b16 %v125, %v121
  %v190 = vpack.c.b16 %v130, %v126
  %v191 = vpack.c.b16 %v131, %v127
  %v192 = vpack.c.b16 %v132, %v128
  %v193 = vpack.c.b16 %v133, %v129
  %v194 = vpack.c.b16 %v138, %v134
  %v195 = vpack.c.b16 %v139, %v135
  %v196 = vpack.c.b16 %v140, %v136
  %v197 = vpack.c.b16 %v141, %v137
  %v198 = vpack.c.b16 %v146, %v142
  %v199 = vpack.c.b16 %v147, %v143
  %v200 = vpack.c.b16 %v148, %v144
  %v201 = vpack.c.b16 %v149, %v145
  %v202 = vpack.c.b16 %v154, %v150
  %v203 = vpack.c.b16 %v155, %v151
  %v204 = vpack.c.b16 %v156, %v152
  %v205 = vpack.c.b16 %v157, %v153
  %v206 = vpack.c.b16 %v162, %v158
  %v207 = vpack.c.b16 %v163, %v159
  %v208 = vpack.c.b16 %v164, %v160
  %v209 = vpack.c.b16 %v165, %v161
  %v210 = vpack.c.b16 %v170, %v166
  %v211 = vpack.c.b16 %v171, %v167
  %v212 = vpack.c.b16 %v172, %v168
  %v213 = vpack.c.b16 %v173, %v169
  %v214 = vpack.c.b16 %v178, %v174
  %v215 = vpack.c.b16 %v179, %v175
  %v216 = vpack.c.b16 %v180, %v176
  %v217 = vpack.c.b16 %v181, %v177
  %vm254 = vcmask 130048
  %v256 = vsel %vm254, %v72, 0
  %258 = vmatprep.subr.bf16.mxu0 %v183
  %259 = vmatpush1.bf16.msra.mxu0 %v182
  %260 = vmatprep.subr.bf16.mxu0 %v187
  %261 = vmatpush1.bf16.msra.mxu0 %v186
  %262 = vmatprep.subr.bf16.mxu0 %v191
  %263 = vmatpush1.bf16.msra.mxu0 %v190
  %264 = vmatprep.subr.bf16.mxu0 %v195
  %265 = vmatpush1.bf16.msra.mxu0 %v194
  %266 = vmatprep.subr.bf16.mxu0 %v199
  %267 = vmatpush1.bf16.msra.mxu0 %v198
  %268 = vmatprep.subr.bf16.mxu0 %v203
  %269 = vmatpush1.bf16.msra.mxu0 %v202
  %270 = vmatprep.subr.bf16.mxu0 %v207
  %271 = vmatpush1.bf16.msra.mxu0 %v206
  %272 = vmatprep.subr.bf16.mxu0 %v211
  %273 = vmatpush1.bf16.msra.mxu0 %v210
  %274 = vmatprep.subr.bf16.mxu0 %v215
  %275 = vmatpush1.bf16.msra.mxu0 %v214
  %276 = vmatprep.subr.bf16.mxu0 0
  %277 = vmatpush1.bf16.msra.mxu0 0
  %278 = vmatprep.subr.bf16.mxu0 0
  %279 = vmatpush1.bf16.msra.mxu0 0
  %280 = vmatprep.subr.bf16.mxu0 0
  %281 = vmatpush1.bf16.msra.mxu0 0
  %282 = vmatprep.subr.bf16.mxu0 0
  %283 = vmatpush1.bf16.msra.mxu0 0
  %284 = vmatprep.subr.bf16.mxu0 0
  %285 = vmatpush1.bf16.msra.mxu0 0
  %286 = vmatprep.subr.bf16.mxu0 0
  %287 = vmatpush1.bf16.msra.mxu0 0
  %288 = vmatprep.subr.bf16.mxu0 0
  %289 = vmatpush1.bf16.msra.mxu0 0
  %290 = vmatprep.mubr.bf16.mxu0 %v256
  %291 = vmatmul.mubr.bf16.gmra.mrb[0].mxu0 %v71
  %v292 = vpop.f32.mrb[0].mxu0
  %v293 = vadd.f32 %v58, %v292
  %v294 = vpop.f32.mrb[0].mxu0
  %v295 = vadd.f32 %v58, %v294
  %v296 = vpop.f32.mrb[0].mxu0
  %v297 = vadd.f32 %v63, %v296
  %v298 = vpop.f32.mrb[0].mxu0
  %v299 = vadd.f32 %v63, %v298
  %300 = vdwg.mxu0
  %301 = vmatprep.subr.bf16.mxu0 %v185
  %302 = vmatpush1.bf16.msra.mxu0 %v184
  %303 = vmatprep.subr.bf16.mxu0 %v189
  %304 = vmatpush1.bf16.msra.mxu0 %v188
  %305 = vmatprep.subr.bf16.mxu0 %v193
  %306 = vmatpush1.bf16.msra.mxu0 %v192
  %307 = vmatprep.subr.bf16.mxu0 %v197
  %308 = vmatpush1.bf16.msra.mxu0 %v196
  %309 = vmatprep.subr.bf16.mxu0 %v201
  %310 = vmatpush1.bf16.msra.mxu0 %v200
  %311 = vmatprep.subr.bf16.mxu0 %v205
  %312 = vmatpush1.bf16.msra.mxu0 %v204
  %313 = vmatprep.subr.bf16.mxu0 %v209
  %314 = vmatpush1.bf16.msra.mxu0 %v208
  %315 = vmatprep.subr.bf16.mxu0 %v213
  %316 = vmatpush1.bf16.msra.mxu0 %v212
  %317 = vmatprep.subr.bf16.mxu0 %v217
  %318 = vmatpush1.bf16.msra.mxu0 %v216
  %319 = vmatprep.subr.bf16.mxu0 0
  %320 = vmatpush1.bf16.msra.mxu0 0
  %321 = vmatprep.subr.bf16.mxu0 0
  %322 = vmatpush1.bf16.msra.mxu0 0
  %323 = vmatprep.subr.bf16.mxu0 0
  %324 = vmatpush1.bf16.msra.mxu0 0
  %325 = vmatprep.subr.bf16.mxu0 0
  %326 = vmatpush1.bf16.msra.mxu0 0
  %327 = vmatprep.subr.bf16.mxu0 0
  %328 = vmatpush1.bf16.msra.mxu0 0
  %329 = vmatprep.subr.bf16.mxu0 0
  %330 = vmatpush1.bf16.msra.mxu0 0
  %331 = vmatprep.subr.bf16.mxu0 0
  %332 = vmatpush1.bf16.msra.mxu0 0
  %333 = vmatprep.mubr.bf16.mxu0 %v256
  %334 = vmatmul.mubr.bf16.gmra.mrb[0].mxu0 %v71
  %v335 = vpop.f32.mrb[0].mxu0
  %v336 = vadd.f32 %v58, %v335
  %v337 = vpop.f32.mrb[0].mxu0
  %v338 = vadd.f32 %v58, %v337
  %v339 = vpop.f32.mrb[0].mxu0
  %v340 = vadd.f32 %v63, %v339
  %v341 = vpop.f32.mrb[0].mxu0
  %v342 = vadd.f32 %v63, %v341
  %343 = vdwg.mxu0
  %v344 = vmax.f32 %v293, 0.0
  %v345 = vmax.f32 %v295, 0.0
  %v346 = vmax.f32 %v336, 0.0
  %v347 = vmax.f32 %v338, 0.0
  %v348 = vmax.f32 %v297, 0.0
  %v349 = vmax.f32 %v299, 0.0
  %v350 = vmax.f32 %v340, 0.0
  %v351 = vmax.f32 %v342, 0.0
  %v352 = vpack.c.bf16 %v348, %v344
  %v353 = vpack.c.bf16 %v349, %v345
  %v354 = vpack.c.bf16 %v350, %v346
  %v355 = vpack.c.bf16 %v351, %v347
  %v360 = vunpack.c.l.b16 %v352
  %v361 = vunpack.c.l.b16 %v353
  %v362 = vunpack.c.l.b16 %v354
  %v363 = vunpack.c.l.b16 %v355
  %v364 = vunpack.c.h.b16 %v352
  %v365 = vunpack.c.h.b16 %v353
  %v366 = vunpack.c.h.b16 %v354
  %v367 = vunpack.c.h.b16 %v355
  %v368 = vpack.c.b16 %v361, %v360
  %v369 = vpack.c.b16 %v363, %v362
  %v370 = vpack.c.b16 %v365, %v364
  %v371 = vpack.c.b16 %v367, %v366
  %376 = vst [vmem:[%s3] sm:$0xff] %v368
  %377 = vst [vmem:[%s3 + $0x8] sm:$0xff] %v369
  %378 = vst [vmem:[%s3 + $0x10] sm:$0xff] %v370
  %379 = vst [vmem:[%s3 + $0x18] sm:$0xff] %v371
  // Predicated region
  $region14: #{sam2unet_forward.66} parent=0 // pred_check
    _
  $region15: #{sam2unet_forward.66} parent=0 // pred_check_branch
    %381 = sbr.rel (0) target = $region17
  $region16: #{sam2unet_forward.66} parent=0 // pred_region
    _
  $region17: #{sam2unet_forward.66} parent=0 // pred_fallthru
    _
  // Predicated region
  $region18: #{sam2unet_forward.66} parent=0 // pred_check
    _
  $region19: #{sam2unet_forward.66} parent=0 // pred_check_branch
    %383 = sbr.rel (0) target = $region21
  $region20: #{sam2unet_forward.66} parent=0 // pred_region
    _
  $region21: #{sam2unet_forward.66} parent=0 // pred_fallthru
    _

// kernel: sam2unet_forward.67
$region0: #{sam2unet_forward.67}
  #allocation0 [shape = 'u32[]', space=smem, size = 0x4, offset = 0x4, fixed_abs, tag = 'smem constant byte address 0x4 - core index']
  #allocation1 [shape = 'u32[144,128]{1,0:T(1,128)}', space=vmem, size = 0x12000, scoped, tag = 'internal scratch']
  %s0 = inlined_call_operand.vmem [shape: bf16[16,16], index: 0, kind: input, shape index: {}]
  %s1 = inlined_call_operand.vmem [shape: bf16[16,512], index: 1, kind: input, shape index: {}]
  %s2 = inlined_call_operand.vmem [shape: f32[16,1], index: 2, kind: input, shape index: {}]
  %s3 = inlined_call_operand.vmem [shape: f32[16,512], index: 3, kind: output, shape index: {}]
  %s4 = sld [smem:[#allocation0]]
  $region22: #{sam2unet_forward.67} parent=0
    _
  %s6 = ssub.s32 1, %s4
  %s7 = scalar_select 0, %s6, %s4
  // Predicated region
  $region2: #{sam2unet_forward.67} parent=0 // pred_check
    _
  $region3: #{sam2unet_forward.67} parent=0 // pred_check_branch
    %9 = sbr.rel (0) target = $region5
  $region4: #{sam2unet_forward.67} parent=0 // pred_region
    _
  $region5: #{sam2unet_forward.67} parent=0 // pred_fallthru
    _
  // Predicated region
  $region6: #{sam2unet_forward.67} parent=0 // pred_check
    _
  $region7: #{sam2unet_forward.67} parent=0 // pred_check_branch
    %11 = sbr.rel (0) target = $region9
  $region8: #{sam2unet_forward.67} parent=0 // pred_region
    _
  $region9: #{sam2unet_forward.67} parent=0 // pred_fallthru
    _
  // Predicated region
  $region10: #{sam2unet_forward.67} parent=0 // pred_check
    _
  $region11: #{sam2unet_forward.67} parent=0 // pred_check_branch
    %13 = sbr.rel (0) target = $region13
  $region12: #{sam2unet_forward.67} parent=0 // pred_region
    _
  $region13: #{sam2unet_forward.67} parent=0 // pred_fallthru
    _
  %v15 = vld [vmem:[%s0] sm:$0xf]
  %v16 = vld [vmem:[%s0 + $0x4] sm:$0xf]
  %v17 = vld [vmem:[%s1] sm:$0xff]
  %v18 = vld [vmem:[%s1 + $0x8] sm:$0xff]
  %v19 = vld [vmem:[%s1 + $0x10] sm:$0xff]
  %v20 = vld [vmem:[%s1 + $0x18] sm:$0xff]
  %v21 = vld [vmem:[%s2] sm:$0xff]
  %v22 = vld [vmem:[%s2 + $0x8] sm:$0xff]
  %24 = vset.pattern.permute.xlu0 0
  %25 = vperm.xlu0 %24, %v21
  %v26 = vpop.permute.xlu0 %25
  %29 = vset.pattern.permute.xlu0 0
  %30 = vperm.xlu0 %29, %v22
  %v31 = vpop.permute.xlu0 %30
  %v35 = vunpack.c.l.b16 %v15
  %v36 = vunpack.c.l.b16 %v16
  %v37 = vpack.c.b16 %v36, %v35
  %v42 = vunpack.c.l.b16 %v17
  %v43 = vunpack.c.h.b16 %v17
  %v44 = vunpack.c.l.b16 %v18
  %v45 = vunpack.c.h.b16 %v18
  %v46 = vunpack.c.l.b16 %v19
  %v47 = vunpack.c.h.b16 %v19
  %v48 = vunpack.c.l.b16 %v20
  %v49 = vunpack.c.h.b16 %v20
  %v50 = vpack.c.b16 %v46, %v42
  %v51 = vpack.c.b16 %v47, %v43
  %v52 = vpack.c.b16 %v48, %v44
  %v53 = vpack.c.b16 %v49, %v45
  %vm58 = vcmask 130048
  %v60 = vsel %vm58, %v37, 0
  %62 = vmatprep.subr.bf16.mxu0 %v51
  %63 = vmatpush1.bf16.msra.mxu0 %v50
  %64 = vmatprep.subr.bf16.mxu0 0
  %65 = vmatpush1.bf16.msra.mxu0 0
  %66 = vmatprep.subr.bf16.mxu0 0
  %67 = vmatpush1.bf16.msra.mxu0 0
  %68 = vmatprep.subr.bf16.mxu0 0
  %69 = vmatpush1.bf16.msra.mxu0 0
  %70 = vmatprep.subr.bf16.mxu0 0
  %71 = vmatpush1.bf16.msra.mxu0 0
  %72 = vmatprep.subr.bf16.mxu0 0
  %73 = vmatpush1.bf16.msra.mxu0 0
  %74 = vmatprep.subr.bf16.mxu0 0
  %75 = vmatpush1.bf16.msra.mxu0 0
  %76 = vmatprep.subr.bf16.mxu0 0
  %77 = vmatpush1.bf16.msra.mxu0 0
  %78 = vmatprep.subr.bf16.mxu0 0
  %79 = vmatpush1.bf16.msra.mxu0 0
  %80 = vmatprep.subr.bf16.mxu0 0
  %81 = vmatpush1.bf16.msra.mxu0 0
  %82 = vmatprep.subr.bf16.mxu0 0
  %83 = vmatpush1.bf16.msra.mxu0 0
  %84 = vmatprep.subr.bf16.mxu0 0
  %85 = vmatpush1.bf16.msra.mxu0 0
  %86 = vmatprep.subr.bf16.mxu0 0
  %87 = vmatpush1.bf16.msra.mxu0 0
  %88 = vmatprep.subr.bf16.mxu0 0
  %89 = vmatpush1.bf16.msra.mxu0 0
  %90 = vmatprep.subr.bf16.mxu0 0
  %91 = vmatpush1.bf16.msra.mxu0 0
  %92 = vmatprep.subr.bf16.mxu0 0
  %93 = vmatpush1.bf16.msra.mxu0 0
  %94 = vmatprep.mubr.bf16.mxu0 0
  %95 = vmatmul.mubr.bf16.gmra.mrb[0].mxu0 %v60
  %v96 = vpop.f32.mrb[0].mxu0
  %v97 = vadd.f32 %v26, %v96
  %v98 = vpop.f32.mrb[0].mxu0
  %v99 = vadd.f32 %v26, %v98
  %v100 = vpop.f32.mrb[0].mxu0
  %v101 = vadd.f32 %v31, %v100
  %v102 = vpop.f32.mrb[0].mxu0
  %v103 = vadd.f32 %v31, %v102
  %104 = vdwg.mxu0
  %105 = vmatprep.subr.bf16.mxu0 %v53
  %106 = vmatpush1.bf16.msra.mxu0 %v52
  %107 = vmatprep.subr.bf16.mxu0 0
  %108 = vmatpush1.bf16.msra.mxu0 0
  %109 = vmatprep.subr.bf16.mxu0 0
  %110 = vmatpush1.bf16.msra.mxu0 0
  %111 = vmatprep.subr.bf16.mxu0 0
  %112 = vmatpush1.bf16.msra.mxu0 0
  %113 = vmatprep.subr.bf16.mxu0 0
  %114 = vmatpush1.bf16.msra.mxu0 0
  %115 = vmatprep.subr.bf16.mxu0 0
  %116 = vmatpush1.bf16.msra.mxu0 0
  %117 = vmatprep.subr.bf16.mxu0 0
  %118 = vmatpush1.bf16.msra.mxu0 0
  %119 = vmatprep.subr.bf16.mxu0 0
  %120 = vmatpush1.bf16.msra.mxu0 0
  %121 = vmatprep.subr.bf16.mxu0 0
  %122 = vmatpush1.bf16.msra.mxu0 0
  %123 = vmatprep.subr.bf16.mxu0 0
  %124 = vmatpush1.bf16.msra.mxu0 0
  %125 = vmatprep.subr.bf16.mxu0 0
  %126 = vmatpush1.bf16.msra.mxu0 0
  %127 = vmatprep.subr.bf16.mxu0 0
  %128 = vmatpush1.bf16.msra.mxu0 0
  %129 = vmatprep.subr.bf16.mxu0 0
  %130 = vmatpush1.bf16.msra.mxu0 0
  %131 = vmatprep.subr.bf16.mxu0 0
  %132 = vmatpush1.bf16.msra.mxu0 0
  %133 = vmatprep.subr.bf16.mxu0 0
  %134 = vmatpush1.bf16.msra.mxu0 0
  %135 = vmatprep.subr.bf16.mxu0 0
  %136 = vmatpush1.bf16.msra.mxu0 0
  %137 = vmatprep.mubr.bf16.mxu0 0
  %138 = vmatmul.mubr.bf16.gmra.mrb[0].mxu0 %v60
  %v139 = vpop.f32.mrb[0].mxu0
  %v140 = vadd.f32 %v26, %v139
  %v141 = vpop.f32.mrb[0].mxu0
  %v142 = vadd.f32 %v26, %v141
  %v143 = vpop.f32.mrb[0].mxu0
  %v144 = vadd.f32 %v31, %v143
  %v145 = vpop.f32.mrb[0].mxu0
  %v146 = vadd.f32 %v31, %v145
  %147 = vdwg.mxu0
  %148 = vst [vmem:[%s3] sm:$0xff] %v97
  %149 = vst [vmem:[%s3 + $0x8] sm:$0xff] %v99
  %150 = vst [vmem:[%s3 + $0x10] sm:$0xff] %v140
  %151 = vst [vmem:[%s3 + $0x18] sm:$0xff] %v142
  %152 = vst [vmem:[%s3 + $0x20] sm:$0xff] %v101
  %153 = vst [vmem:[%s3 + $0x28] sm:$0xff] %v103
  %154 = vst [vmem:[%s3 + $0x30] sm:$0xff] %v144
  %155 = vst [vmem:[%s3 + $0x38] sm:$0xff] %v146
  // Predicated region
  $region14: #{sam2unet_forward.67} parent=0 // pred_check
    _
  $region15: #{sam2unet_forward.67} parent=0 // pred_check_branch
    %157 = sbr.rel (0) target = $region17
  $region16: #{sam2unet_forward.67} parent=0 // pred_region
    _
  $region17: #{sam2unet_forward.67} parent=0 // pred_fallthru
    _
  // Predicated region
  $region18: #{sam2unet_forward.67} parent=0 // pred_check
    _
  $region19: #{sam2unet_forward.67} parent=0 // pred_check_branch
    %159 = sbr.rel (0) target = $region21
  $region20: #{sam2unet_forward.67} parent=0 // pred_region
    _
  $region21: #{sam2unet_forward.67} parent=0 // pred_fallthru
    _

// kernel: sam2unet_forward.64
$region0: #{sam2unet_forward.64}
  #allocation0 [shape = 'u32[]', space=smem, size = 0x4, offset = 0x4, fixed_abs, tag = 'smem constant byte address 0x4 - core index']
  #allocation1 [shape = 'u32[144,128]{1,0:T(1,128)}', space=vmem, size = 0x12000, scoped, tag = 'internal scratch']
  %s0 = inlined_call_operand.vmem [shape: bf16[16,16], index: 0, kind: input, shape index: {}]
  %s1 = inlined_call_operand.vmem [shape: bf16[16,128], index: 1, kind: input, shape index: {}]
  %s2 = inlined_call_operand.vmem [shape: f32[16,1], index: 2, kind: input, shape index: {}]
  %s3 = inlined_call_operand.vmem [shape: f32[16,128], index: 3, kind: output, shape index: {}]
  %s4 = sld [smem:[#allocation0]]
  $region22: #{sam2unet_forward.64} parent=0
    _
  %s6 = ssub.s32 1, %s4
  %s7 = scalar_select 0, %s6, %s4
  // Predicated region
  $region2: #{sam2unet_forward.64} parent=0 // pred_check
    _
  $region3: #{sam2unet_forward.64} parent=0 // pred_check_branch
    %9 = sbr.rel (0) target = $region5
  $region4: #{sam2unet_forward.64} parent=0 // pred_region
    _
  $region5: #{sam2unet_forward.64} parent=0 // pred_fallthru
    _
  // Predicated region
  $region6: #{sam2unet_forward.64} parent=0 // pred_check
    _
  $region7: #{sam2unet_forward.64} parent=0 // pred_check_branch
    %11 = sbr.rel (0) target = $region9
  $region8: #{sam2unet_forward.64} parent=0 // pred_region
    _
  $region9: #{sam2unet_forward.64} parent=0 // pred_fallthru
    _
  // Predicated region
  $region10: #{sam2unet_forward.64} parent=0 // pred_check
    _
  $region11: #{sam2unet_forward.64} parent=0 // pred_check_branch
    %13 = sbr.rel (0) target = $region13
  $region12: #{sam2unet_forward.64} parent=0 // pred_region
    _
  $region13: #{sam2unet_forward.64} parent=0 // pred_fallthru
    _
  %v15 = vld [vmem:[%s0] sm:$0xf]
  %v16 = vld [vmem:[%s0 + $0x4] sm:$0xf]
  %v17 = vld [vmem:[%s1] sm:$0xf]
  %v18 = vld [vmem:[%s1 + $0x4] sm:$0xf]
  %v19 = vld [vmem:[%s2] sm:$0xff]
  %v20 = vld [vmem:[%s2 + $0x8] sm:$0xff]
  %22 = vset.pattern.permute.xlu0 0
  %23 = vperm.xlu0 %22, %v19
  %v24 = vpop.permute.xlu0 %23
  %27 = vset.pattern.permute.xlu0 0
  %28 = vperm.xlu0 %27, %v20
  %v29 = vpop.permute.xlu0 %28
  %v33 = vunpack.c.l.b16 %v15
  %v34 = vunpack.c.l.b16 %v16
  %v35 = vpack.c.b16 %v34, %v33
  %v38 = vunpack.c.l.b16 %v17
  %v39 = vunpack.c.l.b16 %v18
  %v40 = vpack.c.b16 %v39, %v38
  %vm42 = vcmask 130048
  %v44 = vsel %vm42, %v35, 0
  %46 = vmatprep.subr.bf16.mxu0 0
  %47 = vmatpush1.bf16.msra.mxu0 %v40
  %48 = vmatprep.subr.bf16.mxu0 0
  %49 = vmatpush1.bf16.msra.mxu0 0
  %50 = vmatprep.subr.bf16.mxu0 0
  %51 = vmatpush1.bf16.msra.mxu0 0
  %52 = vmatprep.subr.bf16.mxu0 0
  %53 = vmatpush1.bf16.msra.mxu0 0
  %54 = vmatprep.subr.bf16.mxu0 0
  %55 = vmatpush1.bf16.msra.mxu0 0
  %56 = vmatprep.subr.bf16.mxu0 0
  %57 = vmatpush1.bf16.msra.mxu0 0
  %58 = vmatprep.subr.bf16.mxu0 0
  %59 = vmatpush1.bf16.msra.mxu0 0
  %60 = vmatprep.subr.bf16.mxu0 0
  %61 = vmatpush1.bf16.msra.mxu0 0
  %62 = vmatprep.subr.bf16.mxu0 0
  %63 = vmatpush1.bf16.msra.mxu0 0
  %64 = vmatprep.subr.bf16.mxu0 0
  %65 = vmatpush1.bf16.msra.mxu0 0
  %66 = vmatprep.subr.bf16.mxu0 0
  %67 = vmatpush1.bf16.msra.mxu0 0
  %68 = vmatprep.subr.bf16.mxu0 0
  %69 = vmatpush1.bf16.msra.mxu0 0
  %70 = vmatprep.subr.bf16.mxu0 0
  %71 = vmatpush1.bf16.msra.mxu0 0
  %72 = vmatprep.subr.bf16.mxu0 0
  %73 = vmatpush1.bf16.msra.mxu0 0
  %74 = vmatprep.subr.bf16.mxu0 0
  %75 = vmatpush1.bf16.msra.mxu0 0
  %76 = vmatprep.subr.bf16.mxu0 0
  %77 = vmatpush1.bf16.msra.mxu0 0
  %78 = vmatprep.mubr.bf16.mxu0 0
  %79 = vmatmul.mubr.bf16.gmra.mrb[0].mxu0 %v44
  %v80 = vpop.f32.mrb[0].mxu0
  %v81 = vadd.f32 %v24, %v80
  %v82 = vpop.f32.mrb[0].mxu0
  %v83 = vpop.f32.mrb[0].mxu0
  %v84 = vadd.f32 %v29, %v83
  %v85 = vpop.f32.mrb[0].mxu0
  %86 = vdwg.mxu0
  %87 = vst [vmem:[%s3] sm:$0xff] %v81
  %88 = vst [vmem:[%s3 + $0x8] sm:$0xff] %v84
  // Predicated region
  $region14: #{sam2unet_forward.64} parent=0 // pred_check
    _
  $region15: #{sam2unet_forward.64} parent=0 // pred_check_branch
    %90 = sbr.rel (0) target = $region17
  $region16: #{sam2unet_forward.64} parent=0 // pred_region
    _
  $region17: #{sam2unet_forward.64} parent=0 // pred_fallthru
    _
  // Predicated region
  $region18: #{sam2unet_forward.64} parent=0 // pred_check
    _
  $region19: #{sam2unet_forward.64} parent=0 // pred_check_branch
    %92 = sbr.rel (0) target = $region21
  $region20: #{sam2unet_forward.64} parent=0 // pred_region
    _
  $region21: #{sam2unet_forward.64} parent=0 // pred_fallthru
    _

</llo_original>
